<compile_context>
chip_gen: v6e
topology: v6e:2x2x1
jax: 0.10.0
libtpu: 0.0.40
codegen_flags: <defaults>
</compile_context>

<pallas_src>
import math
import functools

import jax
import jax.numpy as jnp
from jax import lax
from jax.experimental import pallas as pl
from jax.experimental.pallas import tpu as pltpu  # noqa: F401  (TPU backend)


ENC_KEYS = ('wqkv', 'bqkv', 'wo', 'bo', 'ln1_g', 'ln1_b',
            'w1', 'b1', 'w2', 'b2', 'ln2_g', 'ln2_b')


# ----------------------------- in-kernel helpers ---------------------------

def _layernorm(y, g, b, eps=1e-5):
    mean = jnp.mean(y, axis=-1, keepdims=True)
    c = y - mean
    var = jnp.mean(c * c, axis=-1, keepdims=True)
    return c * lax.rsqrt(var + eps) * g + b


def _softmax_last(s):
    m = jnp.max(s, axis=-1, keepdims=True)
    e = jnp.exp(s - m)
    # approx reciprocal -> EUP slot; ~2^-12 relative error, fine for this model.
    return e * pl.reciprocal(jnp.sum(e, axis=-1, keepdims=True), approx=True)


def _encoder_tower(e, p, score_ref, *, B, S, h, dq, dv):
    """Runs all N encoder layers of one tower on a VMEM-resident activation.

    e: (B*S, D) value.  p: dict of stacked (N, ...) weight refs.
    Writes the LAST layer's attention scores to score_ref ((h*B, S, S)),
    matching torch's loop (score is overwritten each layer).
    Returns the (B*S, D) output value.
    """
    N = p['wqkv'].shape[0]
    scale = 1.0 / math.sqrt(dq)
    k_off = h * dq
    v_off = 2 * h * dq

    for n in range(N):                      # static unroll; weights stay in VMEM
        qkv = (jnp.dot(e, p['wqkv'][n], preferred_element_type=jnp.float32)
               + p['bqkv'][n])              # (B*S, h*(2q+v)) — one fused matmul
        # Batch-major 3-D view built with static slices + stack (no relayout).
        qkv3 = jnp.stack([qkv[b * S:(b + 1) * S, :] for b in range(B)], axis=0)

        probs = []
        heads = []
        for i in range(h):                  # B-batched per-head attention
            q_i = qkv3[:, :, i * dq:(i + 1) * dq]                       # (B,S,dq)
            k_i = qkv3[:, :, k_off + i * dq:k_off + (i + 1) * dq]       # (B,S,dq)
            v_i = qkv3[:, :, v_off + i * dv:v_off + (i + 1) * dv]       # (B,S,dv)
            s_i = jnp.einsum('bqd,bkd->bqk', q_i, k_i,
                             preferred_element_type=jnp.float32) * scale
            p_i = _softmax_last(s_i)                                    # (B,S,S)
            probs.append(p_i)
            heads.append(jnp.einsum('bqk,bkd->bqd', p_i, v_i,
                                    preferred_element_type=jnp.float32))
        if n == N - 1:
            # torch cat(chunk(dim=0)) ordering: index = head*B + batch.
            score_ref[...] = jnp.concatenate(probs, axis=0)

        # Re-attach heads lane-dense: (B, S, h*dv) -> (B*S, h*dv).
        attn3 = jnp.concatenate(heads, axis=-1)
        attn = jnp.concatenate([attn3[b] for b in range(B)], axis=0)

        mha = (jnp.dot(attn, p['wo'][n], preferred_element_type=jnp.float32)
               + p['bo'][n])
        x1 = _layernorm(e + mha, p['ln1_g'][n], p['ln1_b'][n])

        hid = jnp.maximum(
            jnp.dot(x1, p['w1'][n], preferred_element_type=jnp.float32)
            + p['b1'][n], 0.0)
        ff = (jnp.dot(hid, p['w2'][n], preferred_element_type=jnp.float32)
              + p['b2'][n])
        e = _layernorm(x1 + ff, p['ln2_g'][n], p['ln2_b'][n])
    return e


# ----------------------------- the fused kernel ----------------------------

def _forward_kernel(*refs, h, dq, dv):
    # ---- unpack refs (inputs, then outputs; no scratch needed) ----
    x2_ref, xt2_ref = refs[0], refs[1]
    emb_c_w, emb_c_b, emb_i_w, emb_i_b = refs[2:6]
    enc1 = dict(zip(ENC_KEYS, refs[6:18]))
    enc2 = dict(zip(ENC_KEYS, refs[18:30]))
    gate_wt, gate_b, out_w, out_b = refs[30:34]
    (out_ref, enc_ref, score1_ref, score2_ref,
     itg_ref, ctg_ref, gate_ref) = refs[34:41]

    B, d_input, d_model = itg_ref.shape
    d_channel = ctg_ref.shape[1]

    # ---- embeddings (one matmul per tower, activations stay resident) ----
    e1 = (jnp.dot(x2_ref[...], emb_c_w[...],
                  preferred_element_type=jnp.float32) + emb_c_b[...])
    e2 = (jnp.dot(xt2_ref[...], emb_i_w[...],
                  preferred_element_type=jnp.float32) + emb_i_b[...])
    for b in range(B):
        itg_ref[b] = e1[b * d_input:(b + 1) * d_input, :]
        ctg_ref[b] = e2[b * d_channel:(b + 1) * d_channel, :]

    # ---- encoder towers (all N layers in-kernel, activations in VMEM) ----
    e1 = _encoder_tower(e1, enc1, score1_ref,
                        B=B, S=d_input, h=h, dq=dq, dv=dv)
    e2 = _encoder_tower(e2, enc2, score2_ref,
                        B=B, S=d_channel, h=h, dq=dq, dv=dv)

    # ---- flatten (B*S, D) -> (B, S*D) with lane-dense concats ----
    def flatten(e, S):
        rows = [jnp.concatenate(
            [e[b * S + i:b * S + i + 1, :] for i in range(S)], axis=-1)
            for b in range(B)]
        return jnp.concatenate(rows, axis=0)          # (B, S*d_model)

    e1_flat = flatten(e1, d_input)
    e2_flat = flatten(e2, d_channel)
    e_cat = jnp.concatenate([e1_flat, e2_flat], axis=-1)      # (B, d_cat)

    # ---- 2-way gate: VPU multiply + lane reductions (no 2-wide MXU pass) ----
    gwt = gate_wt[...]                                # (2, d_cat), pre-transposed
    gb = gate_b[...]                                  # (1, 2)
    l0 = jnp.sum(e_cat * gwt[0:1, :], axis=-1, keepdims=True) + gb[0:1, 0:1]
    l1 = jnp.sum(e_cat * gwt[1:2, :], axis=-1, keepdims=True) + gb[0:1, 1:2]
    m = jnp.maximum(l0, l1)
    p0 = jnp.exp(l0 - m)
    p1 = jnp.exp(l1 - m)
    inv = pl.reciprocal(p0 + p1, approx=True)
    g0 = p0 * inv                                     # (B, 1)
    g1 = p1 * inv                                     # (B, 1)
    gate_ref[...] = jnp.concatenate([g0, g1], axis=-1)

    # ---- gated concat (lane-dense) + output linear ----
    enc = jnp.concatenate([e1_flat * g0, e2_flat * g1], axis=-1)
    enc_ref[...] = enc
    out_ref[...] = (jnp.dot(enc, out_w[...],
                            preferred_element_type=jnp.float32) + out_b[...])


# ----------------------------- model forward -------------------------------

def transformer_forward(params, x, *, h, q, v, stage='test'):
    """x: (B, d_input, d_channel) float32.  Mirrors Transformer.forward()."""
    del stage                     # dropout / mask inactive (eval mode)
    B, d_input, d_channel = x.shape
    d_model = params['emb_c_w'].shape[1]
    d_output = params['out_w'].shape[1]
    d_cat = d_model * d_input + d_model * d_channel

    x2 = x.reshape(B * d_input, d_channel)
    # Tiny XLA transpose (256 B); both views of x enter the ONE fused kernel.
    xt2 = jnp.transpose(x, (0, 2, 1)).reshape(B * d_channel, d_input)

    inputs = [x2, xt2,
              params['emb_c_w'], params['emb_c_b'],
              params['emb_i_w'], params['emb_i_b']]
    inputs += [params['enc1'][k] for k in ENC_KEYS]
    inputs += [params['enc2'][k] for k in ENC_KEYS]
    inputs += [params['gate_wt'], params['gate_b'],
               params['out_w'], params['out_b']]

    out_shape = (
        jax.ShapeDtypeStruct((B, d_output), jnp.float32),                # output
        jax.ShapeDtypeStruct((B, d_cat), jnp.float32),                   # encoding
        jax.ShapeDtypeStruct((h * B, d_input, d_input), jnp.float32),    # score_input
        jax.ShapeDtypeStruct((h * B, d_channel, d_channel), jnp.float32),# score_channel
        jax.ShapeDtypeStruct((B, d_input, d_model), jnp.float32),        # input_to_gather
        jax.ShapeDtypeStruct((B, d_channel, d_model), jnp.float32),      # channel_to_gather
        jax.ShapeDtypeStruct((B, 2), jnp.float32),                       # gate
    )

    kern = functools.partial(_forward_kernel, h=h, dq=q, dv=v)
    # Whole-array VMEM blocks, no grid: total footprint is KB-scale, far below
    # the scoped VMEM default on v5e/v6e/v7x, so tiling would only add overhead.
    (out, encoding, score_input, score_channel,
     input_to_gather, channel_to_gather, gate) = pl.pallas_call(
        kern, out_shape=out_shape,
    )(*inputs)

    return (out, encoding, score_input, score_channel,
            input_to_gather, channel_to_gather, gate)


# ----------------------------- parameter init ------------------------------

def init_params(key, d_model, d_input, d_channel, d_output, d_hidden,
                q, v, h, N):
    cnt = [0]

    def nk():
        cnt[0] += 1
        return jax.random.fold_in(key, cnt[0])

    def lin(fi, fo):
        kw, kb = jax.random.split(nk())
        bound = 1.0 / math.sqrt(fi)             # torch.nn.Linear default init
        w = jax.random.uniform(kw, (fi, fo), jnp.float32, -bound, bound)
        b = jax.random.uniform(kb, (1, fo), jnp.float32, -bound, bound)
        return w, b

    def enc_layer():
        wq, bq = lin(d_model, q * h)
        wk, bk = lin(d_model, q * h)
        wv, bv = lin(d_model, v * h)
        p = {}
        p['wqkv'] = jnp.concatenate([wq, wk, wv], axis=1)   # (D, h*(2q+v))
        p['bqkv'] = jnp.concatenate([bq, bk, bv], axis=1)   # (1, h*(2q+v))
        p['wo'], p['bo'] = lin(v * h, d_model)
        p['ln1_g'] = jnp.ones((1, d_model), jnp.float32)
        p['ln1_b'] = jnp.zeros((1, d_model), jnp.float32)
        p['w1'], p['b1'] = lin(d_model, d_hidden)
        p['w2'], p['b2'] = lin(d_hidden, d_model)
        p['ln2_g'] = jnp.ones((1, d_model), jnp.float32)
        p['ln2_b'] = jnp.zeros((1, d_model), jnp.float32)
        return p

    def stack_tower():
        layers = [enc_layer() for _ in range(N)]
        return {k: jnp.stack([l[k] for l in layers], axis=0) for k in ENC_KEYS}

    params = {}
    params['emb_c_w'], params['emb_c_b'] = lin(d_channel, d_model)
    params['emb_i_w'], params['emb_i_b'] = lin(d_input, d_model)
    d_cat = d_model * d_input + d_model * d_channel
    gw, gb = lin(d_cat, 2)
    params['gate_wt'] = gw.T                    # (2, d_cat): lane-dense rows
    params['gate_b'] = gb                       # (1, 2)
    params['out_w'], params['out_b'] = lin(d_cat, d_output)
    params['enc1'] = stack_tower()              # stacked (N, ...) per key
    params['enc2'] = stack_tower()
    return params


# --------------------------------- main -------------------------------------

if __name__ == "__main__":
    d_model, d_input, d_channel = 32, 8, 4
    d_output, d_hidden = 4, 32
    q_dim, v_dim, n_heads, N = 8, 8, 4, 2
    B = 2

    key = jax.random.PRNGKey(0)
    params = init_params(key, d_model, d_input, d_channel, d_output,
                         d_hidden, q_dim, v_dim, n_heads, N)
    x = jax.random.normal(jax.random.fold_in(key, 12345),
                          (B, d_input, d_channel), jnp.float32)

    # h/q/v are bound as static Python ints (not traced pytree leaves).
    fwd = jax.jit(functools.partial(transformer_forward,
                                    h=n_heads, q=q_dim, v=v_dim, stage='test'))
    outs = fwd(params, x)
    jax.block_until_ready(outs)

    out, encoding, score_in, score_ch, itg, ctg, gate = outs
    assert out.shape == (B, d_output)
    assert encoding.shape == (B, d_model * d_input + d_model * d_channel)
    assert score_in.shape == (n_heads * B, d_input, d_input)
    assert score_ch.shape == (n_heads * B, d_channel, d_channel)
    assert itg.shape == (B, d_input, d_model)
    assert ctg.shape == (B, d_channel, d_model)
    assert gate.shape == (B, 2)
    assert bool(jnp.all(jnp.isfinite(out)))
    assert bool(jnp.abs(jnp.sum(gate) - B) < 1e-2)   # gate rows ~ sum to 1
    print("KERNEL_OK")
</pallas_src>

<mosaic_0001>
module attributes {stable_mosaic.version = 11 : i64} {
  func.func @_forward_kernel(%arg0: memref<16x4xf32, #tpu.memory_space<vmem>>, %arg1: memref<8x8xf32, #tpu.memory_space<vmem>>, %arg2: memref<4x32xf32, #tpu.memory_space<vmem>>, %arg3: memref<1x32xf32, #tpu.memory_space<vmem>>, %arg4: memref<8x32xf32, #tpu.memory_space<vmem>>, %arg5: memref<1x32xf32, #tpu.memory_space<vmem>>, %arg6: memref<2x32x96xf32, #tpu.memory_space<vmem>>, %arg7: memref<2x1x96xf32, #tpu.memory_space<vmem>>, %arg8: memref<2x32x32xf32, #tpu.memory_space<vmem>>, %arg9: memref<2x1x32xf32, #tpu.memory_space<vmem>>, %arg10: memref<2x1x32xf32, #tpu.memory_space<vmem>>, %arg11: memref<2x1x32xf32, #tpu.memory_space<vmem>>, %arg12: memref<2x32x32xf32, #tpu.memory_space<vmem>>, %arg13: memref<2x1x32xf32, #tpu.memory_space<vmem>>, %arg14: memref<2x32x32xf32, #tpu.memory_space<vmem>>, %arg15: memref<2x1x32xf32, #tpu.memory_space<vmem>>, %arg16: memref<2x1x32xf32, #tpu.memory_space<vmem>>, %arg17: memref<2x1x32xf32, #tpu.memory_space<vmem>>, %arg18: memref<2x32x96xf32, #tpu.memory_space<vmem>>, %arg19: memref<2x1x96xf32, #tpu.memory_space<vmem>>, %arg20: memref<2x32x32xf32, #tpu.memory_space<vmem>>, %arg21: memref<2x1x32xf32, #tpu.memory_space<vmem>>, %arg22: memref<2x1x32xf32, #tpu.memory_space<vmem>>, %arg23: memref<2x1x32xf32, #tpu.memory_space<vmem>>, %arg24: memref<2x32x32xf32, #tpu.memory_space<vmem>>, %arg25: memref<2x1x32xf32, #tpu.memory_space<vmem>>, %arg26: memref<2x32x32xf32, #tpu.memory_space<vmem>>, %arg27: memref<2x1x32xf32, #tpu.memory_space<vmem>>, %arg28: memref<2x1x32xf32, #tpu.memory_space<vmem>>, %arg29: memref<2x1x32xf32, #tpu.memory_space<vmem>>, %arg30: memref<2x384xf32, #tpu.memory_space<vmem>>, %arg31: memref<1x2xf32, #tpu.memory_space<vmem>>, %arg32: memref<384x4xf32, #tpu.memory_space<vmem>>, %arg33: memref<1x4xf32, #tpu.memory_space<vmem>>, %arg34: memref<2x4xf32, #tpu.memory_space<vmem>>, %arg35: memref<2x384xf32, #tpu.memory_space<vmem>>, %arg36: memref<8x8x8xf32, #tpu.memory_space<vmem>>, %arg37: memref<8x4x4xf32, #tpu.memory_space<vmem>>, %arg38: memref<2x8x32xf32, #tpu.memory_space<vmem>>, %arg39: memref<2x4x32xf32, #tpu.memory_space<vmem>>, %arg40: memref<2x2xf32, #tpu.memory_space<vmem>>) attributes {dimension_semantics = [], scalar_prefetch = 0 : i64, scratch_operands = 0 : i64, tpu.core_type = #tpu.core_type<tc>} {
    %c0 = arith.constant 0 : index
    %c0_0 = arith.constant 0 : index
    %0 = vector.load %arg0[%c0, %c0_0] : memref<16x4xf32, #tpu.memory_space<vmem>>, vector<16x4xf32>
    %c0_1 = arith.constant 0 : index
    %c0_2 = arith.constant 0 : index
    %1 = vector.load %arg2[%c0_1, %c0_2] : memref<4x32xf32, #tpu.memory_space<vmem>>, vector<4x32xf32>
    %cst = arith.constant dense<0.000000e+00> : vector<16x32xf32>
    %2 = tpu.matmul %0, %1, %cst {dimension_numbers = #tpu.dot_dimension_numbers<[1], [0], [0], [1], [0, 0, 1, 1], [], []>} : vector<16x4xf32>, vector<4x32xf32>, vector<16x32xf32> -> vector<16x32xf32>
    %c0_3 = arith.constant 0 : index
    %c0_4 = arith.constant 0 : index
    %3 = vector.load %arg3[%c0_3, %c0_4] : memref<1x32xf32, #tpu.memory_space<vmem>>, vector<1x32xf32>
    %4 = vector.broadcast %3 : vector<1x32xf32> to vector<16x32xf32>
    %5 = arith.addf %2, %4 : vector<16x32xf32>
    %c0_5 = arith.constant 0 : index
    %c0_6 = arith.constant 0 : index
    %6 = vector.load %arg1[%c0_5, %c0_6] : memref<8x8xf32, #tpu.memory_space<vmem>>, vector<8x8xf32>
    %c0_7 = arith.constant 0 : index
    %c0_8 = arith.constant 0 : index
    %7 = vector.load %arg4[%c0_7, %c0_8] : memref<8x32xf32, #tpu.memory_space<vmem>>, vector<8x32xf32>
    %cst_9 = arith.constant dense<0.000000e+00> : vector<8x32xf32>
    %8 = tpu.matmul %6, %7, %cst_9 {dimension_numbers = #tpu.dot_dimension_numbers<[1], [0], [0], [1], [0, 0, 1, 1], [], []>} : vector<8x8xf32>, vector<8x32xf32>, vector<8x32xf32> -> vector<8x32xf32>
    %c0_10 = arith.constant 0 : index
    %c0_11 = arith.constant 0 : index
    %9 = vector.load %arg5[%c0_10, %c0_11] : memref<1x32xf32, #tpu.memory_space<vmem>>, vector<1x32xf32>
    %10 = vector.broadcast %9 : vector<1x32xf32> to vector<8x32xf32>
    %11 = arith.addf %8, %10 : vector<8x32xf32>
    %12 = vector.extract_strided_slice %5 {offsets = [0, 0], sizes = [8, 32], strides = [1, 1]} : vector<16x32xf32> to vector<8x32xf32>
    %c0_12 = arith.constant 0 : index
    %c0_13 = arith.constant 0 : index
    %c0_14 = arith.constant 0 : index
    %13 = vector.load %arg38[%c0_12, %c0_13, %c0_14] : memref<2x8x32xf32, #tpu.memory_space<vmem>>, vector<1x8x32xf32>
    %14 = vector.shape_cast %13 : vector<1x8x32xf32> to vector<8x32xf32>
    %15 = vector.shape_cast %12 : vector<8x32xf32> to vector<1x8x32xf32>
    tpu.vector_store %arg38[%c0_12, %c0_13, %c0_14], %15 {strides = array<i32>} : memref<2x8x32xf32, #tpu.memory_space<vmem>>, vector<1x8x32xf32>,
    %16 = vector.extract_strided_slice %11 {offsets = [0, 0], sizes = [4, 32], strides = [1, 1]} : vector<8x32xf32> to vector<4x32xf32>
    %c0_15 = arith.constant 0 : index
    %c0_16 = arith.constant 0 : index
    %c0_17 = arith.constant 0 : index
    %17 = vector.load %arg39[%c0_15, %c0_16, %c0_17] : memref<2x4x32xf32, #tpu.memory_space<vmem>>, vector<1x4x32xf32>
    %18 = vector.shape_cast %17 : vector<1x4x32xf32> to vector<4x32xf32>
    %19 = vector.shape_cast %16 : vector<4x32xf32> to vector<1x4x32xf32>
    tpu.vector_store %arg39[%c0_15, %c0_16, %c0_17], %19 {strides = array<i32>} : memref<2x4x32xf32, #tpu.memory_space<vmem>>, vector<1x4x32xf32>,
    %20 = vector.extract_strided_slice %5 {offsets = [8, 0], sizes = [8, 32], strides = [1, 1]} : vector<16x32xf32> to vector<8x32xf32>
    %c1 = arith.constant 1 : index
    %c0_18 = arith.constant 0 : index
    %c0_19 = arith.constant 0 : index
    %21 = vector.load %arg38[%c1, %c0_18, %c0_19] : memref<2x8x32xf32, #tpu.memory_space<vmem>>, vector<1x8x32xf32>
    %22 = vector.shape_cast %21 : vector<1x8x32xf32> to vector<8x32xf32>
    %23 = vector.shape_cast %20 : vector<8x32xf32> to vector<1x8x32xf32>
    tpu.vector_store %arg38[%c1, %c0_18, %c0_19], %23 {strides = array<i32>} : memref<2x8x32xf32, #tpu.memory_space<vmem>>, vector<1x8x32xf32>,
    %24 = vector.extract_strided_slice %11 {offsets = [4, 0], sizes = [4, 32], strides = [1, 1]} : vector<8x32xf32> to vector<4x32xf32>
    %c1_20 = arith.constant 1 : index
    %c0_21 = arith.constant 0 : index
    %c0_22 = arith.constant 0 : index
    %25 = vector.load %arg39[%c1_20, %c0_21, %c0_22] : memref<2x4x32xf32, #tpu.memory_space<vmem>>, vector<1x4x32xf32>
    %26 = vector.shape_cast %25 : vector<1x4x32xf32> to vector<4x32xf32>
    %27 = vector.shape_cast %24 : vector<4x32xf32> to vector<1x4x32xf32>
    tpu.vector_store %arg39[%c1_20, %c0_21, %c0_22], %27 {strides = array<i32>} : memref<2x4x32xf32, #tpu.memory_space<vmem>>, vector<1x4x32xf32>,
    %c0_23 = arith.constant 0 : index
    %c0_24 = arith.constant 0 : index
    %c0_25 = arith.constant 0 : index
    %28 = vector.load %arg6[%c0_23, %c0_24, %c0_25] : memref<2x32x96xf32, #tpu.memory_space<vmem>>, vector<1x32x96xf32>
    %29 = vector.shape_cast %28 : vector<1x32x96xf32> to vector<32x96xf32>
    %cst_26 = arith.constant dense<0.000000e+00> : vector<16x96xf32>
    %30 = tpu.matmul %5, %29, %cst_26 {dimension_numbers = #tpu.dot_dimension_numbers<[1], [0], [0], [1], [0, 0, 1, 1], [], []>} : vector<16x32xf32>, vector<32x96xf32>, vector<16x96xf32> -> vector<16x96xf32>
    %c0_27 = arith.constant 0 : index
    %c0_28 = arith.constant 0 : index
    %c0_29 = arith.constant 0 : index
    %31 = vector.load %arg7[%c0_27, %c0_28, %c0_29] : memref<2x1x96xf32, #tpu.memory_space<vmem>>, vector<1x1x96xf32>
    %32 = vector.shape_cast %31 : vector<1x1x96xf32> to vector<1x96xf32>
    %33 = vector.broadcast %32 : vector<1x96xf32> to vector<16x96xf32>
    %34 = arith.addf %30, %33 : vector<16x96xf32>
    %35 = vector.extract_strided_slice %34 {offsets = [0, 0], sizes = [8, 96], strides = [1, 1]} : vector<16x96xf32> to vector<8x96xf32>
    %36 = vector.extract_strided_slice %34 {offsets = [8, 0], sizes = [8, 96], strides = [1, 1]} : vector<16x96xf32> to vector<8x96xf32>
    %37 = vector.shape_cast %35 : vector<8x96xf32> to vector<1x8x96xf32>
    %38 = vector.shape_cast %36 : vector<8x96xf32> to vector<1x8x96xf32>
    %39 = tpu.concatenate %37, %38 in 0 : vector<1x8x96xf32>, vector<1x8x96xf32> -> vector<2x8x96xf32>
    %40 = vector.extract_strided_slice %39 {offsets = [0, 0, 0], sizes = [2, 8, 8], strides = [1, 1, 1]} : vector<2x8x96xf32> to vector<2x8x8xf32>
    %41 = vector.extract_strided_slice %39 {offsets = [0, 0, 32], sizes = [2, 8, 8], strides = [1, 1, 1]} : vector<2x8x96xf32> to vector<2x8x8xf32>
    %42 = vector.extract_strided_slice %39 {offsets = [0, 0, 64], sizes = [2, 8, 8], strides = [1, 1, 1]} : vector<2x8x96xf32> to vector<2x8x8xf32>
    "tpu.trace_start"() <{level = 10 : i32, message = "bqd,bkd->bqk"}> : () -> ()
    %cst_30 = arith.constant dense<0.000000e+00> : vector<2x8x8xf32>
    %43 = tpu.matmul %40, %41, %cst_30 {dimension_numbers = #tpu.dot_dimension_numbers<[2], [2], [1], [1], [0, 0, 0, 1, 1, 1], [0], [0]>} : vector<2x8x8xf32>, vector<2x8x8xf32>, vector<2x8x8xf32> -> vector<2x8x8xf32>
    "tpu.trace_stop"() : () -> ()
    %cst_31 = arith.constant 0.353553385 : f32
    %44 = vector.broadcast %cst_31 : f32 to vector<2x8x8xf32>
    %45 = arith.mulf %43, %44 : vector<2x8x8xf32>
    %cst_32 = arith.constant dense<0xFF800000> : vector<2x8xf32>
    %46 = vector.multi_reduction <maximumf>, %45, %cst_32 [2] : vector<2x8x8xf32> to vector<2x8xf32>
    %47 = vector.shape_cast %46 : vector<2x8xf32> to vector<2x8x1xf32>
    %48 = vector.broadcast %47 : vector<2x8x1xf32> to vector<2x8x8xf32>
    %49 = arith.subf %45, %48 : vector<2x8x8xf32>
    %50 = math.exp %49 : vector<2x8x8xf32>
    %cst_33 = arith.constant dense<0.000000e+00> : vector<2x8xf32>
    %51 = vector.multi_reduction <add>, %50, %cst_33 [2] : vector<2x8x8xf32> to vector<2x8xf32>
    %52 = vector.shape_cast %51 : vector<2x8xf32> to vector<2x8x1xf32>
    %53 = tpu.reciprocal %52 {approx = true} : vector<2x8x1xf32> -> vector<2x8x1xf32>
    %54 = vector.broadcast %53 : vector<2x8x1xf32> to vector<2x8x8xf32>
    %55 = arith.mulf %50, %54 : vector<2x8x8xf32>
    "tpu.trace_start"() <{level = 10 : i32, message = "bqk,bkd->bqd"}> : () -> ()
    %cst_34 = arith.constant dense<0.000000e+00> : vector<2x8x8xf32>
    %56 = tpu.matmul %55, %42, %cst_34 {dimension_numbers = #tpu.dot_dimension_numbers<[2], [1], [1], [2], [0, 0, 0, 1, 1, 2], [0], [0]>} : vector<2x8x8xf32>, vector<2x8x8xf32>, vector<2x8x8xf32> -> vector<2x8x8xf32>
    "tpu.trace_stop"() : () -> ()
    %57 = vector.extract_strided_slice %39 {offsets = [0, 0, 8], sizes = [2, 8, 8], strides = [1, 1, 1]} : vector<2x8x96xf32> to vector<2x8x8xf32>
    %58 = vector.extract_strided_slice %39 {offsets = [0, 0, 40], sizes = [2, 8, 8], strides = [1, 1, 1]} : vector<2x8x96xf32> to vector<2x8x8xf32>
    %59 = vector.extract_strided_slice %39 {offsets = [0, 0, 72], sizes = [2, 8, 8], strides = [1, 1, 1]} : vector<2x8x96xf32> to vector<2x8x8xf32>
    "tpu.trace_start"() <{level = 10 : i32, message = "bqd,bkd->bqk"}> : () -> ()
    %cst_35 = arith.constant dense<0.000000e+00> : vector<2x8x8xf32>
    %60 = tpu.matmul %57, %58, %cst_35 {dimension_numbers = #tpu.dot_dimension_numbers<[2], [2], [1], [1], [0, 0, 0, 1, 1, 1], [0], [0]>} : vector<2x8x8xf32>, vector<2x8x8xf32>, vector<2x8x8xf32> -> vector<2x8x8xf32>
    "tpu.trace_stop"() : () -> ()
    %cst_36 = arith.constant 0.353553385 : f32
    %61 = vector.broadcast %cst_36 : f32 to vector<2x8x8xf32>
    %62 = arith.mulf %60, %61 : vector<2x8x8xf32>
    %cst_37 = arith.constant dense<0xFF800000> : vector<2x8xf32>
    %63 = vector.multi_reduction <maximumf>, %62, %cst_37 [2] : vector<2x8x8xf32> to vector<2x8xf32>
    %64 = vector.shape_cast %63 : vector<2x8xf32> to vector<2x8x1xf32>
    %65 = vector.broadcast %64 : vector<2x8x1xf32> to vector<2x8x8xf32>
    %66 = arith.subf %62, %65 : vector<2x8x8xf32>
    %67 = math.exp %66 : vector<2x8x8xf32>
    %cst_38 = arith.constant dense<0.000000e+00> : vector<2x8xf32>
    %68 = vector.multi_reduction <add>, %67, %cst_38 [2] : vector<2x8x8xf32> to vector<2x8xf32>
    %69 = vector.shape_cast %68 : vector<2x8xf32> to vector<2x8x1xf32>
    %70 = tpu.reciprocal %69 {approx = true} : vector<2x8x1xf32> -> vector<2x8x1xf32>
    %71 = vector.broadcast %70 : vector<2x8x1xf32> to vector<2x8x8xf32>
    %72 = arith.mulf %67, %71 : vector<2x8x8xf32>
    "tpu.trace_start"() <{level = 10 : i32, message = "bqk,bkd->bqd"}> : () -> ()
    %cst_39 = arith.constant dense<0.000000e+00> : vector<2x8x8xf32>
    %73 = tpu.matmul %72, %59, %cst_39 {dimension_numbers = #tpu.dot_dimension_numbers<[2], [1], [1], [2], [0, 0, 0, 1, 1, 2], [0], [0]>} : vector<2x8x8xf32>, vector<2x8x8xf32>, vector<2x8x8xf32> -> vector<2x8x8xf32>
    "tpu.trace_stop"() : () -> ()
    %74 = vector.extract_strided_slice %39 {offsets = [0, 0, 16], sizes = [2, 8, 8], strides = [1, 1, 1]} : vector<2x8x96xf32> to vector<2x8x8xf32>
    %75 = vector.extract_strided_slice %39 {offsets = [0, 0, 48], sizes = [2, 8, 8], strides = [1, 1, 1]} : vector<2x8x96xf32> to vector<2x8x8xf32>
    %76 = vector.extract_strided_slice %39 {offsets = [0, 0, 80], sizes = [2, 8, 8], strides = [1, 1, 1]} : vector<2x8x96xf32> to vector<2x8x8xf32>
    "tpu.trace_start"() <{level = 10 : i32, message = "bqd,bkd->bqk"}> : () -> ()
    %cst_40 = arith.constant dense<0.000000e+00> : vector<2x8x8xf32>
    %77 = tpu.matmul %74, %75, %cst_40 {dimension_numbers = #tpu.dot_dimension_numbers<[2], [2], [1], [1], [0, 0, 0, 1, 1, 1], [0], [0]>} : vector<2x8x8xf32>, vector<2x8x8xf32>, vector<2x8x8xf32> -> vector<2x8x8xf32>
    "tpu.trace_stop"() : () -> ()
    %cst_41 = arith.constant 0.353553385 : f32
    %78 = vector.broadcast %cst_41 : f32 to vector<2x8x8xf32>
    %79 = arith.mulf %77, %78 : vector<2x8x8xf32>
    %cst_42 = arith.constant dense<0xFF800000> : vector<2x8xf32>
    %80 = vector.multi_reduction <maximumf>, %79, %cst_42 [2] : vector<2x8x8xf32> to vector<2x8xf32>
    %81 = vector.shape_cast %80 : vector<2x8xf32> to vector<2x8x1xf32>
    %82 = vector.broadcast %81 : vector<2x8x1xf32> to vector<2x8x8xf32>
    %83 = arith.subf %79, %82 : vector<2x8x8xf32>
    %84 = math.exp %83 : vector<2x8x8xf32>
    %cst_43 = arith.constant dense<0.000000e+00> : vector<2x8xf32>
    %85 = vector.multi_reduction <add>, %84, %cst_43 [2] : vector<2x8x8xf32> to vector<2x8xf32>
    %86 = vector.shape_cast %85 : vector<2x8xf32> to vector<2x8x1xf32>
    %87 = tpu.reciprocal %86 {approx = true} : vector<2x8x1xf32> -> vector<2x8x1xf32>
    %88 = vector.broadcast %87 : vector<2x8x1xf32> to vector<2x8x8xf32>
    %89 = arith.mulf %84, %88 : vector<2x8x8xf32>
    "tpu.trace_start"() <{level = 10 : i32, message = "bqk,bkd->bqd"}> : () -> ()
    %cst_44 = arith.constant dense<0.000000e+00> : vector<2x8x8xf32>
    %90 = tpu.matmul %89, %76, %cst_44 {dimension_numbers = #tpu.dot_dimension_numbers<[2], [1], [1], [2], [0, 0, 0, 1, 1, 2], [0], [0]>} : vector<2x8x8xf32>, vector<2x8x8xf32>, vector<2x8x8xf32> -> vector<2x8x8xf32>
    "tpu.trace_stop"() : () -> ()
    %91 = vector.extract_strided_slice %39 {offsets = [0, 0, 24], sizes = [2, 8, 8], strides = [1, 1, 1]} : vector<2x8x96xf32> to vector<2x8x8xf32>
    %92 = vector.extract_strided_slice %39 {offsets = [0, 0, 56], sizes = [2, 8, 8], strides = [1, 1, 1]} : vector<2x8x96xf32> to vector<2x8x8xf32>
    %93 = vector.extract_strided_slice %39 {offsets = [0, 0, 88], sizes = [2, 8, 8], strides = [1, 1, 1]} : vector<2x8x96xf32> to vector<2x8x8xf32>
    "tpu.trace_start"() <{level = 10 : i32, message = "bqd,bkd->bqk"}> : () -> ()
    %cst_45 = arith.constant dense<0.000000e+00> : vector<2x8x8xf32>
    %94 = tpu.matmul %91, %92, %cst_45 {dimension_numbers = #tpu.dot_dimension_numbers<[2], [2], [1], [1], [0, 0, 0, 1, 1, 1], [0], [0]>} : vector<2x8x8xf32>, vector<2x8x8xf32>, vector<2x8x8xf32> -> vector<2x8x8xf32>
    "tpu.trace_stop"() : () -> ()
    %cst_46 = arith.constant 0.353553385 : f32
    %95 = vector.broadcast %cst_46 : f32 to vector<2x8x8xf32>
    %96 = arith.mulf %94, %95 : vector<2x8x8xf32>
    %cst_47 = arith.constant dense<0xFF800000> : vector<2x8xf32>
    %97 = vector.multi_reduction <maximumf>, %96, %cst_47 [2] : vector<2x8x8xf32> to vector<2x8xf32>
    %98 = vector.shape_cast %97 : vector<2x8xf32> to vector<2x8x1xf32>
    %99 = vector.broadcast %98 : vector<2x8x1xf32> to vector<2x8x8xf32>
    %100 = arith.subf %96, %99 : vector<2x8x8xf32>
    %101 = math.exp %100 : vector<2x8x8xf32>
    %cst_48 = arith.constant dense<0.000000e+00> : vector<2x8xf32>
    %102 = vector.multi_reduction <add>, %101, %cst_48 [2] : vector<2x8x8xf32> to vector<2x8xf32>
    %103 = vector.shape_cast %102 : vector<2x8xf32> to vector<2x8x1xf32>
    %104 = tpu.reciprocal %103 {approx = true} : vector<2x8x1xf32> -> vector<2x8x1xf32>
    %105 = vector.broadcast %104 : vector<2x8x1xf32> to vector<2x8x8xf32>
    %106 = arith.mulf %101, %105 : vector<2x8x8xf32>
    "tpu.trace_start"() <{level = 10 : i32, message = "bqk,bkd->bqd"}> : () -> ()
    %cst_49 = arith.constant dense<0.000000e+00> : vector<2x8x8xf32>
    %107 = tpu.matmul %106, %93, %cst_49 {dimension_numbers = #tpu.dot_dimension_numbers<[2], [1], [1], [2], [0, 0, 0, 1, 1, 2], [0], [0]>} : vector<2x8x8xf32>, vector<2x8x8xf32>, vector<2x8x8xf32> -> vector<2x8x8xf32>
    "tpu.trace_stop"() : () -> ()
    %108 = tpu.concatenate %56, %73, %90, %107 in 2 : vector<2x8x8xf32>, vector<2x8x8xf32>, vector<2x8x8xf32>, vector<2x8x8xf32> -> vector<2x8x32xf32>
    %109 = vector.extract_strided_slice %108 {offsets = [0, 0, 0], sizes = [1, 8, 32], strides = [1, 1, 1]} : vector<2x8x32xf32> to vector<1x8x32xf32>
    %110 = vector.shape_cast %109 : vector<1x8x32xf32> to vector<8x32xf32>
    %111 = vector.extract_strided_slice %108 {offsets = [1, 0, 0], sizes = [1, 8, 32], strides = [1, 1, 1]} : vector<2x8x32xf32> to vector<1x8x32xf32>
    %112 = vector.shape_cast %111 : vector<1x8x32xf32> to vector<8x32xf32>
    %113 = tpu.concatenate %110, %112 in 0 : vector<8x32xf32>, vector<8x32xf32> -> vector<16x32xf32>
    %c0_50 = arith.constant 0 : index
    %c0_51 = arith.constant 0 : index
    %c0_52 = arith.constant 0 : index
    %114 = vector.load %arg8[%c0_50, %c0_51, %c0_52] : memref<2x32x32xf32, #tpu.memory_space<vmem>>, vector<1x32x32xf32>
    %115 = vector.shape_cast %114 : vector<1x32x32xf32> to vector<32x32xf32>
    %cst_53 = arith.constant dense<0.000000e+00> : vector<16x32xf32>
    %116 = tpu.matmul %113, %115, %cst_53 {dimension_numbers = #tpu.dot_dimension_numbers<[1], [0], [0], [1], [0, 0, 1, 1], [], []>} : vector<16x32xf32>, vector<32x32xf32>, vector<16x32xf32> -> vector<16x32xf32>
    %c0_54 = arith.constant 0 : index
    %c0_55 = arith.constant 0 : index
    %c0_56 = arith.constant 0 : index
    %117 = vector.load %arg9[%c0_54, %c0_55, %c0_56] : memref<2x1x32xf32, #tpu.memory_space<vmem>>, vector<1x1x32xf32>
    %118 = vector.shape_cast %117 : vector<1x1x32xf32> to vector<1x32xf32>
    %119 = vector.broadcast %118 : vector<1x32xf32> to vector<16x32xf32>
    %120 = arith.addf %116, %119 : vector<16x32xf32>
    %121 = arith.addf %5, %120 : vector<16x32xf32>
    %c0_57 = arith.constant 0 : index
    %c0_58 = arith.constant 0 : index
    %c0_59 = arith.constant 0 : index
    %122 = vector.load %arg10[%c0_57, %c0_58, %c0_59] : memref<2x1x32xf32, #tpu.memory_space<vmem>>, vector<1x1x32xf32>
    %123 = vector.shape_cast %122 : vector<1x1x32xf32> to vector<1x32xf32>
    %c0_60 = arith.constant 0 : index
    %c0_61 = arith.constant 0 : index
    %c0_62 = arith.constant 0 : index
    %124 = vector.load %arg11[%c0_60, %c0_61, %c0_62] : memref<2x1x32xf32, #tpu.memory_space<vmem>>, vector<1x1x32xf32>
    %125 = vector.shape_cast %124 : vector<1x1x32xf32> to vector<1x32xf32>
    %cst_63 = arith.constant dense<0.000000e+00> : vector<16xf32>
    %126 = vector.multi_reduction <add>, %121, %cst_63 [1] : vector<16x32xf32> to vector<16xf32>
    %127 = vector.shape_cast %126 : vector<16xf32> to vector<16x1xf32>
    %cst_64 = arith.constant 3.200000e+01 : f32
    %128 = vector.broadcast %cst_64 : f32 to vector<16x1xf32>
    %129 = arith.divf %127, %128 : vector<16x1xf32>
    %130 = vector.broadcast %129 : vector<16x1xf32> to vector<16x32xf32>
    %131 = arith.subf %121, %130 : vector<16x32xf32>
    %132 = arith.mulf %131, %131 : vector<16x32xf32>
    %cst_65 = arith.constant dense<0.000000e+00> : vector<16xf32>
    %133 = vector.multi_reduction <add>, %132, %cst_65 [1] : vector<16x32xf32> to vector<16xf32>
    %134 = vector.shape_cast %133 : vector<16xf32> to vector<16x1xf32>
    %cst_66 = arith.constant 3.200000e+01 : f32
    %135 = vector.broadcast %cst_66 : f32 to vector<16x1xf32>
    %136 = arith.divf %134, %135 : vector<16x1xf32>
    %cst_67 = arith.constant 9.99999974E-6 : f32
    %137 = vector.broadcast %cst_67 : f32 to vector<16x1xf32>
    %138 = arith.addf %136, %137 : vector<16x1xf32>
    %139 = math.rsqrt %138 : vector<16x1xf32>
    %140 = vector.broadcast %139 : vector<16x1xf32> to vector<16x32xf32>
    %141 = arith.mulf %131, %140 : vector<16x32xf32>
    %142 = vector.broadcast %123 : vector<1x32xf32> to vector<16x32xf32>
    %143 = arith.mulf %141, %142 : vector<16x32xf32>
    %144 = vector.broadcast %125 : vector<1x32xf32> to vector<16x32xf32>
    %145 = arith.addf %143, %144 : vector<16x32xf32>
    %c0_68 = arith.constant 0 : index
    %c0_69 = arith.constant 0 : index
    %c0_70 = arith.constant 0 : index
    %146 = vector.load %arg12[%c0_68, %c0_69, %c0_70] : memref<2x32x32xf32, #tpu.memory_space<vmem>>, vector<1x32x32xf32>
    %147 = vector.shape_cast %146 : vector<1x32x32xf32> to vector<32x32xf32>
    %cst_71 = arith.constant dense<0.000000e+00> : vector<16x32xf32>
    %148 = tpu.matmul %145, %147, %cst_71 {dimension_numbers = #tpu.dot_dimension_numbers<[1], [0], [0], [1], [0, 0, 1, 1], [], []>} : vector<16x32xf32>, vector<32x32xf32>, vector<16x32xf32> -> vector<16x32xf32>
    %c0_72 = arith.constant 0 : index
    %c0_73 = arith.constant 0 : index
    %c0_74 = arith.constant 0 : index
    %149 = vector.load %arg13[%c0_72, %c0_73, %c0_74] : memref<2x1x32xf32, #tpu.memory_space<vmem>>, vector<1x1x32xf32>
    %150 = vector.shape_cast %149 : vector<1x1x32xf32> to vector<1x32xf32>
    %151 = vector.broadcast %150 : vector<1x32xf32> to vector<16x32xf32>
    %152 = arith.addf %148, %151 : vector<16x32xf32>
    %cst_75 = arith.constant 0.000000e+00 : f32
    %153 = vector.broadcast %cst_75 : f32 to vector<16x32xf32>
    %154 = arith.maximumf %152, %153 : vector<16x32xf32>
    %c0_76 = arith.constant 0 : index
    %c0_77 = arith.constant 0 : index
    %c0_78 = arith.constant 0 : index
    %155 = vector.load %arg14[%c0_76, %c0_77, %c0_78] : memref<2x32x32xf32, #tpu.memory_space<vmem>>, vector<1x32x32xf32>
    %156 = vector.shape_cast %155 : vector<1x32x32xf32> to vector<32x32xf32>
    %cst_79 = arith.constant dense<0.000000e+00> : vector<16x32xf32>
    %157 = tpu.matmul %154, %156, %cst_79 {dimension_numbers = #tpu.dot_dimension_numbers<[1], [0], [0], [1], [0, 0, 1, 1], [], []>} : vector<16x32xf32>, vector<32x32xf32>, vector<16x32xf32> -> vector<16x32xf32>
    %c0_80 = arith.constant 0 : index
    %c0_81 = arith.constant 0 : index
    %c0_82 = arith.constant 0 : index
    %158 = vector.load %arg15[%c0_80, %c0_81, %c0_82] : memref<2x1x32xf32, #tpu.memory_space<vmem>>, vector<1x1x32xf32>
    %159 = vector.shape_cast %158 : vector<1x1x32xf32> to vector<1x32xf32>
    %160 = vector.broadcast %159 : vector<1x32xf32> to vector<16x32xf32>
    %161 = arith.addf %157, %160 : vector<16x32xf32>
    %162 = arith.addf %145, %161 : vector<16x32xf32>
    %c0_83 = arith.constant 0 : index
    %c0_84 = arith.constant 0 : index
    %c0_85 = arith.constant 0 : index
    %163 = vector.load %arg16[%c0_83, %c0_84, %c0_85] : memref<2x1x32xf32, #tpu.memory_space<vmem>>, vector<1x1x32xf32>
    %164 = vector.shape_cast %163 : vector<1x1x32xf32> to vector<1x32xf32>
    %c0_86 = arith.constant 0 : index
    %c0_87 = arith.constant 0 : index
    %c0_88 = arith.constant 0 : index
    %165 = vector.load %arg17[%c0_86, %c0_87, %c0_88] : memref<2x1x32xf32, #tpu.memory_space<vmem>>, vector<1x1x32xf32>
    %166 = vector.shape_cast %165 : vector<1x1x32xf32> to vector<1x32xf32>
    %cst_89 = arith.constant dense<0.000000e+00> : vector<16xf32>
    %167 = vector.multi_reduction <add>, %162, %cst_89 [1] : vector<16x32xf32> to vector<16xf32>
    %168 = vector.shape_cast %167 : vector<16xf32> to vector<16x1xf32>
    %cst_90 = arith.constant 3.200000e+01 : f32
    %169 = vector.broadcast %cst_90 : f32 to vector<16x1xf32>
    %170 = arith.divf %168, %169 : vector<16x1xf32>
    %171 = vector.broadcast %170 : vector<16x1xf32> to vector<16x32xf32>
    %172 = arith.subf %162, %171 : vector<16x32xf32>
    %173 = arith.mulf %172, %172 : vector<16x32xf32>
    %cst_91 = arith.constant dense<0.000000e+00> : vector<16xf32>
    %174 = vector.multi_reduction <add>, %173, %cst_91 [1] : vector<16x32xf32> to vector<16xf32>
    %175 = vector.shape_cast %174 : vector<16xf32> to vector<16x1xf32>
    %cst_92 = arith.constant 3.200000e+01 : f32
    %176 = vector.broadcast %cst_92 : f32 to vector<16x1xf32>
    %177 = arith.divf %175, %176 : vector<16x1xf32>
    %cst_93 = arith.constant 9.99999974E-6 : f32
    %178 = vector.broadcast %cst_93 : f32 to vector<16x1xf32>
    %179 = arith.addf %177, %178 : vector<16x1xf32>
    %180 = math.rsqrt %179 : vector<16x1xf32>
    %181 = vector.broadcast %180 : vector<16x1xf32> to vector<16x32xf32>
    %182 = arith.mulf %172, %181 : vector<16x32xf32>
    %183 = vector.broadcast %164 : vector<1x32xf32> to vector<16x32xf32>
    %184 = arith.mulf %182, %183 : vector<16x32xf32>
    %185 = vector.broadcast %166 : vector<1x32xf32> to vector<16x32xf32>
    %186 = arith.addf %184, %185 : vector<16x32xf32>
    %c1_94 = arith.constant 1 : index
    %c0_95 = arith.constant 0 : index
    %c0_96 = arith.constant 0 : index
    %187 = vector.load %arg6[%c1_94, %c0_95, %c0_96] : memref<2x32x96xf32, #tpu.memory_space<vmem>>, vector<1x32x96xf32>
    %188 = vector.shape_cast %187 : vector<1x32x96xf32> to vector<32x96xf32>
    %cst_97 = arith.constant dense<0.000000e+00> : vector<16x96xf32>
    %189 = tpu.matmul %186, %188, %cst_97 {dimension_numbers = #tpu.dot_dimension_numbers<[1], [0], [0], [1], [0, 0, 1, 1], [], []>} : vector<16x32xf32>, vector<32x96xf32>, vector<16x96xf32> -> vector<16x96xf32>
    %c1_98 = arith.constant 1 : index
    %c0_99 = arith.constant 0 : index
    %c0_100 = arith.constant 0 : index
    %190 = vector.load %arg7[%c1_98, %c0_99, %c0_100] : memref<2x1x96xf32, #tpu.memory_space<vmem>>, vector<1x1x96xf32>
    %191 = vector.shape_cast %190 : vector<1x1x96xf32> to vector<1x96xf32>
    %192 = vector.broadcast %191 : vector<1x96xf32> to vector<16x96xf32>
    %193 = arith.addf %189, %192 : vector<16x96xf32>
    %194 = vector.extract_strided_slice %193 {offsets = [0, 0], sizes = [8, 96], strides = [1, 1]} : vector<16x96xf32> to vector<8x96xf32>
    %195 = vector.extract_strided_slice %193 {offsets = [8, 0], sizes = [8, 96], strides = [1, 1]} : vector<16x96xf32> to vector<8x96xf32>
    %196 = vector.shape_cast %194 : vector<8x96xf32> to vector<1x8x96xf32>
    %197 = vector.shape_cast %195 : vector<8x96xf32> to vector<1x8x96xf32>
    %198 = tpu.concatenate %196, %197 in 0 : vector<1x8x96xf32>, vector<1x8x96xf32> -> vector<2x8x96xf32>
    %199 = vector.extract_strided_slice %198 {offsets = [0, 0, 0], sizes = [2, 8, 8], strides = [1, 1, 1]} : vector<2x8x96xf32> to vector<2x8x8xf32>
    %200 = vector.extract_strided_slice %198 {offsets = [0, 0, 32], sizes = [2, 8, 8], strides = [1, 1, 1]} : vector<2x8x96xf32> to vector<2x8x8xf32>
    %201 = vector.extract_strided_slice %198 {offsets = [0, 0, 64], sizes = [2, 8, 8], strides = [1, 1, 1]} : vector<2x8x96xf32> to vector<2x8x8xf32>
    "tpu.trace_start"() <{level = 10 : i32, message = "bqd,bkd->bqk"}> : () -> ()
    %cst_101 = arith.constant dense<0.000000e+00> : vector<2x8x8xf32>
    %202 = tpu.matmul %199, %200, %cst_101 {dimension_numbers = #tpu.dot_dimension_numbers<[2], [2], [1], [1], [0, 0, 0, 1, 1, 1], [0], [0]>} : vector<2x8x8xf32>, vector<2x8x8xf32>, vector<2x8x8xf32> -> vector<2x8x8xf32>
    "tpu.trace_stop"() : () -> ()
    %cst_102 = arith.constant 0.353553385 : f32
    %203 = vector.broadcast %cst_102 : f32 to vector<2x8x8xf32>
    %204 = arith.mulf %202, %203 : vector<2x8x8xf32>
    %cst_103 = arith.constant dense<0xFF800000> : vector<2x8xf32>
    %205 = vector.multi_reduction <maximumf>, %204, %cst_103 [2] : vector<2x8x8xf32> to vector<2x8xf32>
    %206 = vector.shape_cast %205 : vector<2x8xf32> to vector<2x8x1xf32>
    %207 = vector.broadcast %206 : vector<2x8x1xf32> to vector<2x8x8xf32>
    %208 = arith.subf %204, %207 : vector<2x8x8xf32>
    %209 = math.exp %208 : vector<2x8x8xf32>
    %cst_104 = arith.constant dense<0.000000e+00> : vector<2x8xf32>
    %210 = vector.multi_reduction <add>, %209, %cst_104 [2] : vector<2x8x8xf32> to vector<2x8xf32>
    %211 = vector.shape_cast %210 : vector<2x8xf32> to vector<2x8x1xf32>
    %212 = tpu.reciprocal %211 {approx = true} : vector<2x8x1xf32> -> vector<2x8x1xf32>
    %213 = vector.broadcast %212 : vector<2x8x1xf32> to vector<2x8x8xf32>
    %214 = arith.mulf %209, %213 : vector<2x8x8xf32>
    "tpu.trace_start"() <{level = 10 : i32, message = "bqk,bkd->bqd"}> : () -> ()
    %cst_105 = arith.constant dense<0.000000e+00> : vector<2x8x8xf32>
    %215 = tpu.matmul %214, %201, %cst_105 {dimension_numbers = #tpu.dot_dimension_numbers<[2], [1], [1], [2], [0, 0, 0, 1, 1, 2], [0], [0]>} : vector<2x8x8xf32>, vector<2x8x8xf32>, vector<2x8x8xf32> -> vector<2x8x8xf32>
    "tpu.trace_stop"() : () -> ()
    %216 = vector.extract_strided_slice %198 {offsets = [0, 0, 8], sizes = [2, 8, 8], strides = [1, 1, 1]} : vector<2x8x96xf32> to vector<2x8x8xf32>
    %217 = vector.extract_strided_slice %198 {offsets = [0, 0, 40], sizes = [2, 8, 8], strides = [1, 1, 1]} : vector<2x8x96xf32> to vector<2x8x8xf32>
    %218 = vector.extract_strided_slice %198 {offsets = [0, 0, 72], sizes = [2, 8, 8], strides = [1, 1, 1]} : vector<2x8x96xf32> to vector<2x8x8xf32>
    "tpu.trace_start"() <{level = 10 : i32, message = "bqd,bkd->bqk"}> : () -> ()
    %cst_106 = arith.constant dense<0.000000e+00> : vector<2x8x8xf32>
    %219 = tpu.matmul %216, %217, %cst_106 {dimension_numbers = #tpu.dot_dimension_numbers<[2], [2], [1], [1], [0, 0, 0, 1, 1, 1], [0], [0]>} : vector<2x8x8xf32>, vector<2x8x8xf32>, vector<2x8x8xf32> -> vector<2x8x8xf32>
    "tpu.trace_stop"() : () -> ()
    %cst_107 = arith.constant 0.353553385 : f32
    %220 = vector.broadcast %cst_107 : f32 to vector<2x8x8xf32>
    %221 = arith.mulf %219, %220 : vector<2x8x8xf32>
    %cst_108 = arith.constant dense<0xFF800000> : vector<2x8xf32>
    %222 = vector.multi_reduction <maximumf>, %221, %cst_108 [2] : vector<2x8x8xf32> to vector<2x8xf32>
    %223 = vector.shape_cast %222 : vector<2x8xf32> to vector<2x8x1xf32>
    %224 = vector.broadcast %223 : vector<2x8x1xf32> to vector<2x8x8xf32>
    %225 = arith.subf %221, %224 : vector<2x8x8xf32>
    %226 = math.exp %225 : vector<2x8x8xf32>
    %cst_109 = arith.constant dense<0.000000e+00> : vector<2x8xf32>
    %227 = vector.multi_reduction <add>, %226, %cst_109 [2] : vector<2x8x8xf32> to vector<2x8xf32>
    %228 = vector.shape_cast %227 : vector<2x8xf32> to vector<2x8x1xf32>
    %229 = tpu.reciprocal %228 {approx = true} : vector<2x8x1xf32> -> vector<2x8x1xf32>
    %230 = vector.broadcast %229 : vector<2x8x1xf32> to vector<2x8x8xf32>
    %231 = arith.mulf %226, %230 : vector<2x8x8xf32>
    "tpu.trace_start"() <{level = 10 : i32, message = "bqk,bkd->bqd"}> : () -> ()
    %cst_110 = arith.constant dense<0.000000e+00> : vector<2x8x8xf32>
    %232 = tpu.matmul %231, %218, %cst_110 {dimension_numbers = #tpu.dot_dimension_numbers<[2], [1], [1], [2], [0, 0, 0, 1, 1, 2], [0], [0]>} : vector<2x8x8xf32>, vector<2x8x8xf32>, vector<2x8x8xf32> -> vector<2x8x8xf32>
    "tpu.trace_stop"() : () -> ()
    %233 = vector.extract_strided_slice %198 {offsets = [0, 0, 16], sizes = [2, 8, 8], strides = [1, 1, 1]} : vector<2x8x96xf32> to vector<2x8x8xf32>
    %234 = vector.extract_strided_slice %198 {offsets = [0, 0, 48], sizes = [2, 8, 8], strides = [1, 1, 1]} : vector<2x8x96xf32> to vector<2x8x8xf32>
    %235 = vector.extract_strided_slice %198 {offsets = [0, 0, 80], sizes = [2, 8, 8], strides = [1, 1, 1]} : vector<2x8x96xf32> to vector<2x8x8xf32>
    "tpu.trace_start"() <{level = 10 : i32, message = "bqd,bkd->bqk"}> : () -> ()
    %cst_111 = arith.constant dense<0.000000e+00> : vector<2x8x8xf32>
    %236 = tpu.matmul %233, %234, %cst_111 {dimension_numbers = #tpu.dot_dimension_numbers<[2], [2], [1], [1], [0, 0, 0, 1, 1, 1], [0], [0]>} : vector<2x8x8xf32>, vector<2x8x8xf32>, vector<2x8x8xf32> -> vector<2x8x8xf32>
    "tpu.trace_stop"() : () -> ()
    %cst_112 = arith.constant 0.353553385 : f32
    %237 = vector.broadcast %cst_112 : f32 to vector<2x8x8xf32>
    %238 = arith.mulf %236, %237 : vector<2x8x8xf32>
    %cst_113 = arith.constant dense<0xFF800000> : vector<2x8xf32>
    %239 = vector.multi_reduction <maximumf>, %238, %cst_113 [2] : vector<2x8x8xf32> to vector<2x8xf32>
    %240 = vector.shape_cast %239 : vector<2x8xf32> to vector<2x8x1xf32>
    %241 = vector.broadcast %240 : vector<2x8x1xf32> to vector<2x8x8xf32>
    %242 = arith.subf %238, %241 : vector<2x8x8xf32>
    %243 = math.exp %242 : vector<2x8x8xf32>
    %cst_114 = arith.constant dense<0.000000e+00> : vector<2x8xf32>
    %244 = vector.multi_reduction <add>, %243, %cst_114 [2] : vector<2x8x8xf32> to vector<2x8xf32>
    %245 = vector.shape_cast %244 : vector<2x8xf32> to vector<2x8x1xf32>
    %246 = tpu.reciprocal %245 {approx = true} : vector<2x8x1xf32> -> vector<2x8x1xf32>
    %247 = vector.broadcast %246 : vector<2x8x1xf32> to vector<2x8x8xf32>
    %248 = arith.mulf %243, %247 : vector<2x8x8xf32>
    "tpu.trace_start"() <{level = 10 : i32, message = "bqk,bkd->bqd"}> : () -> ()
    %cst_115 = arith.constant dense<0.000000e+00> : vector<2x8x8xf32>
    %249 = tpu.matmul %248, %235, %cst_115 {dimension_numbers = #tpu.dot_dimension_numbers<[2], [1], [1], [2], [0, 0, 0, 1, 1, 2], [0], [0]>} : vector<2x8x8xf32>, vector<2x8x8xf32>, vector<2x8x8xf32> -> vector<2x8x8xf32>
    "tpu.trace_stop"() : () -> ()
    %250 = vector.extract_strided_slice %198 {offsets = [0, 0, 24], sizes = [2, 8, 8], strides = [1, 1, 1]} : vector<2x8x96xf32> to vector<2x8x8xf32>
    %251 = vector.extract_strided_slice %198 {offsets = [0, 0, 56], sizes = [2, 8, 8], strides = [1, 1, 1]} : vector<2x8x96xf32> to vector<2x8x8xf32>
    %252 = vector.extract_strided_slice %198 {offsets = [0, 0, 88], sizes = [2, 8, 8], strides = [1, 1, 1]} : vector<2x8x96xf32> to vector<2x8x8xf32>
    "tpu.trace_start"() <{level = 10 : i32, message = "bqd,bkd->bqk"}> : () -> ()
    %cst_116 = arith.constant dense<0.000000e+00> : vector<2x8x8xf32>
    %253 = tpu.matmul %250, %251, %cst_116 {dimension_numbers = #tpu.dot_dimension_numbers<[2], [2], [1], [1], [0, 0, 0, 1, 1, 1], [0], [0]>} : vector<2x8x8xf32>, vector<2x8x8xf32>, vector<2x8x8xf32> -> vector<2x8x8xf32>
    "tpu.trace_stop"() : () -> ()
    %cst_117 = arith.constant 0.353553385 : f32
    %254 = vector.broadcast %cst_117 : f32 to vector<2x8x8xf32>
    %255 = arith.mulf %253, %254 : vector<2x8x8xf32>
    %cst_118 = arith.constant dense<0xFF800000> : vector<2x8xf32>
    %256 = vector.multi_reduction <maximumf>, %255, %cst_118 [2] : vector<2x8x8xf32> to vector<2x8xf32>
    %257 = vector.shape_cast %256 : vector<2x8xf32> to vector<2x8x1xf32>
    %258 = vector.broadcast %257 : vector<2x8x1xf32> to vector<2x8x8xf32>
    %259 = arith.subf %255, %258 : vector<2x8x8xf32>
    %260 = math.exp %259 : vector<2x8x8xf32>
    %cst_119 = arith.constant dense<0.000000e+00> : vector<2x8xf32>
    %261 = vector.multi_reduction <add>, %260, %cst_119 [2] : vector<2x8x8xf32> to vector<2x8xf32>
    %262 = vector.shape_cast %261 : vector<2x8xf32> to vector<2x8x1xf32>
    %263 = tpu.reciprocal %262 {approx = true} : vector<2x8x1xf32> -> vector<2x8x1xf32>
    %264 = vector.broadcast %263 : vector<2x8x1xf32> to vector<2x8x8xf32>
    %265 = arith.mulf %260, %264 : vector<2x8x8xf32>
    "tpu.trace_start"() <{level = 10 : i32, message = "bqk,bkd->bqd"}> : () -> ()
    %cst_120 = arith.constant dense<0.000000e+00> : vector<2x8x8xf32>
    %266 = tpu.matmul %265, %252, %cst_120 {dimension_numbers = #tpu.dot_dimension_numbers<[2], [1], [1], [2], [0, 0, 0, 1, 1, 2], [0], [0]>} : vector<2x8x8xf32>, vector<2x8x8xf32>, vector<2x8x8xf32> -> vector<2x8x8xf32>
    "tpu.trace_stop"() : () -> ()
    %267 = tpu.concatenate %214, %231, %248, %265 in 0 : vector<2x8x8xf32>, vector<2x8x8xf32>, vector<2x8x8xf32>, vector<2x8x8xf32> -> vector<8x8x8xf32>
    %c0_121 = arith.constant 0 : index
    %c0_122 = arith.constant 0 : index
    %c0_123 = arith.constant 0 : index
    %268 = vector.load %arg36[%c0_121, %c0_122, %c0_123] : memref<8x8x8xf32, #tpu.memory_space<vmem>>, vector<8x8x8xf32>
    tpu.vector_store %arg36[%c0_121, %c0_122, %c0_123], %267 {strides = array<i32>} : memref<8x8x8xf32, #tpu.memory_space<vmem>>, vector<8x8x8xf32>,
    %269 = tpu.concatenate %215, %232, %249, %266 in 2 : vector<2x8x8xf32>, vector<2x8x8xf32>, vector<2x8x8xf32>, vector<2x8x8xf32> -> vector<2x8x32xf32>
    %270 = vector.extract_strided_slice %269 {offsets = [0, 0, 0], sizes = [1, 8, 32], strides = [1, 1, 1]} : vector<2x8x32xf32> to vector<1x8x32xf32>
    %271 = vector.shape_cast %270 : vector<1x8x32xf32> to vector<8x32xf32>
    %272 = vector.extract_strided_slice %269 {offsets = [1, 0, 0], sizes = [1, 8, 32], strides = [1, 1, 1]} : vector<2x8x32xf32> to vector<1x8x32xf32>
    %273 = vector.shape_cast %272 : vector<1x8x32xf32> to vector<8x32xf32>
    %274 = tpu.concatenate %271, %273 in 0 : vector<8x32xf32>, vector<8x32xf32> -> vector<16x32xf32>
    %c1_124 = arith.constant 1 : index
    %c0_125 = arith.constant 0 : index
    %c0_126 = arith.constant 0 : index
    %275 = vector.load %arg8[%c1_124, %c0_125, %c0_126] : memref<2x32x32xf32, #tpu.memory_space<vmem>>, vector<1x32x32xf32>
    %276 = vector.shape_cast %275 : vector<1x32x32xf32> to vector<32x32xf32>
    %cst_127 = arith.constant dense<0.000000e+00> : vector<16x32xf32>
    %277 = tpu.matmul %274, %276, %cst_127 {dimension_numbers = #tpu.dot_dimension_numbers<[1], [0], [0], [1], [0, 0, 1, 1], [], []>} : vector<16x32xf32>, vector<32x32xf32>, vector<16x32xf32> -> vector<16x32xf32>
    %c1_128 = arith.constant 1 : index
    %c0_129 = arith.constant 0 : index
    %c0_130 = arith.constant 0 : index
    %278 = vector.load %arg9[%c1_128, %c0_129, %c0_130] : memref<2x1x32xf32, #tpu.memory_space<vmem>>, vector<1x1x32xf32>
    %279 = vector.shape_cast %278 : vector<1x1x32xf32> to vector<1x32xf32>
    %280 = vector.broadcast %279 : vector<1x32xf32> to vector<16x32xf32>
    %281 = arith.addf %277, %280 : vector<16x32xf32>
    %282 = arith.addf %186, %281 : vector<16x32xf32>
    %c1_131 = arith.constant 1 : index
    %c0_132 = arith.constant 0 : index
    %c0_133 = arith.constant 0 : index
    %283 = vector.load %arg10[%c1_131, %c0_132, %c0_133] : memref<2x1x32xf32, #tpu.memory_space<vmem>>, vector<1x1x32xf32>
    %284 = vector.shape_cast %283 : vector<1x1x32xf32> to vector<1x32xf32>
    %c1_134 = arith.constant 1 : index
    %c0_135 = arith.constant 0 : index
    %c0_136 = arith.constant 0 : index
    %285 = vector.load %arg11[%c1_134, %c0_135, %c0_136] : memref<2x1x32xf32, #tpu.memory_space<vmem>>, vector<1x1x32xf32>
    %286 = vector.shape_cast %285 : vector<1x1x32xf32> to vector<1x32xf32>
    %cst_137 = arith.constant dense<0.000000e+00> : vector<16xf32>
    %287 = vector.multi_reduction <add>, %282, %cst_137 [1] : vector<16x32xf32> to vector<16xf32>
    %288 = vector.shape_cast %287 : vector<16xf32> to vector<16x1xf32>
    %cst_138 = arith.constant 3.200000e+01 : f32
    %289 = vector.broadcast %cst_138 : f32 to vector<16x1xf32>
    %290 = arith.divf %288, %289 : vector<16x1xf32>
    %291 = vector.broadcast %290 : vector<16x1xf32> to vector<16x32xf32>
    %292 = arith.subf %282, %291 : vector<16x32xf32>
    %293 = arith.mulf %292, %292 : vector<16x32xf32>
    %cst_139 = arith.constant dense<0.000000e+00> : vector<16xf32>
    %294 = vector.multi_reduction <add>, %293, %cst_139 [1] : vector<16x32xf32> to vector<16xf32>
    %295 = vector.shape_cast %294 : vector<16xf32> to vector<16x1xf32>
    %cst_140 = arith.constant 3.200000e+01 : f32
    %296 = vector.broadcast %cst_140 : f32 to vector<16x1xf32>
    %297 = arith.divf %295, %296 : vector<16x1xf32>
    %cst_141 = arith.constant 9.99999974E-6 : f32
    %298 = vector.broadcast %cst_141 : f32 to vector<16x1xf32>
    %299 = arith.addf %297, %298 : vector<16x1xf32>
    %300 = math.rsqrt %299 : vector<16x1xf32>
    %301 = vector.broadcast %300 : vector<16x1xf32> to vector<16x32xf32>
    %302 = arith.mulf %292, %301 : vector<16x32xf32>
    %303 = vector.broadcast %284 : vector<1x32xf32> to vector<16x32xf32>
    %304 = arith.mulf %302, %303 : vector<16x32xf32>
    %305 = vector.broadcast %286 : vector<1x32xf32> to vector<16x32xf32>
    %306 = arith.addf %304, %305 : vector<16x32xf32>
    %c1_142 = arith.constant 1 : index
    %c0_143 = arith.constant 0 : index
    %c0_144 = arith.constant 0 : index
    %307 = vector.load %arg12[%c1_142, %c0_143, %c0_144] : memref<2x32x32xf32, #tpu.memory_space<vmem>>, vector<1x32x32xf32>
    %308 = vector.shape_cast %307 : vector<1x32x32xf32> to vector<32x32xf32>
    %cst_145 = arith.constant dense<0.000000e+00> : vector<16x32xf32>
    %309 = tpu.matmul %306, %308, %cst_145 {dimension_numbers = #tpu.dot_dimension_numbers<[1], [0], [0], [1], [0, 0, 1, 1], [], []>} : vector<16x32xf32>, vector<32x32xf32>, vector<16x32xf32> -> vector<16x32xf32>
    %c1_146 = arith.constant 1 : index
    %c0_147 = arith.constant 0 : index
    %c0_148 = arith.constant 0 : index
    %310 = vector.load %arg13[%c1_146, %c0_147, %c0_148] : memref<2x1x32xf32, #tpu.memory_space<vmem>>, vector<1x1x32xf32>
    %311 = vector.shape_cast %310 : vector<1x1x32xf32> to vector<1x32xf32>
    %312 = vector.broadcast %311 : vector<1x32xf32> to vector<16x32xf32>
    %313 = arith.addf %309, %312 : vector<16x32xf32>
    %cst_149 = arith.constant 0.000000e+00 : f32
    %314 = vector.broadcast %cst_149 : f32 to vector<16x32xf32>
    %315 = arith.maximumf %313, %314 : vector<16x32xf32>
    %c1_150 = arith.constant 1 : index
    %c0_151 = arith.constant 0 : index
    %c0_152 = arith.constant 0 : index
    %316 = vector.load %arg14[%c1_150, %c0_151, %c0_152] : memref<2x32x32xf32, #tpu.memory_space<vmem>>, vector<1x32x32xf32>
    %317 = vector.shape_cast %316 : vector<1x32x32xf32> to vector<32x32xf32>
    %cst_153 = arith.constant dense<0.000000e+00> : vector<16x32xf32>
    %318 = tpu.matmul %315, %317, %cst_153 {dimension_numbers = #tpu.dot_dimension_numbers<[1], [0], [0], [1], [0, 0, 1, 1], [], []>} : vector<16x32xf32>, vector<32x32xf32>, vector<16x32xf32> -> vector<16x32xf32>
    %c1_154 = arith.constant 1 : index
    %c0_155 = arith.constant 0 : index
    %c0_156 = arith.constant 0 : index
    %319 = vector.load %arg15[%c1_154, %c0_155, %c0_156] : memref<2x1x32xf32, #tpu.memory_space<vmem>>, vector<1x1x32xf32>
    %320 = vector.shape_cast %319 : vector<1x1x32xf32> to vector<1x32xf32>
    %321 = vector.broadcast %320 : vector<1x32xf32> to vector<16x32xf32>
    %322 = arith.addf %318, %321 : vector<16x32xf32>
    %323 = arith.addf %306, %322 : vector<16x32xf32>
    %c1_157 = arith.constant 1 : index
    %c0_158 = arith.constant 0 : index
    %c0_159 = arith.constant 0 : index
    %324 = vector.load %arg16[%c1_157, %c0_158, %c0_159] : memref<2x1x32xf32, #tpu.memory_space<vmem>>, vector<1x1x32xf32>
    %325 = vector.shape_cast %324 : vector<1x1x32xf32> to vector<1x32xf32>
    %c1_160 = arith.constant 1 : index
    %c0_161 = arith.constant 0 : index
    %c0_162 = arith.constant 0 : index
    %326 = vector.load %arg17[%c1_160, %c0_161, %c0_162] : memref<2x1x32xf32, #tpu.memory_space<vmem>>, vector<1x1x32xf32>
    %327 = vector.shape_cast %326 : vector<1x1x32xf32> to vector<1x32xf32>
    %cst_163 = arith.constant dense<0.000000e+00> : vector<16xf32>
    %328 = vector.multi_reduction <add>, %323, %cst_163 [1] : vector<16x32xf32> to vector<16xf32>
    %329 = vector.shape_cast %328 : vector<16xf32> to vector<16x1xf32>
    %cst_164 = arith.constant 3.200000e+01 : f32
    %330 = vector.broadcast %cst_164 : f32 to vector<16x1xf32>
    %331 = arith.divf %329, %330 : vector<16x1xf32>
    %332 = vector.broadcast %331 : vector<16x1xf32> to vector<16x32xf32>
    %333 = arith.subf %323, %332 : vector<16x32xf32>
    %334 = arith.mulf %333, %333 : vector<16x32xf32>
    %cst_165 = arith.constant dense<0.000000e+00> : vector<16xf32>
    %335 = vector.multi_reduction <add>, %334, %cst_165 [1] : vector<16x32xf32> to vector<16xf32>
    %336 = vector.shape_cast %335 : vector<16xf32> to vector<16x1xf32>
    %cst_166 = arith.constant 3.200000e+01 : f32
    %337 = vector.broadcast %cst_166 : f32 to vector<16x1xf32>
    %338 = arith.divf %336, %337 : vector<16x1xf32>
    %cst_167 = arith.constant 9.99999974E-6 : f32
    %339 = vector.broadcast %cst_167 : f32 to vector<16x1xf32>
    %340 = arith.addf %338, %339 : vector<16x1xf32>
    %341 = math.rsqrt %340 : vector<16x1xf32>
    %342 = vector.broadcast %341 : vector<16x1xf32> to vector<16x32xf32>
    %343 = arith.mulf %333, %342 : vector<16x32xf32>
    %344 = vector.broadcast %325 : vector<1x32xf32> to vector<16x32xf32>
    %345 = arith.mulf %343, %344 : vector<16x32xf32>
    %346 = vector.broadcast %327 : vector<1x32xf32> to vector<16x32xf32>
    %347 = arith.addf %345, %346 : vector<16x32xf32>
    %c0_168 = arith.constant 0 : index
    %c0_169 = arith.constant 0 : index
    %c0_170 = arith.constant 0 : index
    %348 = vector.load %arg18[%c0_168, %c0_169, %c0_170] : memref<2x32x96xf32, #tpu.memory_space<vmem>>, vector<1x32x96xf32>
    %349 = vector.shape_cast %348 : vector<1x32x96xf32> to vector<32x96xf32>
    %cst_171 = arith.constant dense<0.000000e+00> : vector<8x96xf32>
    %350 = tpu.matmul %11, %349, %cst_171 {dimension_numbers = #tpu.dot_dimension_numbers<[1], [0], [0], [1], [0, 0, 1, 1], [], []>} : vector<8x32xf32>, vector<32x96xf32>, vector<8x96xf32> -> vector<8x96xf32>
    %c0_172 = arith.constant 0 : index
    %c0_173 = arith.constant 0 : index
    %c0_174 = arith.constant 0 : index
    %351 = vector.load %arg19[%c0_172, %c0_173, %c0_174] : memref<2x1x96xf32, #tpu.memory_space<vmem>>, vector<1x1x96xf32>
    %352 = vector.shape_cast %351 : vector<1x1x96xf32> to vector<1x96xf32>
    %353 = vector.broadcast %352 : vector<1x96xf32> to vector<8x96xf32>
    %354 = arith.addf %350, %353 : vector<8x96xf32>
    %355 = vector.extract_strided_slice %354 {offsets = [0, 0], sizes = [4, 96], strides = [1, 1]} : vector<8x96xf32> to vector<4x96xf32>
    %356 = vector.extract_strided_slice %354 {offsets = [4, 0], sizes = [4, 96], strides = [1, 1]} : vector<8x96xf32> to vector<4x96xf32>
    %357 = vector.shape_cast %355 : vector<4x96xf32> to vector<1x4x96xf32>
    %358 = vector.shape_cast %356 : vector<4x96xf32> to vector<1x4x96xf32>
    %359 = tpu.concatenate %357, %358 in 0 : vector<1x4x96xf32>, vector<1x4x96xf32> -> vector<2x4x96xf32>
    %360 = vector.extract_strided_slice %359 {offsets = [0, 0, 0], sizes = [2, 4, 8], strides = [1, 1, 1]} : vector<2x4x96xf32> to vector<2x4x8xf32>
    %361 = vector.extract_strided_slice %359 {offsets = [0, 0, 32], sizes = [2, 4, 8], strides = [1, 1, 1]} : vector<2x4x96xf32> to vector<2x4x8xf32>
    %362 = vector.extract_strided_slice %359 {offsets = [0, 0, 64], sizes = [2, 4, 8], strides = [1, 1, 1]} : vector<2x4x96xf32> to vector<2x4x8xf32>
    "tpu.trace_start"() <{level = 10 : i32, message = "bqd,bkd->bqk"}> : () -> ()
    %cst_175 = arith.constant dense<0.000000e+00> : vector<2x4x4xf32>
    %363 = tpu.matmul %360, %361, %cst_175 {dimension_numbers = #tpu.dot_dimension_numbers<[2], [2], [1], [1], [0, 0, 0, 1, 1, 1], [0], [0]>} : vector<2x4x8xf32>, vector<2x4x8xf32>, vector<2x4x4xf32> -> vector<2x4x4xf32>
    "tpu.trace_stop"() : () -> ()
    %cst_176 = arith.constant 0.353553385 : f32
    %364 = vector.broadcast %cst_176 : f32 to vector<2x4x4xf32>
    %365 = arith.mulf %363, %364 : vector<2x4x4xf32>
    %cst_177 = arith.constant dense<0xFF800000> : vector<2x4xf32>
    %366 = vector.multi_reduction <maximumf>, %365, %cst_177 [2] : vector<2x4x4xf32> to vector<2x4xf32>
    %367 = vector.shape_cast %366 : vector<2x4xf32> to vector<2x4x1xf32>
    %368 = vector.broadcast %367 : vector<2x4x1xf32> to vector<2x4x4xf32>
    %369 = arith.subf %365, %368 : vector<2x4x4xf32>
    %370 = math.exp %369 : vector<2x4x4xf32>
    %cst_178 = arith.constant dense<0.000000e+00> : vector<2x4xf32>
    %371 = vector.multi_reduction <add>, %370, %cst_178 [2] : vector<2x4x4xf32> to vector<2x4xf32>
    %372 = vector.shape_cast %371 : vector<2x4xf32> to vector<2x4x1xf32>
    %373 = tpu.reciprocal %372 {approx = true} : vector<2x4x1xf32> -> vector<2x4x1xf32>
    %374 = vector.broadcast %373 : vector<2x4x1xf32> to vector<2x4x4xf32>
    %375 = arith.mulf %370, %374 : vector<2x4x4xf32>
    "tpu.trace_start"() <{level = 10 : i32, message = "bqk,bkd->bqd"}> : () -> ()
    %cst_179 = arith.constant dense<0.000000e+00> : vector<2x4x8xf32>
    %376 = tpu.matmul %375, %362, %cst_179 {dimension_numbers = #tpu.dot_dimension_numbers<[2], [1], [1], [2], [0, 0, 0, 1, 1, 2], [0], [0]>} : vector<2x4x4xf32>, vector<2x4x8xf32>, vector<2x4x8xf32> -> vector<2x4x8xf32>
    "tpu.trace_stop"() : () -> ()
    %377 = vector.extract_strided_slice %359 {offsets = [0, 0, 8], sizes = [2, 4, 8], strides = [1, 1, 1]} : vector<2x4x96xf32> to vector<2x4x8xf32>
    %378 = vector.extract_strided_slice %359 {offsets = [0, 0, 40], sizes = [2, 4, 8], strides = [1, 1, 1]} : vector<2x4x96xf32> to vector<2x4x8xf32>
    %379 = vector.extract_strided_slice %359 {offsets = [0, 0, 72], sizes = [2, 4, 8], strides = [1, 1, 1]} : vector<2x4x96xf32> to vector<2x4x8xf32>
    "tpu.trace_start"() <{level = 10 : i32, message = "bqd,bkd->bqk"}> : () -> ()
    %cst_180 = arith.constant dense<0.000000e+00> : vector<2x4x4xf32>
    %380 = tpu.matmul %377, %378, %cst_180 {dimension_numbers = #tpu.dot_dimension_numbers<[2], [2], [1], [1], [0, 0, 0, 1, 1, 1], [0], [0]>} : vector<2x4x8xf32>, vector<2x4x8xf32>, vector<2x4x4xf32> -> vector<2x4x4xf32>
    "tpu.trace_stop"() : () -> ()
    %cst_181 = arith.constant 0.353553385 : f32
    %381 = vector.broadcast %cst_181 : f32 to vector<2x4x4xf32>
    %382 = arith.mulf %380, %381 : vector<2x4x4xf32>
    %cst_182 = arith.constant dense<0xFF800000> : vector<2x4xf32>
    %383 = vector.multi_reduction <maximumf>, %382, %cst_182 [2] : vector<2x4x4xf32> to vector<2x4xf32>
    %384 = vector.shape_cast %383 : vector<2x4xf32> to vector<2x4x1xf32>
    %385 = vector.broadcast %384 : vector<2x4x1xf32> to vector<2x4x4xf32>
    %386 = arith.subf %382, %385 : vector<2x4x4xf32>
    %387 = math.exp %386 : vector<2x4x4xf32>
    %cst_183 = arith.constant dense<0.000000e+00> : vector<2x4xf32>
    %388 = vector.multi_reduction <add>, %387, %cst_183 [2] : vector<2x4x4xf32> to vector<2x4xf32>
    %389 = vector.shape_cast %388 : vector<2x4xf32> to vector<2x4x1xf32>
    %390 = tpu.reciprocal %389 {approx = true} : vector<2x4x1xf32> -> vector<2x4x1xf32>
    %391 = vector.broadcast %390 : vector<2x4x1xf32> to vector<2x4x4xf32>
    %392 = arith.mulf %387, %391 : vector<2x4x4xf32>
    "tpu.trace_start"() <{level = 10 : i32, message = "bqk,bkd->bqd"}> : () -> ()
    %cst_184 = arith.constant dense<0.000000e+00> : vector<2x4x8xf32>
    %393 = tpu.matmul %392, %379, %cst_184 {dimension_numbers = #tpu.dot_dimension_numbers<[2], [1], [1], [2], [0, 0, 0, 1, 1, 2], [0], [0]>} : vector<2x4x4xf32>, vector<2x4x8xf32>, vector<2x4x8xf32> -> vector<2x4x8xf32>
    "tpu.trace_stop"() : () -> ()
    %394 = vector.extract_strided_slice %359 {offsets = [0, 0, 16], sizes = [2, 4, 8], strides = [1, 1, 1]} : vector<2x4x96xf32> to vector<2x4x8xf32>
    %395 = vector.extract_strided_slice %359 {offsets = [0, 0, 48], sizes = [2, 4, 8], strides = [1, 1, 1]} : vector<2x4x96xf32> to vector<2x4x8xf32>
    %396 = vector.extract_strided_slice %359 {offsets = [0, 0, 80], sizes = [2, 4, 8], strides = [1, 1, 1]} : vector<2x4x96xf32> to vector<2x4x8xf32>
    "tpu.trace_start"() <{level = 10 : i32, message = "bqd,bkd->bqk"}> : () -> ()
    %cst_185 = arith.constant dense<0.000000e+00> : vector<2x4x4xf32>
    %397 = tpu.matmul %394, %395, %cst_185 {dimension_numbers = #tpu.dot_dimension_numbers<[2], [2], [1], [1], [0, 0, 0, 1, 1, 1], [0], [0]>} : vector<2x4x8xf32>, vector<2x4x8xf32>, vector<2x4x4xf32> -> vector<2x4x4xf32>
    "tpu.trace_stop"() : () -> ()
    %cst_186 = arith.constant 0.353553385 : f32
    %398 = vector.broadcast %cst_186 : f32 to vector<2x4x4xf32>
    %399 = arith.mulf %397, %398 : vector<2x4x4xf32>
    %cst_187 = arith.constant dense<0xFF800000> : vector<2x4xf32>
    %400 = vector.multi_reduction <maximumf>, %399, %cst_187 [2] : vector<2x4x4xf32> to vector<2x4xf32>
    %401 = vector.shape_cast %400 : vector<2x4xf32> to vector<2x4x1xf32>
    %402 = vector.broadcast %401 : vector<2x4x1xf32> to vector<2x4x4xf32>
    %403 = arith.subf %399, %402 : vector<2x4x4xf32>
    %404 = math.exp %403 : vector<2x4x4xf32>
    %cst_188 = arith.constant dense<0.000000e+00> : vector<2x4xf32>
    %405 = vector.multi_reduction <add>, %404, %cst_188 [2] : vector<2x4x4xf32> to vector<2x4xf32>
    %406 = vector.shape_cast %405 : vector<2x4xf32> to vector<2x4x1xf32>
    %407 = tpu.reciprocal %406 {approx = true} : vector<2x4x1xf32> -> vector<2x4x1xf32>
    %408 = vector.broadcast %407 : vector<2x4x1xf32> to vector<2x4x4xf32>
    %409 = arith.mulf %404, %408 : vector<2x4x4xf32>
    "tpu.trace_start"() <{level = 10 : i32, message = "bqk,bkd->bqd"}> : () -> ()
    %cst_189 = arith.constant dense<0.000000e+00> : vector<2x4x8xf32>
    %410 = tpu.matmul %409, %396, %cst_189 {dimension_numbers = #tpu.dot_dimension_numbers<[2], [1], [1], [2], [0, 0, 0, 1, 1, 2], [0], [0]>} : vector<2x4x4xf32>, vector<2x4x8xf32>, vector<2x4x8xf32> -> vector<2x4x8xf32>
    "tpu.trace_stop"() : () -> ()
    %411 = vector.extract_strided_slice %359 {offsets = [0, 0, 24], sizes = [2, 4, 8], strides = [1, 1, 1]} : vector<2x4x96xf32> to vector<2x4x8xf32>
    %412 = vector.extract_strided_slice %359 {offsets = [0, 0, 56], sizes = [2, 4, 8], strides = [1, 1, 1]} : vector<2x4x96xf32> to vector<2x4x8xf32>
    %413 = vector.extract_strided_slice %359 {offsets = [0, 0, 88], sizes = [2, 4, 8], strides = [1, 1, 1]} : vector<2x4x96xf32> to vector<2x4x8xf32>
    "tpu.trace_start"() <{level = 10 : i32, message = "bqd,bkd->bqk"}> : () -> ()
    %cst_190 = arith.constant dense<0.000000e+00> : vector<2x4x4xf32>
    %414 = tpu.matmul %411, %412, %cst_190 {dimension_numbers = #tpu.dot_dimension_numbers<[2], [2], [1], [1], [0, 0, 0, 1, 1, 1], [0], [0]>} : vector<2x4x8xf32>, vector<2x4x8xf32>, vector<2x4x4xf32> -> vector<2x4x4xf32>
    "tpu.trace_stop"() : () -> ()
    %cst_191 = arith.constant 0.353553385 : f32
    %415 = vector.broadcast %cst_191 : f32 to vector<2x4x4xf32>
    %416 = arith.mulf %414, %415 : vector<2x4x4xf32>
    %cst_192 = arith.constant dense<0xFF800000> : vector<2x4xf32>
    %417 = vector.multi_reduction <maximumf>, %416, %cst_192 [2] : vector<2x4x4xf32> to vector<2x4xf32>
    %418 = vector.shape_cast %417 : vector<2x4xf32> to vector<2x4x1xf32>
    %419 = vector.broadcast %418 : vector<2x4x1xf32> to vector<2x4x4xf32>
    %420 = arith.subf %416, %419 : vector<2x4x4xf32>
    %421 = math.exp %420 : vector<2x4x4xf32>
    %cst_193 = arith.constant dense<0.000000e+00> : vector<2x4xf32>
    %422 = vector.multi_reduction <add>, %421, %cst_193 [2] : vector<2x4x4xf32> to vector<2x4xf32>
    %423 = vector.shape_cast %422 : vector<2x4xf32> to vector<2x4x1xf32>
    %424 = tpu.reciprocal %423 {approx = true} : vector<2x4x1xf32> -> vector<2x4x1xf32>
    %425 = vector.broadcast %424 : vector<2x4x1xf32> to vector<2x4x4xf32>
    %426 = arith.mulf %421, %425 : vector<2x4x4xf32>
    "tpu.trace_start"() <{level = 10 : i32, message = "bqk,bkd->bqd"}> : () -> ()
    %cst_194 = arith.constant dense<0.000000e+00> : vector<2x4x8xf32>
    %427 = tpu.matmul %426, %413, %cst_194 {dimension_numbers = #tpu.dot_dimension_numbers<[2], [1], [1], [2], [0, 0, 0, 1, 1, 2], [0], [0]>} : vector<2x4x4xf32>, vector<2x4x8xf32>, vector<2x4x8xf32> -> vector<2x4x8xf32>
    "tpu.trace_stop"() : () -> ()
    %428 = tpu.concatenate %376, %393, %410, %427 in 2 : vector<2x4x8xf32>, vector<2x4x8xf32>, vector<2x4x8xf32>, vector<2x4x8xf32> -> vector<2x4x32xf32>
    %429 = vector.extract_strided_slice %428 {offsets = [0, 0, 0], sizes = [1, 4, 32], strides = [1, 1, 1]} : vector<2x4x32xf32> to vector<1x4x32xf32>
    %430 = vector.shape_cast %429 : vector<1x4x32xf32> to vector<4x32xf32>
    %431 = vector.extract_strided_slice %428 {offsets = [1, 0, 0], sizes = [1, 4, 32], strides = [1, 1, 1]} : vector<2x4x32xf32> to vector<1x4x32xf32>
    %432 = vector.shape_cast %431 : vector<1x4x32xf32> to vector<4x32xf32>
    %433 = tpu.concatenate %430, %432 in 0 : vector<4x32xf32>, vector<4x32xf32> -> vector<8x32xf32>
    %c0_195 = arith.constant 0 : index
    %c0_196 = arith.constant 0 : index
    %c0_197 = arith.constant 0 : index
    %434 = vector.load %arg20[%c0_195, %c0_196, %c0_197] : memref<2x32x32xf32, #tpu.memory_space<vmem>>, vector<1x32x32xf32>
    %435 = vector.shape_cast %434 : vector<1x32x32xf32> to vector<32x32xf32>
    %cst_198 = arith.constant dense<0.000000e+00> : vector<8x32xf32>
    %436 = tpu.matmul %433, %435, %cst_198 {dimension_numbers = #tpu.dot_dimension_numbers<[1], [0], [0], [1], [0, 0, 1, 1], [], []>} : vector<8x32xf32>, vector<32x32xf32>, vector<8x32xf32> -> vector<8x32xf32>
    %c0_199 = arith.constant 0 : index
    %c0_200 = arith.constant 0 : index
    %c0_201 = arith.constant 0 : index
    %437 = vector.load %arg21[%c0_199, %c0_200, %c0_201] : memref<2x1x32xf32, #tpu.memory_space<vmem>>, vector<1x1x32xf32>
    %438 = vector.shape_cast %437 : vector<1x1x32xf32> to vector<1x32xf32>
    %439 = vector.broadcast %438 : vector<1x32xf32> to vector<8x32xf32>
    %440 = arith.addf %436, %439 : vector<8x32xf32>
    %441 = arith.addf %11, %440 : vector<8x32xf32>
    %c0_202 = arith.constant 0 : index
    %c0_203 = arith.constant 0 : index
    %c0_204 = arith.constant 0 : index
    %442 = vector.load %arg22[%c0_202, %c0_203, %c0_204] : memref<2x1x32xf32, #tpu.memory_space<vmem>>, vector<1x1x32xf32>
    %443 = vector.shape_cast %442 : vector<1x1x32xf32> to vector<1x32xf32>
    %c0_205 = arith.constant 0 : index
    %c0_206 = arith.constant 0 : index
    %c0_207 = arith.constant 0 : index
    %444 = vector.load %arg23[%c0_205, %c0_206, %c0_207] : memref<2x1x32xf32, #tpu.memory_space<vmem>>, vector<1x1x32xf32>
    %445 = vector.shape_cast %444 : vector<1x1x32xf32> to vector<1x32xf32>
    %cst_208 = arith.constant dense<0.000000e+00> : vector<8xf32>
    %446 = vector.multi_reduction <add>, %441, %cst_208 [1] : vector<8x32xf32> to vector<8xf32>
    %447 = vector.shape_cast %446 : vector<8xf32> to vector<8x1xf32>
    %cst_209 = arith.constant 3.200000e+01 : f32
    %448 = vector.broadcast %cst_209 : f32 to vector<8x1xf32>
    %449 = arith.divf %447, %448 : vector<8x1xf32>
    %450 = vector.broadcast %449 : vector<8x1xf32> to vector<8x32xf32>
    %451 = arith.subf %441, %450 : vector<8x32xf32>
    %452 = arith.mulf %451, %451 : vector<8x32xf32>
    %cst_210 = arith.constant dense<0.000000e+00> : vector<8xf32>
    %453 = vector.multi_reduction <add>, %452, %cst_210 [1] : vector<8x32xf32> to vector<8xf32>
    %454 = vector.shape_cast %453 : vector<8xf32> to vector<8x1xf32>
    %cst_211 = arith.constant 3.200000e+01 : f32
    %455 = vector.broadcast %cst_211 : f32 to vector<8x1xf32>
    %456 = arith.divf %454, %455 : vector<8x1xf32>
    %cst_212 = arith.constant 9.99999974E-6 : f32
    %457 = vector.broadcast %cst_212 : f32 to vector<8x1xf32>
    %458 = arith.addf %456, %457 : vector<8x1xf32>
    %459 = math.rsqrt %458 : vector<8x1xf32>
    %460 = vector.broadcast %459 : vector<8x1xf32> to vector<8x32xf32>
    %461 = arith.mulf %451, %460 : vector<8x32xf32>
    %462 = vector.broadcast %443 : vector<1x32xf32> to vector<8x32xf32>
    %463 = arith.mulf %461, %462 : vector<8x32xf32>
    %464 = vector.broadcast %445 : vector<1x32xf32> to vector<8x32xf32>
    %465 = arith.addf %463, %464 : vector<8x32xf32>
    %c0_213 = arith.constant 0 : index
    %c0_214 = arith.constant 0 : index
    %c0_215 = arith.constant 0 : index
    %466 = vector.load %arg24[%c0_213, %c0_214, %c0_215] : memref<2x32x32xf32, #tpu.memory_space<vmem>>, vector<1x32x32xf32>
    %467 = vector.shape_cast %466 : vector<1x32x32xf32> to vector<32x32xf32>
    %cst_216 = arith.constant dense<0.000000e+00> : vector<8x32xf32>
    %468 = tpu.matmul %465, %467, %cst_216 {dimension_numbers = #tpu.dot_dimension_numbers<[1], [0], [0], [1], [0, 0, 1, 1], [], []>} : vector<8x32xf32>, vector<32x32xf32>, vector<8x32xf32> -> vector<8x32xf32>
    %c0_217 = arith.constant 0 : index
    %c0_218 = arith.constant 0 : index
    %c0_219 = arith.constant 0 : index
    %469 = vector.load %arg25[%c0_217, %c0_218, %c0_219] : memref<2x1x32xf32, #tpu.memory_space<vmem>>, vector<1x1x32xf32>
    %470 = vector.shape_cast %469 : vector<1x1x32xf32> to vector<1x32xf32>
    %471 = vector.broadcast %470 : vector<1x32xf32> to vector<8x32xf32>
    %472 = arith.addf %468, %471 : vector<8x32xf32>
    %cst_220 = arith.constant 0.000000e+00 : f32
    %473 = vector.broadcast %cst_220 : f32 to vector<8x32xf32>
    %474 = arith.maximumf %472, %473 : vector<8x32xf32>
    %c0_221 = arith.constant 0 : index
    %c0_222 = arith.constant 0 : index
    %c0_223 = arith.constant 0 : index
    %475 = vector.load %arg26[%c0_221, %c0_222, %c0_223] : memref<2x32x32xf32, #tpu.memory_space<vmem>>, vector<1x32x32xf32>
    %476 = vector.shape_cast %475 : vector<1x32x32xf32> to vector<32x32xf32>
    %cst_224 = arith.constant dense<0.000000e+00> : vector<8x32xf32>
    %477 = tpu.matmul %474, %476, %cst_224 {dimension_numbers = #tpu.dot_dimension_numbers<[1], [0], [0], [1], [0, 0, 1, 1], [], []>} : vector<8x32xf32>, vector<32x32xf32>, vector<8x32xf32> -> vector<8x32xf32>
    %c0_225 = arith.constant 0 : index
    %c0_226 = arith.constant 0 : index
    %c0_227 = arith.constant 0 : index
    %478 = vector.load %arg27[%c0_225, %c0_226, %c0_227] : memref<2x1x32xf32, #tpu.memory_space<vmem>>, vector<1x1x32xf32>
    %479 = vector.shape_cast %478 : vector<1x1x32xf32> to vector<1x32xf32>
    %480 = vector.broadcast %479 : vector<1x32xf32> to vector<8x32xf32>
    %481 = arith.addf %477, %480 : vector<8x32xf32>
    %482 = arith.addf %465, %481 : vector<8x32xf32>
    %c0_228 = arith.constant 0 : index
    %c0_229 = arith.constant 0 : index
    %c0_230 = arith.constant 0 : index
    %483 = vector.load %arg28[%c0_228, %c0_229, %c0_230] : memref<2x1x32xf32, #tpu.memory_space<vmem>>, vector<1x1x32xf32>
    %484 = vector.shape_cast %483 : vector<1x1x32xf32> to vector<1x32xf32>
    %c0_231 = arith.constant 0 : index
    %c0_232 = arith.constant 0 : index
    %c0_233 = arith.constant 0 : index
    %485 = vector.load %arg29[%c0_231, %c0_232, %c0_233] : memref<2x1x32xf32, #tpu.memory_space<vmem>>, vector<1x1x32xf32>
    %486 = vector.shape_cast %485 : vector<1x1x32xf32> to vector<1x32xf32>
    %cst_234 = arith.constant dense<0.000000e+00> : vector<8xf32>
    %487 = vector.multi_reduction <add>, %482, %cst_234 [1] : vector<8x32xf32> to vector<8xf32>
    %488 = vector.shape_cast %487 : vector<8xf32> to vector<8x1xf32>
    %cst_235 = arith.constant 3.200000e+01 : f32
    %489 = vector.broadcast %cst_235 : f32 to vector<8x1xf32>
    %490 = arith.divf %488, %489 : vector<8x1xf32>
    %491 = vector.broadcast %490 : vector<8x1xf32> to vector<8x32xf32>
    %492 = arith.subf %482, %491 : vector<8x32xf32>
    %493 = arith.mulf %492, %492 : vector<8x32xf32>
    %cst_236 = arith.constant dense<0.000000e+00> : vector<8xf32>
    %494 = vector.multi_reduction <add>, %493, %cst_236 [1] : vector<8x32xf32> to vector<8xf32>
    %495 = vector.shape_cast %494 : vector<8xf32> to vector<8x1xf32>
    %cst_237 = arith.constant 3.200000e+01 : f32
    %496 = vector.broadcast %cst_237 : f32 to vector<8x1xf32>
    %497 = arith.divf %495, %496 : vector<8x1xf32>
    %cst_238 = arith.constant 9.99999974E-6 : f32
    %498 = vector.broadcast %cst_238 : f32 to vector<8x1xf32>
    %499 = arith.addf %497, %498 : vector<8x1xf32>
    %500 = math.rsqrt %499 : vector<8x1xf32>
    %501 = vector.broadcast %500 : vector<8x1xf32> to vector<8x32xf32>
    %502 = arith.mulf %492, %501 : vector<8x32xf32>
    %503 = vector.broadcast %484 : vector<1x32xf32> to vector<8x32xf32>
    %504 = arith.mulf %502, %503 : vector<8x32xf32>
    %505 = vector.broadcast %486 : vector<1x32xf32> to vector<8x32xf32>
    %506 = arith.addf %504, %505 : vector<8x32xf32>
    %c1_239 = arith.constant 1 : index
    %c0_240 = arith.constant 0 : index
    %c0_241 = arith.constant 0 : index
    %507 = vector.load %arg18[%c1_239, %c0_240, %c0_241] : memref<2x32x96xf32, #tpu.memory_space<vmem>>, vector<1x32x96xf32>
    %508 = vector.shape_cast %507 : vector<1x32x96xf32> to vector<32x96xf32>
    %cst_242 = arith.constant dense<0.000000e+00> : vector<8x96xf32>
    %509 = tpu.matmul %506, %508, %cst_242 {dimension_numbers = #tpu.dot_dimension_numbers<[1], [0], [0], [1], [0, 0, 1, 1], [], []>} : vector<8x32xf32>, vector<32x96xf32>, vector<8x96xf32> -> vector<8x96xf32>
    %c1_243 = arith.constant 1 : index
    %c0_244 = arith.constant 0 : index
    %c0_245 = arith.constant 0 : index
    %510 = vector.load %arg19[%c1_243, %c0_244, %c0_245] : memref<2x1x96xf32, #tpu.memory_space<vmem>>, vector<1x1x96xf32>
    %511 = vector.shape_cast %510 : vector<1x1x96xf32> to vector<1x96xf32>
    %512 = vector.broadcast %511 : vector<1x96xf32> to vector<8x96xf32>
    %513 = arith.addf %509, %512 : vector<8x96xf32>
    %514 = vector.extract_strided_slice %513 {offsets = [0, 0], sizes = [4, 96], strides = [1, 1]} : vector<8x96xf32> to vector<4x96xf32>
    %515 = vector.extract_strided_slice %513 {offsets = [4, 0], sizes = [4, 96], strides = [1, 1]} : vector<8x96xf32> to vector<4x96xf32>
    %516 = vector.shape_cast %514 : vector<4x96xf32> to vector<1x4x96xf32>
    %517 = vector.shape_cast %515 : vector<4x96xf32> to vector<1x4x96xf32>
    %518 = tpu.concatenate %516, %517 in 0 : vector<1x4x96xf32>, vector<1x4x96xf32> -> vector<2x4x96xf32>
    %519 = vector.extract_strided_slice %518 {offsets = [0, 0, 0], sizes = [2, 4, 8], strides = [1, 1, 1]} : vector<2x4x96xf32> to vector<2x4x8xf32>
    %520 = vector.extract_strided_slice %518 {offsets = [0, 0, 32], sizes = [2, 4, 8], strides = [1, 1, 1]} : vector<2x4x96xf32> to vector<2x4x8xf32>
    %521 = vector.extract_strided_slice %518 {offsets = [0, 0, 64], sizes = [2, 4, 8], strides = [1, 1, 1]} : vector<2x4x96xf32> to vector<2x4x8xf32>
    "tpu.trace_start"() <{level = 10 : i32, message = "bqd,bkd->bqk"}> : () -> ()
    %cst_246 = arith.constant dense<0.000000e+00> : vector<2x4x4xf32>
    %522 = tpu.matmul %519, %520, %cst_246 {dimension_numbers = #tpu.dot_dimension_numbers<[2], [2], [1], [1], [0, 0, 0, 1, 1, 1], [0], [0]>} : vector<2x4x8xf32>, vector<2x4x8xf32>, vector<2x4x4xf32> -> vector<2x4x4xf32>
    "tpu.trace_stop"() : () -> ()
    %cst_247 = arith.constant 0.353553385 : f32
    %523 = vector.broadcast %cst_247 : f32 to vector<2x4x4xf32>
    %524 = arith.mulf %522, %523 : vector<2x4x4xf32>
    %cst_248 = arith.constant dense<0xFF800000> : vector<2x4xf32>
    %525 = vector.multi_reduction <maximumf>, %524, %cst_248 [2] : vector<2x4x4xf32> to vector<2x4xf32>
    %526 = vector.shape_cast %525 : vector<2x4xf32> to vector<2x4x1xf32>
    %527 = vector.broadcast %526 : vector<2x4x1xf32> to vector<2x4x4xf32>
    %528 = arith.subf %524, %527 : vector<2x4x4xf32>
    %529 = math.exp %528 : vector<2x4x4xf32>
    %cst_249 = arith.constant dense<0.000000e+00> : vector<2x4xf32>
    %530 = vector.multi_reduction <add>, %529, %cst_249 [2] : vector<2x4x4xf32> to vector<2x4xf32>
    %531 = vector.shape_cast %530 : vector<2x4xf32> to vector<2x4x1xf32>
    %532 = tpu.reciprocal %531 {approx = true} : vector<2x4x1xf32> -> vector<2x4x1xf32>
    %533 = vector.broadcast %532 : vector<2x4x1xf32> to vector<2x4x4xf32>
    %534 = arith.mulf %529, %533 : vector<2x4x4xf32>
    "tpu.trace_start"() <{level = 10 : i32, message = "bqk,bkd->bqd"}> : () -> ()
    %cst_250 = arith.constant dense<0.000000e+00> : vector<2x4x8xf32>
    %535 = tpu.matmul %534, %521, %cst_250 {dimension_numbers = #tpu.dot_dimension_numbers<[2], [1], [1], [2], [0, 0, 0, 1, 1, 2], [0], [0]>} : vector<2x4x4xf32>, vector<2x4x8xf32>, vector<2x4x8xf32> -> vector<2x4x8xf32>
    "tpu.trace_stop"() : () -> ()
    %536 = vector.extract_strided_slice %518 {offsets = [0, 0, 8], sizes = [2, 4, 8], strides = [1, 1, 1]} : vector<2x4x96xf32> to vector<2x4x8xf32>
    %537 = vector.extract_strided_slice %518 {offsets = [0, 0, 40], sizes = [2, 4, 8], strides = [1, 1, 1]} : vector<2x4x96xf32> to vector<2x4x8xf32>
    %538 = vector.extract_strided_slice %518 {offsets = [0, 0, 72], sizes = [2, 4, 8], strides = [1, 1, 1]} : vector<2x4x96xf32> to vector<2x4x8xf32>
    "tpu.trace_start"() <{level = 10 : i32, message = "bqd,bkd->bqk"}> : () -> ()
    %cst_251 = arith.constant dense<0.000000e+00> : vector<2x4x4xf32>
    %539 = tpu.matmul %536, %537, %cst_251 {dimension_numbers = #tpu.dot_dimension_numbers<[2], [2], [1], [1], [0, 0, 0, 1, 1, 1], [0], [0]>} : vector<2x4x8xf32>, vector<2x4x8xf32>, vector<2x4x4xf32> -> vector<2x4x4xf32>
    "tpu.trace_stop"() : () -> ()
    %cst_252 = arith.constant 0.353553385 : f32
    %540 = vector.broadcast %cst_252 : f32 to vector<2x4x4xf32>
    %541 = arith.mulf %539, %540 : vector<2x4x4xf32>
    %cst_253 = arith.constant dense<0xFF800000> : vector<2x4xf32>
    %542 = vector.multi_reduction <maximumf>, %541, %cst_253 [2] : vector<2x4x4xf32> to vector<2x4xf32>
    %543 = vector.shape_cast %542 : vector<2x4xf32> to vector<2x4x1xf32>
    %544 = vector.broadcast %543 : vector<2x4x1xf32> to vector<2x4x4xf32>
    %545 = arith.subf %541, %544 : vector<2x4x4xf32>
    %546 = math.exp %545 : vector<2x4x4xf32>
    %cst_254 = arith.constant dense<0.000000e+00> : vector<2x4xf32>
    %547 = vector.multi_reduction <add>, %546, %cst_254 [2] : vector<2x4x4xf32> to vector<2x4xf32>
    %548 = vector.shape_cast %547 : vector<2x4xf32> to vector<2x4x1xf32>
    %549 = tpu.reciprocal %548 {approx = true} : vector<2x4x1xf32> -> vector<2x4x1xf32>
    %550 = vector.broadcast %549 : vector<2x4x1xf32> to vector<2x4x4xf32>
    %551 = arith.mulf %546, %550 : vector<2x4x4xf32>
    "tpu.trace_start"() <{level = 10 : i32, message = "bqk,bkd->bqd"}> : () -> ()
    %cst_255 = arith.constant dense<0.000000e+00> : vector<2x4x8xf32>
    %552 = tpu.matmul %551, %538, %cst_255 {dimension_numbers = #tpu.dot_dimension_numbers<[2], [1], [1], [2], [0, 0, 0, 1, 1, 2], [0], [0]>} : vector<2x4x4xf32>, vector<2x4x8xf32>, vector<2x4x8xf32> -> vector<2x4x8xf32>
    "tpu.trace_stop"() : () -> ()
    %553 = vector.extract_strided_slice %518 {offsets = [0, 0, 16], sizes = [2, 4, 8], strides = [1, 1, 1]} : vector<2x4x96xf32> to vector<2x4x8xf32>
    %554 = vector.extract_strided_slice %518 {offsets = [0, 0, 48], sizes = [2, 4, 8], strides = [1, 1, 1]} : vector<2x4x96xf32> to vector<2x4x8xf32>
    %555 = vector.extract_strided_slice %518 {offsets = [0, 0, 80], sizes = [2, 4, 8], strides = [1, 1, 1]} : vector<2x4x96xf32> to vector<2x4x8xf32>
    "tpu.trace_start"() <{level = 10 : i32, message = "bqd,bkd->bqk"}> : () -> ()
    %cst_256 = arith.constant dense<0.000000e+00> : vector<2x4x4xf32>
    %556 = tpu.matmul %553, %554, %cst_256 {dimension_numbers = #tpu.dot_dimension_numbers<[2], [2], [1], [1], [0, 0, 0, 1, 1, 1], [0], [0]>} : vector<2x4x8xf32>, vector<2x4x8xf32>, vector<2x4x4xf32> -> vector<2x4x4xf32>
    "tpu.trace_stop"() : () -> ()
    %cst_257 = arith.constant 0.353553385 : f32
    %557 = vector.broadcast %cst_257 : f32 to vector<2x4x4xf32>
    %558 = arith.mulf %556, %557 : vector<2x4x4xf32>
    %cst_258 = arith.constant dense<0xFF800000> : vector<2x4xf32>
    %559 = vector.multi_reduction <maximumf>, %558, %cst_258 [2] : vector<2x4x4xf32> to vector<2x4xf32>
    %560 = vector.shape_cast %559 : vector<2x4xf32> to vector<2x4x1xf32>
    %561 = vector.broadcast %560 : vector<2x4x1xf32> to vector<2x4x4xf32>
    %562 = arith.subf %558, %561 : vector<2x4x4xf32>
    %563 = math.exp %562 : vector<2x4x4xf32>
    %cst_259 = arith.constant dense<0.000000e+00> : vector<2x4xf32>
    %564 = vector.multi_reduction <add>, %563, %cst_259 [2] : vector<2x4x4xf32> to vector<2x4xf32>
    %565 = vector.shape_cast %564 : vector<2x4xf32> to vector<2x4x1xf32>
    %566 = tpu.reciprocal %565 {approx = true} : vector<2x4x1xf32> -> vector<2x4x1xf32>
    %567 = vector.broadcast %566 : vector<2x4x1xf32> to vector<2x4x4xf32>
    %568 = arith.mulf %563, %567 : vector<2x4x4xf32>
    "tpu.trace_start"() <{level = 10 : i32, message = "bqk,bkd->bqd"}> : () -> ()
    %cst_260 = arith.constant dense<0.000000e+00> : vector<2x4x8xf32>
    %569 = tpu.matmul %568, %555, %cst_260 {dimension_numbers = #tpu.dot_dimension_numbers<[2], [1], [1], [2], [0, 0, 0, 1, 1, 2], [0], [0]>} : vector<2x4x4xf32>, vector<2x4x8xf32>, vector<2x4x8xf32> -> vector<2x4x8xf32>
    "tpu.trace_stop"() : () -> ()
    %570 = vector.extract_strided_slice %518 {offsets = [0, 0, 24], sizes = [2, 4, 8], strides = [1, 1, 1]} : vector<2x4x96xf32> to vector<2x4x8xf32>
    %571 = vector.extract_strided_slice %518 {offsets = [0, 0, 56], sizes = [2, 4, 8], strides = [1, 1, 1]} : vector<2x4x96xf32> to vector<2x4x8xf32>
    %572 = vector.extract_strided_slice %518 {offsets = [0, 0, 88], sizes = [2, 4, 8], strides = [1, 1, 1]} : vector<2x4x96xf32> to vector<2x4x8xf32>
    "tpu.trace_start"() <{level = 10 : i32, message = "bqd,bkd->bqk"}> : () -> ()
    %cst_261 = arith.constant dense<0.000000e+00> : vector<2x4x4xf32>
    %573 = tpu.matmul %570, %571, %cst_261 {dimension_numbers = #tpu.dot_dimension_numbers<[2], [2], [1], [1], [0, 0, 0, 1, 1, 1], [0], [0]>} : vector<2x4x8xf32>, vector<2x4x8xf32>, vector<2x4x4xf32> -> vector<2x4x4xf32>
    "tpu.trace_stop"() : () -> ()
    %cst_262 = arith.constant 0.353553385 : f32
    %574 = vector.broadcast %cst_262 : f32 to vector<2x4x4xf32>
    %575 = arith.mulf %573, %574 : vector<2x4x4xf32>
    %cst_263 = arith.constant dense<0xFF800000> : vector<2x4xf32>
    %576 = vector.multi_reduction <maximumf>, %575, %cst_263 [2] : vector<2x4x4xf32> to vector<2x4xf32>
    %577 = vector.shape_cast %576 : vector<2x4xf32> to vector<2x4x1xf32>
    %578 = vector.broadcast %577 : vector<2x4x1xf32> to vector<2x4x4xf32>
    %579 = arith.subf %575, %578 : vector<2x4x4xf32>
    %580 = math.exp %579 : vector<2x4x4xf32>
    %cst_264 = arith.constant dense<0.000000e+00> : vector<2x4xf32>
    %581 = vector.multi_reduction <add>, %580, %cst_264 [2] : vector<2x4x4xf32> to vector<2x4xf32>
    %582 = vector.shape_cast %581 : vector<2x4xf32> to vector<2x4x1xf32>
    %583 = tpu.reciprocal %582 {approx = true} : vector<2x4x1xf32> -> vector<2x4x1xf32>
    %584 = vector.broadcast %583 : vector<2x4x1xf32> to vector<2x4x4xf32>
    %585 = arith.mulf %580, %584 : vector<2x4x4xf32>
    "tpu.trace_start"() <{level = 10 : i32, message = "bqk,bkd->bqd"}> : () -> ()
    %cst_265 = arith.constant dense<0.000000e+00> : vector<2x4x8xf32>
    %586 = tpu.matmul %585, %572, %cst_265 {dimension_numbers = #tpu.dot_dimension_numbers<[2], [1], [1], [2], [0, 0, 0, 1, 1, 2], [0], [0]>} : vector<2x4x4xf32>, vector<2x4x8xf32>, vector<2x4x8xf32> -> vector<2x4x8xf32>
    "tpu.trace_stop"() : () -> ()
    %587 = tpu.concatenate %534, %551, %568, %585 in 0 : vector<2x4x4xf32>, vector<2x4x4xf32>, vector<2x4x4xf32>, vector<2x4x4xf32> -> vector<8x4x4xf32>
    %c0_266 = arith.constant 0 : index
    %c0_267 = arith.constant 0 : index
    %c0_268 = arith.constant 0 : index
    %588 = vector.load %arg37[%c0_266, %c0_267, %c0_268] : memref<8x4x4xf32, #tpu.memory_space<vmem>>, vector<8x4x4xf32>
    tpu.vector_store %arg37[%c0_266, %c0_267, %c0_268], %587 {strides = array<i32>} : memref<8x4x4xf32, #tpu.memory_space<vmem>>, vector<8x4x4xf32>,
    %589 = tpu.concatenate %535, %552, %569, %586 in 2 : vector<2x4x8xf32>, vector<2x4x8xf32>, vector<2x4x8xf32>, vector<2x4x8xf32> -> vector<2x4x32xf32>
    %590 = vector.extract_strided_slice %589 {offsets = [0, 0, 0], sizes = [1, 4, 32], strides = [1, 1, 1]} : vector<2x4x32xf32> to vector<1x4x32xf32>
    %591 = vector.shape_cast %590 : vector<1x4x32xf32> to vector<4x32xf32>
    %592 = vector.extract_strided_slice %589 {offsets = [1, 0, 0], sizes = [1, 4, 32], strides = [1, 1, 1]} : vector<2x4x32xf32> to vector<1x4x32xf32>
    %593 = vector.shape_cast %592 : vector<1x4x32xf32> to vector<4x32xf32>
    %594 = tpu.concatenate %591, %593 in 0 : vector<4x32xf32>, vector<4x32xf32> -> vector<8x32xf32>
    %c1_269 = arith.constant 1 : index
    %c0_270 = arith.constant 0 : index
    %c0_271 = arith.constant 0 : index
    %595 = vector.load %arg20[%c1_269, %c0_270, %c0_271] : memref<2x32x32xf32, #tpu.memory_space<vmem>>, vector<1x32x32xf32>
    %596 = vector.shape_cast %595 : vector<1x32x32xf32> to vector<32x32xf32>
    %cst_272 = arith.constant dense<0.000000e+00> : vector<8x32xf32>
    %597 = tpu.matmul %594, %596, %cst_272 {dimension_numbers = #tpu.dot_dimension_numbers<[1], [0], [0], [1], [0, 0, 1, 1], [], []>} : vector<8x32xf32>, vector<32x32xf32>, vector<8x32xf32> -> vector<8x32xf32>
    %c1_273 = arith.constant 1 : index
    %c0_274 = arith.constant 0 : index
    %c0_275 = arith.constant 0 : index
    %598 = vector.load %arg21[%c1_273, %c0_274, %c0_275] : memref<2x1x32xf32, #tpu.memory_space<vmem>>, vector<1x1x32xf32>
    %599 = vector.shape_cast %598 : vector<1x1x32xf32> to vector<1x32xf32>
    %600 = vector.broadcast %599 : vector<1x32xf32> to vector<8x32xf32>
    %601 = arith.addf %597, %600 : vector<8x32xf32>
    %602 = arith.addf %506, %601 : vector<8x32xf32>
    %c1_276 = arith.constant 1 : index
    %c0_277 = arith.constant 0 : index
    %c0_278 = arith.constant 0 : index
    %603 = vector.load %arg22[%c1_276, %c0_277, %c0_278] : memref<2x1x32xf32, #tpu.memory_space<vmem>>, vector<1x1x32xf32>
    %604 = vector.shape_cast %603 : vector<1x1x32xf32> to vector<1x32xf32>
    %c1_279 = arith.constant 1 : index
    %c0_280 = arith.constant 0 : index
    %c0_281 = arith.constant 0 : index
    %605 = vector.load %arg23[%c1_279, %c0_280, %c0_281] : memref<2x1x32xf32, #tpu.memory_space<vmem>>, vector<1x1x32xf32>
    %606 = vector.shape_cast %605 : vector<1x1x32xf32> to vector<1x32xf32>
    %cst_282 = arith.constant dense<0.000000e+00> : vector<8xf32>
    %607 = vector.multi_reduction <add>, %602, %cst_282 [1] : vector<8x32xf32> to vector<8xf32>
    %608 = vector.shape_cast %607 : vector<8xf32> to vector<8x1xf32>
    %cst_283 = arith.constant 3.200000e+01 : f32
    %609 = vector.broadcast %cst_283 : f32 to vector<8x1xf32>
    %610 = arith.divf %608, %609 : vector<8x1xf32>
    %611 = vector.broadcast %610 : vector<8x1xf32> to vector<8x32xf32>
    %612 = arith.subf %602, %611 : vector<8x32xf32>
    %613 = arith.mulf %612, %612 : vector<8x32xf32>
    %cst_284 = arith.constant dense<0.000000e+00> : vector<8xf32>
    %614 = vector.multi_reduction <add>, %613, %cst_284 [1] : vector<8x32xf32> to vector<8xf32>
    %615 = vector.shape_cast %614 : vector<8xf32> to vector<8x1xf32>
    %cst_285 = arith.constant 3.200000e+01 : f32
    %616 = vector.broadcast %cst_285 : f32 to vector<8x1xf32>
    %617 = arith.divf %615, %616 : vector<8x1xf32>
    %cst_286 = arith.constant 9.99999974E-6 : f32
    %618 = vector.broadcast %cst_286 : f32 to vector<8x1xf32>
    %619 = arith.addf %617, %618 : vector<8x1xf32>
    %620 = math.rsqrt %619 : vector<8x1xf32>
    %621 = vector.broadcast %620 : vector<8x1xf32> to vector<8x32xf32>
    %622 = arith.mulf %612, %621 : vector<8x32xf32>
    %623 = vector.broadcast %604 : vector<1x32xf32> to vector<8x32xf32>
    %624 = arith.mulf %622, %623 : vector<8x32xf32>
    %625 = vector.broadcast %606 : vector<1x32xf32> to vector<8x32xf32>
    %626 = arith.addf %624, %625 : vector<8x32xf32>
    %c1_287 = arith.constant 1 : index
    %c0_288 = arith.constant 0 : index
    %c0_289 = arith.constant 0 : index
    %627 = vector.load %arg24[%c1_287, %c0_288, %c0_289] : memref<2x32x32xf32, #tpu.memory_space<vmem>>, vector<1x32x32xf32>
    %628 = vector.shape_cast %627 : vector<1x32x32xf32> to vector<32x32xf32>
    %cst_290 = arith.constant dense<0.000000e+00> : vector<8x32xf32>
    %629 = tpu.matmul %626, %628, %cst_290 {dimension_numbers = #tpu.dot_dimension_numbers<[1], [0], [0], [1], [0, 0, 1, 1], [], []>} : vector<8x32xf32>, vector<32x32xf32>, vector<8x32xf32> -> vector<8x32xf32>
    %c1_291 = arith.constant 1 : index
    %c0_292 = arith.constant 0 : index
    %c0_293 = arith.constant 0 : index
    %630 = vector.load %arg25[%c1_291, %c0_292, %c0_293] : memref<2x1x32xf32, #tpu.memory_space<vmem>>, vector<1x1x32xf32>
    %631 = vector.shape_cast %630 : vector<1x1x32xf32> to vector<1x32xf32>
    %632 = vector.broadcast %631 : vector<1x32xf32> to vector<8x32xf32>
    %633 = arith.addf %629, %632 : vector<8x32xf32>
    %cst_294 = arith.constant 0.000000e+00 : f32
    %634 = vector.broadcast %cst_294 : f32 to vector<8x32xf32>
    %635 = arith.maximumf %633, %634 : vector<8x32xf32>
    %c1_295 = arith.constant 1 : index
    %c0_296 = arith.constant 0 : index
    %c0_297 = arith.constant 0 : index
    %636 = vector.load %arg26[%c1_295, %c0_296, %c0_297] : memref<2x32x32xf32, #tpu.memory_space<vmem>>, vector<1x32x32xf32>
    %637 = vector.shape_cast %636 : vector<1x32x32xf32> to vector<32x32xf32>
    %cst_298 = arith.constant dense<0.000000e+00> : vector<8x32xf32>
    %638 = tpu.matmul %635, %637, %cst_298 {dimension_numbers = #tpu.dot_dimension_numbers<[1], [0], [0], [1], [0, 0, 1, 1], [], []>} : vector<8x32xf32>, vector<32x32xf32>, vector<8x32xf32> -> vector<8x32xf32>
    %c1_299 = arith.constant 1 : index
    %c0_300 = arith.constant 0 : index
    %c0_301 = arith.constant 0 : index
    %639 = vector.load %arg27[%c1_299, %c0_300, %c0_301] : memref<2x1x32xf32, #tpu.memory_space<vmem>>, vector<1x1x32xf32>
    %640 = vector.shape_cast %639 : vector<1x1x32xf32> to vector<1x32xf32>
    %641 = vector.broadcast %640 : vector<1x32xf32> to vector<8x32xf32>
    %642 = arith.addf %638, %641 : vector<8x32xf32>
    %643 = arith.addf %626, %642 : vector<8x32xf32>
    %c1_302 = arith.constant 1 : index
    %c0_303 = arith.constant 0 : index
    %c0_304 = arith.constant 0 : index
    %644 = vector.load %arg28[%c1_302, %c0_303, %c0_304] : memref<2x1x32xf32, #tpu.memory_space<vmem>>, vector<1x1x32xf32>
    %645 = vector.shape_cast %644 : vector<1x1x32xf32> to vector<1x32xf32>
    %c1_305 = arith.constant 1 : index
    %c0_306 = arith.constant 0 : index
    %c0_307 = arith.constant 0 : index
    %646 = vector.load %arg29[%c1_305, %c0_306, %c0_307] : memref<2x1x32xf32, #tpu.memory_space<vmem>>, vector<1x1x32xf32>
    %647 = vector.shape_cast %646 : vector<1x1x32xf32> to vector<1x32xf32>
    %cst_308 = arith.constant dense<0.000000e+00> : vector<8xf32>
    %648 = vector.multi_reduction <add>, %643, %cst_308 [1] : vector<8x32xf32> to vector<8xf32>
    %649 = vector.shape_cast %648 : vector<8xf32> to vector<8x1xf32>
    %cst_309 = arith.constant 3.200000e+01 : f32
    %650 = vector.broadcast %cst_309 : f32 to vector<8x1xf32>
    %651 = arith.divf %649, %650 : vector<8x1xf32>
    %652 = vector.broadcast %651 : vector<8x1xf32> to vector<8x32xf32>
    %653 = arith.subf %643, %652 : vector<8x32xf32>
    %654 = arith.mulf %653, %653 : vector<8x32xf32>
    %cst_310 = arith.constant dense<0.000000e+00> : vector<8xf32>
    %655 = vector.multi_reduction <add>, %654, %cst_310 [1] : vector<8x32xf32> to vector<8xf32>
    %656 = vector.shape_cast %655 : vector<8xf32> to vector<8x1xf32>
    %cst_311 = arith.constant 3.200000e+01 : f32
    %657 = vector.broadcast %cst_311 : f32 to vector<8x1xf32>
    %658 = arith.divf %656, %657 : vector<8x1xf32>
    %cst_312 = arith.constant 9.99999974E-6 : f32
    %659 = vector.broadcast %cst_312 : f32 to vector<8x1xf32>
    %660 = arith.addf %658, %659 : vector<8x1xf32>
    %661 = math.rsqrt %660 : vector<8x1xf32>
    %662 = vector.broadcast %661 : vector<8x1xf32> to vector<8x32xf32>
    %663 = arith.mulf %653, %662 : vector<8x32xf32>
    %664 = vector.broadcast %645 : vector<1x32xf32> to vector<8x32xf32>
    %665 = arith.mulf %663, %664 : vector<8x32xf32>
    %666 = vector.broadcast %647 : vector<1x32xf32> to vector<8x32xf32>
    %667 = arith.addf %665, %666 : vector<8x32xf32>
    %668 = vector.extract_strided_slice %347 {offsets = [0, 0], sizes = [1, 32], strides = [1, 1]} : vector<16x32xf32> to vector<1x32xf32>
    %669 = vector.extract_strided_slice %347 {offsets = [1, 0], sizes = [1, 32], strides = [1, 1]} : vector<16x32xf32> to vector<1x32xf32>
    %670 = vector.extract_strided_slice %347 {offsets = [2, 0], sizes = [1, 32], strides = [1, 1]} : vector<16x32xf32> to vector<1x32xf32>
    %671 = vector.extract_strided_slice %347 {offsets = [3, 0], sizes = [1, 32], strides = [1, 1]} : vector<16x32xf32> to vector<1x32xf32>
    %672 = vector.extract_strided_slice %347 {offsets = [4, 0], sizes = [1, 32], strides = [1, 1]} : vector<16x32xf32> to vector<1x32xf32>
    %673 = vector.extract_strided_slice %347 {offsets = [5, 0], sizes = [1, 32], strides = [1, 1]} : vector<16x32xf32> to vector<1x32xf32>
    %674 = vector.extract_strided_slice %347 {offsets = [6, 0], sizes = [1, 32], strides = [1, 1]} : vector<16x32xf32> to vector<1x32xf32>
    %675 = vector.extract_strided_slice %347 {offsets = [7, 0], sizes = [1, 32], strides = [1, 1]} : vector<16x32xf32> to vector<1x32xf32>
    %676 = tpu.concatenate %668, %669, %670, %671, %672, %673, %674, %675 in 1 : vector<1x32xf32>, vector<1x32xf32>, vector<1x32xf32>, vector<1x32xf32>, vector<1x32xf32>, vector<1x32xf32>, vector<1x32xf32>, vector<1x32xf32> -> vector<1x256xf32>
    %677 = vector.extract_strided_slice %347 {offsets = [8, 0], sizes = [1, 32], strides = [1, 1]} : vector<16x32xf32> to vector<1x32xf32>
    %678 = vector.extract_strided_slice %347 {offsets = [9, 0], sizes = [1, 32], strides = [1, 1]} : vector<16x32xf32> to vector<1x32xf32>
    %679 = vector.extract_strided_slice %347 {offsets = [10, 0], sizes = [1, 32], strides = [1, 1]} : vector<16x32xf32> to vector<1x32xf32>
    %680 = vector.extract_strided_slice %347 {offsets = [11, 0], sizes = [1, 32], strides = [1, 1]} : vector<16x32xf32> to vector<1x32xf32>
    %681 = vector.extract_strided_slice %347 {offsets = [12, 0], sizes = [1, 32], strides = [1, 1]} : vector<16x32xf32> to vector<1x32xf32>
    %682 = vector.extract_strided_slice %347 {offsets = [13, 0], sizes = [1, 32], strides = [1, 1]} : vector<16x32xf32> to vector<1x32xf32>
    %683 = vector.extract_strided_slice %347 {offsets = [14, 0], sizes = [1, 32], strides = [1, 1]} : vector<16x32xf32> to vector<1x32xf32>
    %684 = vector.extract_strided_slice %347 {offsets = [15, 0], sizes = [1, 32], strides = [1, 1]} : vector<16x32xf32> to vector<1x32xf32>
    %685 = tpu.concatenate %677, %678, %679, %680, %681, %682, %683, %684 in 1 : vector<1x32xf32>, vector<1x32xf32>, vector<1x32xf32>, vector<1x32xf32>, vector<1x32xf32>, vector<1x32xf32>, vector<1x32xf32>, vector<1x32xf32> -> vector<1x256xf32>
    %686 = tpu.concatenate %676, %685 in 0 : vector<1x256xf32>, vector<1x256xf32> -> vector<2x256xf32>
    %687 = vector.extract_strided_slice %667 {offsets = [0, 0], sizes = [1, 32], strides = [1, 1]} : vector<8x32xf32> to vector<1x32xf32>
    %688 = vector.extract_strided_slice %667 {offsets = [1, 0], sizes = [1, 32], strides = [1, 1]} : vector<8x32xf32> to vector<1x32xf32>
    %689 = vector.extract_strided_slice %667 {offsets = [2, 0], sizes = [1, 32], strides = [1, 1]} : vector<8x32xf32> to vector<1x32xf32>
    %690 = vector.extract_strided_slice %667 {offsets = [3, 0], sizes = [1, 32], strides = [1, 1]} : vector<8x32xf32> to vector<1x32xf32>
    %691 = tpu.concatenate %687, %688, %689, %690 in 1 : vector<1x32xf32>, vector<1x32xf32>, vector<1x32xf32>, vector<1x32xf32> -> vector<1x128xf32>
    %692 = vector.extract_strided_slice %667 {offsets = [4, 0], sizes = [1, 32], strides = [1, 1]} : vector<8x32xf32> to vector<1x32xf32>
    %693 = vector.extract_strided_slice %667 {offsets = [5, 0], sizes = [1, 32], strides = [1, 1]} : vector<8x32xf32> to vector<1x32xf32>
    %694 = vector.extract_strided_slice %667 {offsets = [6, 0], sizes = [1, 32], strides = [1, 1]} : vector<8x32xf32> to vector<1x32xf32>
    %695 = vector.extract_strided_slice %667 {offsets = [7, 0], sizes = [1, 32], strides = [1, 1]} : vector<8x32xf32> to vector<1x32xf32>
    %696 = tpu.concatenate %692, %693, %694, %695 in 1 : vector<1x32xf32>, vector<1x32xf32>, vector<1x32xf32>, vector<1x32xf32> -> vector<1x128xf32>
    %697 = tpu.concatenate %691, %696 in 0 : vector<1x128xf32>, vector<1x128xf32> -> vector<2x128xf32>
    %698 = tpu.concatenate %686, %697 in 1 : vector<2x256xf32>, vector<2x128xf32> -> vector<2x384xf32>
    %c0_313 = arith.constant 0 : index
    %c0_314 = arith.constant 0 : index
    %699 = vector.load %arg30[%c0_313, %c0_314] : memref<2x384xf32, #tpu.memory_space<vmem>>, vector<2x384xf32>
    %c0_315 = arith.constant 0 : index
    %c0_316 = arith.constant 0 : index
    %700 = vector.load %arg31[%c0_315, %c0_316] : memref<1x2xf32, #tpu.memory_space<vmem>>, vector<1x2xf32>
    %701 = vector.extract_strided_slice %699 {offsets = [0, 0], sizes = [1, 384], strides = [1, 1]} : vector<2x384xf32> to vector<1x384xf32>
    %702 = vector.broadcast %701 : vector<1x384xf32> to vector<2x384xf32>
    %703 = arith.mulf %698, %702 : vector<2x384xf32>
    %cst_317 = arith.constant dense<0.000000e+00> : vector<2xf32>
    %704 = vector.multi_reduction <add>, %703, %cst_317 [1] : vector<2x384xf32> to vector<2xf32>
    %705 = vector.shape_cast %704 : vector<2xf32> to vector<2x1xf32>
    %706 = vector.extract_strided_slice %700 {offsets = [0, 0], sizes = [1, 1], strides = [1, 1]} : vector<1x2xf32> to vector<1x1xf32>
    %707 = vector.broadcast %706 : vector<1x1xf32> to vector<2x1xf32>
    %708 = arith.addf %705, %707 : vector<2x1xf32>
    %709 = vector.extract_strided_slice %699 {offsets = [1, 0], sizes = [1, 384], strides = [1, 1]} : vector<2x384xf32> to vector<1x384xf32>
    %710 = vector.broadcast %709 : vector<1x384xf32> to vector<2x384xf32>
    %711 = arith.mulf %698, %710 : vector<2x384xf32>
    %cst_318 = arith.constant dense<0.000000e+00> : vector<2xf32>
    %712 = vector.multi_reduction <add>, %711, %cst_318 [1] : vector<2x384xf32> to vector<2xf32>
    %713 = vector.shape_cast %712 : vector<2xf32> to vector<2x1xf32>
    %714 = vector.extract_strided_slice %700 {offsets = [0, 1], sizes = [1, 1], strides = [1, 1]} : vector<1x2xf32> to vector<1x1xf32>
    %715 = vector.broadcast %714 : vector<1x1xf32> to vector<2x1xf32>
    %716 = arith.addf %713, %715 : vector<2x1xf32>
    %717 = arith.maximumf %708, %716 : vector<2x1xf32>
    %718 = arith.subf %708, %717 : vector<2x1xf32>
    %719 = math.exp %718 : vector<2x1xf32>
    %720 = arith.subf %716, %717 : vector<2x1xf32>
    %721 = math.exp %720 : vector<2x1xf32>
    %722 = arith.addf %719, %721 : vector<2x1xf32>
    %723 = tpu.reciprocal %722 {approx = true} : vector<2x1xf32> -> vector<2x1xf32>
    %724 = arith.mulf %719, %723 : vector<2x1xf32>
    %725 = arith.mulf %721, %723 : vector<2x1xf32>
    %726 = tpu.concatenate %724, %725 in 1 : vector<2x1xf32>, vector<2x1xf32> -> vector<2x2xf32>
    %c0_319 = arith.constant 0 : index
    %c0_320 = arith.constant 0 : index
    %727 = vector.load %arg40[%c0_319, %c0_320] : memref<2x2xf32, #tpu.memory_space<vmem>>, vector<2x2xf32>
    tpu.vector_store %arg40[%c0_319, %c0_320], %726 {strides = array<i32>} : memref<2x2xf32, #tpu.memory_space<vmem>>, vector<2x2xf32>,
    %728 = vector.broadcast %724 : vector<2x1xf32> to vector<2x256xf32>
    %729 = arith.mulf %686, %728 : vector<2x256xf32>
    %730 = vector.broadcast %725 : vector<2x1xf32> to vector<2x128xf32>
    %731 = arith.mulf %697, %730 : vector<2x128xf32>
    %732 = tpu.concatenate %729, %731 in 1 : vector<2x256xf32>, vector<2x128xf32> -> vector<2x384xf32>
    %c0_321 = arith.constant 0 : index
    %c0_322 = arith.constant 0 : index
    %733 = vector.load %arg35[%c0_321, %c0_322] : memref<2x384xf32, #tpu.memory_space<vmem>>, vector<2x384xf32>
    tpu.vector_store %arg35[%c0_321, %c0_322], %732 {strides = array<i32>} : memref<2x384xf32, #tpu.memory_space<vmem>>, vector<2x384xf32>,
    %c0_323 = arith.constant 0 : index
    %c0_324 = arith.constant 0 : index
    %734 = vector.load %arg32[%c0_323, %c0_324] : memref<384x4xf32, #tpu.memory_space<vmem>>, vector<384x4xf32>
    %cst_325 = arith.constant dense<0.000000e+00> : vector<2x4xf32>
    %735 = tpu.matmul %732, %734, %cst_325 {dimension_numbers = #tpu.dot_dimension_numbers<[1], [0], [0], [1], [0, 0, 1, 1], [], []>} : vector<2x384xf32>, vector<384x4xf32>, vector<2x4xf32> -> vector<2x4xf32>
    %c0_326 = arith.constant 0 : index
    %c0_327 = arith.constant 0 : index
    %736 = vector.load %arg33[%c0_326, %c0_327] : memref<1x4xf32, #tpu.memory_space<vmem>>, vector<1x4xf32>
    %737 = vector.broadcast %736 : vector<1x4xf32> to vector<2x4xf32>
    %738 = arith.addf %735, %737 : vector<2x4xf32>
    %c0_328 = arith.constant 0 : index
    %c0_329 = arith.constant 0 : index
    %739 = vector.load %arg34[%c0_328, %c0_329] : memref<2x4xf32, #tpu.memory_space<vmem>>, vector<2x4xf32>
    tpu.vector_store %arg34[%c0_328, %c0_329], %738 {strides = array<i32>} : memref<2x4xf32, #tpu.memory_space<vmem>>, vector<2x4xf32>,
    return
  }
}

</mosaic_0001>

<llo_original>
// kernel: transformer_forward.1
$region0: #{transformer_forward.1}
  #allocation0 [shape = 'u32[]', space=smem, size = 0x4, offset = 0x4, fixed_abs, tag = 'smem constant byte address 0x4 - core index']
  #allocation1 [shape = 'u32[144,128]{1,0:T(1,128)}', space=vmem, size = 0x12000, scoped, tag = 'internal scratch']
  %s0 = inlined_call_operand.smem [shape: u32[41], index: -1, kind: input, shape index: {}]
  %s1 = sld [smem:[%s0]]
  %s2 = scalar_lea.smem %s0, 1
  %s3 = sld [smem:[%s2]]
  %s4 = scalar_lea.smem %s0, 2
  %s5 = sld [smem:[%s4]]
  %s6 = scalar_lea.smem %s0, 3
  %s7 = sld [smem:[%s6]]
  %s8 = scalar_lea.smem %s0, 4
  %s9 = sld [smem:[%s8]]
  %s10 = scalar_lea.smem %s0, 5
  %s11 = sld [smem:[%s10]]
  %s12 = scalar_lea.smem %s0, 6
  %s13 = sld [smem:[%s12]]
  %s14 = scalar_lea.smem %s0, 7
  %s15 = sld [smem:[%s14]]
  %s16 = scalar_lea.smem %s0, 8
  %s17 = sld [smem:[%s16]]
  %s18 = scalar_lea.smem %s0, 9
  %s19 = sld [smem:[%s18]]
  %s20 = scalar_lea.smem %s0, 10
  %s21 = sld [smem:[%s20]]
  %s22 = scalar_lea.smem %s0, 11
  %s23 = sld [smem:[%s22]]
  %s24 = scalar_lea.smem %s0, 12
  %s25 = sld [smem:[%s24]]
  %s26 = scalar_lea.smem %s0, 13
  %s27 = sld [smem:[%s26]]
  %s28 = scalar_lea.smem %s0, 14
  %s29 = sld [smem:[%s28]]
  %s30 = scalar_lea.smem %s0, 15
  %s31 = sld [smem:[%s30]]
  %s32 = scalar_lea.smem %s0, 16
  %s33 = sld [smem:[%s32]]
  %s34 = scalar_lea.smem %s0, 17
  %s35 = sld [smem:[%s34]]
  %s36 = scalar_lea.smem %s0, 18
  %s37 = sld [smem:[%s36]]
  %s38 = scalar_lea.smem %s0, 19
  %s39 = sld [smem:[%s38]]
  %s40 = scalar_lea.smem %s0, 20
  %s41 = sld [smem:[%s40]]
  %s42 = scalar_lea.smem %s0, 21
  %s43 = sld [smem:[%s42]]
  %s44 = scalar_lea.smem %s0, 22
  %s45 = sld [smem:[%s44]]
  %s46 = scalar_lea.smem %s0, 23
  %s47 = sld [smem:[%s46]]
  %s48 = scalar_lea.smem %s0, 24
  %s49 = sld [smem:[%s48]]
  %s50 = scalar_lea.smem %s0, 25
  %s51 = sld [smem:[%s50]]
  %s52 = scalar_lea.smem %s0, 26
  %s53 = sld [smem:[%s52]]
  %s54 = scalar_lea.smem %s0, 27
  %s55 = sld [smem:[%s54]]
  %s56 = scalar_lea.smem %s0, 28
  %s57 = sld [smem:[%s56]]
  %s58 = scalar_lea.smem %s0, 29
  %s59 = sld [smem:[%s58]]
  %s60 = scalar_lea.smem %s0, 30
  %s61 = sld [smem:[%s60]]
  %s62 = scalar_lea.smem %s0, 31
  %s63 = sld [smem:[%s62]]
  %s64 = scalar_lea.smem %s0, 32
  %s65 = sld [smem:[%s64]]
  %s66 = scalar_lea.smem %s0, 33
  %s67 = sld [smem:[%s66]]
  %s68 = scalar_lea.smem %s0, 34
  %s69 = sld [smem:[%s68]]
  %s70 = scalar_lea.smem %s0, 35
  %s71 = sld [smem:[%s70]]
  %s72 = scalar_lea.smem %s0, 36
  %s73 = sld [smem:[%s72]]
  %s74 = scalar_lea.smem %s0, 37
  %s75 = sld [smem:[%s74]]
  %s76 = scalar_lea.smem %s0, 38
  %s77 = sld [smem:[%s76]]
  %s78 = scalar_lea.smem %s0, 39
  %s79 = sld [smem:[%s78]]
  %s80 = scalar_lea.smem %s0, 40
  %s81 = sld [smem:[%s80]]
  %82 = xla_tuple %s69, %s71, %s73, %s75, %s77, %s79, %s81
  %s83 = sld [smem:[#allocation0]]
  $region278: #{transformer_forward.1} parent=0
    _
  %s85 = ssub.s32 1, %s83
  %s86 = scalar_select 0, %s85, %s83
  $region1: #{transformer_forward.1} parent=0
    #allocation2 [shape = 'u8[2048]{0}', space=vmem, size = 0x800, scoped, tag = 'input window, operand 2, single buffered']
    #allocation3 [shape = 's32[1]{0}', space=sflag, size = 0x4, scoped, tag = 'scoped memory for transformer_forward.1']
    #allocation4 [shape = 's32[1]{0}', space=sflag, size = 0x4, scoped, tag = 'scoped memory for transformer_forward.1']
    #allocation5 [shape = 'u8[512]{0}', space=vmem, size = 0x400, scoped, tag = 'input window, operand 3, single buffered']
    #allocation6 [shape = 's32[1]{0}', space=sflag, size = 0x4, scoped, tag = 'scoped memory for transformer_forward.1']
    #allocation7 [shape = 'u8[4096]{0}', space=vmem, size = 0x1000, scoped, tag = 'input window, operand 4, single buffered']
    #allocation8 [shape = 'u8[512]{0}', space=vmem, size = 0x400, scoped, tag = 'input window, operand 5, single buffered']
    #allocation9 [shape = 's32[1]{0}', space=sflag, size = 0x4, scoped, tag = 'scoped memory for transformer_forward.1']
    #allocation10 [shape = 'u8[1024]{0}', space=vmem, size = 0x400, scoped, tag = 'input window, operand 7, single buffered']
    #allocation11 [shape = 'u8[1024]{0}', space=vmem, size = 0x400, scoped, tag = 'input window, operand 9, single buffered']
    #allocation12 [shape = 's32[1]{0}', space=sflag, size = 0x4, scoped, tag = 'scoped memory for transformer_forward.1']
    #allocation13 [shape = 'u8[1024]{0}', space=vmem, size = 0x400, scoped, tag = 'input window, operand 10, single buffered']
    #allocation14 [shape = 'u8[1024]{0}', space=vmem, size = 0x400, scoped, tag = 'input window, operand 11, single buffered']
    #allocation15 [shape = 's32[1]{0}', space=sflag, size = 0x4, scoped, tag = 'scoped memory for transformer_forward.1']
    #allocation16 [shape = 'u8[1024]{0}', space=vmem, size = 0x400, scoped, tag = 'input window, operand 13, single buffered']
    #allocation17 [shape = 'u8[1024]{0}', space=vmem, size = 0x400, scoped, tag = 'input window, operand 15, single buffered']
    #allocation18 [shape = 's32[1]{0}', space=sflag, size = 0x4, scoped, tag = 'scoped memory for transformer_forward.1']
    #allocation19 [shape = 'u8[1024]{0}', space=vmem, size = 0x400, scoped, tag = 'input window, operand 16, single buffered']
    #allocation20 [shape = 'u8[1024]{0}', space=vmem, size = 0x400, scoped, tag = 'input window, operand 17, single buffered']
    #allocation21 [shape = 's32[1]{0}', space=sflag, size = 0x4, scoped, tag = 'scoped memory for transformer_forward.1']
    #allocation22 [shape = 'u8[1024]{0}', space=vmem, size = 0x400, scoped, tag = 'input window, operand 19, single buffered']
    #allocation23 [shape = 'u8[1024]{0}', space=vmem, size = 0x400, scoped, tag = 'input window, operand 21, single buffered']
    #allocation24 [shape = 's32[1]{0}', space=sflag, size = 0x4, scoped, tag = 'scoped memory for transformer_forward.1']
    #allocation25 [shape = 'u8[1024]{0}', space=vmem, size = 0x400, scoped, tag = 'input window, operand 22, single buffered']
    #allocation26 [shape = 'u8[1024]{0}', space=vmem, size = 0x400, scoped, tag = 'input window, operand 23, single buffered']
    #allocation27 [shape = 's32[1]{0}', space=sflag, size = 0x4, scoped, tag = 'scoped memory for transformer_forward.1']
    #allocation28 [shape = 'u8[1024]{0}', space=vmem, size = 0x400, scoped, tag = 'input window, operand 25, single buffered']
    #allocation29 [shape = 'u8[32768]{0}', space=vmem, size = 0x8000, scoped, tag = 'input window, operand 26, single buffered']
    #allocation30 [shape = 's32[1]{0}', space=sflag, size = 0x4, scoped, tag = 'scoped memory for transformer_forward.1']
    #allocation31 [shape = 'u8[1024]{0}', space=vmem, size = 0x400, scoped, tag = 'input window, operand 27, single buffered']
    #allocation32 [shape = 'u8[1024]{0}', space=vmem, size = 0x400, scoped, tag = 'input window, operand 28, single buffered']
    #allocation33 [shape = 's32[1]{0}', space=sflag, size = 0x4, scoped, tag = 'scoped memory for transformer_forward.1']
    #allocation34 [shape = 'u8[1024]{0}', space=vmem, size = 0x400, scoped, tag = 'input window, operand 29, single buffered']
    #allocation35 [shape = 'u8[1024]{0}', space=vmem, size = 0x400, scoped, tag = 'output window, operand 0, single buffered']
    #allocation36 [shape = 'u8[3072]{0}', space=vmem, size = 0xc00, scoped, tag = 'output window, operand 1, single buffered']
    #allocation37 [shape = 's32[1]{0}', space=sflag, size = 0x4, scoped, tag = 'scoped memory for transformer_forward.1']
    #allocation38 [shape = 'u8[32768]{0}', space=vmem, size = 0x8000, scoped, tag = 'output window, operand 2, single buffered']
    #allocation39 [shape = 'u8[8192]{0}', space=vmem, size = 0x2000, scoped, tag = 'output window, operand 4, single buffered']
    #allocation40 [shape = 's32[1]{0}', space=sflag, size = 0x4, scoped, tag = 'scoped memory for transformer_forward.1']
    #allocation41 [shape = 'u8[4096]{0}', space=vmem, size = 0x1000, scoped, tag = 'output window, operand 5, single buffered']
    #allocation42 [shape = 'u8[1024]{0}', space=vmem, size = 0x400, scoped, tag = 'output window, operand 6, single buffered']
    #allocation43 [shape = 's32[1]{0}', space=sflag, size = 0x4, scoped, tag = 'scoped memory for transformer_forward.1']
    %87 = vsyncpa [#allocation3], 0
    %88 = vsyncpa [#allocation6], 0
    %89 = vsyncpa [#allocation9], 0
    %90 = vsyncpa [#allocation12], 0
    %91 = vsyncpa [#allocation15], 0
    %92 = vsyncpa [#allocation18], 0
    %93 = vsyncpa [#allocation21], 0
    %94 = vsyncpa [#allocation24], 0
    %95 = vsyncpa [#allocation27], 0
    %96 = vsyncpa [#allocation30], 0
    %97 = vsyncpa [#allocation33], 0
    %98 = vsyncpa [#allocation4], 0
    %99 = vsyncpa [#allocation37], 0
    %100 = vsyncpa [#allocation40], 0
    %101 = vsyncpa [#allocation43], 0
    // Predicated region
    $region2: #{transformer_forward.1} parent=1 // pred_check
      _
    $region3: #{transformer_forward.1} parent=1 // pred_check_branch
      %103 = sbr.rel (0) target = $region5
    $region4: #{transformer_forward.1} parent=1 // pred_region
      _
    $region5: #{transformer_forward.1} parent=1 // pred_fallthru
      _
    // Predicated region
    $region6: #{transformer_forward.1} parent=1 // pred_check
      _
    $region7: #{transformer_forward.1} parent=1 // pred_check_branch
      %105 = sbr.rel (0) target = $region9
    $region8: #{transformer_forward.1} parent=1 // pred_region
      _
    $region9: #{transformer_forward.1} parent=1 // pred_fallthru
      _
    // Predicated region
    $region10: #{transformer_forward.1} parent=1 // pred_check
      _
    $region11: #{transformer_forward.1} parent=1 // pred_check_branch
      %107 = sbr.rel (0) target = $region13
    $region12: #{transformer_forward.1} parent=1 // pred_region
      %s109 = ssub.s32 64, 64
      %110 = vsyncadd [#allocation3], %s109
      %s112 = sshll.u32 [#allocation2], 4
      %s113 = int_to_ptr.vmem [resolvable:$true] %s112
      %115 = dma.hbm_to_vmem [thread:$0]  %s5, 64, %s113, [#allocation3]
    $region13: #{transformer_forward.1} parent=1 // pred_fallthru
      _
    // Predicated region
    $region14: #{transformer_forward.1} parent=1 // pred_check
      _
    $region15: #{transformer_forward.1} parent=1 // pred_check_branch
      %117 = sbr.rel (0) target = $region17
    $region16: #{transformer_forward.1} parent=1 // pred_region
      %s119 = ssub.s32 16, 16
      %120 = vsyncadd [#allocation6], %s119
      %s122 = sshll.u32 [#allocation5], 4
      %s123 = int_to_ptr.vmem [resolvable:$true] %s122
      %125 = dma.hbm_to_vmem [thread:$0]  %s7, 16, %s123, [#allocation6]
    $region17: #{transformer_forward.1} parent=1 // pred_fallthru
      _
    // Predicated region
    $region18: #{transformer_forward.1} parent=1 // pred_check
      _
    $region19: #{transformer_forward.1} parent=1 // pred_check_branch
      %127 = sbr.rel (0) target = $region21
    $region20: #{transformer_forward.1} parent=1 // pred_region
      %s129 = ssub.s32 128, 128
      %130 = vsyncadd [#allocation6], %s129
      %s132 = sshll.u32 [#allocation7], 4
      %s133 = int_to_ptr.vmem [resolvable:$true] %s132
      %135 = dma.hbm_to_vmem [thread:$0]  %s9, 128, %s133, [#allocation6]
    $region21: #{transformer_forward.1} parent=1 // pred_fallthru
      _
    // Predicated region
    $region22: #{transformer_forward.1} parent=1 // pred_check
      _
    $region23: #{transformer_forward.1} parent=1 // pred_check_branch
      %137 = sbr.rel (0) target = $region25
    $region24: #{transformer_forward.1} parent=1 // pred_region
      %s139 = ssub.s32 16, 16
      %140 = vsyncadd [#allocation9], %s139
      %s142 = sshll.u32 [#allocation8], 4
      %s143 = int_to_ptr.vmem [resolvable:$true] %s142
      %145 = dma.hbm_to_vmem [thread:$0]  %s11, 16, %s143, [#allocation9]
    $region25: #{transformer_forward.1} parent=1 // pred_fallthru
      _
    // Predicated region
    $region26: #{transformer_forward.1} parent=1 // pred_check
      _
    $region27: #{transformer_forward.1} parent=1 // pred_check_branch
      %147 = sbr.rel (0) target = $region29
    $region28: #{transformer_forward.1} parent=1 // pred_region
      _
    $region29: #{transformer_forward.1} parent=1 // pred_fallthru
      _
    // Predicated region
    $region30: #{transformer_forward.1} parent=1 // pred_check
      _
    $region31: #{transformer_forward.1} parent=1 // pred_check_branch
      %149 = sbr.rel (0) target = $region33
    $region32: #{transformer_forward.1} parent=1 // pred_region
      %s151 = ssub.s32 32, 32
      %152 = vsyncadd [#allocation9], %s151
      %s153 = sshll.u32 [#allocation10], 4
      %s154 = int_to_ptr.vmem [resolvable:$true] %s153
      %159 = dma.hbm_to_vmem [thread:$0]  %s15, 32, %s154, [#allocation9], 16, 16, 1
    $region33: #{transformer_forward.1} parent=1 // pred_fallthru
      _
    // Predicated region
    $region34: #{transformer_forward.1} parent=1 // pred_check
      _
    $region35: #{transformer_forward.1} parent=1 // pred_check_branch
      %161 = sbr.rel (0) target = $region37
    $region36: #{transformer_forward.1} parent=1 // pred_region
      _
    $region37: #{transformer_forward.1} parent=1 // pred_fallthru
      _
    // Predicated region
    $region38: #{transformer_forward.1} parent=1 // pred_check
      _
    $region39: #{transformer_forward.1} parent=1 // pred_check_branch
      %163 = sbr.rel (0) target = $region41
    $region40: #{transformer_forward.1} parent=1 // pred_region
      %s165 = ssub.s32 32, 32
      %166 = vsyncadd [#allocation12], %s165
      %s167 = sshll.u32 [#allocation11], 4
      %s168 = int_to_ptr.vmem [resolvable:$true] %s167
      %173 = dma.hbm_to_vmem [thread:$0]  %s19, 32, %s168, [#allocation12], 16, 16, 1
    $region41: #{transformer_forward.1} parent=1 // pred_fallthru
      _
    // Predicated region
    $region42: #{transformer_forward.1} parent=1 // pred_check
      _
    $region43: #{transformer_forward.1} parent=1 // pred_check_branch
      %175 = sbr.rel (0) target = $region45
    $region44: #{transformer_forward.1} parent=1 // pred_region
      %s177 = ssub.s32 32, 32
      %178 = vsyncadd [#allocation12], %s177
      %s179 = sshll.u32 [#allocation13], 4
      %s180 = int_to_ptr.vmem [resolvable:$true] %s179
      %185 = dma.hbm_to_vmem [thread:$0]  %s21, 32, %s180, [#allocation12], 16, 16, 1
    $region45: #{transformer_forward.1} parent=1 // pred_fallthru
      _
    // Predicated region
    $region46: #{transformer_forward.1} parent=1 // pred_check
      _
    $region47: #{transformer_forward.1} parent=1 // pred_check_branch
      %187 = sbr.rel (0) target = $region49
    $region48: #{transformer_forward.1} parent=1 // pred_region
      %s189 = ssub.s32 32, 32
      %190 = vsyncadd [#allocation15], %s189
      %s191 = sshll.u32 [#allocation14], 4
      %s192 = int_to_ptr.vmem [resolvable:$true] %s191
      %197 = dma.hbm_to_vmem [thread:$0]  %s23, 32, %s192, [#allocation15], 16, 16, 1
    $region49: #{transformer_forward.1} parent=1 // pred_fallthru
      _
    // Predicated region
    $region50: #{transformer_forward.1} parent=1 // pred_check
      _
    $region51: #{transformer_forward.1} parent=1 // pred_check_branch
      %199 = sbr.rel (0) target = $region53
    $region52: #{transformer_forward.1} parent=1 // pred_region
      _
    $region53: #{transformer_forward.1} parent=1 // pred_fallthru
      _
    // Predicated region
    $region54: #{transformer_forward.1} parent=1 // pred_check
      _
    $region55: #{transformer_forward.1} parent=1 // pred_check_branch
      %201 = sbr.rel (0) target = $region57
    $region56: #{transformer_forward.1} parent=1 // pred_region
      %s203 = ssub.s32 32, 32
      %204 = vsyncadd [#allocation15], %s203
      %s205 = sshll.u32 [#allocation16], 4
      %s206 = int_to_ptr.vmem [resolvable:$true] %s205
      %211 = dma.hbm_to_vmem [thread:$0]  %s27, 32, %s206, [#allocation15], 16, 16, 1
    $region57: #{transformer_forward.1} parent=1 // pred_fallthru
      _
    // Predicated region
    $region58: #{transformer_forward.1} parent=1 // pred_check
      _
    $region59: #{transformer_forward.1} parent=1 // pred_check_branch
      %213 = sbr.rel (0) target = $region61
    $region60: #{transformer_forward.1} parent=1 // pred_region
      _
    $region61: #{transformer_forward.1} parent=1 // pred_fallthru
      _
    // Predicated region
    $region62: #{transformer_forward.1} parent=1 // pred_check
      _
    $region63: #{transformer_forward.1} parent=1 // pred_check_branch
      %215 = sbr.rel (0) target = $region65
    $region64: #{transformer_forward.1} parent=1 // pred_region
      %s217 = ssub.s32 32, 32
      %218 = vsyncadd [#allocation18], %s217
      %s219 = sshll.u32 [#allocation17], 4
      %s220 = int_to_ptr.vmem [resolvable:$true] %s219
      %225 = dma.hbm_to_vmem [thread:$0]  %s31, 32, %s220, [#allocation18], 16, 16, 1
    $region65: #{transformer_forward.1} parent=1 // pred_fallthru
      _
    // Predicated region
    $region66: #{transformer_forward.1} parent=1 // pred_check
      _
    $region67: #{transformer_forward.1} parent=1 // pred_check_branch
      %227 = sbr.rel (0) target = $region69
    $region68: #{transformer_forward.1} parent=1 // pred_region
      %s229 = ssub.s32 32, 32
      %230 = vsyncadd [#allocation18], %s229
      %s231 = sshll.u32 [#allocation19], 4
      %s232 = int_to_ptr.vmem [resolvable:$true] %s231
      %237 = dma.hbm_to_vmem [thread:$0]  %s33, 32, %s232, [#allocation18], 16, 16, 1
    $region69: #{transformer_forward.1} parent=1 // pred_fallthru
      _
    // Predicated region
    $region70: #{transformer_forward.1} parent=1 // pred_check
      _
    $region71: #{transformer_forward.1} parent=1 // pred_check_branch
      %239 = sbr.rel (0) target = $region73
    $region72: #{transformer_forward.1} parent=1 // pred_region
      %s241 = ssub.s32 32, 32
      %242 = vsyncadd [#allocation21], %s241
      %s243 = sshll.u32 [#allocation20], 4
      %s244 = int_to_ptr.vmem [resolvable:$true] %s243
      %249 = dma.hbm_to_vmem [thread:$0]  %s35, 32, %s244, [#allocation21], 16, 16, 1
    $region73: #{transformer_forward.1} parent=1 // pred_fallthru
      _
    // Predicated region
    $region74: #{transformer_forward.1} parent=1 // pred_check
      _
    $region75: #{transformer_forward.1} parent=1 // pred_check_branch
      %251 = sbr.rel (0) target = $region77
    $region76: #{transformer_forward.1} parent=1 // pred_region
      _
    $region77: #{transformer_forward.1} parent=1 // pred_fallthru
      _
    // Predicated region
    $region78: #{transformer_forward.1} parent=1 // pred_check
      _
    $region79: #{transformer_forward.1} parent=1 // pred_check_branch
      %253 = sbr.rel (0) target = $region81
    $region80: #{transformer_forward.1} parent=1 // pred_region
      %s255 = ssub.s32 32, 32
      %256 = vsyncadd [#allocation21], %s255
      %s257 = sshll.u32 [#allocation22], 4
      %s258 = int_to_ptr.vmem [resolvable:$true] %s257
      %263 = dma.hbm_to_vmem [thread:$0]  %s39, 32, %s258, [#allocation21], 16, 16, 1
    $region81: #{transformer_forward.1} parent=1 // pred_fallthru
      _
    // Predicated region
    $region82: #{transformer_forward.1} parent=1 // pred_check
      _
    $region83: #{transformer_forward.1} parent=1 // pred_check_branch
      %265 = sbr.rel (0) target = $region85
    $region84: #{transformer_forward.1} parent=1 // pred_region
      _
    $region85: #{transformer_forward.1} parent=1 // pred_fallthru
      _
    // Predicated region
    $region86: #{transformer_forward.1} parent=1 // pred_check
      _
    $region87: #{transformer_forward.1} parent=1 // pred_check_branch
      %267 = sbr.rel (0) target = $region89
    $region88: #{transformer_forward.1} parent=1 // pred_region
      %s269 = ssub.s32 32, 32
      %270 = vsyncadd [#allocation24], %s269
      %s271 = sshll.u32 [#allocation23], 4
      %s272 = int_to_ptr.vmem [resolvable:$true] %s271
      %277 = dma.hbm_to_vmem [thread:$0]  %s43, 32, %s272, [#allocation24], 16, 16, 1
    $region89: #{transformer_forward.1} parent=1 // pred_fallthru
      _
    // Predicated region
    $region90: #{transformer_forward.1} parent=1 // pred_check
      _
    $region91: #{transformer_forward.1} parent=1 // pred_check_branch
      %279 = sbr.rel (0) target = $region93
    $region92: #{transformer_forward.1} parent=1 // pred_region
      %s281 = ssub.s32 32, 32
      %282 = vsyncadd [#allocation24], %s281
      %s283 = sshll.u32 [#allocation25], 4
      %s284 = int_to_ptr.vmem [resolvable:$true] %s283
      %289 = dma.hbm_to_vmem [thread:$0]  %s45, 32, %s284, [#allocation24], 16, 16, 1
    $region93: #{transformer_forward.1} parent=1 // pred_fallthru
      _
    // Predicated region
    $region94: #{transformer_forward.1} parent=1 // pred_check
      _
    $region95: #{transformer_forward.1} parent=1 // pred_check_branch
      %291 = sbr.rel (0) target = $region97
    $region96: #{transformer_forward.1} parent=1 // pred_region
      %s293 = ssub.s32 32, 32
      %294 = vsyncadd [#allocation27], %s293
      %s295 = sshll.u32 [#allocation26], 4
      %s296 = int_to_ptr.vmem [resolvable:$true] %s295
      %301 = dma.hbm_to_vmem [thread:$0]  %s47, 32, %s296, [#allocation27], 16, 16, 1
    $region97: #{transformer_forward.1} parent=1 // pred_fallthru
      _
    // Predicated region
    $region98: #{transformer_forward.1} parent=1 // pred_check
      _
    $region99: #{transformer_forward.1} parent=1 // pred_check_branch
      %303 = sbr.rel (0) target = $region101
    $region100: #{transformer_forward.1} parent=1 // pred_region
      _
    $region101: #{transformer_forward.1} parent=1 // pred_fallthru
      _
    // Predicated region
    $region102: #{transformer_forward.1} parent=1 // pred_check
      _
    $region103: #{transformer_forward.1} parent=1 // pred_check_branch
      %305 = sbr.rel (0) target = $region105
    $region104: #{transformer_forward.1} parent=1 // pred_region
      %s307 = ssub.s32 32, 32
      %308 = vsyncadd [#allocation27], %s307
      %s309 = sshll.u32 [#allocation28], 4
      %s310 = int_to_ptr.vmem [resolvable:$true] %s309
      %315 = dma.hbm_to_vmem [thread:$0]  %s51, 32, %s310, [#allocation27], 16, 16, 1
    $region105: #{transformer_forward.1} parent=1 // pred_fallthru
      _
    // Predicated region
    $region106: #{transformer_forward.1} parent=1 // pred_check
      _
    $region107: #{transformer_forward.1} parent=1 // pred_check_branch
      %317 = sbr.rel (0) target = $region109
    $region108: #{transformer_forward.1} parent=1 // pred_region
      %s319 = ssub.s32 1024, 1024
      %320 = vsyncadd [#allocation30], %s319
      %s321 = sshll.u32 [#allocation29], 4
      %s322 = int_to_ptr.vmem [resolvable:$true] %s321
      %327 = dma.hbm_to_vmem [thread:$0]  %s53, 1024, %s322, [#allocation30], 128, 128, 8
    $region109: #{transformer_forward.1} parent=1 // pred_fallthru
      _
    // Predicated region
    $region110: #{transformer_forward.1} parent=1 // pred_check
      _
    $region111: #{transformer_forward.1} parent=1 // pred_check_branch
      %329 = sbr.rel (0) target = $region113
    $region112: #{transformer_forward.1} parent=1 // pred_region
      %s331 = ssub.s32 32, 32
      %332 = vsyncadd [#allocation30], %s331
      %s333 = sshll.u32 [#allocation31], 4
      %s334 = int_to_ptr.vmem [resolvable:$true] %s333
      %339 = dma.hbm_to_vmem [thread:$0]  %s55, 32, %s334, [#allocation30], 16, 16, 1
    $region113: #{transformer_forward.1} parent=1 // pred_fallthru
      _
    // Predicated region
    $region114: #{transformer_forward.1} parent=1 // pred_check
      _
    $region115: #{transformer_forward.1} parent=1 // pred_check_branch
      %341 = sbr.rel (0) target = $region117
    $region116: #{transformer_forward.1} parent=1 // pred_region
      %s343 = ssub.s32 32, 32
      %344 = vsyncadd [#allocation33], %s343
      %s345 = sshll.u32 [#allocation32], 4
      %s346 = int_to_ptr.vmem [resolvable:$true] %s345
      %351 = dma.hbm_to_vmem [thread:$0]  %s57, 32, %s346, [#allocation33], 16, 16, 1
    $region117: #{transformer_forward.1} parent=1 // pred_fallthru
      _
    // Predicated region
    $region118: #{transformer_forward.1} parent=1 // pred_check
      _
    $region119: #{transformer_forward.1} parent=1 // pred_check_branch
      %353 = sbr.rel (0) target = $region121
    $region120: #{transformer_forward.1} parent=1 // pred_region
      %s355 = ssub.s32 32, 32
      %356 = vsyncadd [#allocation33], %s355
      %s357 = sshll.u32 [#allocation34], 4
      %s358 = int_to_ptr.vmem [resolvable:$true] %s357
      %363 = dma.hbm_to_vmem [thread:$0]  %s59, 32, %s358, [#allocation33], 16, 16, 1
    $region121: #{transformer_forward.1} parent=1 // pred_fallthru
      _
    // Predicated region
    $region122: #{transformer_forward.1} parent=1 // pred_check
      _
    $region123: #{transformer_forward.1} parent=1 // pred_check_branch
      %365 = sbr.rel (0) target = $region125
    $region124: #{transformer_forward.1} parent=1 // pred_region
      _
    $region125: #{transformer_forward.1} parent=1 // pred_fallthru
      _
    // Predicated region
    $region126: #{transformer_forward.1} parent=1 // pred_check
      _
    $region127: #{transformer_forward.1} parent=1 // pred_check_branch
      %367 = sbr.rel (0) target = $region129
    $region128: #{transformer_forward.1} parent=1 // pred_region
      _
    $region129: #{transformer_forward.1} parent=1 // pred_fallthru
      _
    // Predicated region
    $region130: #{transformer_forward.1} parent=1 // pred_check
      _
    $region131: #{transformer_forward.1} parent=1 // pred_check_branch
      %369 = sbr.rel (0) target = $region133
    $region132: #{transformer_forward.1} parent=1 // pred_region
      _
    $region133: #{transformer_forward.1} parent=1 // pred_fallthru
      _
    // Predicated region
    $region134: #{transformer_forward.1} parent=1 // pred_check
      _
    $region135: #{transformer_forward.1} parent=1 // pred_check_branch
      %371 = sbr.rel (0) target = $region137
    $region136: #{transformer_forward.1} parent=1 // pred_region
      _
    $region137: #{transformer_forward.1} parent=1 // pred_fallthru
      _
    // Predicated region
    $region138: #{transformer_forward.1} parent=1 // pred_check
      _
    $region139: #{transformer_forward.1} parent=1 // pred_check_branch
      %373 = sbr.rel (0) target = $region141
    $region140: #{transformer_forward.1} parent=1 // pred_region
      %374 = dma.done [#allocation3], 64
    $region141: #{transformer_forward.1} parent=1 // pred_fallthru
      _
    // Predicated region
    $region142: #{transformer_forward.1} parent=1 // pred_check
      _
    $region143: #{transformer_forward.1} parent=1 // pred_check_branch
      %376 = sbr.rel (0) target = $region145
    $region144: #{transformer_forward.1} parent=1 // pred_region
      %377 = dma.done [#allocation6], 16
    $region145: #{transformer_forward.1} parent=1 // pred_fallthru
      _
    // Predicated region
    $region146: #{transformer_forward.1} parent=1 // pred_check
      _
    $region147: #{transformer_forward.1} parent=1 // pred_check_branch
      %379 = sbr.rel (0) target = $region149
    $region148: #{transformer_forward.1} parent=1 // pred_region
      %380 = dma.done [#allocation6], 128
    $region149: #{transformer_forward.1} parent=1 // pred_fallthru
      _
    // Predicated region
    $region150: #{transformer_forward.1} parent=1 // pred_check
      _
    $region151: #{transformer_forward.1} parent=1 // pred_check_branch
      %382 = sbr.rel (0) target = $region153
    $region152: #{transformer_forward.1} parent=1 // pred_region
      %383 = dma.done [#allocation9], 16
    $region153: #{transformer_forward.1} parent=1 // pred_fallthru
      _
    // Predicated region
    $region154: #{transformer_forward.1} parent=1 // pred_check
      _
    $region155: #{transformer_forward.1} parent=1 // pred_check_branch
      %385 = sbr.rel (0) target = $region157
    $region156: #{transformer_forward.1} parent=1 // pred_region
      %386 = dma.done [#allocation9], 32
    $region157: #{transformer_forward.1} parent=1 // pred_fallthru
      _
    // Predicated region
    $region158: #{transformer_forward.1} parent=1 // pred_check
      _
    $region159: #{transformer_forward.1} parent=1 // pred_check_branch
      %388 = sbr.rel (0) target = $region161
    $region160: #{transformer_forward.1} parent=1 // pred_region
      %389 = dma.done [#allocation12], 32
    $region161: #{transformer_forward.1} parent=1 // pred_fallthru
      _
    // Predicated region
    $region162: #{transformer_forward.1} parent=1 // pred_check
      _
    $region163: #{transformer_forward.1} parent=1 // pred_check_branch
      %391 = sbr.rel (0) target = $region165
    $region164: #{transformer_forward.1} parent=1 // pred_region
      %392 = dma.done [#allocation12], 32
    $region165: #{transformer_forward.1} parent=1 // pred_fallthru
      _
    // Predicated region
    $region166: #{transformer_forward.1} parent=1 // pred_check
      _
    $region167: #{transformer_forward.1} parent=1 // pred_check_branch
      %394 = sbr.rel (0) target = $region169
    $region168: #{transformer_forward.1} parent=1 // pred_region
      %395 = dma.done [#allocation15], 32
    $region169: #{transformer_forward.1} parent=1 // pred_fallthru
      _
    // Predicated region
    $region170: #{transformer_forward.1} parent=1 // pred_check
      _
    $region171: #{transformer_forward.1} parent=1 // pred_check_branch
      %397 = sbr.rel (0) target = $region173
    $region172: #{transformer_forward.1} parent=1 // pred_region
      %398 = dma.done [#allocation15], 32
    $region173: #{transformer_forward.1} parent=1 // pred_fallthru
      _
    // Predicated region
    $region174: #{transformer_forward.1} parent=1 // pred_check
      _
    $region175: #{transformer_forward.1} parent=1 // pred_check_branch
      %400 = sbr.rel (0) target = $region177
    $region176: #{transformer_forward.1} parent=1 // pred_region
      %401 = dma.done [#allocation18], 32
    $region177: #{transformer_forward.1} parent=1 // pred_fallthru
      _
    // Predicated region
    $region178: #{transformer_forward.1} parent=1 // pred_check
      _
    $region179: #{transformer_forward.1} parent=1 // pred_check_branch
      %403 = sbr.rel (0) target = $region181
    $region180: #{transformer_forward.1} parent=1 // pred_region
      %404 = dma.done [#allocation18], 32
    $region181: #{transformer_forward.1} parent=1 // pred_fallthru
      _
    // Predicated region
    $region182: #{transformer_forward.1} parent=1 // pred_check
      _
    $region183: #{transformer_forward.1} parent=1 // pred_check_branch
      %406 = sbr.rel (0) target = $region185
    $region184: #{transformer_forward.1} parent=1 // pred_region
      %407 = dma.done [#allocation21], 32
    $region185: #{transformer_forward.1} parent=1 // pred_fallthru
      _
    // Predicated region
    $region186: #{transformer_forward.1} parent=1 // pred_check
      _
    $region187: #{transformer_forward.1} parent=1 // pred_check_branch
      %409 = sbr.rel (0) target = $region189
    $region188: #{transformer_forward.1} parent=1 // pred_region
      %410 = dma.done [#allocation21], 32
    $region189: #{transformer_forward.1} parent=1 // pred_fallthru
      _
    // Predicated region
    $region190: #{transformer_forward.1} parent=1 // pred_check
      _
    $region191: #{transformer_forward.1} parent=1 // pred_check_branch
      %412 = sbr.rel (0) target = $region193
    $region192: #{transformer_forward.1} parent=1 // pred_region
      %413 = dma.done [#allocation24], 32
    $region193: #{transformer_forward.1} parent=1 // pred_fallthru
      _
    // Predicated region
    $region194: #{transformer_forward.1} parent=1 // pred_check
      _
    $region195: #{transformer_forward.1} parent=1 // pred_check_branch
      %415 = sbr.rel (0) target = $region197
    $region196: #{transformer_forward.1} parent=1 // pred_region
      %416 = dma.done [#allocation24], 32
    $region197: #{transformer_forward.1} parent=1 // pred_fallthru
      _
    // Predicated region
    $region198: #{transformer_forward.1} parent=1 // pred_check
      _
    $region199: #{transformer_forward.1} parent=1 // pred_check_branch
      %418 = sbr.rel (0) target = $region201
    $region200: #{transformer_forward.1} parent=1 // pred_region
      %419 = dma.done [#allocation27], 32
    $region201: #{transformer_forward.1} parent=1 // pred_fallthru
      _
    // Predicated region
    $region202: #{transformer_forward.1} parent=1 // pred_check
      _
    $region203: #{transformer_forward.1} parent=1 // pred_check_branch
      %421 = sbr.rel (0) target = $region205
    $region204: #{transformer_forward.1} parent=1 // pred_region
      %422 = dma.done [#allocation27], 32
    $region205: #{transformer_forward.1} parent=1 // pred_fallthru
      _
    // Predicated region
    $region206: #{transformer_forward.1} parent=1 // pred_check
      _
    $region207: #{transformer_forward.1} parent=1 // pred_check_branch
      %424 = sbr.rel (0) target = $region209
    $region208: #{transformer_forward.1} parent=1 // pred_region
      %425 = dma.done [#allocation30], 1024
    $region209: #{transformer_forward.1} parent=1 // pred_fallthru
      _
    // Predicated region
    $region210: #{transformer_forward.1} parent=1 // pred_check
      _
    $region211: #{transformer_forward.1} parent=1 // pred_check_branch
      %427 = sbr.rel (0) target = $region213
    $region212: #{transformer_forward.1} parent=1 // pred_region
      %428 = dma.done [#allocation30], 32
    $region213: #{transformer_forward.1} parent=1 // pred_fallthru
      _
    // Predicated region
    $region214: #{transformer_forward.1} parent=1 // pred_check
      _
    $region215: #{transformer_forward.1} parent=1 // pred_check_branch
      %430 = sbr.rel (0) target = $region217
    $region216: #{transformer_forward.1} parent=1 // pred_region
      %431 = dma.done [#allocation33], 32
    $region217: #{transformer_forward.1} parent=1 // pred_fallthru
      _
    // Predicated region
    $region218: #{transformer_forward.1} parent=1 // pred_check
      _
    $region219: #{transformer_forward.1} parent=1 // pred_check_branch
      %433 = sbr.rel (0) target = $region221
    $region220: #{transformer_forward.1} parent=1 // pred_region
      %434 = dma.done [#allocation33], 32
    $region221: #{transformer_forward.1} parent=1 // pred_fallthru
      _
    %v435 = vld [vmem:[%s1] sm:$0xff]
    %v436 = vld [vmem:[%s1 + $0x8] sm:$0xff]
    %v437 = vld [vmem:[#allocation2] sm:$0xf]
    %v438 = vld [vmem:[#allocation5] sm:$0x1]
    %v440 = vlaneseq
    %v441 = vshrl.u32 %v440, 7
    %v442 = vsub.s32 0, %v441
    %v443 = vrot.slane %v438, %v442
    %vm445 = vcmask 31744
    %v447 = vsel %vm445, %v435, 0
    %v450 = vsel %vm445, %v436, 0
    %vm452 = vcmask 1043456
    %v454 = vsel %vm452, %v437, 0
    %456 = vmatprep.subr.mxu0 0.0
    %457 = vmatpush1.msra.mxu0 0.0
    %458 = vmatprep.subr.mxu0 0.0
    %459 = vmatpush1.msra.mxu0 0.0
    %460 = vmatprep.subr.mxu0 0.0
    %461 = vmatpush1.msra.mxu0 0.0
    %462 = vmatprep.subr.mxu0 0.0
    %463 = vmatpush1.msra.mxu0 0.0
    %464 = vmatprep.subr.mxu0 0.0
    %465 = vmatpush1.msra.mxu0 0.0
    %466 = vmatprep.subr.mxu0 0.0
    %467 = vmatpush1.msra.mxu0 0.0
    %468 = vmatprep.subr.mxu0 0.0
    %469 = vmatpush1.msra.mxu0 0.0
    %470 = vmatprep.subr.mxu0 0.0
    %471 = vmatpush1.msra.mxu0 0.0
    %472 = vmatprep.subr.mxu0 0.0
    %473 = vmatpush1.msra.mxu0 0.0
    %474 = vmatprep.subr.mxu0 0.0
    %475 = vmatpush1.msra.mxu0 0.0
    %476 = vmatprep.subr.mxu0 0.0
    %477 = vmatpush1.msra.mxu0 0.0
    %478 = vmatprep.subr.mxu0 0.0
    %479 = vmatpush1.msra.mxu0 0.0
    %480 = vmatprep.subr.mxu0 0.0
    %481 = vmatpush1.msra.mxu0 0.0
    %482 = vmatprep.subr.mxu0 0.0
    %483 = vmatpush1.msra.mxu0 0.0
    %484 = vmatprep.subr.mxu0 0.0
    %485 = vmatpush1.msra.mxu0 0.0
    %486 = vmatprep.subr.mxu0 0.0
    %487 = vmatpush1.msra.mxu0 %v454
    %488 = vmatprep.subr.mxu0 0.0
    %489 = vmatpush2.msra.mxu0 0.0
    %490 = vmatprep.subr.mxu0 0.0
    %491 = vmatpush2.msra.mxu0 0.0
    %492 = vmatprep.subr.mxu0 0.0
    %493 = vmatpush2.msra.mxu0 0.0
    %494 = vmatprep.subr.mxu0 0.0
    %495 = vmatpush2.msra.mxu0 0.0
    %496 = vmatprep.subr.mxu0 0.0
    %497 = vmatpush2.msra.mxu0 0.0
    %498 = vmatprep.subr.mxu0 0.0
    %499 = vmatpush2.msra.mxu0 0.0
    %500 = vmatprep.subr.mxu0 0.0
    %501 = vmatpush2.msra.mxu0 0.0
    %502 = vmatprep.subr.mxu0 0.0
    %503 = vmatpush2.msra.mxu0 0.0
    %504 = vmatprep.subr.mxu0 0.0
    %505 = vmatpush2.msra.mxu0 0.0
    %506 = vmatprep.subr.mxu0 0.0
    %507 = vmatpush2.msra.mxu0 0.0
    %508 = vmatprep.subr.mxu0 0.0
    %509 = vmatpush2.msra.mxu0 0.0
    %510 = vmatprep.subr.mxu0 0.0
    %511 = vmatpush2.msra.mxu0 0.0
    %512 = vmatprep.subr.mxu0 0.0
    %513 = vmatpush2.msra.mxu0 0.0
    %514 = vmatprep.subr.mxu0 0.0
    %515 = vmatpush2.msra.mxu0 0.0
    %516 = vmatprep.subr.mxu0 0.0
    %517 = vmatpush2.msra.mxu0 0.0
    %518 = vmatprep.subr.mxu0 0.0
    %519 = vmatpush2.msra.mxu0 0.0
    %520 = vmatprep.mubr.f32.mxu0 0.0
    %521 = vmatmul.mubr.f32.gmra.mxu0 %v447
    %v522 = vpop.f32.mrf.mxu0
    %v523 = vadd.f32 %v443, %v522
    %v524 = vpop.f32.mrf.mxu0
    %525 = vmatprep.mubr.f32.mxu0 0.0
    %526 = vmatmul.mubr.f32.gmra.mxu0 %v450
    %v527 = vpop.f32.mrf.mxu0
    %v528 = vadd.f32 %v443, %v527
    %v529 = vpop.f32.mrf.mxu0
    %530 = vdwg.mxu0
    %v531 = vld [vmem:[%s3] sm:$0xff]
    %v532 = vld [vmem:[#allocation7] sm:$0xff]
    %v533 = vld [vmem:[#allocation8] sm:$0x1]
    %v535 = vlaneseq
    %v536 = vshrl.u32 %v535, 7
    %v537 = vsub.s32 0, %v536
    %v538 = vrot.slane %v533, %v537
    %vm540 = vcmask 64512
    %v542 = vsel %vm540, %v531, 0
    %544 = vmatprep.subr.mxu0 0.0
    %545 = vmatpush1.msra.mxu0 0.0
    %546 = vmatprep.subr.mxu0 0.0
    %547 = vmatpush1.msra.mxu0 0.0
    %548 = vmatprep.subr.mxu0 0.0
    %549 = vmatpush1.msra.mxu0 0.0
    %550 = vmatprep.subr.mxu0 0.0
    %551 = vmatpush1.msra.mxu0 0.0
    %552 = vmatprep.subr.mxu0 0.0
    %553 = vmatpush1.msra.mxu0 0.0
    %554 = vmatprep.subr.mxu0 0.0
    %555 = vmatpush1.msra.mxu0 0.0
    %556 = vmatprep.subr.mxu0 0.0
    %557 = vmatpush1.msra.mxu0 0.0
    %558 = vmatprep.subr.mxu0 0.0
    %559 = vmatpush1.msra.mxu0 0.0
    %560 = vmatprep.subr.mxu0 0.0
    %561 = vmatpush1.msra.mxu0 0.0
    %562 = vmatprep.subr.mxu0 0.0
    %563 = vmatpush1.msra.mxu0 0.0
    %564 = vmatprep.subr.mxu0 0.0
    %565 = vmatpush1.msra.mxu0 0.0
    %566 = vmatprep.subr.mxu0 0.0
    %567 = vmatpush1.msra.mxu0 0.0
    %568 = vmatprep.subr.mxu0 0.0
    %569 = vmatpush1.msra.mxu0 0.0
    %570 = vmatprep.subr.mxu0 0.0
    %571 = vmatpush1.msra.mxu0 0.0
    %572 = vmatprep.subr.mxu0 0.0
    %573 = vmatpush1.msra.mxu0 0.0
    %574 = vmatprep.subr.mxu0 0.0
    %575 = vmatpush1.msra.mxu0 %v532
    %576 = vmatprep.subr.mxu0 0.0
    %577 = vmatpush2.msra.mxu0 0.0
    %578 = vmatprep.subr.mxu0 0.0
    %579 = vmatpush2.msra.mxu0 0.0
    %580 = vmatprep.subr.mxu0 0.0
    %581 = vmatpush2.msra.mxu0 0.0
    %582 = vmatprep.subr.mxu0 0.0
    %583 = vmatpush2.msra.mxu0 0.0
    %584 = vmatprep.subr.mxu0 0.0
    %585 = vmatpush2.msra.mxu0 0.0
    %586 = vmatprep.subr.mxu0 0.0
    %587 = vmatpush2.msra.mxu0 0.0
    %588 = vmatprep.subr.mxu0 0.0
    %589 = vmatpush2.msra.mxu0 0.0
    %590 = vmatprep.subr.mxu0 0.0
    %591 = vmatpush2.msra.mxu0 0.0
    %592 = vmatprep.subr.mxu0 0.0
    %593 = vmatpush2.msra.mxu0 0.0
    %594 = vmatprep.subr.mxu0 0.0
    %595 = vmatpush2.msra.mxu0 0.0
    %596 = vmatprep.subr.mxu0 0.0
    %597 = vmatpush2.msra.mxu0 0.0
    %598 = vmatprep.subr.mxu0 0.0
    %599 = vmatpush2.msra.mxu0 0.0
    %600 = vmatprep.subr.mxu0 0.0
    %601 = vmatpush2.msra.mxu0 0.0
    %602 = vmatprep.subr.mxu0 0.0
    %603 = vmatpush2.msra.mxu0 0.0
    %604 = vmatprep.subr.mxu0 0.0
    %605 = vmatpush2.msra.mxu0 0.0
    %606 = vmatprep.subr.mxu0 0.0
    %607 = vmatpush2.msra.mxu0 0.0
    %608 = vmatprep.mubr.f32.mxu0 0.0
    %609 = vmatmul.mubr.f32.gmra.mxu0 %v542
    %v610 = vpop.f32.mrf.mxu0
    %v611 = vadd.f32 %v538, %v610
    %v612 = vpop.f32.mrf.mxu0
    %613 = vdwg.mxu0
    %vm614 = vcmask 261120
    %615 = vst.msk [vmem:[#allocation39] sm:$0xff] %vm614, %v523
    %vm616 = vcmask 257024
    %617 = vst.msk [vmem:[#allocation41] sm:$0xf] %vm616, %v611
    %s618 = scalar_lea.vmem [#allocation39], 8
    %619 = vst.msk [vmem:[%s618] sm:$0xff] %vm614, %v528
    %s620 = scalar_lea.vmem [#allocation41], 4
    %vm621 = vcmask 261124
    %622 = vst.msk [vmem:[%s620 - $0x4] sm:$0xf0] %vm621, %v611
    %v623 = vld [vmem:[%s13] sm:$0xff]
    %v624 = vld [vmem:[%s13 + $0x8] sm:$0xff]
    %v625 = vld [vmem:[%s13 + $0x10] sm:$0xff]
    %v626 = vld [vmem:[%s13 + $0x18] sm:$0xff]
    %v627 = vld [vmem:[#allocation10] sm:$0x1]
    %v629 = vlaneseq
    %v630 = vshrl.u32 %v629, 7
    %v631 = vsub.s32 0, %v630
    %v632 = vrot.slane %v627, %v631
    %v635 = vsel %vm614, %v523, 0
    %v638 = vsel %vm614, %v528, 0
    %640 = vmatprep.subr.mxu0 0.0
    %641 = vmatpush1.msra.mxu0 0.0
    %642 = vmatprep.subr.mxu0 0.0
    %643 = vmatpush1.msra.mxu0 0.0
    %644 = vmatprep.subr.mxu0 0.0
    %645 = vmatpush1.msra.mxu0 0.0
    %646 = vmatprep.subr.mxu0 0.0
    %647 = vmatpush1.msra.mxu0 0.0
    %648 = vmatprep.subr.mxu0 0.0
    %649 = vmatpush1.msra.mxu0 0.0
    %650 = vmatprep.subr.mxu0 0.0
    %651 = vmatpush1.msra.mxu0 0.0
    %652 = vmatprep.subr.mxu0 0.0
    %653 = vmatpush1.msra.mxu0 0.0
    %654 = vmatprep.subr.mxu0 0.0
    %655 = vmatpush1.msra.mxu0 0.0
    %656 = vmatprep.subr.mxu0 0.0
    %657 = vmatpush1.msra.mxu0 0.0
    %658 = vmatprep.subr.mxu0 0.0
    %659 = vmatpush1.msra.mxu0 0.0
    %660 = vmatprep.subr.mxu0 0.0
    %661 = vmatpush1.msra.mxu0 0.0
    %662 = vmatprep.subr.mxu0 0.0
    %663 = vmatpush1.msra.mxu0 0.0
    %664 = vmatprep.subr.mxu0 0.0
    %665 = vmatpush1.msra.mxu0 %v626
    %666 = vmatprep.subr.mxu0 0.0
    %667 = vmatpush1.msra.mxu0 %v625
    %668 = vmatprep.subr.mxu0 0.0
    %669 = vmatpush1.msra.mxu0 %v624
    %670 = vmatprep.subr.mxu0 0.0
    %671 = vmatpush1.msra.mxu0 %v623
    %672 = vmatprep.subr.mxu0 0.0
    %673 = vmatpush2.msra.mxu0 0.0
    %674 = vmatprep.subr.mxu0 0.0
    %675 = vmatpush2.msra.mxu0 0.0
    %676 = vmatprep.subr.mxu0 0.0
    %677 = vmatpush2.msra.mxu0 0.0
    %678 = vmatprep.subr.mxu0 0.0
    %679 = vmatpush2.msra.mxu0 0.0
    %680 = vmatprep.subr.mxu0 0.0
    %681 = vmatpush2.msra.mxu0 0.0
    %682 = vmatprep.subr.mxu0 0.0
    %683 = vmatpush2.msra.mxu0 0.0
    %684 = vmatprep.subr.mxu0 0.0
    %685 = vmatpush2.msra.mxu0 0.0
    %686 = vmatprep.subr.mxu0 0.0
    %687 = vmatpush2.msra.mxu0 0.0
    %688 = vmatprep.subr.mxu0 0.0
    %689 = vmatpush2.msra.mxu0 0.0
    %690 = vmatprep.subr.mxu0 0.0
    %691 = vmatpush2.msra.mxu0 0.0
    %692 = vmatprep.subr.mxu0 0.0
    %693 = vmatpush2.msra.mxu0 0.0
    %694 = vmatprep.subr.mxu0 0.0
    %695 = vmatpush2.msra.mxu0 0.0
    %696 = vmatprep.subr.mxu0 0.0
    %697 = vmatpush2.msra.mxu0 0.0
    %698 = vmatprep.subr.mxu0 0.0
    %699 = vmatpush2.msra.mxu0 0.0
    %700 = vmatprep.subr.mxu0 0.0
    %701 = vmatpush2.msra.mxu0 0.0
    %702 = vmatprep.subr.mxu0 0.0
    %703 = vmatpush2.msra.mxu0 0.0
    %704 = vmatprep.mubr.f32.mxu0 0.0
    %705 = vmatmul.mubr.f32.gmra.mxu0 %v635
    %v706 = vpop.f32.mrf.mxu0
    %v707 = vadd.f32 %v632, %v706
    %v708 = vpop.f32.mrf.mxu0
    %709 = vmatprep.mubr.f32.mxu0 0.0
    %710 = vmatmul.mubr.f32.gmra.mxu0 %v638
    %v711 = vpop.f32.mrf.mxu0
    %v712 = vadd.f32 %v632, %v711
    %v713 = vpop.f32.mrf.mxu0
    %714 = vdwg.mxu0
    %716 = vrot.lane.b32.xlu0 %v707, 96
    %v717 = vpop.permute.xlu0 %716
    %v718 = vsel %vm540, %v707, 0
    %v720 = vsel %vm540, %v717, 0
    %722 = vmatprep.subr.mxu0 0.0
    %723 = vmatpush1.xpose.msra.mxu0 0.0
    %724 = vmatprep.subr.mxu0 0.0
    %725 = vmatpush1.xpose.msra.mxu0 0.0
    %726 = vmatprep.subr.mxu0 0.0
    %727 = vmatpush1.xpose.msra.mxu0 0.0
    %728 = vmatprep.subr.mxu0 0.0
    %729 = vmatpush1.xpose.msra.mxu0 0.0
    %730 = vmatprep.subr.mxu0 0.0
    %731 = vmatpush1.xpose.msra.mxu0 0.0
    %732 = vmatprep.subr.mxu0 0.0
    %733 = vmatpush1.xpose.msra.mxu0 0.0
    %734 = vmatprep.subr.mxu0 0.0
    %735 = vmatpush1.xpose.msra.mxu0 0.0
    %736 = vmatprep.subr.mxu0 0.0
    %737 = vmatpush1.xpose.msra.mxu0 0.0
    %738 = vmatprep.subr.mxu0 0.0
    %739 = vmatpush1.xpose.msra.mxu0 0.0
    %740 = vmatprep.subr.mxu0 0.0
    %741 = vmatpush1.xpose.msra.mxu0 0.0
    %742 = vmatprep.subr.mxu0 0.0
    %743 = vmatpush1.xpose.msra.mxu0 0.0
    %744 = vmatprep.subr.mxu0 0.0
    %745 = vmatpush1.xpose.msra.mxu0 0.0
    %746 = vmatprep.subr.mxu0 0.0
    %747 = vmatpush1.xpose.msra.mxu0 0.0
    %748 = vmatprep.subr.mxu0 0.0
    %749 = vmatpush1.xpose.msra.mxu0 0.0
    %750 = vmatprep.subr.mxu0 0.0
    %751 = vmatpush1.xpose.msra.mxu0 0.0
    %752 = vmatprep.subr.mxu0 0.0
    %753 = vmatpush1.xpose.msra.mxu0 %v720
    %754 = vmatprep.subr.mxu0 0.0
    %755 = vmatpush2.xpose.msra.mxu0 0.0
    %756 = vmatprep.subr.mxu0 0.0
    %757 = vmatpush2.xpose.msra.mxu0 0.0
    %758 = vmatprep.subr.mxu0 0.0
    %759 = vmatpush2.xpose.msra.mxu0 0.0
    %760 = vmatprep.subr.mxu0 0.0
    %761 = vmatpush2.xpose.msra.mxu0 0.0
    %762 = vmatprep.subr.mxu0 0.0
    %763 = vmatpush2.xpose.msra.mxu0 0.0
    %764 = vmatprep.subr.mxu0 0.0
    %765 = vmatpush2.xpose.msra.mxu0 0.0
    %766 = vmatprep.subr.mxu0 0.0
    %767 = vmatpush2.xpose.msra.mxu0 0.0
    %768 = vmatprep.subr.mxu0 0.0
    %769 = vmatpush2.xpose.msra.mxu0 0.0
    %770 = vmatprep.subr.mxu0 0.0
    %771 = vmatpush2.xpose.msra.mxu0 0.0
    %772 = vmatprep.subr.mxu0 0.0
    %773 = vmatpush2.xpose.msra.mxu0 0.0
    %774 = vmatprep.subr.mxu0 0.0
    %775 = vmatpush2.xpose.msra.mxu0 0.0
    %776 = vmatprep.subr.mxu0 0.0
    %777 = vmatpush2.xpose.msra.mxu0 0.0
    %778 = vmatprep.subr.mxu0 0.0
    %779 = vmatpush2.xpose.msra.mxu0 0.0
    %780 = vmatprep.subr.mxu0 0.0
    %781 = vmatpush2.xpose.msra.mxu0 0.0
    %782 = vmatprep.subr.mxu0 0.0
    %783 = vmatpush2.xpose.msra.mxu0 0.0
    %784 = vmatprep.subr.mxu0 0.0
    %785 = vmatpush2.xpose.msra.mxu0 0.0
    %786 = vmatprep.mubr.f32.mxu0 0.0
    %787 = vmatmul.mubr.f32.gmra.mxu0 %v718
    %v788 = vpop.f32.mrf.mxu0
    %v789 = vadd.f32 0.0, %v788
    %v790 = vpop.f32.mrf.mxu0
    %791 = vdwg.mxu0
    %793 = vrot.lane.b32.xlu0 %v712, 96
    %v794 = vpop.permute.xlu0 %793
    %v795 = vsel %vm540, %v712, 0
    %v797 = vsel %vm540, %v794, 0
    %799 = vmatprep.subr.mxu0 0.0
    %800 = vmatpush1.xpose.msra.mxu0 0.0
    %801 = vmatprep.subr.mxu0 0.0
    %802 = vmatpush1.xpose.msra.mxu0 0.0
    %803 = vmatprep.subr.mxu0 0.0
    %804 = vmatpush1.xpose.msra.mxu0 0.0
    %805 = vmatprep.subr.mxu0 0.0
    %806 = vmatpush1.xpose.msra.mxu0 0.0
    %807 = vmatprep.subr.mxu0 0.0
    %808 = vmatpush1.xpose.msra.mxu0 0.0
    %809 = vmatprep.subr.mxu0 0.0
    %810 = vmatpush1.xpose.msra.mxu0 0.0
    %811 = vmatprep.subr.mxu0 0.0
    %812 = vmatpush1.xpose.msra.mxu0 0.0
    %813 = vmatprep.subr.mxu0 0.0
    %814 = vmatpush1.xpose.msra.mxu0 0.0
    %815 = vmatprep.subr.mxu0 0.0
    %816 = vmatpush1.xpose.msra.mxu0 0.0
    %817 = vmatprep.subr.mxu0 0.0
    %818 = vmatpush1.xpose.msra.mxu0 0.0
    %819 = vmatprep.subr.mxu0 0.0
    %820 = vmatpush1.xpose.msra.mxu0 0.0
    %821 = vmatprep.subr.mxu0 0.0
    %822 = vmatpush1.xpose.msra.mxu0 0.0
    %823 = vmatprep.subr.mxu0 0.0
    %824 = vmatpush1.xpose.msra.mxu0 0.0
    %825 = vmatprep.subr.mxu0 0.0
    %826 = vmatpush1.xpose.msra.mxu0 0.0
    %827 = vmatprep.subr.mxu0 0.0
    %828 = vmatpush1.xpose.msra.mxu0 0.0
    %829 = vmatprep.subr.mxu0 0.0
    %830 = vmatpush1.xpose.msra.mxu0 %v797
    %831 = vmatprep.subr.mxu0 0.0
    %832 = vmatpush2.xpose.msra.mxu0 0.0
    %833 = vmatprep.subr.mxu0 0.0
    %834 = vmatpush2.xpose.msra.mxu0 0.0
    %835 = vmatprep.subr.mxu0 0.0
    %836 = vmatpush2.xpose.msra.mxu0 0.0
    %837 = vmatprep.subr.mxu0 0.0
    %838 = vmatpush2.xpose.msra.mxu0 0.0
    %839 = vmatprep.subr.mxu0 0.0
    %840 = vmatpush2.xpose.msra.mxu0 0.0
    %841 = vmatprep.subr.mxu0 0.0
    %842 = vmatpush2.xpose.msra.mxu0 0.0
    %843 = vmatprep.subr.mxu0 0.0
    %844 = vmatpush2.xpose.msra.mxu0 0.0
    %845 = vmatprep.subr.mxu0 0.0
    %846 = vmatpush2.xpose.msra.mxu0 0.0
    %847 = vmatprep.subr.mxu0 0.0
    %848 = vmatpush2.xpose.msra.mxu0 0.0
    %849 = vmatprep.subr.mxu0 0.0
    %850 = vmatpush2.xpose.msra.mxu0 0.0
    %851 = vmatprep.subr.mxu0 0.0
    %852 = vmatpush2.xpose.msra.mxu0 0.0
    %853 = vmatprep.subr.mxu0 0.0
    %854 = vmatpush2.xpose.msra.mxu0 0.0
    %855 = vmatprep.subr.mxu0 0.0
    %856 = vmatpush2.xpose.msra.mxu0 0.0
    %857 = vmatprep.subr.mxu0 0.0
    %858 = vmatpush2.xpose.msra.mxu0 0.0
    %859 = vmatprep.subr.mxu0 0.0
    %860 = vmatpush2.xpose.msra.mxu0 0.0
    %861 = vmatprep.subr.mxu0 0.0
    %862 = vmatpush2.xpose.msra.mxu0 0.0
    %863 = vmatprep.mubr.f32.mxu0 0.0
    %864 = vmatmul.mubr.f32.gmra.mxu0 %v795
    %v865 = vpop.f32.mrf.mxu0
    %v866 = vadd.f32 0.0, %v865
    %v867 = vpop.f32.mrf.mxu0
    %868 = vdwg.mxu0
    %v869 = vmul.f32 %v789, 0.35355338
    %v870 = vmul.f32 %v866, 0.35355338
    %v871 = vsel %vm540, %v869, -inf
    %872 = vmax.xlane.f32.xlu0 %v871
    %v873 = vpop.xlane.xlu0 %872
    %v874 = vsel %vm540, %v870, -inf
    %875 = vmax.xlane.f32.xlu0 %v874
    %v876 = vpop.xlane.xlu0 %875
    %v877 = vsub.f32 %v869, %v873
    %v878 = vsub.f32 %v870, %v876
    %v879 = vmul.f32 %v877, 1.442695
    %v880 = vpow.pop %v879
    %v881 = vmul.f32 %v878, 1.442695
    %v882 = vpow.pop %v881
    %v883 = vsel %vm540, %v880, 0.0
    %884 = vadd.xlane.f32.xlu0 %v883
    %v885 = vpop.xlane.xlu0 %884
    %v886 = vsel %vm540, %v882, 0.0
    %887 = vadd.xlane.f32.xlu0 %v886
    %v888 = vpop.xlane.xlu0 %887
    %v889 = vrcp.pop %v885
    %v890 = vrcp.pop %v888
    %v891 = vmul.f32 %v880, %v889
    %v892 = vmul.f32 %v882, %v890
    %893 = vrot.lane.b32.xlu0 %v707, 64
    %v894 = vpop.permute.xlu0 %893
    %v897 = vsel %vm540, %v891, 0
    %899 = vmatprep.subr.mxu0 0.0
    %900 = vmatpush1.msra.mxu0 0.0
    %901 = vmatprep.subr.mxu0 0.0
    %902 = vmatpush1.msra.mxu0 0.0
    %903 = vmatprep.subr.mxu0 0.0
    %904 = vmatpush1.msra.mxu0 0.0
    %905 = vmatprep.subr.mxu0 0.0
    %906 = vmatpush1.msra.mxu0 0.0
    %907 = vmatprep.subr.mxu0 0.0
    %908 = vmatpush1.msra.mxu0 0.0
    %909 = vmatprep.subr.mxu0 0.0
    %910 = vmatpush1.msra.mxu0 0.0
    %911 = vmatprep.subr.mxu0 0.0
    %912 = vmatpush1.msra.mxu0 0.0
    %913 = vmatprep.subr.mxu0 0.0
    %914 = vmatpush1.msra.mxu0 0.0
    %915 = vmatprep.subr.mxu0 0.0
    %916 = vmatpush1.msra.mxu0 0.0
    %917 = vmatprep.subr.mxu0 0.0
    %918 = vmatpush1.msra.mxu0 0.0
    %919 = vmatprep.subr.mxu0 0.0
    %920 = vmatpush1.msra.mxu0 0.0
    %921 = vmatprep.subr.mxu0 0.0
    %922 = vmatpush1.msra.mxu0 0.0
    %923 = vmatprep.subr.mxu0 0.0
    %924 = vmatpush1.msra.mxu0 0.0
    %925 = vmatprep.subr.mxu0 0.0
    %926 = vmatpush1.msra.mxu0 0.0
    %927 = vmatprep.subr.mxu0 0.0
    %928 = vmatpush1.msra.mxu0 0.0
    %929 = vmatprep.subr.mxu0 0.0
    %930 = vmatpush1.msra.mxu0 %v894
    %931 = vmatprep.subr.mxu0 0.0
    %932 = vmatpush2.msra.mxu0 0.0
    %933 = vmatprep.subr.mxu0 0.0
    %934 = vmatpush2.msra.mxu0 0.0
    %935 = vmatprep.subr.mxu0 0.0
    %936 = vmatpush2.msra.mxu0 0.0
    %937 = vmatprep.subr.mxu0 0.0
    %938 = vmatpush2.msra.mxu0 0.0
    %939 = vmatprep.subr.mxu0 0.0
    %940 = vmatpush2.msra.mxu0 0.0
    %941 = vmatprep.subr.mxu0 0.0
    %942 = vmatpush2.msra.mxu0 0.0
    %943 = vmatprep.subr.mxu0 0.0
    %944 = vmatpush2.msra.mxu0 0.0
    %945 = vmatprep.subr.mxu0 0.0
    %946 = vmatpush2.msra.mxu0 0.0
    %947 = vmatprep.subr.mxu0 0.0
    %948 = vmatpush2.msra.mxu0 0.0
    %949 = vmatprep.subr.mxu0 0.0
    %950 = vmatpush2.msra.mxu0 0.0
    %951 = vmatprep.subr.mxu0 0.0
    %952 = vmatpush2.msra.mxu0 0.0
    %953 = vmatprep.subr.mxu0 0.0
    %954 = vmatpush2.msra.mxu0 0.0
    %955 = vmatprep.subr.mxu0 0.0
    %956 = vmatpush2.msra.mxu0 0.0
    %957 = vmatprep.subr.mxu0 0.0
    %958 = vmatpush2.msra.mxu0 0.0
    %959 = vmatprep.subr.mxu0 0.0
    %960 = vmatpush2.msra.mxu0 0.0
    %961 = vmatprep.subr.mxu0 0.0
    %962 = vmatpush2.msra.mxu0 0.0
    %963 = vmatprep.mubr.f32.mxu0 0.0
    %964 = vmatmul.mubr.f32.gmra.mxu0 %v897
    %v965 = vpop.f32.mrf.mxu0
    %v966 = vadd.f32 0.0, %v965
    %v967 = vpop.f32.mrf.mxu0
    %968 = vdwg.mxu0
    %969 = vrot.lane.b32.xlu0 %v712, 64
    %v970 = vpop.permute.xlu0 %969
    %v973 = vsel %vm540, %v892, 0
    %975 = vmatprep.subr.mxu0 0.0
    %976 = vmatpush1.msra.mxu0 0.0
    %977 = vmatprep.subr.mxu0 0.0
    %978 = vmatpush1.msra.mxu0 0.0
    %979 = vmatprep.subr.mxu0 0.0
    %980 = vmatpush1.msra.mxu0 0.0
    %981 = vmatprep.subr.mxu0 0.0
    %982 = vmatpush1.msra.mxu0 0.0
    %983 = vmatprep.subr.mxu0 0.0
    %984 = vmatpush1.msra.mxu0 0.0
    %985 = vmatprep.subr.mxu0 0.0
    %986 = vmatpush1.msra.mxu0 0.0
    %987 = vmatprep.subr.mxu0 0.0
    %988 = vmatpush1.msra.mxu0 0.0
    %989 = vmatprep.subr.mxu0 0.0
    %990 = vmatpush1.msra.mxu0 0.0
    %991 = vmatprep.subr.mxu0 0.0
    %992 = vmatpush1.msra.mxu0 0.0
    %993 = vmatprep.subr.mxu0 0.0
    %994 = vmatpush1.msra.mxu0 0.0
    %995 = vmatprep.subr.mxu0 0.0
    %996 = vmatpush1.msra.mxu0 0.0
    %997 = vmatprep.subr.mxu0 0.0
    %998 = vmatpush1.msra.mxu0 0.0
    %999 = vmatprep.subr.mxu0 0.0
    %1000 = vmatpush1.msra.mxu0 0.0
    %1001 = vmatprep.subr.mxu0 0.0
    %1002 = vmatpush1.msra.mxu0 0.0
    %1003 = vmatprep.subr.mxu0 0.0
    %1004 = vmatpush1.msra.mxu0 0.0
    %1005 = vmatprep.subr.mxu0 0.0
    %1006 = vmatpush1.msra.mxu0 %v970
    %1007 = vmatprep.subr.mxu0 0.0
    %1008 = vmatpush2.msra.mxu0 0.0
    %1009 = vmatprep.subr.mxu0 0.0
    %1010 = vmatpush2.msra.mxu0 0.0
    %1011 = vmatprep.subr.mxu0 0.0
    %1012 = vmatpush2.msra.mxu0 0.0
    %1013 = vmatprep.subr.mxu0 0.0
    %1014 = vmatpush2.msra.mxu0 0.0
    %1015 = vmatprep.subr.mxu0 0.0
    %1016 = vmatpush2.msra.mxu0 0.0
    %1017 = vmatprep.subr.mxu0 0.0
    %1018 = vmatpush2.msra.mxu0 0.0
    %1019 = vmatprep.subr.mxu0 0.0
    %1020 = vmatpush2.msra.mxu0 0.0
    %1021 = vmatprep.subr.mxu0 0.0
    %1022 = vmatpush2.msra.mxu0 0.0
    %1023 = vmatprep.subr.mxu0 0.0
    %1024 = vmatpush2.msra.mxu0 0.0
    %1025 = vmatprep.subr.mxu0 0.0
    %1026 = vmatpush2.msra.mxu0 0.0
    %1027 = vmatprep.subr.mxu0 0.0
    %1028 = vmatpush2.msra.mxu0 0.0
    %1029 = vmatprep.subr.mxu0 0.0
    %1030 = vmatpush2.msra.mxu0 0.0
    %1031 = vmatprep.subr.mxu0 0.0
    %1032 = vmatpush2.msra.mxu0 0.0
    %1033 = vmatprep.subr.mxu0 0.0
    %1034 = vmatpush2.msra.mxu0 0.0
    %1035 = vmatprep.subr.mxu0 0.0
    %1036 = vmatpush2.msra.mxu0 0.0
    %1037 = vmatprep.subr.mxu0 0.0
    %1038 = vmatpush2.msra.mxu0 0.0
    %1039 = vmatprep.mubr.f32.mxu0 0.0
    %1040 = vmatmul.mubr.f32.gmra.mxu0 %v973
    %v1041 = vpop.f32.mrf.mxu0
    %v1042 = vadd.f32 0.0, %v1041
    %v1043 = vpop.f32.mrf.mxu0
    %1044 = vdwg.mxu0
    %1045 = vrot.lane.b32.xlu0 %v707, 120
    %v1046 = vpop.permute.xlu0 %1045
    %1047 = vrot.lane.b32.xlu0 %v707, 88
    %v1048 = vpop.permute.xlu0 %1047
    %v1049 = vsel %vm540, %v1046, 0
    %v1051 = vsel %vm540, %v1048, 0
    %1053 = vmatprep.subr.mxu0 0.0
    %1054 = vmatpush1.xpose.msra.mxu0 0.0
    %1055 = vmatprep.subr.mxu0 0.0
    %1056 = vmatpush1.xpose.msra.mxu0 0.0
    %1057 = vmatprep.subr.mxu0 0.0
    %1058 = vmatpush1.xpose.msra.mxu0 0.0
    %1059 = vmatprep.subr.mxu0 0.0
    %1060 = vmatpush1.xpose.msra.mxu0 0.0
    %1061 = vmatprep.subr.mxu0 0.0
    %1062 = vmatpush1.xpose.msra.mxu0 0.0
    %1063 = vmatprep.subr.mxu0 0.0
    %1064 = vmatpush1.xpose.msra.mxu0 0.0
    %1065 = vmatprep.subr.mxu0 0.0
    %1066 = vmatpush1.xpose.msra.mxu0 0.0
    %1067 = vmatprep.subr.mxu0 0.0
    %1068 = vmatpush1.xpose.msra.mxu0 0.0
    %1069 = vmatprep.subr.mxu0 0.0
    %1070 = vmatpush1.xpose.msra.mxu0 0.0
    %1071 = vmatprep.subr.mxu0 0.0
    %1072 = vmatpush1.xpose.msra.mxu0 0.0
    %1073 = vmatprep.subr.mxu0 0.0
    %1074 = vmatpush1.xpose.msra.mxu0 0.0
    %1075 = vmatprep.subr.mxu0 0.0
    %1076 = vmatpush1.xpose.msra.mxu0 0.0
    %1077 = vmatprep.subr.mxu0 0.0
    %1078 = vmatpush1.xpose.msra.mxu0 0.0
    %1079 = vmatprep.subr.mxu0 0.0
    %1080 = vmatpush1.xpose.msra.mxu0 0.0
    %1081 = vmatprep.subr.mxu0 0.0
    %1082 = vmatpush1.xpose.msra.mxu0 0.0
    %1083 = vmatprep.subr.mxu0 0.0
    %1084 = vmatpush1.xpose.msra.mxu0 %v1051
    %1085 = vmatprep.subr.mxu0 0.0
    %1086 = vmatpush2.xpose.msra.mxu0 0.0
    %1087 = vmatprep.subr.mxu0 0.0
    %1088 = vmatpush2.xpose.msra.mxu0 0.0
    %1089 = vmatprep.subr.mxu0 0.0
    %1090 = vmatpush2.xpose.msra.mxu0 0.0
    %1091 = vmatprep.subr.mxu0 0.0
    %1092 = vmatpush2.xpose.msra.mxu0 0.0
    %1093 = vmatprep.subr.mxu0 0.0
    %1094 = vmatpush2.xpose.msra.mxu0 0.0
    %1095 = vmatprep.subr.mxu0 0.0
    %1096 = vmatpush2.xpose.msra.mxu0 0.0
    %1097 = vmatprep.subr.mxu0 0.0
    %1098 = vmatpush2.xpose.msra.mxu0 0.0
    %1099 = vmatprep.subr.mxu0 0.0
    %1100 = vmatpush2.xpose.msra.mxu0 0.0
    %1101 = vmatprep.subr.mxu0 0.0
    %1102 = vmatpush2.xpose.msra.mxu0 0.0
    %1103 = vmatprep.subr.mxu0 0.0
    %1104 = vmatpush2.xpose.msra.mxu0 0.0
    %1105 = vmatprep.subr.mxu0 0.0
    %1106 = vmatpush2.xpose.msra.mxu0 0.0
    %1107 = vmatprep.subr.mxu0 0.0
    %1108 = vmatpush2.xpose.msra.mxu0 0.0
    %1109 = vmatprep.subr.mxu0 0.0
    %1110 = vmatpush2.xpose.msra.mxu0 0.0
    %1111 = vmatprep.subr.mxu0 0.0
    %1112 = vmatpush2.xpose.msra.mxu0 0.0
    %1113 = vmatprep.subr.mxu0 0.0
    %1114 = vmatpush2.xpose.msra.mxu0 0.0
    %1115 = vmatprep.subr.mxu0 0.0
    %1116 = vmatpush2.xpose.msra.mxu0 0.0
    %1117 = vmatprep.mubr.f32.mxu0 0.0
    %1118 = vmatmul.mubr.f32.gmra.mxu0 %v1049
    %v1119 = vpop.f32.mrf.mxu0
    %v1120 = vadd.f32 0.0, %v1119
    %v1121 = vpop.f32.mrf.mxu0
    %1122 = vdwg.mxu0
    %1123 = vrot.lane.b32.xlu0 %v712, 120
    %v1124 = vpop.permute.xlu0 %1123
    %1125 = vrot.lane.b32.xlu0 %v712, 88
    %v1126 = vpop.permute.xlu0 %1125
    %v1127 = vsel %vm540, %v1124, 0
    %v1129 = vsel %vm540, %v1126, 0
    %1131 = vmatprep.subr.mxu0 0.0
    %1132 = vmatpush1.xpose.msra.mxu0 0.0
    %1133 = vmatprep.subr.mxu0 0.0
    %1134 = vmatpush1.xpose.msra.mxu0 0.0
    %1135 = vmatprep.subr.mxu0 0.0
    %1136 = vmatpush1.xpose.msra.mxu0 0.0
    %1137 = vmatprep.subr.mxu0 0.0
    %1138 = vmatpush1.xpose.msra.mxu0 0.0
    %1139 = vmatprep.subr.mxu0 0.0
    %1140 = vmatpush1.xpose.msra.mxu0 0.0
    %1141 = vmatprep.subr.mxu0 0.0
    %1142 = vmatpush1.xpose.msra.mxu0 0.0
    %1143 = vmatprep.subr.mxu0 0.0
    %1144 = vmatpush1.xpose.msra.mxu0 0.0
    %1145 = vmatprep.subr.mxu0 0.0
    %1146 = vmatpush1.xpose.msra.mxu0 0.0
    %1147 = vmatprep.subr.mxu0 0.0
    %1148 = vmatpush1.xpose.msra.mxu0 0.0
    %1149 = vmatprep.subr.mxu0 0.0
    %1150 = vmatpush1.xpose.msra.mxu0 0.0
    %1151 = vmatprep.subr.mxu0 0.0
    %1152 = vmatpush1.xpose.msra.mxu0 0.0
    %1153 = vmatprep.subr.mxu0 0.0
    %1154 = vmatpush1.xpose.msra.mxu0 0.0
    %1155 = vmatprep.subr.mxu0 0.0
    %1156 = vmatpush1.xpose.msra.mxu0 0.0
    %1157 = vmatprep.subr.mxu0 0.0
    %1158 = vmatpush1.xpose.msra.mxu0 0.0
    %1159 = vmatprep.subr.mxu0 0.0
    %1160 = vmatpush1.xpose.msra.mxu0 0.0
    %1161 = vmatprep.subr.mxu0 0.0
    %1162 = vmatpush1.xpose.msra.mxu0 %v1129
    %1163 = vmatprep.subr.mxu0 0.0
    %1164 = vmatpush2.xpose.msra.mxu0 0.0
    %1165 = vmatprep.subr.mxu0 0.0
    %1166 = vmatpush2.xpose.msra.mxu0 0.0
    %1167 = vmatprep.subr.mxu0 0.0
    %1168 = vmatpush2.xpose.msra.mxu0 0.0
    %1169 = vmatprep.subr.mxu0 0.0
    %1170 = vmatpush2.xpose.msra.mxu0 0.0
    %1171 = vmatprep.subr.mxu0 0.0
    %1172 = vmatpush2.xpose.msra.mxu0 0.0
    %1173 = vmatprep.subr.mxu0 0.0
    %1174 = vmatpush2.xpose.msra.mxu0 0.0
    %1175 = vmatprep.subr.mxu0 0.0
    %1176 = vmatpush2.xpose.msra.mxu0 0.0
    %1177 = vmatprep.subr.mxu0 0.0
    %1178 = vmatpush2.xpose.msra.mxu0 0.0
    %1179 = vmatprep.subr.mxu0 0.0
    %1180 = vmatpush2.xpose.msra.mxu0 0.0
    %1181 = vmatprep.subr.mxu0 0.0
    %1182 = vmatpush2.xpose.msra.mxu0 0.0
    %1183 = vmatprep.subr.mxu0 0.0
    %1184 = vmatpush2.xpose.msra.mxu0 0.0
    %1185 = vmatprep.subr.mxu0 0.0
    %1186 = vmatpush2.xpose.msra.mxu0 0.0
    %1187 = vmatprep.subr.mxu0 0.0
    %1188 = vmatpush2.xpose.msra.mxu0 0.0
    %1189 = vmatprep.subr.mxu0 0.0
    %1190 = vmatpush2.xpose.msra.mxu0 0.0
    %1191 = vmatprep.subr.mxu0 0.0
    %1192 = vmatpush2.xpose.msra.mxu0 0.0
    %1193 = vmatprep.subr.mxu0 0.0
    %1194 = vmatpush2.xpose.msra.mxu0 0.0
    %1195 = vmatprep.mubr.f32.mxu0 0.0
    %1196 = vmatmul.mubr.f32.gmra.mxu0 %v1127
    %v1197 = vpop.f32.mrf.mxu0
    %v1198 = vadd.f32 0.0, %v1197
    %v1199 = vpop.f32.mrf.mxu0
    %1200 = vdwg.mxu0
    %v1201 = vmul.f32 %v1120, 0.35355338
    %v1202 = vmul.f32 %v1198, 0.35355338
    %v1203 = vsel %vm540, %v1201, -inf
    %1204 = vmax.xlane.f32.xlu0 %v1203
    %v1205 = vpop.xlane.xlu0 %1204
    %v1206 = vsel %vm540, %v1202, -inf
    %1207 = vmax.xlane.f32.xlu0 %v1206
    %v1208 = vpop.xlane.xlu0 %1207
    %v1209 = vsub.f32 %v1201, %v1205
    %v1210 = vsub.f32 %v1202, %v1208
    %v1211 = vmul.f32 %v1209, 1.442695
    %v1212 = vpow.pop %v1211
    %v1213 = vmul.f32 %v1210, 1.442695
    %v1214 = vpow.pop %v1213
    %v1215 = vsel %vm540, %v1212, 0.0
    %1216 = vadd.xlane.f32.xlu0 %v1215
    %v1217 = vpop.xlane.xlu0 %1216
    %v1218 = vsel %vm540, %v1214, 0.0
    %1219 = vadd.xlane.f32.xlu0 %v1218
    %v1220 = vpop.xlane.xlu0 %1219
    %v1221 = vrcp.pop %v1217
    %v1222 = vrcp.pop %v1220
    %v1223 = vmul.f32 %v1212, %v1221
    %v1224 = vmul.f32 %v1214, %v1222
    %1225 = vrot.lane.b32.xlu0 %v707, 56
    %v1226 = vpop.permute.xlu0 %1225
    %v1229 = vsel %vm540, %v1223, 0
    %1231 = vmatprep.subr.mxu0 0.0
    %1232 = vmatpush1.msra.mxu0 0.0
    %1233 = vmatprep.subr.mxu0 0.0
    %1234 = vmatpush1.msra.mxu0 0.0
    %1235 = vmatprep.subr.mxu0 0.0
    %1236 = vmatpush1.msra.mxu0 0.0
    %1237 = vmatprep.subr.mxu0 0.0
    %1238 = vmatpush1.msra.mxu0 0.0
    %1239 = vmatprep.subr.mxu0 0.0
    %1240 = vmatpush1.msra.mxu0 0.0
    %1241 = vmatprep.subr.mxu0 0.0
    %1242 = vmatpush1.msra.mxu0 0.0
    %1243 = vmatprep.subr.mxu0 0.0
    %1244 = vmatpush1.msra.mxu0 0.0
    %1245 = vmatprep.subr.mxu0 0.0
    %1246 = vmatpush1.msra.mxu0 0.0
    %1247 = vmatprep.subr.mxu0 0.0
    %1248 = vmatpush1.msra.mxu0 0.0
    %1249 = vmatprep.subr.mxu0 0.0
    %1250 = vmatpush1.msra.mxu0 0.0
    %1251 = vmatprep.subr.mxu0 0.0
    %1252 = vmatpush1.msra.mxu0 0.0
    %1253 = vmatprep.subr.mxu0 0.0
    %1254 = vmatpush1.msra.mxu0 0.0
    %1255 = vmatprep.subr.mxu0 0.0
    %1256 = vmatpush1.msra.mxu0 0.0
    %1257 = vmatprep.subr.mxu0 0.0
    %1258 = vmatpush1.msra.mxu0 0.0
    %1259 = vmatprep.subr.mxu0 0.0
    %1260 = vmatpush1.msra.mxu0 0.0
    %1261 = vmatprep.subr.mxu0 0.0
    %1262 = vmatpush1.msra.mxu0 %v1226
    %1263 = vmatprep.subr.mxu0 0.0
    %1264 = vmatpush2.msra.mxu0 0.0
    %1265 = vmatprep.subr.mxu0 0.0
    %1266 = vmatpush2.msra.mxu0 0.0
    %1267 = vmatprep.subr.mxu0 0.0
    %1268 = vmatpush2.msra.mxu0 0.0
    %1269 = vmatprep.subr.mxu0 0.0
    %1270 = vmatpush2.msra.mxu0 0.0
    %1271 = vmatprep.subr.mxu0 0.0
    %1272 = vmatpush2.msra.mxu0 0.0
    %1273 = vmatprep.subr.mxu0 0.0
    %1274 = vmatpush2.msra.mxu0 0.0
    %1275 = vmatprep.subr.mxu0 0.0
    %1276 = vmatpush2.msra.mxu0 0.0
    %1277 = vmatprep.subr.mxu0 0.0
    %1278 = vmatpush2.msra.mxu0 0.0
    %1279 = vmatprep.subr.mxu0 0.0
    %1280 = vmatpush2.msra.mxu0 0.0
    %1281 = vmatprep.subr.mxu0 0.0
    %1282 = vmatpush2.msra.mxu0 0.0
    %1283 = vmatprep.subr.mxu0 0.0
    %1284 = vmatpush2.msra.mxu0 0.0
    %1285 = vmatprep.subr.mxu0 0.0
    %1286 = vmatpush2.msra.mxu0 0.0
    %1287 = vmatprep.subr.mxu0 0.0
    %1288 = vmatpush2.msra.mxu0 0.0
    %1289 = vmatprep.subr.mxu0 0.0
    %1290 = vmatpush2.msra.mxu0 0.0
    %1291 = vmatprep.subr.mxu0 0.0
    %1292 = vmatpush2.msra.mxu0 0.0
    %1293 = vmatprep.subr.mxu0 0.0
    %1294 = vmatpush2.msra.mxu0 0.0
    %1295 = vmatprep.mubr.f32.mxu0 0.0
    %1296 = vmatmul.mubr.f32.gmra.mxu0 %v1229
    %v1297 = vpop.f32.mrf.mxu0
    %v1298 = vadd.f32 0.0, %v1297
    %v1299 = vpop.f32.mrf.mxu0
    %1300 = vdwg.mxu0
    %1301 = vrot.lane.b32.xlu0 %v712, 56
    %v1302 = vpop.permute.xlu0 %1301
    %v1305 = vsel %vm540, %v1224, 0
    %1307 = vmatprep.subr.mxu0 0.0
    %1308 = vmatpush1.msra.mxu0 0.0
    %1309 = vmatprep.subr.mxu0 0.0
    %1310 = vmatpush1.msra.mxu0 0.0
    %1311 = vmatprep.subr.mxu0 0.0
    %1312 = vmatpush1.msra.mxu0 0.0
    %1313 = vmatprep.subr.mxu0 0.0
    %1314 = vmatpush1.msra.mxu0 0.0
    %1315 = vmatprep.subr.mxu0 0.0
    %1316 = vmatpush1.msra.mxu0 0.0
    %1317 = vmatprep.subr.mxu0 0.0
    %1318 = vmatpush1.msra.mxu0 0.0
    %1319 = vmatprep.subr.mxu0 0.0
    %1320 = vmatpush1.msra.mxu0 0.0
    %1321 = vmatprep.subr.mxu0 0.0
    %1322 = vmatpush1.msra.mxu0 0.0
    %1323 = vmatprep.subr.mxu0 0.0
    %1324 = vmatpush1.msra.mxu0 0.0
    %1325 = vmatprep.subr.mxu0 0.0
    %1326 = vmatpush1.msra.mxu0 0.0
    %1327 = vmatprep.subr.mxu0 0.0
    %1328 = vmatpush1.msra.mxu0 0.0
    %1329 = vmatprep.subr.mxu0 0.0
    %1330 = vmatpush1.msra.mxu0 0.0
    %1331 = vmatprep.subr.mxu0 0.0
    %1332 = vmatpush1.msra.mxu0 0.0
    %1333 = vmatprep.subr.mxu0 0.0
    %1334 = vmatpush1.msra.mxu0 0.0
    %1335 = vmatprep.subr.mxu0 0.0
    %1336 = vmatpush1.msra.mxu0 0.0
    %1337 = vmatprep.subr.mxu0 0.0
    %1338 = vmatpush1.msra.mxu0 %v1302
    %1339 = vmatprep.subr.mxu0 0.0
    %1340 = vmatpush2.msra.mxu0 0.0
    %1341 = vmatprep.subr.mxu0 0.0
    %1342 = vmatpush2.msra.mxu0 0.0
    %1343 = vmatprep.subr.mxu0 0.0
    %1344 = vmatpush2.msra.mxu0 0.0
    %1345 = vmatprep.subr.mxu0 0.0
    %1346 = vmatpush2.msra.mxu0 0.0
    %1347 = vmatprep.subr.mxu0 0.0
    %1348 = vmatpush2.msra.mxu0 0.0
    %1349 = vmatprep.subr.mxu0 0.0
    %1350 = vmatpush2.msra.mxu0 0.0
    %1351 = vmatprep.subr.mxu0 0.0
    %1352 = vmatpush2.msra.mxu0 0.0
    %1353 = vmatprep.subr.mxu0 0.0
    %1354 = vmatpush2.msra.mxu0 0.0
    %1355 = vmatprep.subr.mxu0 0.0
    %1356 = vmatpush2.msra.mxu0 0.0
    %1357 = vmatprep.subr.mxu0 0.0
    %1358 = vmatpush2.msra.mxu0 0.0
    %1359 = vmatprep.subr.mxu0 0.0
    %1360 = vmatpush2.msra.mxu0 0.0
    %1361 = vmatprep.subr.mxu0 0.0
    %1362 = vmatpush2.msra.mxu0 0.0
    %1363 = vmatprep.subr.mxu0 0.0
    %1364 = vmatpush2.msra.mxu0 0.0
    %1365 = vmatprep.subr.mxu0 0.0
    %1366 = vmatpush2.msra.mxu0 0.0
    %1367 = vmatprep.subr.mxu0 0.0
    %1368 = vmatpush2.msra.mxu0 0.0
    %1369 = vmatprep.subr.mxu0 0.0
    %1370 = vmatpush2.msra.mxu0 0.0
    %1371 = vmatprep.mubr.f32.mxu0 0.0
    %1372 = vmatmul.mubr.f32.gmra.mxu0 %v1305
    %v1373 = vpop.f32.mrf.mxu0
    %v1374 = vadd.f32 0.0, %v1373
    %v1375 = vpop.f32.mrf.mxu0
    %1376 = vdwg.mxu0
    %1377 = vrot.lane.b32.xlu0 %v707, 112
    %v1378 = vpop.permute.xlu0 %1377
    %1379 = vrot.lane.b32.xlu0 %v707, 80
    %v1380 = vpop.permute.xlu0 %1379
    %v1381 = vsel %vm540, %v1378, 0
    %v1383 = vsel %vm540, %v1380, 0
    %1385 = vmatprep.subr.mxu0 0.0
    %1386 = vmatpush1.xpose.msra.mxu0 0.0
    %1387 = vmatprep.subr.mxu0 0.0
    %1388 = vmatpush1.xpose.msra.mxu0 0.0
    %1389 = vmatprep.subr.mxu0 0.0
    %1390 = vmatpush1.xpose.msra.mxu0 0.0
    %1391 = vmatprep.subr.mxu0 0.0
    %1392 = vmatpush1.xpose.msra.mxu0 0.0
    %1393 = vmatprep.subr.mxu0 0.0
    %1394 = vmatpush1.xpose.msra.mxu0 0.0
    %1395 = vmatprep.subr.mxu0 0.0
    %1396 = vmatpush1.xpose.msra.mxu0 0.0
    %1397 = vmatprep.subr.mxu0 0.0
    %1398 = vmatpush1.xpose.msra.mxu0 0.0
    %1399 = vmatprep.subr.mxu0 0.0
    %1400 = vmatpush1.xpose.msra.mxu0 0.0
    %1401 = vmatprep.subr.mxu0 0.0
    %1402 = vmatpush1.xpose.msra.mxu0 0.0
    %1403 = vmatprep.subr.mxu0 0.0
    %1404 = vmatpush1.xpose.msra.mxu0 0.0
    %1405 = vmatprep.subr.mxu0 0.0
    %1406 = vmatpush1.xpose.msra.mxu0 0.0
    %1407 = vmatprep.subr.mxu0 0.0
    %1408 = vmatpush1.xpose.msra.mxu0 0.0
    %1409 = vmatprep.subr.mxu0 0.0
    %1410 = vmatpush1.xpose.msra.mxu0 0.0
    %1411 = vmatprep.subr.mxu0 0.0
    %1412 = vmatpush1.xpose.msra.mxu0 0.0
    %1413 = vmatprep.subr.mxu0 0.0
    %1414 = vmatpush1.xpose.msra.mxu0 0.0
    %1415 = vmatprep.subr.mxu0 0.0
    %1416 = vmatpush1.xpose.msra.mxu0 %v1383
    %1417 = vmatprep.subr.mxu0 0.0
    %1418 = vmatpush2.xpose.msra.mxu0 0.0
    %1419 = vmatprep.subr.mxu0 0.0
    %1420 = vmatpush2.xpose.msra.mxu0 0.0
    %1421 = vmatprep.subr.mxu0 0.0
    %1422 = vmatpush2.xpose.msra.mxu0 0.0
    %1423 = vmatprep.subr.mxu0 0.0
    %1424 = vmatpush2.xpose.msra.mxu0 0.0
    %1425 = vmatprep.subr.mxu0 0.0
    %1426 = vmatpush2.xpose.msra.mxu0 0.0
    %1427 = vmatprep.subr.mxu0 0.0
    %1428 = vmatpush2.xpose.msra.mxu0 0.0
    %1429 = vmatprep.subr.mxu0 0.0
    %1430 = vmatpush2.xpose.msra.mxu0 0.0
    %1431 = vmatprep.subr.mxu0 0.0
    %1432 = vmatpush2.xpose.msra.mxu0 0.0
    %1433 = vmatprep.subr.mxu0 0.0
    %1434 = vmatpush2.xpose.msra.mxu0 0.0
    %1435 = vmatprep.subr.mxu0 0.0
    %1436 = vmatpush2.xpose.msra.mxu0 0.0
    %1437 = vmatprep.subr.mxu0 0.0
    %1438 = vmatpush2.xpose.msra.mxu0 0.0
    %1439 = vmatprep.subr.mxu0 0.0
    %1440 = vmatpush2.xpose.msra.mxu0 0.0
    %1441 = vmatprep.subr.mxu0 0.0
    %1442 = vmatpush2.xpose.msra.mxu0 0.0
    %1443 = vmatprep.subr.mxu0 0.0
    %1444 = vmatpush2.xpose.msra.mxu0 0.0
    %1445 = vmatprep.subr.mxu0 0.0
    %1446 = vmatpush2.xpose.msra.mxu0 0.0
    %1447 = vmatprep.subr.mxu0 0.0
    %1448 = vmatpush2.xpose.msra.mxu0 0.0
    %1449 = vmatprep.mubr.f32.mxu0 0.0
    %1450 = vmatmul.mubr.f32.gmra.mxu0 %v1381
    %v1451 = vpop.f32.mrf.mxu0
    %v1452 = vadd.f32 0.0, %v1451
    %v1453 = vpop.f32.mrf.mxu0
    %1454 = vdwg.mxu0
    %1455 = vrot.lane.b32.xlu0 %v712, 112
    %v1456 = vpop.permute.xlu0 %1455
    %1457 = vrot.lane.b32.xlu0 %v712, 80
    %v1458 = vpop.permute.xlu0 %1457
    %v1459 = vsel %vm540, %v1456, 0
    %v1461 = vsel %vm540, %v1458, 0
    %1463 = vmatprep.subr.mxu0 0.0
    %1464 = vmatpush1.xpose.msra.mxu0 0.0
    %1465 = vmatprep.subr.mxu0 0.0
    %1466 = vmatpush1.xpose.msra.mxu0 0.0
    %1467 = vmatprep.subr.mxu0 0.0
    %1468 = vmatpush1.xpose.msra.mxu0 0.0
    %1469 = vmatprep.subr.mxu0 0.0
    %1470 = vmatpush1.xpose.msra.mxu0 0.0
    %1471 = vmatprep.subr.mxu0 0.0
    %1472 = vmatpush1.xpose.msra.mxu0 0.0
    %1473 = vmatprep.subr.mxu0 0.0
    %1474 = vmatpush1.xpose.msra.mxu0 0.0
    %1475 = vmatprep.subr.mxu0 0.0
    %1476 = vmatpush1.xpose.msra.mxu0 0.0
    %1477 = vmatprep.subr.mxu0 0.0
    %1478 = vmatpush1.xpose.msra.mxu0 0.0
    %1479 = vmatprep.subr.mxu0 0.0
    %1480 = vmatpush1.xpose.msra.mxu0 0.0
    %1481 = vmatprep.subr.mxu0 0.0
    %1482 = vmatpush1.xpose.msra.mxu0 0.0
    %1483 = vmatprep.subr.mxu0 0.0
    %1484 = vmatpush1.xpose.msra.mxu0 0.0
    %1485 = vmatprep.subr.mxu0 0.0
    %1486 = vmatpush1.xpose.msra.mxu0 0.0
    %1487 = vmatprep.subr.mxu0 0.0
    %1488 = vmatpush1.xpose.msra.mxu0 0.0
    %1489 = vmatprep.subr.mxu0 0.0
    %1490 = vmatpush1.xpose.msra.mxu0 0.0
    %1491 = vmatprep.subr.mxu0 0.0
    %1492 = vmatpush1.xpose.msra.mxu0 0.0
    %1493 = vmatprep.subr.mxu0 0.0
    %1494 = vmatpush1.xpose.msra.mxu0 %v1461
    %1495 = vmatprep.subr.mxu0 0.0
    %1496 = vmatpush2.xpose.msra.mxu0 0.0
    %1497 = vmatprep.subr.mxu0 0.0
    %1498 = vmatpush2.xpose.msra.mxu0 0.0
    %1499 = vmatprep.subr.mxu0 0.0
    %1500 = vmatpush2.xpose.msra.mxu0 0.0
    %1501 = vmatprep.subr.mxu0 0.0
    %1502 = vmatpush2.xpose.msra.mxu0 0.0
    %1503 = vmatprep.subr.mxu0 0.0
    %1504 = vmatpush2.xpose.msra.mxu0 0.0
    %1505 = vmatprep.subr.mxu0 0.0
    %1506 = vmatpush2.xpose.msra.mxu0 0.0
    %1507 = vmatprep.subr.mxu0 0.0
    %1508 = vmatpush2.xpose.msra.mxu0 0.0
    %1509 = vmatprep.subr.mxu0 0.0
    %1510 = vmatpush2.xpose.msra.mxu0 0.0
    %1511 = vmatprep.subr.mxu0 0.0
    %1512 = vmatpush2.xpose.msra.mxu0 0.0
    %1513 = vmatprep.subr.mxu0 0.0
    %1514 = vmatpush2.xpose.msra.mxu0 0.0
    %1515 = vmatprep.subr.mxu0 0.0
    %1516 = vmatpush2.xpose.msra.mxu0 0.0
    %1517 = vmatprep.subr.mxu0 0.0
    %1518 = vmatpush2.xpose.msra.mxu0 0.0
    %1519 = vmatprep.subr.mxu0 0.0
    %1520 = vmatpush2.xpose.msra.mxu0 0.0
    %1521 = vmatprep.subr.mxu0 0.0
    %1522 = vmatpush2.xpose.msra.mxu0 0.0
    %1523 = vmatprep.subr.mxu0 0.0
    %1524 = vmatpush2.xpose.msra.mxu0 0.0
    %1525 = vmatprep.subr.mxu0 0.0
    %1526 = vmatpush2.xpose.msra.mxu0 0.0
    %1527 = vmatprep.mubr.f32.mxu0 0.0
    %1528 = vmatmul.mubr.f32.gmra.mxu0 %v1459
    %v1529 = vpop.f32.mrf.mxu0
    %v1530 = vadd.f32 0.0, %v1529
    %v1531 = vpop.f32.mrf.mxu0
    %1532 = vdwg.mxu0
    %v1533 = vmul.f32 %v1452, 0.35355338
    %v1534 = vmul.f32 %v1530, 0.35355338
    %v1535 = vsel %vm540, %v1533, -inf
    %1536 = vmax.xlane.f32.xlu0 %v1535
    %v1537 = vpop.xlane.xlu0 %1536
    %v1538 = vsel %vm540, %v1534, -inf
    %1539 = vmax.xlane.f32.xlu0 %v1538
    %v1540 = vpop.xlane.xlu0 %1539
    %v1541 = vsub.f32 %v1533, %v1537
    %v1542 = vsub.f32 %v1534, %v1540
    %v1543 = vmul.f32 %v1541, 1.442695
    %v1544 = vpow.pop %v1543
    %v1545 = vmul.f32 %v1542, 1.442695
    %v1546 = vpow.pop %v1545
    %v1547 = vsel %vm540, %v1544, 0.0
    %1548 = vadd.xlane.f32.xlu0 %v1547
    %v1549 = vpop.xlane.xlu0 %1548
    %v1550 = vsel %vm540, %v1546, 0.0
    %1551 = vadd.xlane.f32.xlu0 %v1550
    %v1552 = vpop.xlane.xlu0 %1551
    %v1553 = vrcp.pop %v1549
    %v1554 = vrcp.pop %v1552
    %v1555 = vmul.f32 %v1544, %v1553
    %v1556 = vmul.f32 %v1546, %v1554
    %1557 = vrot.lane.b32.xlu0 %v707, 48
    %v1558 = vpop.permute.xlu0 %1557
    %v1561 = vsel %vm540, %v1555, 0
    %1563 = vmatprep.subr.mxu0 0.0
    %1564 = vmatpush1.msra.mxu0 0.0
    %1565 = vmatprep.subr.mxu0 0.0
    %1566 = vmatpush1.msra.mxu0 0.0
    %1567 = vmatprep.subr.mxu0 0.0
    %1568 = vmatpush1.msra.mxu0 0.0
    %1569 = vmatprep.subr.mxu0 0.0
    %1570 = vmatpush1.msra.mxu0 0.0
    %1571 = vmatprep.subr.mxu0 0.0
    %1572 = vmatpush1.msra.mxu0 0.0
    %1573 = vmatprep.subr.mxu0 0.0
    %1574 = vmatpush1.msra.mxu0 0.0
    %1575 = vmatprep.subr.mxu0 0.0
    %1576 = vmatpush1.msra.mxu0 0.0
    %1577 = vmatprep.subr.mxu0 0.0
    %1578 = vmatpush1.msra.mxu0 0.0
    %1579 = vmatprep.subr.mxu0 0.0
    %1580 = vmatpush1.msra.mxu0 0.0
    %1581 = vmatprep.subr.mxu0 0.0
    %1582 = vmatpush1.msra.mxu0 0.0
    %1583 = vmatprep.subr.mxu0 0.0
    %1584 = vmatpush1.msra.mxu0 0.0
    %1585 = vmatprep.subr.mxu0 0.0
    %1586 = vmatpush1.msra.mxu0 0.0
    %1587 = vmatprep.subr.mxu0 0.0
    %1588 = vmatpush1.msra.mxu0 0.0
    %1589 = vmatprep.subr.mxu0 0.0
    %1590 = vmatpush1.msra.mxu0 0.0
    %1591 = vmatprep.subr.mxu0 0.0
    %1592 = vmatpush1.msra.mxu0 0.0
    %1593 = vmatprep.subr.mxu0 0.0
    %1594 = vmatpush1.msra.mxu0 %v1558
    %1595 = vmatprep.subr.mxu0 0.0
    %1596 = vmatpush2.msra.mxu0 0.0
    %1597 = vmatprep.subr.mxu0 0.0
    %1598 = vmatpush2.msra.mxu0 0.0
    %1599 = vmatprep.subr.mxu0 0.0
    %1600 = vmatpush2.msra.mxu0 0.0
    %1601 = vmatprep.subr.mxu0 0.0
    %1602 = vmatpush2.msra.mxu0 0.0
    %1603 = vmatprep.subr.mxu0 0.0
    %1604 = vmatpush2.msra.mxu0 0.0
    %1605 = vmatprep.subr.mxu0 0.0
    %1606 = vmatpush2.msra.mxu0 0.0
    %1607 = vmatprep.subr.mxu0 0.0
    %1608 = vmatpush2.msra.mxu0 0.0
    %1609 = vmatprep.subr.mxu0 0.0
    %1610 = vmatpush2.msra.mxu0 0.0
    %1611 = vmatprep.subr.mxu0 0.0
    %1612 = vmatpush2.msra.mxu0 0.0
    %1613 = vmatprep.subr.mxu0 0.0
    %1614 = vmatpush2.msra.mxu0 0.0
    %1615 = vmatprep.subr.mxu0 0.0
    %1616 = vmatpush2.msra.mxu0 0.0
    %1617 = vmatprep.subr.mxu0 0.0
    %1618 = vmatpush2.msra.mxu0 0.0
    %1619 = vmatprep.subr.mxu0 0.0
    %1620 = vmatpush2.msra.mxu0 0.0
    %1621 = vmatprep.subr.mxu0 0.0
    %1622 = vmatpush2.msra.mxu0 0.0
    %1623 = vmatprep.subr.mxu0 0.0
    %1624 = vmatpush2.msra.mxu0 0.0
    %1625 = vmatprep.subr.mxu0 0.0
    %1626 = vmatpush2.msra.mxu0 0.0
    %1627 = vmatprep.mubr.f32.mxu0 0.0
    %1628 = vmatmul.mubr.f32.gmra.mxu0 %v1561
    %v1629 = vpop.f32.mrf.mxu0
    %v1630 = vadd.f32 0.0, %v1629
    %v1631 = vpop.f32.mrf.mxu0
    %1632 = vdwg.mxu0
    %1633 = vrot.lane.b32.xlu0 %v712, 48
    %v1634 = vpop.permute.xlu0 %1633
    %v1637 = vsel %vm540, %v1556, 0
    %1639 = vmatprep.subr.mxu0 0.0
    %1640 = vmatpush1.msra.mxu0 0.0
    %1641 = vmatprep.subr.mxu0 0.0
    %1642 = vmatpush1.msra.mxu0 0.0
    %1643 = vmatprep.subr.mxu0 0.0
    %1644 = vmatpush1.msra.mxu0 0.0
    %1645 = vmatprep.subr.mxu0 0.0
    %1646 = vmatpush1.msra.mxu0 0.0
    %1647 = vmatprep.subr.mxu0 0.0
    %1648 = vmatpush1.msra.mxu0 0.0
    %1649 = vmatprep.subr.mxu0 0.0
    %1650 = vmatpush1.msra.mxu0 0.0
    %1651 = vmatprep.subr.mxu0 0.0
    %1652 = vmatpush1.msra.mxu0 0.0
    %1653 = vmatprep.subr.mxu0 0.0
    %1654 = vmatpush1.msra.mxu0 0.0
    %1655 = vmatprep.subr.mxu0 0.0
    %1656 = vmatpush1.msra.mxu0 0.0
    %1657 = vmatprep.subr.mxu0 0.0
    %1658 = vmatpush1.msra.mxu0 0.0
    %1659 = vmatprep.subr.mxu0 0.0
    %1660 = vmatpush1.msra.mxu0 0.0
    %1661 = vmatprep.subr.mxu0 0.0
    %1662 = vmatpush1.msra.mxu0 0.0
    %1663 = vmatprep.subr.mxu0 0.0
    %1664 = vmatpush1.msra.mxu0 0.0
    %1665 = vmatprep.subr.mxu0 0.0
    %1666 = vmatpush1.msra.mxu0 0.0
    %1667 = vmatprep.subr.mxu0 0.0
    %1668 = vmatpush1.msra.mxu0 0.0
    %1669 = vmatprep.subr.mxu0 0.0
    %1670 = vmatpush1.msra.mxu0 %v1634
    %1671 = vmatprep.subr.mxu0 0.0
    %1672 = vmatpush2.msra.mxu0 0.0
    %1673 = vmatprep.subr.mxu0 0.0
    %1674 = vmatpush2.msra.mxu0 0.0
    %1675 = vmatprep.subr.mxu0 0.0
    %1676 = vmatpush2.msra.mxu0 0.0
    %1677 = vmatprep.subr.mxu0 0.0
    %1678 = vmatpush2.msra.mxu0 0.0
    %1679 = vmatprep.subr.mxu0 0.0
    %1680 = vmatpush2.msra.mxu0 0.0
    %1681 = vmatprep.subr.mxu0 0.0
    %1682 = vmatpush2.msra.mxu0 0.0
    %1683 = vmatprep.subr.mxu0 0.0
    %1684 = vmatpush2.msra.mxu0 0.0
    %1685 = vmatprep.subr.mxu0 0.0
    %1686 = vmatpush2.msra.mxu0 0.0
    %1687 = vmatprep.subr.mxu0 0.0
    %1688 = vmatpush2.msra.mxu0 0.0
    %1689 = vmatprep.subr.mxu0 0.0
    %1690 = vmatpush2.msra.mxu0 0.0
    %1691 = vmatprep.subr.mxu0 0.0
    %1692 = vmatpush2.msra.mxu0 0.0
    %1693 = vmatprep.subr.mxu0 0.0
    %1694 = vmatpush2.msra.mxu0 0.0
    %1695 = vmatprep.subr.mxu0 0.0
    %1696 = vmatpush2.msra.mxu0 0.0
    %1697 = vmatprep.subr.mxu0 0.0
    %1698 = vmatpush2.msra.mxu0 0.0
    %1699 = vmatprep.subr.mxu0 0.0
    %1700 = vmatpush2.msra.mxu0 0.0
    %1701 = vmatprep.subr.mxu0 0.0
    %1702 = vmatpush2.msra.mxu0 0.0
    %1703 = vmatprep.mubr.f32.mxu0 0.0
    %1704 = vmatmul.mubr.f32.gmra.mxu0 %v1637
    %v1705 = vpop.f32.mrf.mxu0
    %v1706 = vadd.f32 0.0, %v1705
    %v1707 = vpop.f32.mrf.mxu0
    %1708 = vdwg.mxu0
    %1709 = vrot.lane.b32.xlu0 %v707, 104
    %v1710 = vpop.permute.xlu0 %1709
    %1711 = vrot.lane.b32.xlu0 %v707, 72
    %v1712 = vpop.permute.xlu0 %1711
    %v1713 = vsel %vm540, %v1710, 0
    %v1715 = vsel %vm540, %v1712, 0
    %1717 = vmatprep.subr.mxu0 0.0
    %1718 = vmatpush1.xpose.msra.mxu0 0.0
    %1719 = vmatprep.subr.mxu0 0.0
    %1720 = vmatpush1.xpose.msra.mxu0 0.0
    %1721 = vmatprep.subr.mxu0 0.0
    %1722 = vmatpush1.xpose.msra.mxu0 0.0
    %1723 = vmatprep.subr.mxu0 0.0
    %1724 = vmatpush1.xpose.msra.mxu0 0.0
    %1725 = vmatprep.subr.mxu0 0.0
    %1726 = vmatpush1.xpose.msra.mxu0 0.0
    %1727 = vmatprep.subr.mxu0 0.0
    %1728 = vmatpush1.xpose.msra.mxu0 0.0
    %1729 = vmatprep.subr.mxu0 0.0
    %1730 = vmatpush1.xpose.msra.mxu0 0.0
    %1731 = vmatprep.subr.mxu0 0.0
    %1732 = vmatpush1.xpose.msra.mxu0 0.0
    %1733 = vmatprep.subr.mxu0 0.0
    %1734 = vmatpush1.xpose.msra.mxu0 0.0
    %1735 = vmatprep.subr.mxu0 0.0
    %1736 = vmatpush1.xpose.msra.mxu0 0.0
    %1737 = vmatprep.subr.mxu0 0.0
    %1738 = vmatpush1.xpose.msra.mxu0 0.0
    %1739 = vmatprep.subr.mxu0 0.0
    %1740 = vmatpush1.xpose.msra.mxu0 0.0
    %1741 = vmatprep.subr.mxu0 0.0
    %1742 = vmatpush1.xpose.msra.mxu0 0.0
    %1743 = vmatprep.subr.mxu0 0.0
    %1744 = vmatpush1.xpose.msra.mxu0 0.0
    %1745 = vmatprep.subr.mxu0 0.0
    %1746 = vmatpush1.xpose.msra.mxu0 0.0
    %1747 = vmatprep.subr.mxu0 0.0
    %1748 = vmatpush1.xpose.msra.mxu0 %v1715
    %1749 = vmatprep.subr.mxu0 0.0
    %1750 = vmatpush2.xpose.msra.mxu0 0.0
    %1751 = vmatprep.subr.mxu0 0.0
    %1752 = vmatpush2.xpose.msra.mxu0 0.0
    %1753 = vmatprep.subr.mxu0 0.0
    %1754 = vmatpush2.xpose.msra.mxu0 0.0
    %1755 = vmatprep.subr.mxu0 0.0
    %1756 = vmatpush2.xpose.msra.mxu0 0.0
    %1757 = vmatprep.subr.mxu0 0.0
    %1758 = vmatpush2.xpose.msra.mxu0 0.0
    %1759 = vmatprep.subr.mxu0 0.0
    %1760 = vmatpush2.xpose.msra.mxu0 0.0
    %1761 = vmatprep.subr.mxu0 0.0
    %1762 = vmatpush2.xpose.msra.mxu0 0.0
    %1763 = vmatprep.subr.mxu0 0.0
    %1764 = vmatpush2.xpose.msra.mxu0 0.0
    %1765 = vmatprep.subr.mxu0 0.0
    %1766 = vmatpush2.xpose.msra.mxu0 0.0
    %1767 = vmatprep.subr.mxu0 0.0
    %1768 = vmatpush2.xpose.msra.mxu0 0.0
    %1769 = vmatprep.subr.mxu0 0.0
    %1770 = vmatpush2.xpose.msra.mxu0 0.0
    %1771 = vmatprep.subr.mxu0 0.0
    %1772 = vmatpush2.xpose.msra.mxu0 0.0
    %1773 = vmatprep.subr.mxu0 0.0
    %1774 = vmatpush2.xpose.msra.mxu0 0.0
    %1775 = vmatprep.subr.mxu0 0.0
    %1776 = vmatpush2.xpose.msra.mxu0 0.0
    %1777 = vmatprep.subr.mxu0 0.0
    %1778 = vmatpush2.xpose.msra.mxu0 0.0
    %1779 = vmatprep.subr.mxu0 0.0
    %1780 = vmatpush2.xpose.msra.mxu0 0.0
    %1781 = vmatprep.mubr.f32.mxu0 0.0
    %1782 = vmatmul.mubr.f32.gmra.mxu0 %v1713
    %v1783 = vpop.f32.mrf.mxu0
    %v1784 = vadd.f32 0.0, %v1783
    %v1785 = vpop.f32.mrf.mxu0
    %1786 = vdwg.mxu0
    %1787 = vrot.lane.b32.xlu0 %v712, 104
    %v1788 = vpop.permute.xlu0 %1787
    %1789 = vrot.lane.b32.xlu0 %v712, 72
    %v1790 = vpop.permute.xlu0 %1789
    %v1791 = vsel %vm540, %v1788, 0
    %v1793 = vsel %vm540, %v1790, 0
    %1795 = vmatprep.subr.mxu0 0.0
    %1796 = vmatpush1.xpose.msra.mxu0 0.0
    %1797 = vmatprep.subr.mxu0 0.0
    %1798 = vmatpush1.xpose.msra.mxu0 0.0
    %1799 = vmatprep.subr.mxu0 0.0
    %1800 = vmatpush1.xpose.msra.mxu0 0.0
    %1801 = vmatprep.subr.mxu0 0.0
    %1802 = vmatpush1.xpose.msra.mxu0 0.0
    %1803 = vmatprep.subr.mxu0 0.0
    %1804 = vmatpush1.xpose.msra.mxu0 0.0
    %1805 = vmatprep.subr.mxu0 0.0
    %1806 = vmatpush1.xpose.msra.mxu0 0.0
    %1807 = vmatprep.subr.mxu0 0.0
    %1808 = vmatpush1.xpose.msra.mxu0 0.0
    %1809 = vmatprep.subr.mxu0 0.0
    %1810 = vmatpush1.xpose.msra.mxu0 0.0
    %1811 = vmatprep.subr.mxu0 0.0
    %1812 = vmatpush1.xpose.msra.mxu0 0.0
    %1813 = vmatprep.subr.mxu0 0.0
    %1814 = vmatpush1.xpose.msra.mxu0 0.0
    %1815 = vmatprep.subr.mxu0 0.0
    %1816 = vmatpush1.xpose.msra.mxu0 0.0
    %1817 = vmatprep.subr.mxu0 0.0
    %1818 = vmatpush1.xpose.msra.mxu0 0.0
    %1819 = vmatprep.subr.mxu0 0.0
    %1820 = vmatpush1.xpose.msra.mxu0 0.0
    %1821 = vmatprep.subr.mxu0 0.0
    %1822 = vmatpush1.xpose.msra.mxu0 0.0
    %1823 = vmatprep.subr.mxu0 0.0
    %1824 = vmatpush1.xpose.msra.mxu0 0.0
    %1825 = vmatprep.subr.mxu0 0.0
    %1826 = vmatpush1.xpose.msra.mxu0 %v1793
    %1827 = vmatprep.subr.mxu0 0.0
    %1828 = vmatpush2.xpose.msra.mxu0 0.0
    %1829 = vmatprep.subr.mxu0 0.0
    %1830 = vmatpush2.xpose.msra.mxu0 0.0
    %1831 = vmatprep.subr.mxu0 0.0
    %1832 = vmatpush2.xpose.msra.mxu0 0.0
    %1833 = vmatprep.subr.mxu0 0.0
    %1834 = vmatpush2.xpose.msra.mxu0 0.0
    %1835 = vmatprep.subr.mxu0 0.0
    %1836 = vmatpush2.xpose.msra.mxu0 0.0
    %1837 = vmatprep.subr.mxu0 0.0
    %1838 = vmatpush2.xpose.msra.mxu0 0.0
    %1839 = vmatprep.subr.mxu0 0.0
    %1840 = vmatpush2.xpose.msra.mxu0 0.0
    %1841 = vmatprep.subr.mxu0 0.0
    %1842 = vmatpush2.xpose.msra.mxu0 0.0
    %1843 = vmatprep.subr.mxu0 0.0
    %1844 = vmatpush2.xpose.msra.mxu0 0.0
    %1845 = vmatprep.subr.mxu0 0.0
    %1846 = vmatpush2.xpose.msra.mxu0 0.0
    %1847 = vmatprep.subr.mxu0 0.0
    %1848 = vmatpush2.xpose.msra.mxu0 0.0
    %1849 = vmatprep.subr.mxu0 0.0
    %1850 = vmatpush2.xpose.msra.mxu0 0.0
    %1851 = vmatprep.subr.mxu0 0.0
    %1852 = vmatpush2.xpose.msra.mxu0 0.0
    %1853 = vmatprep.subr.mxu0 0.0
    %1854 = vmatpush2.xpose.msra.mxu0 0.0
    %1855 = vmatprep.subr.mxu0 0.0
    %1856 = vmatpush2.xpose.msra.mxu0 0.0
    %1857 = vmatprep.subr.mxu0 0.0
    %1858 = vmatpush2.xpose.msra.mxu0 0.0
    %1859 = vmatprep.mubr.f32.mxu0 0.0
    %1860 = vmatmul.mubr.f32.gmra.mxu0 %v1791
    %v1861 = vpop.f32.mrf.mxu0
    %v1862 = vadd.f32 0.0, %v1861
    %v1863 = vpop.f32.mrf.mxu0
    %1864 = vdwg.mxu0
    %v1865 = vmul.f32 %v1784, 0.35355338
    %v1866 = vmul.f32 %v1862, 0.35355338
    %v1867 = vsel %vm540, %v1865, -inf
    %1868 = vmax.xlane.f32.xlu0 %v1867
    %v1869 = vpop.xlane.xlu0 %1868
    %v1870 = vsel %vm540, %v1866, -inf
    %1871 = vmax.xlane.f32.xlu0 %v1870
    %v1872 = vpop.xlane.xlu0 %1871
    %v1873 = vsub.f32 %v1865, %v1869
    %v1874 = vsub.f32 %v1866, %v1872
    %v1875 = vmul.f32 %v1873, 1.442695
    %v1876 = vpow.pop %v1875
    %v1877 = vmul.f32 %v1874, 1.442695
    %v1878 = vpow.pop %v1877
    %v1879 = vsel %vm540, %v1876, 0.0
    %1880 = vadd.xlane.f32.xlu0 %v1879
    %v1881 = vpop.xlane.xlu0 %1880
    %v1882 = vsel %vm540, %v1878, 0.0
    %1883 = vadd.xlane.f32.xlu0 %v1882
    %v1884 = vpop.xlane.xlu0 %1883
    %v1885 = vrcp.pop %v1881
    %v1886 = vrcp.pop %v1884
    %v1887 = vmul.f32 %v1876, %v1885
    %v1888 = vmul.f32 %v1878, %v1886
    %1889 = vrot.lane.b32.xlu0 %v707, 40
    %v1890 = vpop.permute.xlu0 %1889
    %v1893 = vsel %vm540, %v1887, 0
    %1895 = vmatprep.subr.mxu0 0.0
    %1896 = vmatpush1.msra.mxu0 0.0
    %1897 = vmatprep.subr.mxu0 0.0
    %1898 = vmatpush1.msra.mxu0 0.0
    %1899 = vmatprep.subr.mxu0 0.0
    %1900 = vmatpush1.msra.mxu0 0.0
    %1901 = vmatprep.subr.mxu0 0.0
    %1902 = vmatpush1.msra.mxu0 0.0
    %1903 = vmatprep.subr.mxu0 0.0
    %1904 = vmatpush1.msra.mxu0 0.0
    %1905 = vmatprep.subr.mxu0 0.0
    %1906 = vmatpush1.msra.mxu0 0.0
    %1907 = vmatprep.subr.mxu0 0.0
    %1908 = vmatpush1.msra.mxu0 0.0
    %1909 = vmatprep.subr.mxu0 0.0
    %1910 = vmatpush1.msra.mxu0 0.0
    %1911 = vmatprep.subr.mxu0 0.0
    %1912 = vmatpush1.msra.mxu0 0.0
    %1913 = vmatprep.subr.mxu0 0.0
    %1914 = vmatpush1.msra.mxu0 0.0
    %1915 = vmatprep.subr.mxu0 0.0
    %1916 = vmatpush1.msra.mxu0 0.0
    %1917 = vmatprep.subr.mxu0 0.0
    %1918 = vmatpush1.msra.mxu0 0.0
    %1919 = vmatprep.subr.mxu0 0.0
    %1920 = vmatpush1.msra.mxu0 0.0
    %1921 = vmatprep.subr.mxu0 0.0
    %1922 = vmatpush1.msra.mxu0 0.0
    %1923 = vmatprep.subr.mxu0 0.0
    %1924 = vmatpush1.msra.mxu0 0.0
    %1925 = vmatprep.subr.mxu0 0.0
    %1926 = vmatpush1.msra.mxu0 %v1890
    %1927 = vmatprep.subr.mxu0 0.0
    %1928 = vmatpush2.msra.mxu0 0.0
    %1929 = vmatprep.subr.mxu0 0.0
    %1930 = vmatpush2.msra.mxu0 0.0
    %1931 = vmatprep.subr.mxu0 0.0
    %1932 = vmatpush2.msra.mxu0 0.0
    %1933 = vmatprep.subr.mxu0 0.0
    %1934 = vmatpush2.msra.mxu0 0.0
    %1935 = vmatprep.subr.mxu0 0.0
    %1936 = vmatpush2.msra.mxu0 0.0
    %1937 = vmatprep.subr.mxu0 0.0
    %1938 = vmatpush2.msra.mxu0 0.0
    %1939 = vmatprep.subr.mxu0 0.0
    %1940 = vmatpush2.msra.mxu0 0.0
    %1941 = vmatprep.subr.mxu0 0.0
    %1942 = vmatpush2.msra.mxu0 0.0
    %1943 = vmatprep.subr.mxu0 0.0
    %1944 = vmatpush2.msra.mxu0 0.0
    %1945 = vmatprep.subr.mxu0 0.0
    %1946 = vmatpush2.msra.mxu0 0.0
    %1947 = vmatprep.subr.mxu0 0.0
    %1948 = vmatpush2.msra.mxu0 0.0
    %1949 = vmatprep.subr.mxu0 0.0
    %1950 = vmatpush2.msra.mxu0 0.0
    %1951 = vmatprep.subr.mxu0 0.0
    %1952 = vmatpush2.msra.mxu0 0.0
    %1953 = vmatprep.subr.mxu0 0.0
    %1954 = vmatpush2.msra.mxu0 0.0
    %1955 = vmatprep.subr.mxu0 0.0
    %1956 = vmatpush2.msra.mxu0 0.0
    %1957 = vmatprep.subr.mxu0 0.0
    %1958 = vmatpush2.msra.mxu0 0.0
    %1959 = vmatprep.mubr.f32.mxu0 0.0
    %1960 = vmatmul.mubr.f32.gmra.mxu0 %v1893
    %v1961 = vpop.f32.mrf.mxu0
    %v1962 = vadd.f32 0.0, %v1961
    %v1963 = vpop.f32.mrf.mxu0
    %1964 = vdwg.mxu0
    %1965 = vrot.lane.b32.xlu0 %v712, 40
    %v1966 = vpop.permute.xlu0 %1965
    %v1969 = vsel %vm540, %v1888, 0
    %1971 = vmatprep.subr.mxu0 0.0
    %1972 = vmatpush1.msra.mxu0 0.0
    %1973 = vmatprep.subr.mxu0 0.0
    %1974 = vmatpush1.msra.mxu0 0.0
    %1975 = vmatprep.subr.mxu0 0.0
    %1976 = vmatpush1.msra.mxu0 0.0
    %1977 = vmatprep.subr.mxu0 0.0
    %1978 = vmatpush1.msra.mxu0 0.0
    %1979 = vmatprep.subr.mxu0 0.0
    %1980 = vmatpush1.msra.mxu0 0.0
    %1981 = vmatprep.subr.mxu0 0.0
    %1982 = vmatpush1.msra.mxu0 0.0
    %1983 = vmatprep.subr.mxu0 0.0
    %1984 = vmatpush1.msra.mxu0 0.0
    %1985 = vmatprep.subr.mxu0 0.0
    %1986 = vmatpush1.msra.mxu0 0.0
    %1987 = vmatprep.subr.mxu0 0.0
    %1988 = vmatpush1.msra.mxu0 0.0
    %1989 = vmatprep.subr.mxu0 0.0
    %1990 = vmatpush1.msra.mxu0 0.0
    %1991 = vmatprep.subr.mxu0 0.0
    %1992 = vmatpush1.msra.mxu0 0.0
    %1993 = vmatprep.subr.mxu0 0.0
    %1994 = vmatpush1.msra.mxu0 0.0
    %1995 = vmatprep.subr.mxu0 0.0
    %1996 = vmatpush1.msra.mxu0 0.0
    %1997 = vmatprep.subr.mxu0 0.0
    %1998 = vmatpush1.msra.mxu0 0.0
    %1999 = vmatprep.subr.mxu0 0.0
    %2000 = vmatpush1.msra.mxu0 0.0
    %2001 = vmatprep.subr.mxu0 0.0
    %2002 = vmatpush1.msra.mxu0 %v1966
    %2003 = vmatprep.subr.mxu0 0.0
    %2004 = vmatpush2.msra.mxu0 0.0
    %2005 = vmatprep.subr.mxu0 0.0
    %2006 = vmatpush2.msra.mxu0 0.0
    %2007 = vmatprep.subr.mxu0 0.0
    %2008 = vmatpush2.msra.mxu0 0.0
    %2009 = vmatprep.subr.mxu0 0.0
    %2010 = vmatpush2.msra.mxu0 0.0
    %2011 = vmatprep.subr.mxu0 0.0
    %2012 = vmatpush2.msra.mxu0 0.0
    %2013 = vmatprep.subr.mxu0 0.0
    %2014 = vmatpush2.msra.mxu0 0.0
    %2015 = vmatprep.subr.mxu0 0.0
    %2016 = vmatpush2.msra.mxu0 0.0
    %2017 = vmatprep.subr.mxu0 0.0
    %2018 = vmatpush2.msra.mxu0 0.0
    %2019 = vmatprep.subr.mxu0 0.0
    %2020 = vmatpush2.msra.mxu0 0.0
    %2021 = vmatprep.subr.mxu0 0.0
    %2022 = vmatpush2.msra.mxu0 0.0
    %2023 = vmatprep.subr.mxu0 0.0
    %2024 = vmatpush2.msra.mxu0 0.0
    %2025 = vmatprep.subr.mxu0 0.0
    %2026 = vmatpush2.msra.mxu0 0.0
    %2027 = vmatprep.subr.mxu0 0.0
    %2028 = vmatpush2.msra.mxu0 0.0
    %2029 = vmatprep.subr.mxu0 0.0
    %2030 = vmatpush2.msra.mxu0 0.0
    %2031 = vmatprep.subr.mxu0 0.0
    %2032 = vmatpush2.msra.mxu0 0.0
    %2033 = vmatprep.subr.mxu0 0.0
    %2034 = vmatpush2.msra.mxu0 0.0
    %2035 = vmatprep.mubr.f32.mxu0 0.0
    %2036 = vmatmul.mubr.f32.gmra.mxu0 %v1969
    %v2037 = vpop.f32.mrf.mxu0
    %v2038 = vadd.f32 0.0, %v2037
    %v2039 = vpop.f32.mrf.mxu0
    %2040 = vdwg.mxu0
    %2043 = vrot.lane.b32.xlu0 %v1298, 8
    %v2044 = vpop.permute.xlu0 %2043
    %2045 = vrot.lane.b32.xlu0 %v1374, 8
    %v2046 = vpop.permute.xlu0 %2045
    %2051 = vrot.lane.b32.xlu0 %v1630, 16
    %v2052 = vpop.permute.xlu0 %2051
    %2053 = vrot.lane.b32.xlu0 %v1706, 16
    %v2054 = vpop.permute.xlu0 %2053
    %2059 = vrot.lane.b32.xlu0 %v1962, 24
    %v2060 = vpop.permute.xlu0 %2059
    %2061 = vrot.lane.b32.xlu0 %v2038, 24
    %v2062 = vpop.permute.xlu0 %2061
    %v2065 = vsel %vm540, %v966, %v2044
    %v2066 = vsel %vm540, %v1042, %v2046
    %vm2067 = vcmask 130048
    %v2068 = vsel %vm2067, %v2065, %v2052
    %v2069 = vsel %vm2067, %v2066, %v2054
    %vm2070 = vcmask 195584
    %v2071 = vsel %vm2070, %v2068, %v2060
    %v2072 = vsel %vm2070, %v2069, %v2062
    %v2073 = vld [vmem:[%s17] sm:$0xff]
    %v2074 = vld [vmem:[%s17 + $0x8] sm:$0xff]
    %v2075 = vld [vmem:[%s17 + $0x10] sm:$0xff]
    %v2076 = vld [vmem:[%s17 + $0x18] sm:$0xff]
    %v2077 = vld [vmem:[#allocation11] sm:$0x1]
    %v2079 = vlaneseq
    %v2080 = vshrl.u32 %v2079, 7
    %v2081 = vsub.s32 0, %v2080
    %v2082 = vrot.slane %v2077, %v2081
    %v2085 = vsel %vm614, %v2071, 0
    %v2088 = vsel %vm614, %v2072, 0
    %2090 = vmatprep.subr.mxu0 0.0
    %2091 = vmatpush1.msra.mxu0 0.0
    %2092 = vmatprep.subr.mxu0 0.0
    %2093 = vmatpush1.msra.mxu0 0.0
    %2094 = vmatprep.subr.mxu0 0.0
    %2095 = vmatpush1.msra.mxu0 0.0
    %2096 = vmatprep.subr.mxu0 0.0
    %2097 = vmatpush1.msra.mxu0 0.0
    %2098 = vmatprep.subr.mxu0 0.0
    %2099 = vmatpush1.msra.mxu0 0.0
    %2100 = vmatprep.subr.mxu0 0.0
    %2101 = vmatpush1.msra.mxu0 0.0
    %2102 = vmatprep.subr.mxu0 0.0
    %2103 = vmatpush1.msra.mxu0 0.0
    %2104 = vmatprep.subr.mxu0 0.0
    %2105 = vmatpush1.msra.mxu0 0.0
    %2106 = vmatprep.subr.mxu0 0.0
    %2107 = vmatpush1.msra.mxu0 0.0
    %2108 = vmatprep.subr.mxu0 0.0
    %2109 = vmatpush1.msra.mxu0 0.0
    %2110 = vmatprep.subr.mxu0 0.0
    %2111 = vmatpush1.msra.mxu0 0.0
    %2112 = vmatprep.subr.mxu0 0.0
    %2113 = vmatpush1.msra.mxu0 0.0
    %2114 = vmatprep.subr.mxu0 0.0
    %2115 = vmatpush1.msra.mxu0 %v2076
    %2116 = vmatprep.subr.mxu0 0.0
    %2117 = vmatpush1.msra.mxu0 %v2075
    %2118 = vmatprep.subr.mxu0 0.0
    %2119 = vmatpush1.msra.mxu0 %v2074
    %2120 = vmatprep.subr.mxu0 0.0
    %2121 = vmatpush1.msra.mxu0 %v2073
    %2122 = vmatprep.subr.mxu0 0.0
    %2123 = vmatpush2.msra.mxu0 0.0
    %2124 = vmatprep.subr.mxu0 0.0
    %2125 = vmatpush2.msra.mxu0 0.0
    %2126 = vmatprep.subr.mxu0 0.0
    %2127 = vmatpush2.msra.mxu0 0.0
    %2128 = vmatprep.subr.mxu0 0.0
    %2129 = vmatpush2.msra.mxu0 0.0
    %2130 = vmatprep.subr.mxu0 0.0
    %2131 = vmatpush2.msra.mxu0 0.0
    %2132 = vmatprep.subr.mxu0 0.0
    %2133 = vmatpush2.msra.mxu0 0.0
    %2134 = vmatprep.subr.mxu0 0.0
    %2135 = vmatpush2.msra.mxu0 0.0
    %2136 = vmatprep.subr.mxu0 0.0
    %2137 = vmatpush2.msra.mxu0 0.0
    %2138 = vmatprep.subr.mxu0 0.0
    %2139 = vmatpush2.msra.mxu0 0.0
    %2140 = vmatprep.subr.mxu0 0.0
    %2141 = vmatpush2.msra.mxu0 0.0
    %2142 = vmatprep.subr.mxu0 0.0
    %2143 = vmatpush2.msra.mxu0 0.0
    %2144 = vmatprep.subr.mxu0 0.0
    %2145 = vmatpush2.msra.mxu0 0.0
    %2146 = vmatprep.subr.mxu0 0.0
    %2147 = vmatpush2.msra.mxu0 0.0
    %2148 = vmatprep.subr.mxu0 0.0
    %2149 = vmatpush2.msra.mxu0 0.0
    %2150 = vmatprep.subr.mxu0 0.0
    %2151 = vmatpush2.msra.mxu0 0.0
    %2152 = vmatprep.subr.mxu0 0.0
    %2153 = vmatpush2.msra.mxu0 0.0
    %2154 = vmatprep.mubr.f32.mxu0 0.0
    %2155 = vmatmul.mubr.f32.gmra.mxu0 %v2085
    %v2156 = vpop.f32.mrf.mxu0
    %v2157 = vadd.f32 %v2082, %v2156
    %v2158 = vpop.f32.mrf.mxu0
    %2159 = vmatprep.mubr.f32.mxu0 0.0
    %2160 = vmatmul.mubr.f32.gmra.mxu0 %v2088
    %v2161 = vpop.f32.mrf.mxu0
    %v2162 = vadd.f32 %v2082, %v2161
    %v2163 = vpop.f32.mrf.mxu0
    %2164 = vdwg.mxu0
    %v2165 = vadd.f32 %v523, %v2157
    %v2166 = vadd.f32 %v528, %v2162
    %v2167 = vld [vmem:[#allocation13] sm:$0x1]
    %v2168 = vld [vmem:[#allocation14] sm:$0x1]
    %v2169 = vsel %vm614, %v2165, 0.0
    %2170 = vadd.xlane.f32.xlu0 %v2169
    %v2171 = vpop.xlane.xlu0 %2170
    %v2172 = vsel %vm614, %v2166, 0.0
    %2173 = vadd.xlane.f32.xlu0 %v2172
    %v2174 = vpop.xlane.xlu0 %2173
    %v2175 = vrcp.pop 32.0
    %v2176 = vmul.f32 %v2171, %v2175
    %v2177 = vmul.f32 %v2174, %v2175
    %v2178 = vsub.f32 %v2165, %v2176
    %v2179 = vsub.f32 %v2166, %v2177
    %v2180 = vmul.f32 %v2178, %v2178
    %v2181 = vmul.f32 %v2179, %v2179
    %v2182 = vsel %vm614, %v2180, 0.0
    %2183 = vadd.xlane.f32.xlu0 %v2182
    %v2184 = vpop.xlane.xlu0 %2183
    %v2185 = vsel %vm614, %v2181, 0.0
    %2186 = vadd.xlane.f32.xlu0 %v2185
    %v2187 = vpop.xlane.xlu0 %2186
    %v2188 = vmul.f32 %v2184, %v2175
    %v2189 = vmul.f32 %v2187, %v2175
    %v2190 = vadd.f32 %v2188, 1e-05
    %v2191 = vadd.f32 %v2189, 1e-05
    %v2192 = vrsqrt.pop %v2190
    %v2193 = vrsqrt.pop %v2191
    %v2194 = vmul.f32 %v2178, %v2192
    %v2195 = vmul.f32 %v2179, %v2193
    %v2197 = vlaneseq
    %v2198 = vshrl.u32 %v2197, 7
    %v2199 = vsub.s32 0, %v2198
    %v2200 = vrot.slane %v2167, %v2199
    %v2202 = vmul.f32 %v2194, %v2200
    %v2203 = vmul.f32 %v2195, %v2200
    %v2205 = vlaneseq
    %v2206 = vshrl.u32 %v2205, 7
    %v2207 = vsub.s32 0, %v2206
    %v2208 = vrot.slane %v2168, %v2207
    %v2210 = vadd.f32 %v2202, %v2208
    %v2211 = vadd.f32 %v2203, %v2208
    %v2212 = vld [vmem:[%s25] sm:$0xff]
    %v2213 = vld [vmem:[%s25 + $0x8] sm:$0xff]
    %v2214 = vld [vmem:[%s25 + $0x10] sm:$0xff]
    %v2215 = vld [vmem:[%s25 + $0x18] sm:$0xff]
    %v2216 = vld [vmem:[#allocation16] sm:$0x1]
    %v2218 = vlaneseq
    %v2219 = vshrl.u32 %v2218, 7
    %v2220 = vsub.s32 0, %v2219
    %v2221 = vrot.slane %v2216, %v2220
    %v2224 = vsel %vm614, %v2210, 0
    %v2227 = vsel %vm614, %v2211, 0
    %2229 = vmatprep.subr.mxu0 0.0
    %2230 = vmatpush1.msra.mxu0 0.0
    %2231 = vmatprep.subr.mxu0 0.0
    %2232 = vmatpush1.msra.mxu0 0.0
    %2233 = vmatprep.subr.mxu0 0.0
    %2234 = vmatpush1.msra.mxu0 0.0
    %2235 = vmatprep.subr.mxu0 0.0
    %2236 = vmatpush1.msra.mxu0 0.0
    %2237 = vmatprep.subr.mxu0 0.0
    %2238 = vmatpush1.msra.mxu0 0.0
    %2239 = vmatprep.subr.mxu0 0.0
    %2240 = vmatpush1.msra.mxu0 0.0
    %2241 = vmatprep.subr.mxu0 0.0
    %2242 = vmatpush1.msra.mxu0 0.0
    %2243 = vmatprep.subr.mxu0 0.0
    %2244 = vmatpush1.msra.mxu0 0.0
    %2245 = vmatprep.subr.mxu0 0.0
    %2246 = vmatpush1.msra.mxu0 0.0
    %2247 = vmatprep.subr.mxu0 0.0
    %2248 = vmatpush1.msra.mxu0 0.0
    %2249 = vmatprep.subr.mxu0 0.0
    %2250 = vmatpush1.msra.mxu0 0.0
    %2251 = vmatprep.subr.mxu0 0.0
    %2252 = vmatpush1.msra.mxu0 0.0
    %2253 = vmatprep.subr.mxu0 0.0
    %2254 = vmatpush1.msra.mxu0 %v2215
    %2255 = vmatprep.subr.mxu0 0.0
    %2256 = vmatpush1.msra.mxu0 %v2214
    %2257 = vmatprep.subr.mxu0 0.0
    %2258 = vmatpush1.msra.mxu0 %v2213
    %2259 = vmatprep.subr.mxu0 0.0
    %2260 = vmatpush1.msra.mxu0 %v2212
    %2261 = vmatprep.subr.mxu0 0.0
    %2262 = vmatpush2.msra.mxu0 0.0
    %2263 = vmatprep.subr.mxu0 0.0
    %2264 = vmatpush2.msra.mxu0 0.0
    %2265 = vmatprep.subr.mxu0 0.0
    %2266 = vmatpush2.msra.mxu0 0.0
    %2267 = vmatprep.subr.mxu0 0.0
    %2268 = vmatpush2.msra.mxu0 0.0
    %2269 = vmatprep.subr.mxu0 0.0
    %2270 = vmatpush2.msra.mxu0 0.0
    %2271 = vmatprep.subr.mxu0 0.0
    %2272 = vmatpush2.msra.mxu0 0.0
    %2273 = vmatprep.subr.mxu0 0.0
    %2274 = vmatpush2.msra.mxu0 0.0
    %2275 = vmatprep.subr.mxu0 0.0
    %2276 = vmatpush2.msra.mxu0 0.0
    %2277 = vmatprep.subr.mxu0 0.0
    %2278 = vmatpush2.msra.mxu0 0.0
    %2279 = vmatprep.subr.mxu0 0.0
    %2280 = vmatpush2.msra.mxu0 0.0
    %2281 = vmatprep.subr.mxu0 0.0
    %2282 = vmatpush2.msra.mxu0 0.0
    %2283 = vmatprep.subr.mxu0 0.0
    %2284 = vmatpush2.msra.mxu0 0.0
    %2285 = vmatprep.subr.mxu0 0.0
    %2286 = vmatpush2.msra.mxu0 0.0
    %2287 = vmatprep.subr.mxu0 0.0
    %2288 = vmatpush2.msra.mxu0 0.0
    %2289 = vmatprep.subr.mxu0 0.0
    %2290 = vmatpush2.msra.mxu0 0.0
    %2291 = vmatprep.subr.mxu0 0.0
    %2292 = vmatpush2.msra.mxu0 0.0
    %2293 = vmatprep.mubr.f32.mxu0 0.0
    %2294 = vmatmul.mubr.f32.gmra.mxu0 %v2224
    %v2295 = vpop.f32.mrf.mxu0
    %v2296 = vadd.f32 %v2221, %v2295
    %v2297 = vpop.f32.mrf.mxu0
    %2298 = vmatprep.mubr.f32.mxu0 0.0
    %2299 = vmatmul.mubr.f32.gmra.mxu0 %v2227
    %v2300 = vpop.f32.mrf.mxu0
    %v2301 = vadd.f32 %v2221, %v2300
    %v2302 = vpop.f32.mrf.mxu0
    %2303 = vdwg.mxu0
    %v2304 = vmax.f32 %v2296, 0.0
    %v2305 = vmax.f32 %v2301, 0.0
    %v2306 = vld [vmem:[%s29] sm:$0xff]
    %v2307 = vld [vmem:[%s29 + $0x8] sm:$0xff]
    %v2308 = vld [vmem:[%s29 + $0x10] sm:$0xff]
    %v2309 = vld [vmem:[%s29 + $0x18] sm:$0xff]
    %v2310 = vld [vmem:[#allocation17] sm:$0x1]
    %v2312 = vlaneseq
    %v2313 = vshrl.u32 %v2312, 7
    %v2314 = vsub.s32 0, %v2313
    %v2315 = vrot.slane %v2310, %v2314
    %v2318 = vsel %vm614, %v2304, 0
    %v2321 = vsel %vm614, %v2305, 0
    %2323 = vmatprep.subr.mxu0 0.0
    %2324 = vmatpush1.msra.mxu0 0.0
    %2325 = vmatprep.subr.mxu0 0.0
    %2326 = vmatpush1.msra.mxu0 0.0
    %2327 = vmatprep.subr.mxu0 0.0
    %2328 = vmatpush1.msra.mxu0 0.0
    %2329 = vmatprep.subr.mxu0 0.0
    %2330 = vmatpush1.msra.mxu0 0.0
    %2331 = vmatprep.subr.mxu0 0.0
    %2332 = vmatpush1.msra.mxu0 0.0
    %2333 = vmatprep.subr.mxu0 0.0
    %2334 = vmatpush1.msra.mxu0 0.0
    %2335 = vmatprep.subr.mxu0 0.0
    %2336 = vmatpush1.msra.mxu0 0.0
    %2337 = vmatprep.subr.mxu0 0.0
    %2338 = vmatpush1.msra.mxu0 0.0
    %2339 = vmatprep.subr.mxu0 0.0
    %2340 = vmatpush1.msra.mxu0 0.0
    %2341 = vmatprep.subr.mxu0 0.0
    %2342 = vmatpush1.msra.mxu0 0.0
    %2343 = vmatprep.subr.mxu0 0.0
    %2344 = vmatpush1.msra.mxu0 0.0
    %2345 = vmatprep.subr.mxu0 0.0
    %2346 = vmatpush1.msra.mxu0 0.0
    %2347 = vmatprep.subr.mxu0 0.0
    %2348 = vmatpush1.msra.mxu0 %v2309
    %2349 = vmatprep.subr.mxu0 0.0
    %2350 = vmatpush1.msra.mxu0 %v2308
    %2351 = vmatprep.subr.mxu0 0.0
    %2352 = vmatpush1.msra.mxu0 %v2307
    %2353 = vmatprep.subr.mxu0 0.0
    %2354 = vmatpush1.msra.mxu0 %v2306
    %2355 = vmatprep.subr.mxu0 0.0
    %2356 = vmatpush2.msra.mxu0 0.0
    %2357 = vmatprep.subr.mxu0 0.0
    %2358 = vmatpush2.msra.mxu0 0.0
    %2359 = vmatprep.subr.mxu0 0.0
    %2360 = vmatpush2.msra.mxu0 0.0
    %2361 = vmatprep.subr.mxu0 0.0
    %2362 = vmatpush2.msra.mxu0 0.0
    %2363 = vmatprep.subr.mxu0 0.0
    %2364 = vmatpush2.msra.mxu0 0.0
    %2365 = vmatprep.subr.mxu0 0.0
    %2366 = vmatpush2.msra.mxu0 0.0
    %2367 = vmatprep.subr.mxu0 0.0
    %2368 = vmatpush2.msra.mxu0 0.0
    %2369 = vmatprep.subr.mxu0 0.0
    %2370 = vmatpush2.msra.mxu0 0.0
    %2371 = vmatprep.subr.mxu0 0.0
    %2372 = vmatpush2.msra.mxu0 0.0
    %2373 = vmatprep.subr.mxu0 0.0
    %2374 = vmatpush2.msra.mxu0 0.0
    %2375 = vmatprep.subr.mxu0 0.0
    %2376 = vmatpush2.msra.mxu0 0.0
    %2377 = vmatprep.subr.mxu0 0.0
    %2378 = vmatpush2.msra.mxu0 0.0
    %2379 = vmatprep.subr.mxu0 0.0
    %2380 = vmatpush2.msra.mxu0 0.0
    %2381 = vmatprep.subr.mxu0 0.0
    %2382 = vmatpush2.msra.mxu0 0.0
    %2383 = vmatprep.subr.mxu0 0.0
    %2384 = vmatpush2.msra.mxu0 0.0
    %2385 = vmatprep.subr.mxu0 0.0
    %2386 = vmatpush2.msra.mxu0 0.0
    %2387 = vmatprep.mubr.f32.mxu0 0.0
    %2388 = vmatmul.mubr.f32.gmra.mxu0 %v2318
    %v2389 = vpop.f32.mrf.mxu0
    %v2390 = vadd.f32 %v2315, %v2389
    %v2391 = vpop.f32.mrf.mxu0
    %2392 = vmatprep.mubr.f32.mxu0 0.0
    %2393 = vmatmul.mubr.f32.gmra.mxu0 %v2321
    %v2394 = vpop.f32.mrf.mxu0
    %v2395 = vadd.f32 %v2315, %v2394
    %v2396 = vpop.f32.mrf.mxu0
    %2397 = vdwg.mxu0
    %v2398 = vadd.f32 %v2210, %v2390
    %v2399 = vadd.f32 %v2211, %v2395
    %v2400 = vld [vmem:[#allocation19] sm:$0x1]
    %v2401 = vld [vmem:[#allocation20] sm:$0x1]
    %v2402 = vsel %vm614, %v2398, 0.0
    %2403 = vadd.xlane.f32.xlu0 %v2402
    %v2404 = vpop.xlane.xlu0 %2403
    %v2405 = vsel %vm614, %v2399, 0.0
    %2406 = vadd.xlane.f32.xlu0 %v2405
    %v2407 = vpop.xlane.xlu0 %2406
    %v2408 = vmul.f32 %v2404, %v2175
    %v2409 = vmul.f32 %v2407, %v2175
    %v2410 = vsub.f32 %v2398, %v2408
    %v2411 = vsub.f32 %v2399, %v2409
    %v2412 = vmul.f32 %v2410, %v2410
    %v2413 = vmul.f32 %v2411, %v2411
    %v2414 = vsel %vm614, %v2412, 0.0
    %2415 = vadd.xlane.f32.xlu0 %v2414
    %v2416 = vpop.xlane.xlu0 %2415
    %v2417 = vsel %vm614, %v2413, 0.0
    %2418 = vadd.xlane.f32.xlu0 %v2417
    %v2419 = vpop.xlane.xlu0 %2418
    %v2420 = vmul.f32 %v2416, %v2175
    %v2421 = vmul.f32 %v2419, %v2175
    %v2422 = vadd.f32 %v2420, 1e-05
    %v2423 = vadd.f32 %v2421, 1e-05
    %v2424 = vrsqrt.pop %v2422
    %v2425 = vrsqrt.pop %v2423
    %v2426 = vmul.f32 %v2410, %v2424
    %v2427 = vmul.f32 %v2411, %v2425
    %v2429 = vlaneseq
    %v2430 = vshrl.u32 %v2429, 7
    %v2431 = vsub.s32 0, %v2430
    %v2432 = vrot.slane %v2400, %v2431
    %v2434 = vmul.f32 %v2426, %v2432
    %v2435 = vmul.f32 %v2427, %v2432
    %v2437 = vlaneseq
    %v2438 = vshrl.u32 %v2437, 7
    %v2439 = vsub.s32 0, %v2438
    %v2440 = vrot.slane %v2401, %v2439
    %v2442 = vadd.f32 %v2434, %v2440
    %v2443 = vadd.f32 %v2435, %v2440
    %s2444 = scalar_lea.vmem %s13, 32
    %v2445 = vld [vmem:[%s2444] sm:$0xff]
    %v2446 = vld [vmem:[%s2444 + $0x8] sm:$0xff]
    %v2447 = vld [vmem:[%s2444 + $0x10] sm:$0xff]
    %v2448 = vld [vmem:[%s2444 + $0x18] sm:$0xff]
    %s2449 = scalar_lea.vmem [#allocation10], 1
    %v2450 = vld [vmem:[%s2449] sm:$0x1]
    %v2452 = vlaneseq
    %v2453 = vshrl.u32 %v2452, 7
    %v2454 = vsub.s32 0, %v2453
    %v2455 = vrot.slane %v2450, %v2454
    %v2458 = vsel %vm614, %v2442, 0
    %v2461 = vsel %vm614, %v2443, 0
    %2463 = vmatprep.subr.mxu0 0.0
    %2464 = vmatpush1.msra.mxu0 0.0
    %2465 = vmatprep.subr.mxu0 0.0
    %2466 = vmatpush1.msra.mxu0 0.0
    %2467 = vmatprep.subr.mxu0 0.0
    %2468 = vmatpush1.msra.mxu0 0.0
    %2469 = vmatprep.subr.mxu0 0.0
    %2470 = vmatpush1.msra.mxu0 0.0
    %2471 = vmatprep.subr.mxu0 0.0
    %2472 = vmatpush1.msra.mxu0 0.0
    %2473 = vmatprep.subr.mxu0 0.0
    %2474 = vmatpush1.msra.mxu0 0.0
    %2475 = vmatprep.subr.mxu0 0.0
    %2476 = vmatpush1.msra.mxu0 0.0
    %2477 = vmatprep.subr.mxu0 0.0
    %2478 = vmatpush1.msra.mxu0 0.0
    %2479 = vmatprep.subr.mxu0 0.0
    %2480 = vmatpush1.msra.mxu0 0.0
    %2481 = vmatprep.subr.mxu0 0.0
    %2482 = vmatpush1.msra.mxu0 0.0
    %2483 = vmatprep.subr.mxu0 0.0
    %2484 = vmatpush1.msra.mxu0 0.0
    %2485 = vmatprep.subr.mxu0 0.0
    %2486 = vmatpush1.msra.mxu0 0.0
    %2487 = vmatprep.subr.mxu0 0.0
    %2488 = vmatpush1.msra.mxu0 %v2448
    %2489 = vmatprep.subr.mxu0 0.0
    %2490 = vmatpush1.msra.mxu0 %v2447
    %2491 = vmatprep.subr.mxu0 0.0
    %2492 = vmatpush1.msra.mxu0 %v2446
    %2493 = vmatprep.subr.mxu0 0.0
    %2494 = vmatpush1.msra.mxu0 %v2445
    %2495 = vmatprep.subr.mxu0 0.0
    %2496 = vmatpush2.msra.mxu0 0.0
    %2497 = vmatprep.subr.mxu0 0.0
    %2498 = vmatpush2.msra.mxu0 0.0
    %2499 = vmatprep.subr.mxu0 0.0
    %2500 = vmatpush2.msra.mxu0 0.0
    %2501 = vmatprep.subr.mxu0 0.0
    %2502 = vmatpush2.msra.mxu0 0.0
    %2503 = vmatprep.subr.mxu0 0.0
    %2504 = vmatpush2.msra.mxu0 0.0
    %2505 = vmatprep.subr.mxu0 0.0
    %2506 = vmatpush2.msra.mxu0 0.0
    %2507 = vmatprep.subr.mxu0 0.0
    %2508 = vmatpush2.msra.mxu0 0.0
    %2509 = vmatprep.subr.mxu0 0.0
    %2510 = vmatpush2.msra.mxu0 0.0
    %2511 = vmatprep.subr.mxu0 0.0
    %2512 = vmatpush2.msra.mxu0 0.0
    %2513 = vmatprep.subr.mxu0 0.0
    %2514 = vmatpush2.msra.mxu0 0.0
    %2515 = vmatprep.subr.mxu0 0.0
    %2516 = vmatpush2.msra.mxu0 0.0
    %2517 = vmatprep.subr.mxu0 0.0
    %2518 = vmatpush2.msra.mxu0 0.0
    %2519 = vmatprep.subr.mxu0 0.0
    %2520 = vmatpush2.msra.mxu0 0.0
    %2521 = vmatprep.subr.mxu0 0.0
    %2522 = vmatpush2.msra.mxu0 0.0
    %2523 = vmatprep.subr.mxu0 0.0
    %2524 = vmatpush2.msra.mxu0 0.0
    %2525 = vmatprep.subr.mxu0 0.0
    %2526 = vmatpush2.msra.mxu0 0.0
    %2527 = vmatprep.mubr.f32.mxu0 0.0
    %2528 = vmatmul.mubr.f32.gmra.mxu0 %v2458
    %v2529 = vpop.f32.mrf.mxu0
    %v2530 = vadd.f32 %v2455, %v2529
    %v2531 = vpop.f32.mrf.mxu0
    %2532 = vmatprep.mubr.f32.mxu0 0.0
    %2533 = vmatmul.mubr.f32.gmra.mxu0 %v2461
    %v2534 = vpop.f32.mrf.mxu0
    %v2535 = vadd.f32 %v2455, %v2534
    %v2536 = vpop.f32.mrf.mxu0
    %2537 = vdwg.mxu0
    %2539 = vrot.lane.b32.xlu0 %v2530, 96
    %v2540 = vpop.permute.xlu0 %2539
    %v2541 = vsel %vm540, %v2530, 0
    %v2543 = vsel %vm540, %v2540, 0
    %2545 = vmatprep.subr.mxu0 0.0
    %2546 = vmatpush1.xpose.msra.mxu0 0.0
    %2547 = vmatprep.subr.mxu0 0.0
    %2548 = vmatpush1.xpose.msra.mxu0 0.0
    %2549 = vmatprep.subr.mxu0 0.0
    %2550 = vmatpush1.xpose.msra.mxu0 0.0
    %2551 = vmatprep.subr.mxu0 0.0
    %2552 = vmatpush1.xpose.msra.mxu0 0.0
    %2553 = vmatprep.subr.mxu0 0.0
    %2554 = vmatpush1.xpose.msra.mxu0 0.0
    %2555 = vmatprep.subr.mxu0 0.0
    %2556 = vmatpush1.xpose.msra.mxu0 0.0
    %2557 = vmatprep.subr.mxu0 0.0
    %2558 = vmatpush1.xpose.msra.mxu0 0.0
    %2559 = vmatprep.subr.mxu0 0.0
    %2560 = vmatpush1.xpose.msra.mxu0 0.0
    %2561 = vmatprep.subr.mxu0 0.0
    %2562 = vmatpush1.xpose.msra.mxu0 0.0
    %2563 = vmatprep.subr.mxu0 0.0
    %2564 = vmatpush1.xpose.msra.mxu0 0.0
    %2565 = vmatprep.subr.mxu0 0.0
    %2566 = vmatpush1.xpose.msra.mxu0 0.0
    %2567 = vmatprep.subr.mxu0 0.0
    %2568 = vmatpush1.xpose.msra.mxu0 0.0
    %2569 = vmatprep.subr.mxu0 0.0
    %2570 = vmatpush1.xpose.msra.mxu0 0.0
    %2571 = vmatprep.subr.mxu0 0.0
    %2572 = vmatpush1.xpose.msra.mxu0 0.0
    %2573 = vmatprep.subr.mxu0 0.0
    %2574 = vmatpush1.xpose.msra.mxu0 0.0
    %2575 = vmatprep.subr.mxu0 0.0
    %2576 = vmatpush1.xpose.msra.mxu0 %v2543
    %2577 = vmatprep.subr.mxu0 0.0
    %2578 = vmatpush2.xpose.msra.mxu0 0.0
    %2579 = vmatprep.subr.mxu0 0.0
    %2580 = vmatpush2.xpose.msra.mxu0 0.0
    %2581 = vmatprep.subr.mxu0 0.0
    %2582 = vmatpush2.xpose.msra.mxu0 0.0
    %2583 = vmatprep.subr.mxu0 0.0
    %2584 = vmatpush2.xpose.msra.mxu0 0.0
    %2585 = vmatprep.subr.mxu0 0.0
    %2586 = vmatpush2.xpose.msra.mxu0 0.0
    %2587 = vmatprep.subr.mxu0 0.0
    %2588 = vmatpush2.xpose.msra.mxu0 0.0
    %2589 = vmatprep.subr.mxu0 0.0
    %2590 = vmatpush2.xpose.msra.mxu0 0.0
    %2591 = vmatprep.subr.mxu0 0.0
    %2592 = vmatpush2.xpose.msra.mxu0 0.0
    %2593 = vmatprep.subr.mxu0 0.0
    %2594 = vmatpush2.xpose.msra.mxu0 0.0
    %2595 = vmatprep.subr.mxu0 0.0
    %2596 = vmatpush2.xpose.msra.mxu0 0.0
    %2597 = vmatprep.subr.mxu0 0.0
    %2598 = vmatpush2.xpose.msra.mxu0 0.0
    %2599 = vmatprep.subr.mxu0 0.0
    %2600 = vmatpush2.xpose.msra.mxu0 0.0
    %2601 = vmatprep.subr.mxu0 0.0
    %2602 = vmatpush2.xpose.msra.mxu0 0.0
    %2603 = vmatprep.subr.mxu0 0.0
    %2604 = vmatpush2.xpose.msra.mxu0 0.0
    %2605 = vmatprep.subr.mxu0 0.0
    %2606 = vmatpush2.xpose.msra.mxu0 0.0
    %2607 = vmatprep.subr.mxu0 0.0
    %2608 = vmatpush2.xpose.msra.mxu0 0.0
    %2609 = vmatprep.mubr.f32.mxu0 0.0
    %2610 = vmatmul.mubr.f32.gmra.mxu0 %v2541
    %v2611 = vpop.f32.mrf.mxu0
    %v2612 = vadd.f32 0.0, %v2611
    %v2613 = vpop.f32.mrf.mxu0
    %2614 = vdwg.mxu0
    %2616 = vrot.lane.b32.xlu0 %v2535, 96
    %v2617 = vpop.permute.xlu0 %2616
    %v2618 = vsel %vm540, %v2535, 0
    %v2620 = vsel %vm540, %v2617, 0
    %2622 = vmatprep.subr.mxu0 0.0
    %2623 = vmatpush1.xpose.msra.mxu0 0.0
    %2624 = vmatprep.subr.mxu0 0.0
    %2625 = vmatpush1.xpose.msra.mxu0 0.0
    %2626 = vmatprep.subr.mxu0 0.0
    %2627 = vmatpush1.xpose.msra.mxu0 0.0
    %2628 = vmatprep.subr.mxu0 0.0
    %2629 = vmatpush1.xpose.msra.mxu0 0.0
    %2630 = vmatprep.subr.mxu0 0.0
    %2631 = vmatpush1.xpose.msra.mxu0 0.0
    %2632 = vmatprep.subr.mxu0 0.0
    %2633 = vmatpush1.xpose.msra.mxu0 0.0
    %2634 = vmatprep.subr.mxu0 0.0
    %2635 = vmatpush1.xpose.msra.mxu0 0.0
    %2636 = vmatprep.subr.mxu0 0.0
    %2637 = vmatpush1.xpose.msra.mxu0 0.0
    %2638 = vmatprep.subr.mxu0 0.0
    %2639 = vmatpush1.xpose.msra.mxu0 0.0
    %2640 = vmatprep.subr.mxu0 0.0
    %2641 = vmatpush1.xpose.msra.mxu0 0.0
    %2642 = vmatprep.subr.mxu0 0.0
    %2643 = vmatpush1.xpose.msra.mxu0 0.0
    %2644 = vmatprep.subr.mxu0 0.0
    %2645 = vmatpush1.xpose.msra.mxu0 0.0
    %2646 = vmatprep.subr.mxu0 0.0
    %2647 = vmatpush1.xpose.msra.mxu0 0.0
    %2648 = vmatprep.subr.mxu0 0.0
    %2649 = vmatpush1.xpose.msra.mxu0 0.0
    %2650 = vmatprep.subr.mxu0 0.0
    %2651 = vmatpush1.xpose.msra.mxu0 0.0
    %2652 = vmatprep.subr.mxu0 0.0
    %2653 = vmatpush1.xpose.msra.mxu0 %v2620
    %2654 = vmatprep.subr.mxu0 0.0
    %2655 = vmatpush2.xpose.msra.mxu0 0.0
    %2656 = vmatprep.subr.mxu0 0.0
    %2657 = vmatpush2.xpose.msra.mxu0 0.0
    %2658 = vmatprep.subr.mxu0 0.0
    %2659 = vmatpush2.xpose.msra.mxu0 0.0
    %2660 = vmatprep.subr.mxu0 0.0
    %2661 = vmatpush2.xpose.msra.mxu0 0.0
    %2662 = vmatprep.subr.mxu0 0.0
    %2663 = vmatpush2.xpose.msra.mxu0 0.0
    %2664 = vmatprep.subr.mxu0 0.0
    %2665 = vmatpush2.xpose.msra.mxu0 0.0
    %2666 = vmatprep.subr.mxu0 0.0
    %2667 = vmatpush2.xpose.msra.mxu0 0.0
    %2668 = vmatprep.subr.mxu0 0.0
    %2669 = vmatpush2.xpose.msra.mxu0 0.0
    %2670 = vmatprep.subr.mxu0 0.0
    %2671 = vmatpush2.xpose.msra.mxu0 0.0
    %2672 = vmatprep.subr.mxu0 0.0
    %2673 = vmatpush2.xpose.msra.mxu0 0.0
    %2674 = vmatprep.subr.mxu0 0.0
    %2675 = vmatpush2.xpose.msra.mxu0 0.0
    %2676 = vmatprep.subr.mxu0 0.0
    %2677 = vmatpush2.xpose.msra.mxu0 0.0
    %2678 = vmatprep.subr.mxu0 0.0
    %2679 = vmatpush2.xpose.msra.mxu0 0.0
    %2680 = vmatprep.subr.mxu0 0.0
    %2681 = vmatpush2.xpose.msra.mxu0 0.0
    %2682 = vmatprep.subr.mxu0 0.0
    %2683 = vmatpush2.xpose.msra.mxu0 0.0
    %2684 = vmatprep.subr.mxu0 0.0
    %2685 = vmatpush2.xpose.msra.mxu0 0.0
    %2686 = vmatprep.mubr.f32.mxu0 0.0
    %2687 = vmatmul.mubr.f32.gmra.mxu0 %v2618
    %v2688 = vpop.f32.mrf.mxu0
    %v2689 = vadd.f32 0.0, %v2688
    %v2690 = vpop.f32.mrf.mxu0
    %2691 = vdwg.mxu0
    %v2692 = vmul.f32 %v2612, 0.35355338
    %v2693 = vmul.f32 %v2689, 0.35355338
    %v2694 = vsel %vm540, %v2692, -inf
    %2695 = vmax.xlane.f32.xlu0 %v2694
    %v2696 = vpop.xlane.xlu0 %2695
    %v2697 = vsel %vm540, %v2693, -inf
    %2698 = vmax.xlane.f32.xlu0 %v2697
    %v2699 = vpop.xlane.xlu0 %2698
    %v2700 = vsub.f32 %v2692, %v2696
    %v2701 = vsub.f32 %v2693, %v2699
    %v2702 = vmul.f32 %v2700, 1.442695
    %v2703 = vpow.pop %v2702
    %v2704 = vmul.f32 %v2701, 1.442695
    %v2705 = vpow.pop %v2704
    %v2706 = vsel %vm540, %v2703, 0.0
    %2707 = vadd.xlane.f32.xlu0 %v2706
    %v2708 = vpop.xlane.xlu0 %2707
    %v2709 = vsel %vm540, %v2705, 0.0
    %2710 = vadd.xlane.f32.xlu0 %v2709
    %v2711 = vpop.xlane.xlu0 %2710
    %v2712 = vrcp.pop %v2708
    %v2713 = vrcp.pop %v2711
    %v2714 = vmul.f32 %v2703, %v2712
    %v2715 = vmul.f32 %v2705, %v2713
    %2716 = vrot.lane.b32.xlu0 %v2530, 64
    %v2717 = vpop.permute.xlu0 %2716
    %v2720 = vsel %vm540, %v2714, 0
    %2722 = vmatprep.subr.mxu0 0.0
    %2723 = vmatpush1.msra.mxu0 0.0
    %2724 = vmatprep.subr.mxu0 0.0
    %2725 = vmatpush1.msra.mxu0 0.0
    %2726 = vmatprep.subr.mxu0 0.0
    %2727 = vmatpush1.msra.mxu0 0.0
    %2728 = vmatprep.subr.mxu0 0.0
    %2729 = vmatpush1.msra.mxu0 0.0
    %2730 = vmatprep.subr.mxu0 0.0
    %2731 = vmatpush1.msra.mxu0 0.0
    %2732 = vmatprep.subr.mxu0 0.0
    %2733 = vmatpush1.msra.mxu0 0.0
    %2734 = vmatprep.subr.mxu0 0.0
    %2735 = vmatpush1.msra.mxu0 0.0
    %2736 = vmatprep.subr.mxu0 0.0
    %2737 = vmatpush1.msra.mxu0 0.0
    %2738 = vmatprep.subr.mxu0 0.0
    %2739 = vmatpush1.msra.mxu0 0.0
    %2740 = vmatprep.subr.mxu0 0.0
    %2741 = vmatpush1.msra.mxu0 0.0
    %2742 = vmatprep.subr.mxu0 0.0
    %2743 = vmatpush1.msra.mxu0 0.0
    %2744 = vmatprep.subr.mxu0 0.0
    %2745 = vmatpush1.msra.mxu0 0.0
    %2746 = vmatprep.subr.mxu0 0.0
    %2747 = vmatpush1.msra.mxu0 0.0
    %2748 = vmatprep.subr.mxu0 0.0
    %2749 = vmatpush1.msra.mxu0 0.0
    %2750 = vmatprep.subr.mxu0 0.0
    %2751 = vmatpush1.msra.mxu0 0.0
    %2752 = vmatprep.subr.mxu0 0.0
    %2753 = vmatpush1.msra.mxu0 %v2717
    %2754 = vmatprep.subr.mxu0 0.0
    %2755 = vmatpush2.msra.mxu0 0.0
    %2756 = vmatprep.subr.mxu0 0.0
    %2757 = vmatpush2.msra.mxu0 0.0
    %2758 = vmatprep.subr.mxu0 0.0
    %2759 = vmatpush2.msra.mxu0 0.0
    %2760 = vmatprep.subr.mxu0 0.0
    %2761 = vmatpush2.msra.mxu0 0.0
    %2762 = vmatprep.subr.mxu0 0.0
    %2763 = vmatpush2.msra.mxu0 0.0
    %2764 = vmatprep.subr.mxu0 0.0
    %2765 = vmatpush2.msra.mxu0 0.0
    %2766 = vmatprep.subr.mxu0 0.0
    %2767 = vmatpush2.msra.mxu0 0.0
    %2768 = vmatprep.subr.mxu0 0.0
    %2769 = vmatpush2.msra.mxu0 0.0
    %2770 = vmatprep.subr.mxu0 0.0
    %2771 = vmatpush2.msra.mxu0 0.0
    %2772 = vmatprep.subr.mxu0 0.0
    %2773 = vmatpush2.msra.mxu0 0.0
    %2774 = vmatprep.subr.mxu0 0.0
    %2775 = vmatpush2.msra.mxu0 0.0
    %2776 = vmatprep.subr.mxu0 0.0
    %2777 = vmatpush2.msra.mxu0 0.0
    %2778 = vmatprep.subr.mxu0 0.0
    %2779 = vmatpush2.msra.mxu0 0.0
    %2780 = vmatprep.subr.mxu0 0.0
    %2781 = vmatpush2.msra.mxu0 0.0
    %2782 = vmatprep.subr.mxu0 0.0
    %2783 = vmatpush2.msra.mxu0 0.0
    %2784 = vmatprep.subr.mxu0 0.0
    %2785 = vmatpush2.msra.mxu0 0.0
    %2786 = vmatprep.mubr.f32.mxu0 0.0
    %2787 = vmatmul.mubr.f32.gmra.mxu0 %v2720
    %v2788 = vpop.f32.mrf.mxu0
    %v2789 = vadd.f32 0.0, %v2788
    %v2790 = vpop.f32.mrf.mxu0
    %2791 = vdwg.mxu0
    %2792 = vrot.lane.b32.xlu0 %v2535, 64
    %v2793 = vpop.permute.xlu0 %2792
    %v2796 = vsel %vm540, %v2715, 0
    %2798 = vmatprep.subr.mxu0 0.0
    %2799 = vmatpush1.msra.mxu0 0.0
    %2800 = vmatprep.subr.mxu0 0.0
    %2801 = vmatpush1.msra.mxu0 0.0
    %2802 = vmatprep.subr.mxu0 0.0
    %2803 = vmatpush1.msra.mxu0 0.0
    %2804 = vmatprep.subr.mxu0 0.0
    %2805 = vmatpush1.msra.mxu0 0.0
    %2806 = vmatprep.subr.mxu0 0.0
    %2807 = vmatpush1.msra.mxu0 0.0
    %2808 = vmatprep.subr.mxu0 0.0
    %2809 = vmatpush1.msra.mxu0 0.0
    %2810 = vmatprep.subr.mxu0 0.0
    %2811 = vmatpush1.msra.mxu0 0.0
    %2812 = vmatprep.subr.mxu0 0.0
    %2813 = vmatpush1.msra.mxu0 0.0
    %2814 = vmatprep.subr.mxu0 0.0
    %2815 = vmatpush1.msra.mxu0 0.0
    %2816 = vmatprep.subr.mxu0 0.0
    %2817 = vmatpush1.msra.mxu0 0.0
    %2818 = vmatprep.subr.mxu0 0.0
    %2819 = vmatpush1.msra.mxu0 0.0
    %2820 = vmatprep.subr.mxu0 0.0
    %2821 = vmatpush1.msra.mxu0 0.0
    %2822 = vmatprep.subr.mxu0 0.0
    %2823 = vmatpush1.msra.mxu0 0.0
    %2824 = vmatprep.subr.mxu0 0.0
    %2825 = vmatpush1.msra.mxu0 0.0
    %2826 = vmatprep.subr.mxu0 0.0
    %2827 = vmatpush1.msra.mxu0 0.0
    %2828 = vmatprep.subr.mxu0 0.0
    %2829 = vmatpush1.msra.mxu0 %v2793
    %2830 = vmatprep.subr.mxu0 0.0
    %2831 = vmatpush2.msra.mxu0 0.0
    %2832 = vmatprep.subr.mxu0 0.0
    %2833 = vmatpush2.msra.mxu0 0.0
    %2834 = vmatprep.subr.mxu0 0.0
    %2835 = vmatpush2.msra.mxu0 0.0
    %2836 = vmatprep.subr.mxu0 0.0
    %2837 = vmatpush2.msra.mxu0 0.0
    %2838 = vmatprep.subr.mxu0 0.0
    %2839 = vmatpush2.msra.mxu0 0.0
    %2840 = vmatprep.subr.mxu0 0.0
    %2841 = vmatpush2.msra.mxu0 0.0
    %2842 = vmatprep.subr.mxu0 0.0
    %2843 = vmatpush2.msra.mxu0 0.0
    %2844 = vmatprep.subr.mxu0 0.0
    %2845 = vmatpush2.msra.mxu0 0.0
    %2846 = vmatprep.subr.mxu0 0.0
    %2847 = vmatpush2.msra.mxu0 0.0
    %2848 = vmatprep.subr.mxu0 0.0
    %2849 = vmatpush2.msra.mxu0 0.0
    %2850 = vmatprep.subr.mxu0 0.0
    %2851 = vmatpush2.msra.mxu0 0.0
    %2852 = vmatprep.subr.mxu0 0.0
    %2853 = vmatpush2.msra.mxu0 0.0
    %2854 = vmatprep.subr.mxu0 0.0
    %2855 = vmatpush2.msra.mxu0 0.0
    %2856 = vmatprep.subr.mxu0 0.0
    %2857 = vmatpush2.msra.mxu0 0.0
    %2858 = vmatprep.subr.mxu0 0.0
    %2859 = vmatpush2.msra.mxu0 0.0
    %2860 = vmatprep.subr.mxu0 0.0
    %2861 = vmatpush2.msra.mxu0 0.0
    %2862 = vmatprep.mubr.f32.mxu0 0.0
    %2863 = vmatmul.mubr.f32.gmra.mxu0 %v2796
    %v2864 = vpop.f32.mrf.mxu0
    %v2865 = vadd.f32 0.0, %v2864
    %v2866 = vpop.f32.mrf.mxu0
    %2867 = vdwg.mxu0
    %2868 = vrot.lane.b32.xlu0 %v2530, 120
    %v2869 = vpop.permute.xlu0 %2868
    %2870 = vrot.lane.b32.xlu0 %v2530, 88
    %v2871 = vpop.permute.xlu0 %2870
    %v2872 = vsel %vm540, %v2869, 0
    %v2874 = vsel %vm540, %v2871, 0
    %2876 = vmatprep.subr.mxu0 0.0
    %2877 = vmatpush1.xpose.msra.mxu0 0.0
    %2878 = vmatprep.subr.mxu0 0.0
    %2879 = vmatpush1.xpose.msra.mxu0 0.0
    %2880 = vmatprep.subr.mxu0 0.0
    %2881 = vmatpush1.xpose.msra.mxu0 0.0
    %2882 = vmatprep.subr.mxu0 0.0
    %2883 = vmatpush1.xpose.msra.mxu0 0.0
    %2884 = vmatprep.subr.mxu0 0.0
    %2885 = vmatpush1.xpose.msra.mxu0 0.0
    %2886 = vmatprep.subr.mxu0 0.0
    %2887 = vmatpush1.xpose.msra.mxu0 0.0
    %2888 = vmatprep.subr.mxu0 0.0
    %2889 = vmatpush1.xpose.msra.mxu0 0.0
    %2890 = vmatprep.subr.mxu0 0.0
    %2891 = vmatpush1.xpose.msra.mxu0 0.0
    %2892 = vmatprep.subr.mxu0 0.0
    %2893 = vmatpush1.xpose.msra.mxu0 0.0
    %2894 = vmatprep.subr.mxu0 0.0
    %2895 = vmatpush1.xpose.msra.mxu0 0.0
    %2896 = vmatprep.subr.mxu0 0.0
    %2897 = vmatpush1.xpose.msra.mxu0 0.0
    %2898 = vmatprep.subr.mxu0 0.0
    %2899 = vmatpush1.xpose.msra.mxu0 0.0
    %2900 = vmatprep.subr.mxu0 0.0
    %2901 = vmatpush1.xpose.msra.mxu0 0.0
    %2902 = vmatprep.subr.mxu0 0.0
    %2903 = vmatpush1.xpose.msra.mxu0 0.0
    %2904 = vmatprep.subr.mxu0 0.0
    %2905 = vmatpush1.xpose.msra.mxu0 0.0
    %2906 = vmatprep.subr.mxu0 0.0
    %2907 = vmatpush1.xpose.msra.mxu0 %v2874
    %2908 = vmatprep.subr.mxu0 0.0
    %2909 = vmatpush2.xpose.msra.mxu0 0.0
    %2910 = vmatprep.subr.mxu0 0.0
    %2911 = vmatpush2.xpose.msra.mxu0 0.0
    %2912 = vmatprep.subr.mxu0 0.0
    %2913 = vmatpush2.xpose.msra.mxu0 0.0
    %2914 = vmatprep.subr.mxu0 0.0
    %2915 = vmatpush2.xpose.msra.mxu0 0.0
    %2916 = vmatprep.subr.mxu0 0.0
    %2917 = vmatpush2.xpose.msra.mxu0 0.0
    %2918 = vmatprep.subr.mxu0 0.0
    %2919 = vmatpush2.xpose.msra.mxu0 0.0
    %2920 = vmatprep.subr.mxu0 0.0
    %2921 = vmatpush2.xpose.msra.mxu0 0.0
    %2922 = vmatprep.subr.mxu0 0.0
    %2923 = vmatpush2.xpose.msra.mxu0 0.0
    %2924 = vmatprep.subr.mxu0 0.0
    %2925 = vmatpush2.xpose.msra.mxu0 0.0
    %2926 = vmatprep.subr.mxu0 0.0
    %2927 = vmatpush2.xpose.msra.mxu0 0.0
    %2928 = vmatprep.subr.mxu0 0.0
    %2929 = vmatpush2.xpose.msra.mxu0 0.0
    %2930 = vmatprep.subr.mxu0 0.0
    %2931 = vmatpush2.xpose.msra.mxu0 0.0
    %2932 = vmatprep.subr.mxu0 0.0
    %2933 = vmatpush2.xpose.msra.mxu0 0.0
    %2934 = vmatprep.subr.mxu0 0.0
    %2935 = vmatpush2.xpose.msra.mxu0 0.0
    %2936 = vmatprep.subr.mxu0 0.0
    %2937 = vmatpush2.xpose.msra.mxu0 0.0
    %2938 = vmatprep.subr.mxu0 0.0
    %2939 = vmatpush2.xpose.msra.mxu0 0.0
    %2940 = vmatprep.mubr.f32.mxu0 0.0
    %2941 = vmatmul.mubr.f32.gmra.mxu0 %v2872
    %v2942 = vpop.f32.mrf.mxu0
    %v2943 = vadd.f32 0.0, %v2942
    %v2944 = vpop.f32.mrf.mxu0
    %2945 = vdwg.mxu0
    %2946 = vrot.lane.b32.xlu0 %v2535, 120
    %v2947 = vpop.permute.xlu0 %2946
    %2948 = vrot.lane.b32.xlu0 %v2535, 88
    %v2949 = vpop.permute.xlu0 %2948
    %v2950 = vsel %vm540, %v2947, 0
    %v2952 = vsel %vm540, %v2949, 0
    %2954 = vmatprep.subr.mxu0 0.0
    %2955 = vmatpush1.xpose.msra.mxu0 0.0
    %2956 = vmatprep.subr.mxu0 0.0
    %2957 = vmatpush1.xpose.msra.mxu0 0.0
    %2958 = vmatprep.subr.mxu0 0.0
    %2959 = vmatpush1.xpose.msra.mxu0 0.0
    %2960 = vmatprep.subr.mxu0 0.0
    %2961 = vmatpush1.xpose.msra.mxu0 0.0
    %2962 = vmatprep.subr.mxu0 0.0
    %2963 = vmatpush1.xpose.msra.mxu0 0.0
    %2964 = vmatprep.subr.mxu0 0.0
    %2965 = vmatpush1.xpose.msra.mxu0 0.0
    %2966 = vmatprep.subr.mxu0 0.0
    %2967 = vmatpush1.xpose.msra.mxu0 0.0
    %2968 = vmatprep.subr.mxu0 0.0
    %2969 = vmatpush1.xpose.msra.mxu0 0.0
    %2970 = vmatprep.subr.mxu0 0.0
    %2971 = vmatpush1.xpose.msra.mxu0 0.0
    %2972 = vmatprep.subr.mxu0 0.0
    %2973 = vmatpush1.xpose.msra.mxu0 0.0
    %2974 = vmatprep.subr.mxu0 0.0
    %2975 = vmatpush1.xpose.msra.mxu0 0.0
    %2976 = vmatprep.subr.mxu0 0.0
    %2977 = vmatpush1.xpose.msra.mxu0 0.0
    %2978 = vmatprep.subr.mxu0 0.0
    %2979 = vmatpush1.xpose.msra.mxu0 0.0
    %2980 = vmatprep.subr.mxu0 0.0
    %2981 = vmatpush1.xpose.msra.mxu0 0.0
    %2982 = vmatprep.subr.mxu0 0.0
    %2983 = vmatpush1.xpose.msra.mxu0 0.0
    %2984 = vmatprep.subr.mxu0 0.0
    %2985 = vmatpush1.xpose.msra.mxu0 %v2952
    %2986 = vmatprep.subr.mxu0 0.0
    %2987 = vmatpush2.xpose.msra.mxu0 0.0
    %2988 = vmatprep.subr.mxu0 0.0
    %2989 = vmatpush2.xpose.msra.mxu0 0.0
    %2990 = vmatprep.subr.mxu0 0.0
    %2991 = vmatpush2.xpose.msra.mxu0 0.0
    %2992 = vmatprep.subr.mxu0 0.0
    %2993 = vmatpush2.xpose.msra.mxu0 0.0
    %2994 = vmatprep.subr.mxu0 0.0
    %2995 = vmatpush2.xpose.msra.mxu0 0.0
    %2996 = vmatprep.subr.mxu0 0.0
    %2997 = vmatpush2.xpose.msra.mxu0 0.0
    %2998 = vmatprep.subr.mxu0 0.0
    %2999 = vmatpush2.xpose.msra.mxu0 0.0
    %3000 = vmatprep.subr.mxu0 0.0
    %3001 = vmatpush2.xpose.msra.mxu0 0.0
    %3002 = vmatprep.subr.mxu0 0.0
    %3003 = vmatpush2.xpose.msra.mxu0 0.0
    %3004 = vmatprep.subr.mxu0 0.0
    %3005 = vmatpush2.xpose.msra.mxu0 0.0
    %3006 = vmatprep.subr.mxu0 0.0
    %3007 = vmatpush2.xpose.msra.mxu0 0.0
    %3008 = vmatprep.subr.mxu0 0.0
    %3009 = vmatpush2.xpose.msra.mxu0 0.0
    %3010 = vmatprep.subr.mxu0 0.0
    %3011 = vmatpush2.xpose.msra.mxu0 0.0
    %3012 = vmatprep.subr.mxu0 0.0
    %3013 = vmatpush2.xpose.msra.mxu0 0.0
    %3014 = vmatprep.subr.mxu0 0.0
    %3015 = vmatpush2.xpose.msra.mxu0 0.0
    %3016 = vmatprep.subr.mxu0 0.0
    %3017 = vmatpush2.xpose.msra.mxu0 0.0
    %3018 = vmatprep.mubr.f32.mxu0 0.0
    %3019 = vmatmul.mubr.f32.gmra.mxu0 %v2950
    %v3020 = vpop.f32.mrf.mxu0
    %v3021 = vadd.f32 0.0, %v3020
    %v3022 = vpop.f32.mrf.mxu0
    %3023 = vdwg.mxu0
    %v3024 = vmul.f32 %v2943, 0.35355338
    %v3025 = vmul.f32 %v3021, 0.35355338
    %v3026 = vsel %vm540, %v3024, -inf
    %3027 = vmax.xlane.f32.xlu0 %v3026
    %v3028 = vpop.xlane.xlu0 %3027
    %v3029 = vsel %vm540, %v3025, -inf
    %3030 = vmax.xlane.f32.xlu0 %v3029
    %v3031 = vpop.xlane.xlu0 %3030
    %v3032 = vsub.f32 %v3024, %v3028
    %v3033 = vsub.f32 %v3025, %v3031
    %v3034 = vmul.f32 %v3032, 1.442695
    %v3035 = vpow.pop %v3034
    %v3036 = vmul.f32 %v3033, 1.442695
    %v3037 = vpow.pop %v3036
    %v3038 = vsel %vm540, %v3035, 0.0
    %3039 = vadd.xlane.f32.xlu0 %v3038
    %v3040 = vpop.xlane.xlu0 %3039
    %v3041 = vsel %vm540, %v3037, 0.0
    %3042 = vadd.xlane.f32.xlu0 %v3041
    %v3043 = vpop.xlane.xlu0 %3042
    %v3044 = vrcp.pop %v3040
    %v3045 = vrcp.pop %v3043
    %v3046 = vmul.f32 %v3035, %v3044
    %v3047 = vmul.f32 %v3037, %v3045
    %3048 = vrot.lane.b32.xlu0 %v2530, 56
    %v3049 = vpop.permute.xlu0 %3048
    %v3052 = vsel %vm540, %v3046, 0
    %3054 = vmatprep.subr.mxu0 0.0
    %3055 = vmatpush1.msra.mxu0 0.0
    %3056 = vmatprep.subr.mxu0 0.0
    %3057 = vmatpush1.msra.mxu0 0.0
    %3058 = vmatprep.subr.mxu0 0.0
    %3059 = vmatpush1.msra.mxu0 0.0
    %3060 = vmatprep.subr.mxu0 0.0
    %3061 = vmatpush1.msra.mxu0 0.0
    %3062 = vmatprep.subr.mxu0 0.0
    %3063 = vmatpush1.msra.mxu0 0.0
    %3064 = vmatprep.subr.mxu0 0.0
    %3065 = vmatpush1.msra.mxu0 0.0
    %3066 = vmatprep.subr.mxu0 0.0
    %3067 = vmatpush1.msra.mxu0 0.0
    %3068 = vmatprep.subr.mxu0 0.0
    %3069 = vmatpush1.msra.mxu0 0.0
    %3070 = vmatprep.subr.mxu0 0.0
    %3071 = vmatpush1.msra.mxu0 0.0
    %3072 = vmatprep.subr.mxu0 0.0
    %3073 = vmatpush1.msra.mxu0 0.0
    %3074 = vmatprep.subr.mxu0 0.0
    %3075 = vmatpush1.msra.mxu0 0.0
    %3076 = vmatprep.subr.mxu0 0.0
    %3077 = vmatpush1.msra.mxu0 0.0
    %3078 = vmatprep.subr.mxu0 0.0
    %3079 = vmatpush1.msra.mxu0 0.0
    %3080 = vmatprep.subr.mxu0 0.0
    %3081 = vmatpush1.msra.mxu0 0.0
    %3082 = vmatprep.subr.mxu0 0.0
    %3083 = vmatpush1.msra.mxu0 0.0
    %3084 = vmatprep.subr.mxu0 0.0
    %3085 = vmatpush1.msra.mxu0 %v3049
    %3086 = vmatprep.subr.mxu0 0.0
    %3087 = vmatpush2.msra.mxu0 0.0
    %3088 = vmatprep.subr.mxu0 0.0
    %3089 = vmatpush2.msra.mxu0 0.0
    %3090 = vmatprep.subr.mxu0 0.0
    %3091 = vmatpush2.msra.mxu0 0.0
    %3092 = vmatprep.subr.mxu0 0.0
    %3093 = vmatpush2.msra.mxu0 0.0
    %3094 = vmatprep.subr.mxu0 0.0
    %3095 = vmatpush2.msra.mxu0 0.0
    %3096 = vmatprep.subr.mxu0 0.0
    %3097 = vmatpush2.msra.mxu0 0.0
    %3098 = vmatprep.subr.mxu0 0.0
    %3099 = vmatpush2.msra.mxu0 0.0
    %3100 = vmatprep.subr.mxu0 0.0
    %3101 = vmatpush2.msra.mxu0 0.0
    %3102 = vmatprep.subr.mxu0 0.0
    %3103 = vmatpush2.msra.mxu0 0.0
    %3104 = vmatprep.subr.mxu0 0.0
    %3105 = vmatpush2.msra.mxu0 0.0
    %3106 = vmatprep.subr.mxu0 0.0
    %3107 = vmatpush2.msra.mxu0 0.0
    %3108 = vmatprep.subr.mxu0 0.0
    %3109 = vmatpush2.msra.mxu0 0.0
    %3110 = vmatprep.subr.mxu0 0.0
    %3111 = vmatpush2.msra.mxu0 0.0
    %3112 = vmatprep.subr.mxu0 0.0
    %3113 = vmatpush2.msra.mxu0 0.0
    %3114 = vmatprep.subr.mxu0 0.0
    %3115 = vmatpush2.msra.mxu0 0.0
    %3116 = vmatprep.subr.mxu0 0.0
    %3117 = vmatpush2.msra.mxu0 0.0
    %3118 = vmatprep.mubr.f32.mxu0 0.0
    %3119 = vmatmul.mubr.f32.gmra.mxu0 %v3052
    %v3120 = vpop.f32.mrf.mxu0
    %v3121 = vadd.f32 0.0, %v3120
    %v3122 = vpop.f32.mrf.mxu0
    %3123 = vdwg.mxu0
    %3124 = vrot.lane.b32.xlu0 %v2535, 56
    %v3125 = vpop.permute.xlu0 %3124
    %v3128 = vsel %vm540, %v3047, 0
    %3130 = vmatprep.subr.mxu0 0.0
    %3131 = vmatpush1.msra.mxu0 0.0
    %3132 = vmatprep.subr.mxu0 0.0
    %3133 = vmatpush1.msra.mxu0 0.0
    %3134 = vmatprep.subr.mxu0 0.0
    %3135 = vmatpush1.msra.mxu0 0.0
    %3136 = vmatprep.subr.mxu0 0.0
    %3137 = vmatpush1.msra.mxu0 0.0
    %3138 = vmatprep.subr.mxu0 0.0
    %3139 = vmatpush1.msra.mxu0 0.0
    %3140 = vmatprep.subr.mxu0 0.0
    %3141 = vmatpush1.msra.mxu0 0.0
    %3142 = vmatprep.subr.mxu0 0.0
    %3143 = vmatpush1.msra.mxu0 0.0
    %3144 = vmatprep.subr.mxu0 0.0
    %3145 = vmatpush1.msra.mxu0 0.0
    %3146 = vmatprep.subr.mxu0 0.0
    %3147 = vmatpush1.msra.mxu0 0.0
    %3148 = vmatprep.subr.mxu0 0.0
    %3149 = vmatpush1.msra.mxu0 0.0
    %3150 = vmatprep.subr.mxu0 0.0
    %3151 = vmatpush1.msra.mxu0 0.0
    %3152 = vmatprep.subr.mxu0 0.0
    %3153 = vmatpush1.msra.mxu0 0.0
    %3154 = vmatprep.subr.mxu0 0.0
    %3155 = vmatpush1.msra.mxu0 0.0
    %3156 = vmatprep.subr.mxu0 0.0
    %3157 = vmatpush1.msra.mxu0 0.0
    %3158 = vmatprep.subr.mxu0 0.0
    %3159 = vmatpush1.msra.mxu0 0.0
    %3160 = vmatprep.subr.mxu0 0.0
    %3161 = vmatpush1.msra.mxu0 %v3125
    %3162 = vmatprep.subr.mxu0 0.0
    %3163 = vmatpush2.msra.mxu0 0.0
    %3164 = vmatprep.subr.mxu0 0.0
    %3165 = vmatpush2.msra.mxu0 0.0
    %3166 = vmatprep.subr.mxu0 0.0
    %3167 = vmatpush2.msra.mxu0 0.0
    %3168 = vmatprep.subr.mxu0 0.0
    %3169 = vmatpush2.msra.mxu0 0.0
    %3170 = vmatprep.subr.mxu0 0.0
    %3171 = vmatpush2.msra.mxu0 0.0
    %3172 = vmatprep.subr.mxu0 0.0
    %3173 = vmatpush2.msra.mxu0 0.0
    %3174 = vmatprep.subr.mxu0 0.0
    %3175 = vmatpush2.msra.mxu0 0.0
    %3176 = vmatprep.subr.mxu0 0.0
    %3177 = vmatpush2.msra.mxu0 0.0
    %3178 = vmatprep.subr.mxu0 0.0
    %3179 = vmatpush2.msra.mxu0 0.0
    %3180 = vmatprep.subr.mxu0 0.0
    %3181 = vmatpush2.msra.mxu0 0.0
    %3182 = vmatprep.subr.mxu0 0.0
    %3183 = vmatpush2.msra.mxu0 0.0
    %3184 = vmatprep.subr.mxu0 0.0
    %3185 = vmatpush2.msra.mxu0 0.0
    %3186 = vmatprep.subr.mxu0 0.0
    %3187 = vmatpush2.msra.mxu0 0.0
    %3188 = vmatprep.subr.mxu0 0.0
    %3189 = vmatpush2.msra.mxu0 0.0
    %3190 = vmatprep.subr.mxu0 0.0
    %3191 = vmatpush2.msra.mxu0 0.0
    %3192 = vmatprep.subr.mxu0 0.0
    %3193 = vmatpush2.msra.mxu0 0.0
    %3194 = vmatprep.mubr.f32.mxu0 0.0
    %3195 = vmatmul.mubr.f32.gmra.mxu0 %v3128
    %v3196 = vpop.f32.mrf.mxu0
    %v3197 = vadd.f32 0.0, %v3196
    %v3198 = vpop.f32.mrf.mxu0
    %3199 = vdwg.mxu0
    %3200 = vrot.lane.b32.xlu0 %v2530, 112
    %v3201 = vpop.permute.xlu0 %3200
    %3202 = vrot.lane.b32.xlu0 %v2530, 80
    %v3203 = vpop.permute.xlu0 %3202
    %v3204 = vsel %vm540, %v3201, 0
    %v3206 = vsel %vm540, %v3203, 0
    %3208 = vmatprep.subr.mxu0 0.0
    %3209 = vmatpush1.xpose.msra.mxu0 0.0
    %3210 = vmatprep.subr.mxu0 0.0
    %3211 = vmatpush1.xpose.msra.mxu0 0.0
    %3212 = vmatprep.subr.mxu0 0.0
    %3213 = vmatpush1.xpose.msra.mxu0 0.0
    %3214 = vmatprep.subr.mxu0 0.0
    %3215 = vmatpush1.xpose.msra.mxu0 0.0
    %3216 = vmatprep.subr.mxu0 0.0
    %3217 = vmatpush1.xpose.msra.mxu0 0.0
    %3218 = vmatprep.subr.mxu0 0.0
    %3219 = vmatpush1.xpose.msra.mxu0 0.0
    %3220 = vmatprep.subr.mxu0 0.0
    %3221 = vmatpush1.xpose.msra.mxu0 0.0
    %3222 = vmatprep.subr.mxu0 0.0
    %3223 = vmatpush1.xpose.msra.mxu0 0.0
    %3224 = vmatprep.subr.mxu0 0.0
    %3225 = vmatpush1.xpose.msra.mxu0 0.0
    %3226 = vmatprep.subr.mxu0 0.0
    %3227 = vmatpush1.xpose.msra.mxu0 0.0
    %3228 = vmatprep.subr.mxu0 0.0
    %3229 = vmatpush1.xpose.msra.mxu0 0.0
    %3230 = vmatprep.subr.mxu0 0.0
    %3231 = vmatpush1.xpose.msra.mxu0 0.0
    %3232 = vmatprep.subr.mxu0 0.0
    %3233 = vmatpush1.xpose.msra.mxu0 0.0
    %3234 = vmatprep.subr.mxu0 0.0
    %3235 = vmatpush1.xpose.msra.mxu0 0.0
    %3236 = vmatprep.subr.mxu0 0.0
    %3237 = vmatpush1.xpose.msra.mxu0 0.0
    %3238 = vmatprep.subr.mxu0 0.0
    %3239 = vmatpush1.xpose.msra.mxu0 %v3206
    %3240 = vmatprep.subr.mxu0 0.0
    %3241 = vmatpush2.xpose.msra.mxu0 0.0
    %3242 = vmatprep.subr.mxu0 0.0
    %3243 = vmatpush2.xpose.msra.mxu0 0.0
    %3244 = vmatprep.subr.mxu0 0.0
    %3245 = vmatpush2.xpose.msra.mxu0 0.0
    %3246 = vmatprep.subr.mxu0 0.0
    %3247 = vmatpush2.xpose.msra.mxu0 0.0
    %3248 = vmatprep.subr.mxu0 0.0
    %3249 = vmatpush2.xpose.msra.mxu0 0.0
    %3250 = vmatprep.subr.mxu0 0.0
    %3251 = vmatpush2.xpose.msra.mxu0 0.0
    %3252 = vmatprep.subr.mxu0 0.0
    %3253 = vmatpush2.xpose.msra.mxu0 0.0
    %3254 = vmatprep.subr.mxu0 0.0
    %3255 = vmatpush2.xpose.msra.mxu0 0.0
    %3256 = vmatprep.subr.mxu0 0.0
    %3257 = vmatpush2.xpose.msra.mxu0 0.0
    %3258 = vmatprep.subr.mxu0 0.0
    %3259 = vmatpush2.xpose.msra.mxu0 0.0
    %3260 = vmatprep.subr.mxu0 0.0
    %3261 = vmatpush2.xpose.msra.mxu0 0.0
    %3262 = vmatprep.subr.mxu0 0.0
    %3263 = vmatpush2.xpose.msra.mxu0 0.0
    %3264 = vmatprep.subr.mxu0 0.0
    %3265 = vmatpush2.xpose.msra.mxu0 0.0
    %3266 = vmatprep.subr.mxu0 0.0
    %3267 = vmatpush2.xpose.msra.mxu0 0.0
    %3268 = vmatprep.subr.mxu0 0.0
    %3269 = vmatpush2.xpose.msra.mxu0 0.0
    %3270 = vmatprep.subr.mxu0 0.0
    %3271 = vmatpush2.xpose.msra.mxu0 0.0
    %3272 = vmatprep.mubr.f32.mxu0 0.0
    %3273 = vmatmul.mubr.f32.gmra.mxu0 %v3204
    %v3274 = vpop.f32.mrf.mxu0
    %v3275 = vadd.f32 0.0, %v3274
    %v3276 = vpop.f32.mrf.mxu0
    %3277 = vdwg.mxu0
    %3278 = vrot.lane.b32.xlu0 %v2535, 112
    %v3279 = vpop.permute.xlu0 %3278
    %3280 = vrot.lane.b32.xlu0 %v2535, 80
    %v3281 = vpop.permute.xlu0 %3280
    %v3282 = vsel %vm540, %v3279, 0
    %v3284 = vsel %vm540, %v3281, 0
    %3286 = vmatprep.subr.mxu0 0.0
    %3287 = vmatpush1.xpose.msra.mxu0 0.0
    %3288 = vmatprep.subr.mxu0 0.0
    %3289 = vmatpush1.xpose.msra.mxu0 0.0
    %3290 = vmatprep.subr.mxu0 0.0
    %3291 = vmatpush1.xpose.msra.mxu0 0.0
    %3292 = vmatprep.subr.mxu0 0.0
    %3293 = vmatpush1.xpose.msra.mxu0 0.0
    %3294 = vmatprep.subr.mxu0 0.0
    %3295 = vmatpush1.xpose.msra.mxu0 0.0
    %3296 = vmatprep.subr.mxu0 0.0
    %3297 = vmatpush1.xpose.msra.mxu0 0.0
    %3298 = vmatprep.subr.mxu0 0.0
    %3299 = vmatpush1.xpose.msra.mxu0 0.0
    %3300 = vmatprep.subr.mxu0 0.0
    %3301 = vmatpush1.xpose.msra.mxu0 0.0
    %3302 = vmatprep.subr.mxu0 0.0
    %3303 = vmatpush1.xpose.msra.mxu0 0.0
    %3304 = vmatprep.subr.mxu0 0.0
    %3305 = vmatpush1.xpose.msra.mxu0 0.0
    %3306 = vmatprep.subr.mxu0 0.0
    %3307 = vmatpush1.xpose.msra.mxu0 0.0
    %3308 = vmatprep.subr.mxu0 0.0
    %3309 = vmatpush1.xpose.msra.mxu0 0.0
    %3310 = vmatprep.subr.mxu0 0.0
    %3311 = vmatpush1.xpose.msra.mxu0 0.0
    %3312 = vmatprep.subr.mxu0 0.0
    %3313 = vmatpush1.xpose.msra.mxu0 0.0
    %3314 = vmatprep.subr.mxu0 0.0
    %3315 = vmatpush1.xpose.msra.mxu0 0.0
    %3316 = vmatprep.subr.mxu0 0.0
    %3317 = vmatpush1.xpose.msra.mxu0 %v3284
    %3318 = vmatprep.subr.mxu0 0.0
    %3319 = vmatpush2.xpose.msra.mxu0 0.0
    %3320 = vmatprep.subr.mxu0 0.0
    %3321 = vmatpush2.xpose.msra.mxu0 0.0
    %3322 = vmatprep.subr.mxu0 0.0
    %3323 = vmatpush2.xpose.msra.mxu0 0.0
    %3324 = vmatprep.subr.mxu0 0.0
    %3325 = vmatpush2.xpose.msra.mxu0 0.0
    %3326 = vmatprep.subr.mxu0 0.0
    %3327 = vmatpush2.xpose.msra.mxu0 0.0
    %3328 = vmatprep.subr.mxu0 0.0
    %3329 = vmatpush2.xpose.msra.mxu0 0.0
    %3330 = vmatprep.subr.mxu0 0.0
    %3331 = vmatpush2.xpose.msra.mxu0 0.0
    %3332 = vmatprep.subr.mxu0 0.0
    %3333 = vmatpush2.xpose.msra.mxu0 0.0
    %3334 = vmatprep.subr.mxu0 0.0
    %3335 = vmatpush2.xpose.msra.mxu0 0.0
    %3336 = vmatprep.subr.mxu0 0.0
    %3337 = vmatpush2.xpose.msra.mxu0 0.0
    %3338 = vmatprep.subr.mxu0 0.0
    %3339 = vmatpush2.xpose.msra.mxu0 0.0
    %3340 = vmatprep.subr.mxu0 0.0
    %3341 = vmatpush2.xpose.msra.mxu0 0.0
    %3342 = vmatprep.subr.mxu0 0.0
    %3343 = vmatpush2.xpose.msra.mxu0 0.0
    %3344 = vmatprep.subr.mxu0 0.0
    %3345 = vmatpush2.xpose.msra.mxu0 0.0
    %3346 = vmatprep.subr.mxu0 0.0
    %3347 = vmatpush2.xpose.msra.mxu0 0.0
    %3348 = vmatprep.subr.mxu0 0.0
    %3349 = vmatpush2.xpose.msra.mxu0 0.0
    %3350 = vmatprep.mubr.f32.mxu0 0.0
    %3351 = vmatmul.mubr.f32.gmra.mxu0 %v3282
    %v3352 = vpop.f32.mrf.mxu0
    %v3353 = vadd.f32 0.0, %v3352
    %v3354 = vpop.f32.mrf.mxu0
    %3355 = vdwg.mxu0
    %v3356 = vmul.f32 %v3275, 0.35355338
    %v3357 = vmul.f32 %v3353, 0.35355338
    %v3358 = vsel %vm540, %v3356, -inf
    %3359 = vmax.xlane.f32.xlu0 %v3358
    %v3360 = vpop.xlane.xlu0 %3359
    %v3361 = vsel %vm540, %v3357, -inf
    %3362 = vmax.xlane.f32.xlu0 %v3361
    %v3363 = vpop.xlane.xlu0 %3362
    %v3364 = vsub.f32 %v3356, %v3360
    %v3365 = vsub.f32 %v3357, %v3363
    %v3366 = vmul.f32 %v3364, 1.442695
    %v3367 = vpow.pop %v3366
    %v3368 = vmul.f32 %v3365, 1.442695
    %v3369 = vpow.pop %v3368
    %v3370 = vsel %vm540, %v3367, 0.0
    %3371 = vadd.xlane.f32.xlu0 %v3370
    %v3372 = vpop.xlane.xlu0 %3371
    %v3373 = vsel %vm540, %v3369, 0.0
    %3374 = vadd.xlane.f32.xlu0 %v3373
    %v3375 = vpop.xlane.xlu0 %3374
    %v3376 = vrcp.pop %v3372
    %v3377 = vrcp.pop %v3375
    %v3378 = vmul.f32 %v3367, %v3376
    %v3379 = vmul.f32 %v3369, %v3377
    %3380 = vrot.lane.b32.xlu0 %v2530, 48
    %v3381 = vpop.permute.xlu0 %3380
    %v3384 = vsel %vm540, %v3378, 0
    %3386 = vmatprep.subr.mxu0 0.0
    %3387 = vmatpush1.msra.mxu0 0.0
    %3388 = vmatprep.subr.mxu0 0.0
    %3389 = vmatpush1.msra.mxu0 0.0
    %3390 = vmatprep.subr.mxu0 0.0
    %3391 = vmatpush1.msra.mxu0 0.0
    %3392 = vmatprep.subr.mxu0 0.0
    %3393 = vmatpush1.msra.mxu0 0.0
    %3394 = vmatprep.subr.mxu0 0.0
    %3395 = vmatpush1.msra.mxu0 0.0
    %3396 = vmatprep.subr.mxu0 0.0
    %3397 = vmatpush1.msra.mxu0 0.0
    %3398 = vmatprep.subr.mxu0 0.0
    %3399 = vmatpush1.msra.mxu0 0.0
    %3400 = vmatprep.subr.mxu0 0.0
    %3401 = vmatpush1.msra.mxu0 0.0
    %3402 = vmatprep.subr.mxu0 0.0
    %3403 = vmatpush1.msra.mxu0 0.0
    %3404 = vmatprep.subr.mxu0 0.0
    %3405 = vmatpush1.msra.mxu0 0.0
    %3406 = vmatprep.subr.mxu0 0.0
    %3407 = vmatpush1.msra.mxu0 0.0
    %3408 = vmatprep.subr.mxu0 0.0
    %3409 = vmatpush1.msra.mxu0 0.0
    %3410 = vmatprep.subr.mxu0 0.0
    %3411 = vmatpush1.msra.mxu0 0.0
    %3412 = vmatprep.subr.mxu0 0.0
    %3413 = vmatpush1.msra.mxu0 0.0
    %3414 = vmatprep.subr.mxu0 0.0
    %3415 = vmatpush1.msra.mxu0 0.0
    %3416 = vmatprep.subr.mxu0 0.0
    %3417 = vmatpush1.msra.mxu0 %v3381
    %3418 = vmatprep.subr.mxu0 0.0
    %3419 = vmatpush2.msra.mxu0 0.0
    %3420 = vmatprep.subr.mxu0 0.0
    %3421 = vmatpush2.msra.mxu0 0.0
    %3422 = vmatprep.subr.mxu0 0.0
    %3423 = vmatpush2.msra.mxu0 0.0
    %3424 = vmatprep.subr.mxu0 0.0
    %3425 = vmatpush2.msra.mxu0 0.0
    %3426 = vmatprep.subr.mxu0 0.0
    %3427 = vmatpush2.msra.mxu0 0.0
    %3428 = vmatprep.subr.mxu0 0.0
    %3429 = vmatpush2.msra.mxu0 0.0
    %3430 = vmatprep.subr.mxu0 0.0
    %3431 = vmatpush2.msra.mxu0 0.0
    %3432 = vmatprep.subr.mxu0 0.0
    %3433 = vmatpush2.msra.mxu0 0.0
    %3434 = vmatprep.subr.mxu0 0.0
    %3435 = vmatpush2.msra.mxu0 0.0
    %3436 = vmatprep.subr.mxu0 0.0
    %3437 = vmatpush2.msra.mxu0 0.0
    %3438 = vmatprep.subr.mxu0 0.0
    %3439 = vmatpush2.msra.mxu0 0.0
    %3440 = vmatprep.subr.mxu0 0.0
    %3441 = vmatpush2.msra.mxu0 0.0
    %3442 = vmatprep.subr.mxu0 0.0
    %3443 = vmatpush2.msra.mxu0 0.0
    %3444 = vmatprep.subr.mxu0 0.0
    %3445 = vmatpush2.msra.mxu0 0.0
    %3446 = vmatprep.subr.mxu0 0.0
    %3447 = vmatpush2.msra.mxu0 0.0
    %3448 = vmatprep.subr.mxu0 0.0
    %3449 = vmatpush2.msra.mxu0 0.0
    %3450 = vmatprep.mubr.f32.mxu0 0.0
    %3451 = vmatmul.mubr.f32.gmra.mxu0 %v3384
    %v3452 = vpop.f32.mrf.mxu0
    %v3453 = vadd.f32 0.0, %v3452
    %v3454 = vpop.f32.mrf.mxu0
    %3455 = vdwg.mxu0
    %3456 = vrot.lane.b32.xlu0 %v2535, 48
    %v3457 = vpop.permute.xlu0 %3456
    %v3460 = vsel %vm540, %v3379, 0
    %3462 = vmatprep.subr.mxu0 0.0
    %3463 = vmatpush1.msra.mxu0 0.0
    %3464 = vmatprep.subr.mxu0 0.0
    %3465 = vmatpush1.msra.mxu0 0.0
    %3466 = vmatprep.subr.mxu0 0.0
    %3467 = vmatpush1.msra.mxu0 0.0
    %3468 = vmatprep.subr.mxu0 0.0
    %3469 = vmatpush1.msra.mxu0 0.0
    %3470 = vmatprep.subr.mxu0 0.0
    %3471 = vmatpush1.msra.mxu0 0.0
    %3472 = vmatprep.subr.mxu0 0.0
    %3473 = vmatpush1.msra.mxu0 0.0
    %3474 = vmatprep.subr.mxu0 0.0
    %3475 = vmatpush1.msra.mxu0 0.0
    %3476 = vmatprep.subr.mxu0 0.0
    %3477 = vmatpush1.msra.mxu0 0.0
    %3478 = vmatprep.subr.mxu0 0.0
    %3479 = vmatpush1.msra.mxu0 0.0
    %3480 = vmatprep.subr.mxu0 0.0
    %3481 = vmatpush1.msra.mxu0 0.0
    %3482 = vmatprep.subr.mxu0 0.0
    %3483 = vmatpush1.msra.mxu0 0.0
    %3484 = vmatprep.subr.mxu0 0.0
    %3485 = vmatpush1.msra.mxu0 0.0
    %3486 = vmatprep.subr.mxu0 0.0
    %3487 = vmatpush1.msra.mxu0 0.0
    %3488 = vmatprep.subr.mxu0 0.0
    %3489 = vmatpush1.msra.mxu0 0.0
    %3490 = vmatprep.subr.mxu0 0.0
    %3491 = vmatpush1.msra.mxu0 0.0
    %3492 = vmatprep.subr.mxu0 0.0
    %3493 = vmatpush1.msra.mxu0 %v3457
    %3494 = vmatprep.subr.mxu0 0.0
    %3495 = vmatpush2.msra.mxu0 0.0
    %3496 = vmatprep.subr.mxu0 0.0
    %3497 = vmatpush2.msra.mxu0 0.0
    %3498 = vmatprep.subr.mxu0 0.0
    %3499 = vmatpush2.msra.mxu0 0.0
    %3500 = vmatprep.subr.mxu0 0.0
    %3501 = vmatpush2.msra.mxu0 0.0
    %3502 = vmatprep.subr.mxu0 0.0
    %3503 = vmatpush2.msra.mxu0 0.0
    %3504 = vmatprep.subr.mxu0 0.0
    %3505 = vmatpush2.msra.mxu0 0.0
    %3506 = vmatprep.subr.mxu0 0.0
    %3507 = vmatpush2.msra.mxu0 0.0
    %3508 = vmatprep.subr.mxu0 0.0
    %3509 = vmatpush2.msra.mxu0 0.0
    %3510 = vmatprep.subr.mxu0 0.0
    %3511 = vmatpush2.msra.mxu0 0.0
    %3512 = vmatprep.subr.mxu0 0.0
    %3513 = vmatpush2.msra.mxu0 0.0
    %3514 = vmatprep.subr.mxu0 0.0
    %3515 = vmatpush2.msra.mxu0 0.0
    %3516 = vmatprep.subr.mxu0 0.0
    %3517 = vmatpush2.msra.mxu0 0.0
    %3518 = vmatprep.subr.mxu0 0.0
    %3519 = vmatpush2.msra.mxu0 0.0
    %3520 = vmatprep.subr.mxu0 0.0
    %3521 = vmatpush2.msra.mxu0 0.0
    %3522 = vmatprep.subr.mxu0 0.0
    %3523 = vmatpush2.msra.mxu0 0.0
    %3524 = vmatprep.subr.mxu0 0.0
    %3525 = vmatpush2.msra.mxu0 0.0
    %3526 = vmatprep.mubr.f32.mxu0 0.0
    %3527 = vmatmul.mubr.f32.gmra.mxu0 %v3460
    %v3528 = vpop.f32.mrf.mxu0
    %v3529 = vadd.f32 0.0, %v3528
    %v3530 = vpop.f32.mrf.mxu0
    %3531 = vdwg.mxu0
    %3532 = vrot.lane.b32.xlu0 %v2530, 104
    %v3533 = vpop.permute.xlu0 %3532
    %3534 = vrot.lane.b32.xlu0 %v2530, 72
    %v3535 = vpop.permute.xlu0 %3534
    %v3536 = vsel %vm540, %v3533, 0
    %v3538 = vsel %vm540, %v3535, 0
    %3540 = vmatprep.subr.mxu0 0.0
    %3541 = vmatpush1.xpose.msra.mxu0 0.0
    %3542 = vmatprep.subr.mxu0 0.0
    %3543 = vmatpush1.xpose.msra.mxu0 0.0
    %3544 = vmatprep.subr.mxu0 0.0
    %3545 = vmatpush1.xpose.msra.mxu0 0.0
    %3546 = vmatprep.subr.mxu0 0.0
    %3547 = vmatpush1.xpose.msra.mxu0 0.0
    %3548 = vmatprep.subr.mxu0 0.0
    %3549 = vmatpush1.xpose.msra.mxu0 0.0
    %3550 = vmatprep.subr.mxu0 0.0
    %3551 = vmatpush1.xpose.msra.mxu0 0.0
    %3552 = vmatprep.subr.mxu0 0.0
    %3553 = vmatpush1.xpose.msra.mxu0 0.0
    %3554 = vmatprep.subr.mxu0 0.0
    %3555 = vmatpush1.xpose.msra.mxu0 0.0
    %3556 = vmatprep.subr.mxu0 0.0
    %3557 = vmatpush1.xpose.msra.mxu0 0.0
    %3558 = vmatprep.subr.mxu0 0.0
    %3559 = vmatpush1.xpose.msra.mxu0 0.0
    %3560 = vmatprep.subr.mxu0 0.0
    %3561 = vmatpush1.xpose.msra.mxu0 0.0
    %3562 = vmatprep.subr.mxu0 0.0
    %3563 = vmatpush1.xpose.msra.mxu0 0.0
    %3564 = vmatprep.subr.mxu0 0.0
    %3565 = vmatpush1.xpose.msra.mxu0 0.0
    %3566 = vmatprep.subr.mxu0 0.0
    %3567 = vmatpush1.xpose.msra.mxu0 0.0
    %3568 = vmatprep.subr.mxu0 0.0
    %3569 = vmatpush1.xpose.msra.mxu0 0.0
    %3570 = vmatprep.subr.mxu0 0.0
    %3571 = vmatpush1.xpose.msra.mxu0 %v3538
    %3572 = vmatprep.subr.mxu0 0.0
    %3573 = vmatpush2.xpose.msra.mxu0 0.0
    %3574 = vmatprep.subr.mxu0 0.0
    %3575 = vmatpush2.xpose.msra.mxu0 0.0
    %3576 = vmatprep.subr.mxu0 0.0
    %3577 = vmatpush2.xpose.msra.mxu0 0.0
    %3578 = vmatprep.subr.mxu0 0.0
    %3579 = vmatpush2.xpose.msra.mxu0 0.0
    %3580 = vmatprep.subr.mxu0 0.0
    %3581 = vmatpush2.xpose.msra.mxu0 0.0
    %3582 = vmatprep.subr.mxu0 0.0
    %3583 = vmatpush2.xpose.msra.mxu0 0.0
    %3584 = vmatprep.subr.mxu0 0.0
    %3585 = vmatpush2.xpose.msra.mxu0 0.0
    %3586 = vmatprep.subr.mxu0 0.0
    %3587 = vmatpush2.xpose.msra.mxu0 0.0
    %3588 = vmatprep.subr.mxu0 0.0
    %3589 = vmatpush2.xpose.msra.mxu0 0.0
    %3590 = vmatprep.subr.mxu0 0.0
    %3591 = vmatpush2.xpose.msra.mxu0 0.0
    %3592 = vmatprep.subr.mxu0 0.0
    %3593 = vmatpush2.xpose.msra.mxu0 0.0
    %3594 = vmatprep.subr.mxu0 0.0
    %3595 = vmatpush2.xpose.msra.mxu0 0.0
    %3596 = vmatprep.subr.mxu0 0.0
    %3597 = vmatpush2.xpose.msra.mxu0 0.0
    %3598 = vmatprep.subr.mxu0 0.0
    %3599 = vmatpush2.xpose.msra.mxu0 0.0
    %3600 = vmatprep.subr.mxu0 0.0
    %3601 = vmatpush2.xpose.msra.mxu0 0.0
    %3602 = vmatprep.subr.mxu0 0.0
    %3603 = vmatpush2.xpose.msra.mxu0 0.0
    %3604 = vmatprep.mubr.f32.mxu0 0.0
    %3605 = vmatmul.mubr.f32.gmra.mxu0 %v3536
    %v3606 = vpop.f32.mrf.mxu0
    %v3607 = vadd.f32 0.0, %v3606
    %v3608 = vpop.f32.mrf.mxu0
    %3609 = vdwg.mxu0
    %3610 = vrot.lane.b32.xlu0 %v2535, 104
    %v3611 = vpop.permute.xlu0 %3610
    %3612 = vrot.lane.b32.xlu0 %v2535, 72
    %v3613 = vpop.permute.xlu0 %3612
    %v3614 = vsel %vm540, %v3611, 0
    %v3616 = vsel %vm540, %v3613, 0
    %3618 = vmatprep.subr.mxu0 0.0
    %3619 = vmatpush1.xpose.msra.mxu0 0.0
    %3620 = vmatprep.subr.mxu0 0.0
    %3621 = vmatpush1.xpose.msra.mxu0 0.0
    %3622 = vmatprep.subr.mxu0 0.0
    %3623 = vmatpush1.xpose.msra.mxu0 0.0
    %3624 = vmatprep.subr.mxu0 0.0
    %3625 = vmatpush1.xpose.msra.mxu0 0.0
    %3626 = vmatprep.subr.mxu0 0.0
    %3627 = vmatpush1.xpose.msra.mxu0 0.0
    %3628 = vmatprep.subr.mxu0 0.0
    %3629 = vmatpush1.xpose.msra.mxu0 0.0
    %3630 = vmatprep.subr.mxu0 0.0
    %3631 = vmatpush1.xpose.msra.mxu0 0.0
    %3632 = vmatprep.subr.mxu0 0.0
    %3633 = vmatpush1.xpose.msra.mxu0 0.0
    %3634 = vmatprep.subr.mxu0 0.0
    %3635 = vmatpush1.xpose.msra.mxu0 0.0
    %3636 = vmatprep.subr.mxu0 0.0
    %3637 = vmatpush1.xpose.msra.mxu0 0.0
    %3638 = vmatprep.subr.mxu0 0.0
    %3639 = vmatpush1.xpose.msra.mxu0 0.0
    %3640 = vmatprep.subr.mxu0 0.0
    %3641 = vmatpush1.xpose.msra.mxu0 0.0
    %3642 = vmatprep.subr.mxu0 0.0
    %3643 = vmatpush1.xpose.msra.mxu0 0.0
    %3644 = vmatprep.subr.mxu0 0.0
    %3645 = vmatpush1.xpose.msra.mxu0 0.0
    %3646 = vmatprep.subr.mxu0 0.0
    %3647 = vmatpush1.xpose.msra.mxu0 0.0
    %3648 = vmatprep.subr.mxu0 0.0
    %3649 = vmatpush1.xpose.msra.mxu0 %v3616
    %3650 = vmatprep.subr.mxu0 0.0
    %3651 = vmatpush2.xpose.msra.mxu0 0.0
    %3652 = vmatprep.subr.mxu0 0.0
    %3653 = vmatpush2.xpose.msra.mxu0 0.0
    %3654 = vmatprep.subr.mxu0 0.0
    %3655 = vmatpush2.xpose.msra.mxu0 0.0
    %3656 = vmatprep.subr.mxu0 0.0
    %3657 = vmatpush2.xpose.msra.mxu0 0.0
    %3658 = vmatprep.subr.mxu0 0.0
    %3659 = vmatpush2.xpose.msra.mxu0 0.0
    %3660 = vmatprep.subr.mxu0 0.0
    %3661 = vmatpush2.xpose.msra.mxu0 0.0
    %3662 = vmatprep.subr.mxu0 0.0
    %3663 = vmatpush2.xpose.msra.mxu0 0.0
    %3664 = vmatprep.subr.mxu0 0.0
    %3665 = vmatpush2.xpose.msra.mxu0 0.0
    %3666 = vmatprep.subr.mxu0 0.0
    %3667 = vmatpush2.xpose.msra.mxu0 0.0
    %3668 = vmatprep.subr.mxu0 0.0
    %3669 = vmatpush2.xpose.msra.mxu0 0.0
    %3670 = vmatprep.subr.mxu0 0.0
    %3671 = vmatpush2.xpose.msra.mxu0 0.0
    %3672 = vmatprep.subr.mxu0 0.0
    %3673 = vmatpush2.xpose.msra.mxu0 0.0
    %3674 = vmatprep.subr.mxu0 0.0
    %3675 = vmatpush2.xpose.msra.mxu0 0.0
    %3676 = vmatprep.subr.mxu0 0.0
    %3677 = vmatpush2.xpose.msra.mxu0 0.0
    %3678 = vmatprep.subr.mxu0 0.0
    %3679 = vmatpush2.xpose.msra.mxu0 0.0
    %3680 = vmatprep.subr.mxu0 0.0
    %3681 = vmatpush2.xpose.msra.mxu0 0.0
    %3682 = vmatprep.mubr.f32.mxu0 0.0
    %3683 = vmatmul.mubr.f32.gmra.mxu0 %v3614
    %v3684 = vpop.f32.mrf.mxu0
    %v3685 = vadd.f32 0.0, %v3684
    %v3686 = vpop.f32.mrf.mxu0
    %3687 = vdwg.mxu0
    %v3688 = vmul.f32 %v3607, 0.35355338
    %v3689 = vmul.f32 %v3685, 0.35355338
    %v3690 = vsel %vm540, %v3688, -inf
    %3691 = vmax.xlane.f32.xlu0 %v3690
    %v3692 = vpop.xlane.xlu0 %3691
    %v3693 = vsel %vm540, %v3689, -inf
    %3694 = vmax.xlane.f32.xlu0 %v3693
    %v3695 = vpop.xlane.xlu0 %3694
    %v3696 = vsub.f32 %v3688, %v3692
    %v3697 = vsub.f32 %v3689, %v3695
    %v3698 = vmul.f32 %v3696, 1.442695
    %v3699 = vpow.pop %v3698
    %v3700 = vmul.f32 %v3697, 1.442695
    %v3701 = vpow.pop %v3700
    %v3702 = vsel %vm540, %v3699, 0.0
    %3703 = vadd.xlane.f32.xlu0 %v3702
    %v3704 = vpop.xlane.xlu0 %3703
    %v3705 = vsel %vm540, %v3701, 0.0
    %3706 = vadd.xlane.f32.xlu0 %v3705
    %v3707 = vpop.xlane.xlu0 %3706
    %v3708 = vrcp.pop %v3704
    %v3709 = vrcp.pop %v3707
    %v3710 = vmul.f32 %v3699, %v3708
    %v3711 = vmul.f32 %v3701, %v3709
    %3712 = vrot.lane.b32.xlu0 %v2530, 40
    %v3713 = vpop.permute.xlu0 %3712
    %v3716 = vsel %vm540, %v3710, 0
    %3718 = vmatprep.subr.mxu0 0.0
    %3719 = vmatpush1.msra.mxu0 0.0
    %3720 = vmatprep.subr.mxu0 0.0
    %3721 = vmatpush1.msra.mxu0 0.0
    %3722 = vmatprep.subr.mxu0 0.0
    %3723 = vmatpush1.msra.mxu0 0.0
    %3724 = vmatprep.subr.mxu0 0.0
    %3725 = vmatpush1.msra.mxu0 0.0
    %3726 = vmatprep.subr.mxu0 0.0
    %3727 = vmatpush1.msra.mxu0 0.0
    %3728 = vmatprep.subr.mxu0 0.0
    %3729 = vmatpush1.msra.mxu0 0.0
    %3730 = vmatprep.subr.mxu0 0.0
    %3731 = vmatpush1.msra.mxu0 0.0
    %3732 = vmatprep.subr.mxu0 0.0
    %3733 = vmatpush1.msra.mxu0 0.0
    %3734 = vmatprep.subr.mxu0 0.0
    %3735 = vmatpush1.msra.mxu0 0.0
    %3736 = vmatprep.subr.mxu0 0.0
    %3737 = vmatpush1.msra.mxu0 0.0
    %3738 = vmatprep.subr.mxu0 0.0
    %3739 = vmatpush1.msra.mxu0 0.0
    %3740 = vmatprep.subr.mxu0 0.0
    %3741 = vmatpush1.msra.mxu0 0.0
    %3742 = vmatprep.subr.mxu0 0.0
    %3743 = vmatpush1.msra.mxu0 0.0
    %3744 = vmatprep.subr.mxu0 0.0
    %3745 = vmatpush1.msra.mxu0 0.0
    %3746 = vmatprep.subr.mxu0 0.0
    %3747 = vmatpush1.msra.mxu0 0.0
    %3748 = vmatprep.subr.mxu0 0.0
    %3749 = vmatpush1.msra.mxu0 %v3713
    %3750 = vmatprep.subr.mxu0 0.0
    %3751 = vmatpush2.msra.mxu0 0.0
    %3752 = vmatprep.subr.mxu0 0.0
    %3753 = vmatpush2.msra.mxu0 0.0
    %3754 = vmatprep.subr.mxu0 0.0
    %3755 = vmatpush2.msra.mxu0 0.0
    %3756 = vmatprep.subr.mxu0 0.0
    %3757 = vmatpush2.msra.mxu0 0.0
    %3758 = vmatprep.subr.mxu0 0.0
    %3759 = vmatpush2.msra.mxu0 0.0
    %3760 = vmatprep.subr.mxu0 0.0
    %3761 = vmatpush2.msra.mxu0 0.0
    %3762 = vmatprep.subr.mxu0 0.0
    %3763 = vmatpush2.msra.mxu0 0.0
    %3764 = vmatprep.subr.mxu0 0.0
    %3765 = vmatpush2.msra.mxu0 0.0
    %3766 = vmatprep.subr.mxu0 0.0
    %3767 = vmatpush2.msra.mxu0 0.0
    %3768 = vmatprep.subr.mxu0 0.0
    %3769 = vmatpush2.msra.mxu0 0.0
    %3770 = vmatprep.subr.mxu0 0.0
    %3771 = vmatpush2.msra.mxu0 0.0
    %3772 = vmatprep.subr.mxu0 0.0
    %3773 = vmatpush2.msra.mxu0 0.0
    %3774 = vmatprep.subr.mxu0 0.0
    %3775 = vmatpush2.msra.mxu0 0.0
    %3776 = vmatprep.subr.mxu0 0.0
    %3777 = vmatpush2.msra.mxu0 0.0
    %3778 = vmatprep.subr.mxu0 0.0
    %3779 = vmatpush2.msra.mxu0 0.0
    %3780 = vmatprep.subr.mxu0 0.0
    %3781 = vmatpush2.msra.mxu0 0.0
    %3782 = vmatprep.mubr.f32.mxu0 0.0
    %3783 = vmatmul.mubr.f32.gmra.mxu0 %v3716
    %v3784 = vpop.f32.mrf.mxu0
    %v3785 = vadd.f32 0.0, %v3784
    %v3786 = vpop.f32.mrf.mxu0
    %3787 = vdwg.mxu0
    %3788 = vrot.lane.b32.xlu0 %v2535, 40
    %v3789 = vpop.permute.xlu0 %3788
    %v3792 = vsel %vm540, %v3711, 0
    %3794 = vmatprep.subr.mxu0 0.0
    %3795 = vmatpush1.msra.mxu0 0.0
    %3796 = vmatprep.subr.mxu0 0.0
    %3797 = vmatpush1.msra.mxu0 0.0
    %3798 = vmatprep.subr.mxu0 0.0
    %3799 = vmatpush1.msra.mxu0 0.0
    %3800 = vmatprep.subr.mxu0 0.0
    %3801 = vmatpush1.msra.mxu0 0.0
    %3802 = vmatprep.subr.mxu0 0.0
    %3803 = vmatpush1.msra.mxu0 0.0
    %3804 = vmatprep.subr.mxu0 0.0
    %3805 = vmatpush1.msra.mxu0 0.0
    %3806 = vmatprep.subr.mxu0 0.0
    %3807 = vmatpush1.msra.mxu0 0.0
    %3808 = vmatprep.subr.mxu0 0.0
    %3809 = vmatpush1.msra.mxu0 0.0
    %3810 = vmatprep.subr.mxu0 0.0
    %3811 = vmatpush1.msra.mxu0 0.0
    %3812 = vmatprep.subr.mxu0 0.0
    %3813 = vmatpush1.msra.mxu0 0.0
    %3814 = vmatprep.subr.mxu0 0.0
    %3815 = vmatpush1.msra.mxu0 0.0
    %3816 = vmatprep.subr.mxu0 0.0
    %3817 = vmatpush1.msra.mxu0 0.0
    %3818 = vmatprep.subr.mxu0 0.0
    %3819 = vmatpush1.msra.mxu0 0.0
    %3820 = vmatprep.subr.mxu0 0.0
    %3821 = vmatpush1.msra.mxu0 0.0
    %3822 = vmatprep.subr.mxu0 0.0
    %3823 = vmatpush1.msra.mxu0 0.0
    %3824 = vmatprep.subr.mxu0 0.0
    %3825 = vmatpush1.msra.mxu0 %v3789
    %3826 = vmatprep.subr.mxu0 0.0
    %3827 = vmatpush2.msra.mxu0 0.0
    %3828 = vmatprep.subr.mxu0 0.0
    %3829 = vmatpush2.msra.mxu0 0.0
    %3830 = vmatprep.subr.mxu0 0.0
    %3831 = vmatpush2.msra.mxu0 0.0
    %3832 = vmatprep.subr.mxu0 0.0
    %3833 = vmatpush2.msra.mxu0 0.0
    %3834 = vmatprep.subr.mxu0 0.0
    %3835 = vmatpush2.msra.mxu0 0.0
    %3836 = vmatprep.subr.mxu0 0.0
    %3837 = vmatpush2.msra.mxu0 0.0
    %3838 = vmatprep.subr.mxu0 0.0
    %3839 = vmatpush2.msra.mxu0 0.0
    %3840 = vmatprep.subr.mxu0 0.0
    %3841 = vmatpush2.msra.mxu0 0.0
    %3842 = vmatprep.subr.mxu0 0.0
    %3843 = vmatpush2.msra.mxu0 0.0
    %3844 = vmatprep.subr.mxu0 0.0
    %3845 = vmatpush2.msra.mxu0 0.0
    %3846 = vmatprep.subr.mxu0 0.0
    %3847 = vmatpush2.msra.mxu0 0.0
    %3848 = vmatprep.subr.mxu0 0.0
    %3849 = vmatpush2.msra.mxu0 0.0
    %3850 = vmatprep.subr.mxu0 0.0
    %3851 = vmatpush2.msra.mxu0 0.0
    %3852 = vmatprep.subr.mxu0 0.0
    %3853 = vmatpush2.msra.mxu0 0.0
    %3854 = vmatprep.subr.mxu0 0.0
    %3855 = vmatpush2.msra.mxu0 0.0
    %3856 = vmatprep.subr.mxu0 0.0
    %3857 = vmatpush2.msra.mxu0 0.0
    %3858 = vmatprep.mubr.f32.mxu0 0.0
    %3859 = vmatmul.mubr.f32.gmra.mxu0 %v3792
    %v3860 = vpop.f32.mrf.mxu0
    %v3861 = vadd.f32 0.0, %v3860
    %v3862 = vpop.f32.mrf.mxu0
    %3863 = vdwg.mxu0
    %3864 = vst.msk [vmem:[#allocation38] sm:$0xff] %vm540, %v2714
    %3865 = vst.msk [vmem:[#allocation38 + $0x8] sm:$0xff] %vm540, %v2715
    %3866 = vst.msk [vmem:[#allocation38 + $0x10] sm:$0xff] %vm540, %v3046
    %3867 = vst.msk [vmem:[#allocation38 + $0x18] sm:$0xff] %vm540, %v3047
    %3868 = vst.msk [vmem:[#allocation38 + $0x20] sm:$0xff] %vm540, %v3378
    %3869 = vst.msk [vmem:[#allocation38 + $0x28] sm:$0xff] %vm540, %v3379
    %3870 = vst.msk [vmem:[#allocation38 + $0x30] sm:$0xff] %vm540, %v3710
    %3871 = vst.msk [vmem:[#allocation38 + $0x38] sm:$0xff] %vm540, %v3711
    %3874 = vrot.lane.b32.xlu0 %v3121, 8
    %v3875 = vpop.permute.xlu0 %3874
    %3876 = vrot.lane.b32.xlu0 %v3197, 8
    %v3877 = vpop.permute.xlu0 %3876
    %3882 = vrot.lane.b32.xlu0 %v3453, 16
    %v3883 = vpop.permute.xlu0 %3882
    %3884 = vrot.lane.b32.xlu0 %v3529, 16
    %v3885 = vpop.permute.xlu0 %3884
    %3890 = vrot.lane.b32.xlu0 %v3785, 24
    %v3891 = vpop.permute.xlu0 %3890
    %3892 = vrot.lane.b32.xlu0 %v3861, 24
    %v3893 = vpop.permute.xlu0 %3892
    %v3896 = vsel %vm540, %v2789, %v3875
    %v3897 = vsel %vm540, %v2865, %v3877
    %v3898 = vsel %vm2067, %v3896, %v3883
    %v3899 = vsel %vm2067, %v3897, %v3885
    %v3900 = vsel %vm2070, %v3898, %v3891
    %v3901 = vsel %vm2070, %v3899, %v3893
    %s3902 = scalar_lea.vmem %s17, 32
    %v3903 = vld [vmem:[%s3902] sm:$0xff]
    %v3904 = vld [vmem:[%s3902 + $0x8] sm:$0xff]
    %v3905 = vld [vmem:[%s3902 + $0x10] sm:$0xff]
    %v3906 = vld [vmem:[%s3902 + $0x18] sm:$0xff]
    %s3907 = scalar_lea.vmem [#allocation11], 1
    %v3908 = vld [vmem:[%s3907] sm:$0x1]
    %v3910 = vlaneseq
    %v3911 = vshrl.u32 %v3910, 7
    %v3912 = vsub.s32 0, %v3911
    %v3913 = vrot.slane %v3908, %v3912
    %v3916 = vsel %vm614, %v3900, 0
    %v3919 = vsel %vm614, %v3901, 0
    %3921 = vmatprep.subr.mxu0 0.0
    %3922 = vmatpush1.msra.mxu0 0.0
    %3923 = vmatprep.subr.mxu0 0.0
    %3924 = vmatpush1.msra.mxu0 0.0
    %3925 = vmatprep.subr.mxu0 0.0
    %3926 = vmatpush1.msra.mxu0 0.0
    %3927 = vmatprep.subr.mxu0 0.0
    %3928 = vmatpush1.msra.mxu0 0.0
    %3929 = vmatprep.subr.mxu0 0.0
    %3930 = vmatpush1.msra.mxu0 0.0
    %3931 = vmatprep.subr.mxu0 0.0
    %3932 = vmatpush1.msra.mxu0 0.0
    %3933 = vmatprep.subr.mxu0 0.0
    %3934 = vmatpush1.msra.mxu0 0.0
    %3935 = vmatprep.subr.mxu0 0.0
    %3936 = vmatpush1.msra.mxu0 0.0
    %3937 = vmatprep.subr.mxu0 0.0
    %3938 = vmatpush1.msra.mxu0 0.0
    %3939 = vmatprep.subr.mxu0 0.0
    %3940 = vmatpush1.msra.mxu0 0.0
    %3941 = vmatprep.subr.mxu0 0.0
    %3942 = vmatpush1.msra.mxu0 0.0
    %3943 = vmatprep.subr.mxu0 0.0
    %3944 = vmatpush1.msra.mxu0 0.0
    %3945 = vmatprep.subr.mxu0 0.0
    %3946 = vmatpush1.msra.mxu0 %v3906
    %3947 = vmatprep.subr.mxu0 0.0
    %3948 = vmatpush1.msra.mxu0 %v3905
    %3949 = vmatprep.subr.mxu0 0.0
    %3950 = vmatpush1.msra.mxu0 %v3904
    %3951 = vmatprep.subr.mxu0 0.0
    %3952 = vmatpush1.msra.mxu0 %v3903
    %3953 = vmatprep.subr.mxu0 0.0
    %3954 = vmatpush2.msra.mxu0 0.0
    %3955 = vmatprep.subr.mxu0 0.0
    %3956 = vmatpush2.msra.mxu0 0.0
    %3957 = vmatprep.subr.mxu0 0.0
    %3958 = vmatpush2.msra.mxu0 0.0
    %3959 = vmatprep.subr.mxu0 0.0
    %3960 = vmatpush2.msra.mxu0 0.0
    %3961 = vmatprep.subr.mxu0 0.0
    %3962 = vmatpush2.msra.mxu0 0.0
    %3963 = vmatprep.subr.mxu0 0.0
    %3964 = vmatpush2.msra.mxu0 0.0
    %3965 = vmatprep.subr.mxu0 0.0
    %3966 = vmatpush2.msra.mxu0 0.0
    %3967 = vmatprep.subr.mxu0 0.0
    %3968 = vmatpush2.msra.mxu0 0.0
    %3969 = vmatprep.subr.mxu0 0.0
    %3970 = vmatpush2.msra.mxu0 0.0
    %3971 = vmatprep.subr.mxu0 0.0
    %3972 = vmatpush2.msra.mxu0 0.0
    %3973 = vmatprep.subr.mxu0 0.0
    %3974 = vmatpush2.msra.mxu0 0.0
    %3975 = vmatprep.subr.mxu0 0.0
    %3976 = vmatpush2.msra.mxu0 0.0
    %3977 = vmatprep.subr.mxu0 0.0
    %3978 = vmatpush2.msra.mxu0 0.0
    %3979 = vmatprep.subr.mxu0 0.0
    %3980 = vmatpush2.msra.mxu0 0.0
    %3981 = vmatprep.subr.mxu0 0.0
    %3982 = vmatpush2.msra.mxu0 0.0
    %3983 = vmatprep.subr.mxu0 0.0
    %3984 = vmatpush2.msra.mxu0 0.0
    %3985 = vmatprep.mubr.f32.mxu0 0.0
    %3986 = vmatmul.mubr.f32.gmra.mxu0 %v3916
    %v3987 = vpop.f32.mrf.mxu0
    %v3988 = vadd.f32 %v3913, %v3987
    %v3989 = vpop.f32.mrf.mxu0
    %3990 = vmatprep.mubr.f32.mxu0 0.0
    %3991 = vmatmul.mubr.f32.gmra.mxu0 %v3919
    %v3992 = vpop.f32.mrf.mxu0
    %v3993 = vadd.f32 %v3913, %v3992
    %v3994 = vpop.f32.mrf.mxu0
    %3995 = vdwg.mxu0
    %v3996 = vadd.f32 %v2442, %v3988
    %v3997 = vadd.f32 %v2443, %v3993
    %s3998 = scalar_lea.vmem [#allocation13], 1
    %v3999 = vld [vmem:[%s3998] sm:$0x1]
    %s4000 = scalar_lea.vmem [#allocation14], 1
    %v4001 = vld [vmem:[%s4000] sm:$0x1]
    %v4002 = vsel %vm614, %v3996, 0.0
    %4003 = vadd.xlane.f32.xlu0 %v4002
    %v4004 = vpop.xlane.xlu0 %4003
    %v4005 = vsel %vm614, %v3997, 0.0
    %4006 = vadd.xlane.f32.xlu0 %v4005
    %v4007 = vpop.xlane.xlu0 %4006
    %v4008 = vmul.f32 %v4004, %v2175
    %v4009 = vmul.f32 %v4007, %v2175
    %v4010 = vsub.f32 %v3996, %v4008
    %v4011 = vsub.f32 %v3997, %v4009
    %v4012 = vmul.f32 %v4010, %v4010
    %v4013 = vmul.f32 %v4011, %v4011
    %v4014 = vsel %vm614, %v4012, 0.0
    %4015 = vadd.xlane.f32.xlu0 %v4014
    %v4016 = vpop.xlane.xlu0 %4015
    %v4017 = vsel %vm614, %v4013, 0.0
    %4018 = vadd.xlane.f32.xlu0 %v4017
    %v4019 = vpop.xlane.xlu0 %4018
    %v4020 = vmul.f32 %v4016, %v2175
    %v4021 = vmul.f32 %v4019, %v2175
    %v4022 = vadd.f32 %v4020, 1e-05
    %v4023 = vadd.f32 %v4021, 1e-05
    %v4024 = vrsqrt.pop %v4022
    %v4025 = vrsqrt.pop %v4023
    %v4026 = vmul.f32 %v4010, %v4024
    %v4027 = vmul.f32 %v4011, %v4025
    %v4029 = vlaneseq
    %v4030 = vshrl.u32 %v4029, 7
    %v4031 = vsub.s32 0, %v4030
    %v4032 = vrot.slane %v3999, %v4031
    %v4034 = vmul.f32 %v4026, %v4032
    %v4035 = vmul.f32 %v4027, %v4032
    %v4037 = vlaneseq
    %v4038 = vshrl.u32 %v4037, 7
    %v4039 = vsub.s32 0, %v4038
    %v4040 = vrot.slane %v4001, %v4039
    %v4042 = vadd.f32 %v4034, %v4040
    %v4043 = vadd.f32 %v4035, %v4040
    %s4044 = scalar_lea.vmem %s25, 32
    %v4045 = vld [vmem:[%s4044] sm:$0xff]
    %v4046 = vld [vmem:[%s4044 + $0x8] sm:$0xff]
    %v4047 = vld [vmem:[%s4044 + $0x10] sm:$0xff]
    %v4048 = vld [vmem:[%s4044 + $0x18] sm:$0xff]
    %s4049 = scalar_lea.vmem [#allocation16], 1
    %v4050 = vld [vmem:[%s4049] sm:$0x1]
    %v4052 = vlaneseq
    %v4053 = vshrl.u32 %v4052, 7
    %v4054 = vsub.s32 0, %v4053
    %v4055 = vrot.slane %v4050, %v4054
    %v4058 = vsel %vm614, %v4042, 0
    %v4061 = vsel %vm614, %v4043, 0
    %4063 = vmatprep.subr.mxu0 0.0
    %4064 = vmatpush1.msra.mxu0 0.0
    %4065 = vmatprep.subr.mxu0 0.0
    %4066 = vmatpush1.msra.mxu0 0.0
    %4067 = vmatprep.subr.mxu0 0.0
    %4068 = vmatpush1.msra.mxu0 0.0
    %4069 = vmatprep.subr.mxu0 0.0
    %4070 = vmatpush1.msra.mxu0 0.0
    %4071 = vmatprep.subr.mxu0 0.0
    %4072 = vmatpush1.msra.mxu0 0.0
    %4073 = vmatprep.subr.mxu0 0.0
    %4074 = vmatpush1.msra.mxu0 0.0
    %4075 = vmatprep.subr.mxu0 0.0
    %4076 = vmatpush1.msra.mxu0 0.0
    %4077 = vmatprep.subr.mxu0 0.0
    %4078 = vmatpush1.msra.mxu0 0.0
    %4079 = vmatprep.subr.mxu0 0.0
    %4080 = vmatpush1.msra.mxu0 0.0
    %4081 = vmatprep.subr.mxu0 0.0
    %4082 = vmatpush1.msra.mxu0 0.0
    %4083 = vmatprep.subr.mxu0 0.0
    %4084 = vmatpush1.msra.mxu0 0.0
    %4085 = vmatprep.subr.mxu0 0.0
    %4086 = vmatpush1.msra.mxu0 0.0
    %4087 = vmatprep.subr.mxu0 0.0
    %4088 = vmatpush1.msra.mxu0 %v4048
    %4089 = vmatprep.subr.mxu0 0.0
    %4090 = vmatpush1.msra.mxu0 %v4047
    %4091 = vmatprep.subr.mxu0 0.0
    %4092 = vmatpush1.msra.mxu0 %v4046
    %4093 = vmatprep.subr.mxu0 0.0
    %4094 = vmatpush1.msra.mxu0 %v4045
    %4095 = vmatprep.subr.mxu0 0.0
    %4096 = vmatpush2.msra.mxu0 0.0
    %4097 = vmatprep.subr.mxu0 0.0
    %4098 = vmatpush2.msra.mxu0 0.0
    %4099 = vmatprep.subr.mxu0 0.0
    %4100 = vmatpush2.msra.mxu0 0.0
    %4101 = vmatprep.subr.mxu0 0.0
    %4102 = vmatpush2.msra.mxu0 0.0
    %4103 = vmatprep.subr.mxu0 0.0
    %4104 = vmatpush2.msra.mxu0 0.0
    %4105 = vmatprep.subr.mxu0 0.0
    %4106 = vmatpush2.msra.mxu0 0.0
    %4107 = vmatprep.subr.mxu0 0.0
    %4108 = vmatpush2.msra.mxu0 0.0
    %4109 = vmatprep.subr.mxu0 0.0
    %4110 = vmatpush2.msra.mxu0 0.0
    %4111 = vmatprep.subr.mxu0 0.0
    %4112 = vmatpush2.msra.mxu0 0.0
    %4113 = vmatprep.subr.mxu0 0.0
    %4114 = vmatpush2.msra.mxu0 0.0
    %4115 = vmatprep.subr.mxu0 0.0
    %4116 = vmatpush2.msra.mxu0 0.0
    %4117 = vmatprep.subr.mxu0 0.0
    %4118 = vmatpush2.msra.mxu0 0.0
    %4119 = vmatprep.subr.mxu0 0.0
    %4120 = vmatpush2.msra.mxu0 0.0
    %4121 = vmatprep.subr.mxu0 0.0
    %4122 = vmatpush2.msra.mxu0 0.0
    %4123 = vmatprep.subr.mxu0 0.0
    %4124 = vmatpush2.msra.mxu0 0.0
    %4125 = vmatprep.subr.mxu0 0.0
    %4126 = vmatpush2.msra.mxu0 0.0
    %4127 = vmatprep.mubr.f32.mxu0 0.0
    %4128 = vmatmul.mubr.f32.gmra.mxu0 %v4058
    %v4129 = vpop.f32.mrf.mxu0
    %v4130 = vadd.f32 %v4055, %v4129
    %v4131 = vpop.f32.mrf.mxu0
    %4132 = vmatprep.mubr.f32.mxu0 0.0
    %4133 = vmatmul.mubr.f32.gmra.mxu0 %v4061
    %v4134 = vpop.f32.mrf.mxu0
    %v4135 = vadd.f32 %v4055, %v4134
    %v4136 = vpop.f32.mrf.mxu0
    %4137 = vdwg.mxu0
    %v4138 = vmax.f32 %v4130, 0.0
    %v4139 = vmax.f32 %v4135, 0.0
    %s4140 = scalar_lea.vmem %s29, 32
    %v4141 = vld [vmem:[%s4140] sm:$0xff]
    %v4142 = vld [vmem:[%s4140 + $0x8] sm:$0xff]
    %v4143 = vld [vmem:[%s4140 + $0x10] sm:$0xff]
    %v4144 = vld [vmem:[%s4140 + $0x18] sm:$0xff]
    %s4145 = scalar_lea.vmem [#allocation17], 1
    %v4146 = vld [vmem:[%s4145] sm:$0x1]
    %v4148 = vlaneseq
    %v4149 = vshrl.u32 %v4148, 7
    %v4150 = vsub.s32 0, %v4149
    %v4151 = vrot.slane %v4146, %v4150
    %v4154 = vsel %vm614, %v4138, 0
    %v4157 = vsel %vm614, %v4139, 0
    %4159 = vmatprep.subr.mxu0 0.0
    %4160 = vmatpush1.msra.mxu0 0.0
    %4161 = vmatprep.subr.mxu0 0.0
    %4162 = vmatpush1.msra.mxu0 0.0
    %4163 = vmatprep.subr.mxu0 0.0
    %4164 = vmatpush1.msra.mxu0 0.0
    %4165 = vmatprep.subr.mxu0 0.0
    %4166 = vmatpush1.msra.mxu0 0.0
    %4167 = vmatprep.subr.mxu0 0.0
    %4168 = vmatpush1.msra.mxu0 0.0
    %4169 = vmatprep.subr.mxu0 0.0
    %4170 = vmatpush1.msra.mxu0 0.0
    %4171 = vmatprep.subr.mxu0 0.0
    %4172 = vmatpush1.msra.mxu0 0.0
    %4173 = vmatprep.subr.mxu0 0.0
    %4174 = vmatpush1.msra.mxu0 0.0
    %4175 = vmatprep.subr.mxu0 0.0
    %4176 = vmatpush1.msra.mxu0 0.0
    %4177 = vmatprep.subr.mxu0 0.0
    %4178 = vmatpush1.msra.mxu0 0.0
    %4179 = vmatprep.subr.mxu0 0.0
    %4180 = vmatpush1.msra.mxu0 0.0
    %4181 = vmatprep.subr.mxu0 0.0
    %4182 = vmatpush1.msra.mxu0 0.0
    %4183 = vmatprep.subr.mxu0 0.0
    %4184 = vmatpush1.msra.mxu0 %v4144
    %4185 = vmatprep.subr.mxu0 0.0
    %4186 = vmatpush1.msra.mxu0 %v4143
    %4187 = vmatprep.subr.mxu0 0.0
    %4188 = vmatpush1.msra.mxu0 %v4142
    %4189 = vmatprep.subr.mxu0 0.0
    %4190 = vmatpush1.msra.mxu0 %v4141
    %4191 = vmatprep.subr.mxu0 0.0
    %4192 = vmatpush2.msra.mxu0 0.0
    %4193 = vmatprep.subr.mxu0 0.0
    %4194 = vmatpush2.msra.mxu0 0.0
    %4195 = vmatprep.subr.mxu0 0.0
    %4196 = vmatpush2.msra.mxu0 0.0
    %4197 = vmatprep.subr.mxu0 0.0
    %4198 = vmatpush2.msra.mxu0 0.0
    %4199 = vmatprep.subr.mxu0 0.0
    %4200 = vmatpush2.msra.mxu0 0.0
    %4201 = vmatprep.subr.mxu0 0.0
    %4202 = vmatpush2.msra.mxu0 0.0
    %4203 = vmatprep.subr.mxu0 0.0
    %4204 = vmatpush2.msra.mxu0 0.0
    %4205 = vmatprep.subr.mxu0 0.0
    %4206 = vmatpush2.msra.mxu0 0.0
    %4207 = vmatprep.subr.mxu0 0.0
    %4208 = vmatpush2.msra.mxu0 0.0
    %4209 = vmatprep.subr.mxu0 0.0
    %4210 = vmatpush2.msra.mxu0 0.0
    %4211 = vmatprep.subr.mxu0 0.0
    %4212 = vmatpush2.msra.mxu0 0.0
    %4213 = vmatprep.subr.mxu0 0.0
    %4214 = vmatpush2.msra.mxu0 0.0
    %4215 = vmatprep.subr.mxu0 0.0
    %4216 = vmatpush2.msra.mxu0 0.0
    %4217 = vmatprep.subr.mxu0 0.0
    %4218 = vmatpush2.msra.mxu0 0.0
    %4219 = vmatprep.subr.mxu0 0.0
    %4220 = vmatpush2.msra.mxu0 0.0
    %4221 = vmatprep.subr.mxu0 0.0
    %4222 = vmatpush2.msra.mxu0 0.0
    %4223 = vmatprep.mubr.f32.mxu0 0.0
    %4224 = vmatmul.mubr.f32.gmra.mxu0 %v4154
    %v4225 = vpop.f32.mrf.mxu0
    %v4226 = vadd.f32 %v4151, %v4225
    %v4227 = vpop.f32.mrf.mxu0
    %4228 = vmatprep.mubr.f32.mxu0 0.0
    %4229 = vmatmul.mubr.f32.gmra.mxu0 %v4157
    %v4230 = vpop.f32.mrf.mxu0
    %v4231 = vadd.f32 %v4151, %v4230
    %v4232 = vpop.f32.mrf.mxu0
    %4233 = vdwg.mxu0
    %v4234 = vadd.f32 %v4042, %v4226
    %v4235 = vadd.f32 %v4043, %v4231
    %s4236 = scalar_lea.vmem [#allocation19], 1
    %v4237 = vld [vmem:[%s4236] sm:$0x1]
    %s4238 = scalar_lea.vmem [#allocation20], 1
    %v4239 = vld [vmem:[%s4238] sm:$0x1]
    %v4240 = vsel %vm614, %v4234, 0.0
    %4241 = vadd.xlane.f32.xlu0 %v4240
    %v4242 = vpop.xlane.xlu0 %4241
    %v4243 = vsel %vm614, %v4235, 0.0
    %4244 = vadd.xlane.f32.xlu0 %v4243
    %v4245 = vpop.xlane.xlu0 %4244
    %v4246 = vmul.f32 %v4242, %v2175
    %v4247 = vmul.f32 %v4245, %v2175
    %v4248 = vsub.f32 %v4234, %v4246
    %v4249 = vsub.f32 %v4235, %v4247
    %v4250 = vmul.f32 %v4248, %v4248
    %v4251 = vmul.f32 %v4249, %v4249
    %v4252 = vsel %vm614, %v4250, 0.0
    %4253 = vadd.xlane.f32.xlu0 %v4252
    %v4254 = vpop.xlane.xlu0 %4253
    %v4255 = vsel %vm614, %v4251, 0.0
    %4256 = vadd.xlane.f32.xlu0 %v4255
    %v4257 = vpop.xlane.xlu0 %4256
    %v4258 = vmul.f32 %v4254, %v2175
    %v4259 = vmul.f32 %v4257, %v2175
    %v4260 = vadd.f32 %v4258, 1e-05
    %v4261 = vadd.f32 %v4259, 1e-05
    %v4262 = vrsqrt.pop %v4260
    %v4263 = vrsqrt.pop %v4261
    %v4264 = vmul.f32 %v4248, %v4262
    %v4265 = vmul.f32 %v4249, %v4263
    %v4267 = vlaneseq
    %v4268 = vshrl.u32 %v4267, 7
    %v4269 = vsub.s32 0, %v4268
    %v4270 = vrot.slane %v4237, %v4269
    %v4272 = vmul.f32 %v4264, %v4270
    %v4273 = vmul.f32 %v4265, %v4270
    %v4275 = vlaneseq
    %v4276 = vshrl.u32 %v4275, 7
    %v4277 = vsub.s32 0, %v4276
    %v4278 = vrot.slane %v4239, %v4277
    %v4280 = vadd.f32 %v4272, %v4278
    %v4281 = vadd.f32 %v4273, %v4278
    %v4282 = vld [vmem:[%s37] sm:$0xff]
    %v4283 = vld [vmem:[%s37 + $0x8] sm:$0xff]
    %v4284 = vld [vmem:[%s37 + $0x10] sm:$0xff]
    %v4285 = vld [vmem:[%s37 + $0x18] sm:$0xff]
    %v4286 = vld [vmem:[#allocation22] sm:$0x1]
    %v4288 = vlaneseq
    %v4289 = vshrl.u32 %v4288, 7
    %v4290 = vsub.s32 0, %v4289
    %v4291 = vrot.slane %v4286, %v4290
    %v4294 = vsel %vm614, %v611, 0
    %4296 = vmatprep.subr.mxu0 0.0
    %4297 = vmatpush1.msra.mxu0 0.0
    %4298 = vmatprep.subr.mxu0 0.0
    %4299 = vmatpush1.msra.mxu0 0.0
    %4300 = vmatprep.subr.mxu0 0.0
    %4301 = vmatpush1.msra.mxu0 0.0
    %4302 = vmatprep.subr.mxu0 0.0
    %4303 = vmatpush1.msra.mxu0 0.0
    %4304 = vmatprep.subr.mxu0 0.0
    %4305 = vmatpush1.msra.mxu0 0.0
    %4306 = vmatprep.subr.mxu0 0.0
    %4307 = vmatpush1.msra.mxu0 0.0
    %4308 = vmatprep.subr.mxu0 0.0
    %4309 = vmatpush1.msra.mxu0 0.0
    %4310 = vmatprep.subr.mxu0 0.0
    %4311 = vmatpush1.msra.mxu0 0.0
    %4312 = vmatprep.subr.mxu0 0.0
    %4313 = vmatpush1.msra.mxu0 0.0
    %4314 = vmatprep.subr.mxu0 0.0
    %4315 = vmatpush1.msra.mxu0 0.0
    %4316 = vmatprep.subr.mxu0 0.0
    %4317 = vmatpush1.msra.mxu0 0.0
    %4318 = vmatprep.subr.mxu0 0.0
    %4319 = vmatpush1.msra.mxu0 0.0
    %4320 = vmatprep.subr.mxu0 0.0
    %4321 = vmatpush1.msra.mxu0 %v4285
    %4322 = vmatprep.subr.mxu0 0.0
    %4323 = vmatpush1.msra.mxu0 %v4284
    %4324 = vmatprep.subr.mxu0 0.0
    %4325 = vmatpush1.msra.mxu0 %v4283
    %4326 = vmatprep.subr.mxu0 0.0
    %4327 = vmatpush1.msra.mxu0 %v4282
    %4328 = vmatprep.subr.mxu0 0.0
    %4329 = vmatpush2.msra.mxu0 0.0
    %4330 = vmatprep.subr.mxu0 0.0
    %4331 = vmatpush2.msra.mxu0 0.0
    %4332 = vmatprep.subr.mxu0 0.0
    %4333 = vmatpush2.msra.mxu0 0.0
    %4334 = vmatprep.subr.mxu0 0.0
    %4335 = vmatpush2.msra.mxu0 0.0
    %4336 = vmatprep.subr.mxu0 0.0
    %4337 = vmatpush2.msra.mxu0 0.0
    %4338 = vmatprep.subr.mxu0 0.0
    %4339 = vmatpush2.msra.mxu0 0.0
    %4340 = vmatprep.subr.mxu0 0.0
    %4341 = vmatpush2.msra.mxu0 0.0
    %4342 = vmatprep.subr.mxu0 0.0
    %4343 = vmatpush2.msra.mxu0 0.0
    %4344 = vmatprep.subr.mxu0 0.0
    %4345 = vmatpush2.msra.mxu0 0.0
    %4346 = vmatprep.subr.mxu0 0.0
    %4347 = vmatpush2.msra.mxu0 0.0
    %4348 = vmatprep.subr.mxu0 0.0
    %4349 = vmatpush2.msra.mxu0 0.0
    %4350 = vmatprep.subr.mxu0 0.0
    %4351 = vmatpush2.msra.mxu0 0.0
    %4352 = vmatprep.subr.mxu0 0.0
    %4353 = vmatpush2.msra.mxu0 0.0
    %4354 = vmatprep.subr.mxu0 0.0
    %4355 = vmatpush2.msra.mxu0 0.0
    %4356 = vmatprep.subr.mxu0 0.0
    %4357 = vmatpush2.msra.mxu0 0.0
    %4358 = vmatprep.subr.mxu0 0.0
    %4359 = vmatpush2.msra.mxu0 0.0
    %4360 = vmatprep.mubr.f32.mxu0 0.0
    %4361 = vmatmul.mubr.f32.gmra.mxu0 %v4294
    %v4362 = vpop.f32.mrf.mxu0
    %v4363 = vadd.f32 %v4291, %v4362
    %v4364 = vpop.f32.mrf.mxu0
    %4365 = vdwg.mxu0
    %v4367 = vrot.slane %v4363, 4
    %4368 = vrot.lane.b32.xlu0 %v4363, 96
    %v4369 = vpop.permute.xlu0 %4368
    %v4370 = vsel %vm540, %v4363, 0
    %v4372 = vsel %vm540, %v4369, 0
    %4374 = vmatprep.subr.mxu0 0.0
    %4375 = vmatpush1.xpose.msra.mxu0 0.0
    %4376 = vmatprep.subr.mxu0 0.0
    %4377 = vmatpush1.xpose.msra.mxu0 0.0
    %4378 = vmatprep.subr.mxu0 0.0
    %4379 = vmatpush1.xpose.msra.mxu0 0.0
    %4380 = vmatprep.subr.mxu0 0.0
    %4381 = vmatpush1.xpose.msra.mxu0 0.0
    %4382 = vmatprep.subr.mxu0 0.0
    %4383 = vmatpush1.xpose.msra.mxu0 0.0
    %4384 = vmatprep.subr.mxu0 0.0
    %4385 = vmatpush1.xpose.msra.mxu0 0.0
    %4386 = vmatprep.subr.mxu0 0.0
    %4387 = vmatpush1.xpose.msra.mxu0 0.0
    %4388 = vmatprep.subr.mxu0 0.0
    %4389 = vmatpush1.xpose.msra.mxu0 0.0
    %4390 = vmatprep.subr.mxu0 0.0
    %4391 = vmatpush1.xpose.msra.mxu0 0.0
    %4392 = vmatprep.subr.mxu0 0.0
    %4393 = vmatpush1.xpose.msra.mxu0 0.0
    %4394 = vmatprep.subr.mxu0 0.0
    %4395 = vmatpush1.xpose.msra.mxu0 0.0
    %4396 = vmatprep.subr.mxu0 0.0
    %4397 = vmatpush1.xpose.msra.mxu0 0.0
    %4398 = vmatprep.subr.mxu0 0.0
    %4399 = vmatpush1.xpose.msra.mxu0 0.0
    %4400 = vmatprep.subr.mxu0 0.0
    %4401 = vmatpush1.xpose.msra.mxu0 0.0
    %4402 = vmatprep.subr.mxu0 0.0
    %4403 = vmatpush1.xpose.msra.mxu0 0.0
    %4404 = vmatprep.subr.mxu0 0.0
    %4405 = vmatpush1.xpose.msra.mxu0 %v4372
    %4406 = vmatprep.subr.mxu0 0.0
    %4407 = vmatpush2.xpose.msra.mxu0 0.0
    %4408 = vmatprep.subr.mxu0 0.0
    %4409 = vmatpush2.xpose.msra.mxu0 0.0
    %4410 = vmatprep.subr.mxu0 0.0
    %4411 = vmatpush2.xpose.msra.mxu0 0.0
    %4412 = vmatprep.subr.mxu0 0.0
    %4413 = vmatpush2.xpose.msra.mxu0 0.0
    %4414 = vmatprep.subr.mxu0 0.0
    %4415 = vmatpush2.xpose.msra.mxu0 0.0
    %4416 = vmatprep.subr.mxu0 0.0
    %4417 = vmatpush2.xpose.msra.mxu0 0.0
    %4418 = vmatprep.subr.mxu0 0.0
    %4419 = vmatpush2.xpose.msra.mxu0 0.0
    %4420 = vmatprep.subr.mxu0 0.0
    %4421 = vmatpush2.xpose.msra.mxu0 0.0
    %4422 = vmatprep.subr.mxu0 0.0
    %4423 = vmatpush2.xpose.msra.mxu0 0.0
    %4424 = vmatprep.subr.mxu0 0.0
    %4425 = vmatpush2.xpose.msra.mxu0 0.0
    %4426 = vmatprep.subr.mxu0 0.0
    %4427 = vmatpush2.xpose.msra.mxu0 0.0
    %4428 = vmatprep.subr.mxu0 0.0
    %4429 = vmatpush2.xpose.msra.mxu0 0.0
    %4430 = vmatprep.subr.mxu0 0.0
    %4431 = vmatpush2.xpose.msra.mxu0 0.0
    %4432 = vmatprep.subr.mxu0 0.0
    %4433 = vmatpush2.xpose.msra.mxu0 0.0
    %4434 = vmatprep.subr.mxu0 0.0
    %4435 = vmatpush2.xpose.msra.mxu0 0.0
    %4436 = vmatprep.subr.mxu0 0.0
    %4437 = vmatpush2.xpose.msra.mxu0 0.0
    %4438 = vmatprep.mubr.f32.mxu0 0.0
    %4439 = vmatmul.mubr.f32.gmra.mxu0 %v4370
    %v4440 = vpop.f32.mrf.mxu0
    %v4441 = vadd.f32 0.0, %v4440
    %v4442 = vpop.f32.mrf.mxu0
    %4443 = vdwg.mxu0
    %4444 = vrot.lane.b32.xlu0 %v4367, 96
    %v4445 = vpop.permute.xlu0 %4444
    %v4446 = vsel %vm540, %v4367, 0
    %v4448 = vsel %vm540, %v4445, 0
    %4450 = vmatprep.subr.mxu0 0.0
    %4451 = vmatpush1.xpose.msra.mxu0 0.0
    %4452 = vmatprep.subr.mxu0 0.0
    %4453 = vmatpush1.xpose.msra.mxu0 0.0
    %4454 = vmatprep.subr.mxu0 0.0
    %4455 = vmatpush1.xpose.msra.mxu0 0.0
    %4456 = vmatprep.subr.mxu0 0.0
    %4457 = vmatpush1.xpose.msra.mxu0 0.0
    %4458 = vmatprep.subr.mxu0 0.0
    %4459 = vmatpush1.xpose.msra.mxu0 0.0
    %4460 = vmatprep.subr.mxu0 0.0
    %4461 = vmatpush1.xpose.msra.mxu0 0.0
    %4462 = vmatprep.subr.mxu0 0.0
    %4463 = vmatpush1.xpose.msra.mxu0 0.0
    %4464 = vmatprep.subr.mxu0 0.0
    %4465 = vmatpush1.xpose.msra.mxu0 0.0
    %4466 = vmatprep.subr.mxu0 0.0
    %4467 = vmatpush1.xpose.msra.mxu0 0.0
    %4468 = vmatprep.subr.mxu0 0.0
    %4469 = vmatpush1.xpose.msra.mxu0 0.0
    %4470 = vmatprep.subr.mxu0 0.0
    %4471 = vmatpush1.xpose.msra.mxu0 0.0
    %4472 = vmatprep.subr.mxu0 0.0
    %4473 = vmatpush1.xpose.msra.mxu0 0.0
    %4474 = vmatprep.subr.mxu0 0.0
    %4475 = vmatpush1.xpose.msra.mxu0 0.0
    %4476 = vmatprep.subr.mxu0 0.0
    %4477 = vmatpush1.xpose.msra.mxu0 0.0
    %4478 = vmatprep.subr.mxu0 0.0
    %4479 = vmatpush1.xpose.msra.mxu0 0.0
    %4480 = vmatprep.subr.mxu0 0.0
    %4481 = vmatpush1.xpose.msra.mxu0 %v4448
    %4482 = vmatprep.subr.mxu0 0.0
    %4483 = vmatpush2.xpose.msra.mxu0 0.0
    %4484 = vmatprep.subr.mxu0 0.0
    %4485 = vmatpush2.xpose.msra.mxu0 0.0
    %4486 = vmatprep.subr.mxu0 0.0
    %4487 = vmatpush2.xpose.msra.mxu0 0.0
    %4488 = vmatprep.subr.mxu0 0.0
    %4489 = vmatpush2.xpose.msra.mxu0 0.0
    %4490 = vmatprep.subr.mxu0 0.0
    %4491 = vmatpush2.xpose.msra.mxu0 0.0
    %4492 = vmatprep.subr.mxu0 0.0
    %4493 = vmatpush2.xpose.msra.mxu0 0.0
    %4494 = vmatprep.subr.mxu0 0.0
    %4495 = vmatpush2.xpose.msra.mxu0 0.0
    %4496 = vmatprep.subr.mxu0 0.0
    %4497 = vmatpush2.xpose.msra.mxu0 0.0
    %4498 = vmatprep.subr.mxu0 0.0
    %4499 = vmatpush2.xpose.msra.mxu0 0.0
    %4500 = vmatprep.subr.mxu0 0.0
    %4501 = vmatpush2.xpose.msra.mxu0 0.0
    %4502 = vmatprep.subr.mxu0 0.0
    %4503 = vmatpush2.xpose.msra.mxu0 0.0
    %4504 = vmatprep.subr.mxu0 0.0
    %4505 = vmatpush2.xpose.msra.mxu0 0.0
    %4506 = vmatprep.subr.mxu0 0.0
    %4507 = vmatpush2.xpose.msra.mxu0 0.0
    %4508 = vmatprep.subr.mxu0 0.0
    %4509 = vmatpush2.xpose.msra.mxu0 0.0
    %4510 = vmatprep.subr.mxu0 0.0
    %4511 = vmatpush2.xpose.msra.mxu0 0.0
    %4512 = vmatprep.subr.mxu0 0.0
    %4513 = vmatpush2.xpose.msra.mxu0 0.0
    %4514 = vmatprep.mubr.f32.mxu0 0.0
    %4515 = vmatmul.mubr.f32.gmra.mxu0 %v4446
    %v4516 = vpop.f32.mrf.mxu0
    %v4517 = vadd.f32 0.0, %v4516
    %v4518 = vpop.f32.mrf.mxu0
    %4519 = vdwg.mxu0
    %v4520 = vmul.f32 %v4441, 0.35355338
    %v4521 = vmul.f32 %v4517, 0.35355338
    %vm4522 = vcmask 27648
    %v4523 = vsel %vm4522, %v4520, -inf
    %4524 = vmax.xlane.f32.xlu0 %v4523
    %v4525 = vpop.xlane.xlu0 %4524
    %v4526 = vsel %vm4522, %v4521, -inf
    %4527 = vmax.xlane.f32.xlu0 %v4526
    %v4528 = vpop.xlane.xlu0 %4527
    %v4529 = vsub.f32 %v4520, %v4525
    %v4530 = vsub.f32 %v4521, %v4528
    %v4531 = vmul.f32 %v4529, 1.442695
    %v4532 = vpow.pop %v4531
    %v4533 = vmul.f32 %v4530, 1.442695
    %v4534 = vpow.pop %v4533
    %v4535 = vsel %vm4522, %v4532, 0.0
    %4536 = vadd.xlane.f32.xlu0 %v4535
    %v4537 = vpop.xlane.xlu0 %4536
    %v4538 = vsel %vm4522, %v4534, 0.0
    %4539 = vadd.xlane.f32.xlu0 %v4538
    %v4540 = vpop.xlane.xlu0 %4539
    %v4541 = vrcp.pop %v4537
    %v4542 = vrcp.pop %v4540
    %v4543 = vmul.f32 %v4532, %v4541
    %v4544 = vmul.f32 %v4534, %v4542
    %4545 = vrot.lane.b32.xlu0 %v4363, 64
    %v4546 = vpop.permute.xlu0 %4545
    %v4548 = vsel %vm445, %v4543, 0
    %v4550 = vsel %vm452, %v4546, 0
    %4552 = vmatprep.subr.mxu0 0.0
    %4553 = vmatpush1.msra.mxu0 0.0
    %4554 = vmatprep.subr.mxu0 0.0
    %4555 = vmatpush1.msra.mxu0 0.0
    %4556 = vmatprep.subr.mxu0 0.0
    %4557 = vmatpush1.msra.mxu0 0.0
    %4558 = vmatprep.subr.mxu0 0.0
    %4559 = vmatpush1.msra.mxu0 0.0
    %4560 = vmatprep.subr.mxu0 0.0
    %4561 = vmatpush1.msra.mxu0 0.0
    %4562 = vmatprep.subr.mxu0 0.0
    %4563 = vmatpush1.msra.mxu0 0.0
    %4564 = vmatprep.subr.mxu0 0.0
    %4565 = vmatpush1.msra.mxu0 0.0
    %4566 = vmatprep.subr.mxu0 0.0
    %4567 = vmatpush1.msra.mxu0 0.0
    %4568 = vmatprep.subr.mxu0 0.0
    %4569 = vmatpush1.msra.mxu0 0.0
    %4570 = vmatprep.subr.mxu0 0.0
    %4571 = vmatpush1.msra.mxu0 0.0
    %4572 = vmatprep.subr.mxu0 0.0
    %4573 = vmatpush1.msra.mxu0 0.0
    %4574 = vmatprep.subr.mxu0 0.0
    %4575 = vmatpush1.msra.mxu0 0.0
    %4576 = vmatprep.subr.mxu0 0.0
    %4577 = vmatpush1.msra.mxu0 0.0
    %4578 = vmatprep.subr.mxu0 0.0
    %4579 = vmatpush1.msra.mxu0 0.0
    %4580 = vmatprep.subr.mxu0 0.0
    %4581 = vmatpush1.msra.mxu0 0.0
    %4582 = vmatprep.subr.mxu0 0.0
    %4583 = vmatpush1.msra.mxu0 %v4550
    %4584 = vmatprep.subr.mxu0 0.0
    %4585 = vmatpush2.msra.mxu0 0.0
    %4586 = vmatprep.subr.mxu0 0.0
    %4587 = vmatpush2.msra.mxu0 0.0
    %4588 = vmatprep.subr.mxu0 0.0
    %4589 = vmatpush2.msra.mxu0 0.0
    %4590 = vmatprep.subr.mxu0 0.0
    %4591 = vmatpush2.msra.mxu0 0.0
    %4592 = vmatprep.subr.mxu0 0.0
    %4593 = vmatpush2.msra.mxu0 0.0
    %4594 = vmatprep.subr.mxu0 0.0
    %4595 = vmatpush2.msra.mxu0 0.0
    %4596 = vmatprep.subr.mxu0 0.0
    %4597 = vmatpush2.msra.mxu0 0.0
    %4598 = vmatprep.subr.mxu0 0.0
    %4599 = vmatpush2.msra.mxu0 0.0
    %4600 = vmatprep.subr.mxu0 0.0
    %4601 = vmatpush2.msra.mxu0 0.0
    %4602 = vmatprep.subr.mxu0 0.0
    %4603 = vmatpush2.msra.mxu0 0.0
    %4604 = vmatprep.subr.mxu0 0.0
    %4605 = vmatpush2.msra.mxu0 0.0
    %4606 = vmatprep.subr.mxu0 0.0
    %4607 = vmatpush2.msra.mxu0 0.0
    %4608 = vmatprep.subr.mxu0 0.0
    %4609 = vmatpush2.msra.mxu0 0.0
    %4610 = vmatprep.subr.mxu0 0.0
    %4611 = vmatpush2.msra.mxu0 0.0
    %4612 = vmatprep.subr.mxu0 0.0
    %4613 = vmatpush2.msra.mxu0 0.0
    %4614 = vmatprep.subr.mxu0 0.0
    %4615 = vmatpush2.msra.mxu0 0.0
    %4616 = vmatprep.mubr.f32.mxu0 0.0
    %4617 = vmatmul.mubr.f32.gmra.mxu0 %v4548
    %v4618 = vpop.f32.mrf.mxu0
    %v4619 = vadd.f32 0.0, %v4618
    %v4620 = vpop.f32.mrf.mxu0
    %4621 = vdwg.mxu0
    %4622 = vrot.lane.b32.xlu0 %v4367, 64
    %v4623 = vpop.permute.xlu0 %4622
    %v4625 = vsel %vm445, %v4544, 0
    %v4627 = vsel %vm452, %v4623, 0
    %4629 = vmatprep.subr.mxu0 0.0
    %4630 = vmatpush1.msra.mxu0 0.0
    %4631 = vmatprep.subr.mxu0 0.0
    %4632 = vmatpush1.msra.mxu0 0.0
    %4633 = vmatprep.subr.mxu0 0.0
    %4634 = vmatpush1.msra.mxu0 0.0
    %4635 = vmatprep.subr.mxu0 0.0
    %4636 = vmatpush1.msra.mxu0 0.0
    %4637 = vmatprep.subr.mxu0 0.0
    %4638 = vmatpush1.msra.mxu0 0.0
    %4639 = vmatprep.subr.mxu0 0.0
    %4640 = vmatpush1.msra.mxu0 0.0
    %4641 = vmatprep.subr.mxu0 0.0
    %4642 = vmatpush1.msra.mxu0 0.0
    %4643 = vmatprep.subr.mxu0 0.0
    %4644 = vmatpush1.msra.mxu0 0.0
    %4645 = vmatprep.subr.mxu0 0.0
    %4646 = vmatpush1.msra.mxu0 0.0
    %4647 = vmatprep.subr.mxu0 0.0
    %4648 = vmatpush1.msra.mxu0 0.0
    %4649 = vmatprep.subr.mxu0 0.0
    %4650 = vmatpush1.msra.mxu0 0.0
    %4651 = vmatprep.subr.mxu0 0.0
    %4652 = vmatpush1.msra.mxu0 0.0
    %4653 = vmatprep.subr.mxu0 0.0
    %4654 = vmatpush1.msra.mxu0 0.0
    %4655 = vmatprep.subr.mxu0 0.0
    %4656 = vmatpush1.msra.mxu0 0.0
    %4657 = vmatprep.subr.mxu0 0.0
    %4658 = vmatpush1.msra.mxu0 0.0
    %4659 = vmatprep.subr.mxu0 0.0
    %4660 = vmatpush1.msra.mxu0 %v4627
    %4661 = vmatprep.subr.mxu0 0.0
    %4662 = vmatpush2.msra.mxu0 0.0
    %4663 = vmatprep.subr.mxu0 0.0
    %4664 = vmatpush2.msra.mxu0 0.0
    %4665 = vmatprep.subr.mxu0 0.0
    %4666 = vmatpush2.msra.mxu0 0.0
    %4667 = vmatprep.subr.mxu0 0.0
    %4668 = vmatpush2.msra.mxu0 0.0
    %4669 = vmatprep.subr.mxu0 0.0
    %4670 = vmatpush2.msra.mxu0 0.0
    %4671 = vmatprep.subr.mxu0 0.0
    %4672 = vmatpush2.msra.mxu0 0.0
    %4673 = vmatprep.subr.mxu0 0.0
    %4674 = vmatpush2.msra.mxu0 0.0
    %4675 = vmatprep.subr.mxu0 0.0
    %4676 = vmatpush2.msra.mxu0 0.0
    %4677 = vmatprep.subr.mxu0 0.0
    %4678 = vmatpush2.msra.mxu0 0.0
    %4679 = vmatprep.subr.mxu0 0.0
    %4680 = vmatpush2.msra.mxu0 0.0
    %4681 = vmatprep.subr.mxu0 0.0
    %4682 = vmatpush2.msra.mxu0 0.0
    %4683 = vmatprep.subr.mxu0 0.0
    %4684 = vmatpush2.msra.mxu0 0.0
    %4685 = vmatprep.subr.mxu0 0.0
    %4686 = vmatpush2.msra.mxu0 0.0
    %4687 = vmatprep.subr.mxu0 0.0
    %4688 = vmatpush2.msra.mxu0 0.0
    %4689 = vmatprep.subr.mxu0 0.0
    %4690 = vmatpush2.msra.mxu0 0.0
    %4691 = vmatprep.subr.mxu0 0.0
    %4692 = vmatpush2.msra.mxu0 0.0
    %4693 = vmatprep.mubr.f32.mxu0 0.0
    %4694 = vmatmul.mubr.f32.gmra.mxu0 %v4625
    %v4695 = vpop.f32.mrf.mxu0
    %v4696 = vadd.f32 0.0, %v4695
    %v4697 = vpop.f32.mrf.mxu0
    %4698 = vdwg.mxu0
    %4699 = vrot.lane.b32.xlu0 %v4363, 120
    %v4700 = vpop.permute.xlu0 %4699
    %4701 = vrot.lane.b32.xlu0 %v4363, 88
    %v4702 = vpop.permute.xlu0 %4701
    %v4703 = vsel %vm540, %v4700, 0
    %v4705 = vsel %vm540, %v4702, 0
    %4707 = vmatprep.subr.mxu0 0.0
    %4708 = vmatpush1.xpose.msra.mxu0 0.0
    %4709 = vmatprep.subr.mxu0 0.0
    %4710 = vmatpush1.xpose.msra.mxu0 0.0
    %4711 = vmatprep.subr.mxu0 0.0
    %4712 = vmatpush1.xpose.msra.mxu0 0.0
    %4713 = vmatprep.subr.mxu0 0.0
    %4714 = vmatpush1.xpose.msra.mxu0 0.0
    %4715 = vmatprep.subr.mxu0 0.0
    %4716 = vmatpush1.xpose.msra.mxu0 0.0
    %4717 = vmatprep.subr.mxu0 0.0
    %4718 = vmatpush1.xpose.msra.mxu0 0.0
    %4719 = vmatprep.subr.mxu0 0.0
    %4720 = vmatpush1.xpose.msra.mxu0 0.0
    %4721 = vmatprep.subr.mxu0 0.0
    %4722 = vmatpush1.xpose.msra.mxu0 0.0
    %4723 = vmatprep.subr.mxu0 0.0
    %4724 = vmatpush1.xpose.msra.mxu0 0.0
    %4725 = vmatprep.subr.mxu0 0.0
    %4726 = vmatpush1.xpose.msra.mxu0 0.0
    %4727 = vmatprep.subr.mxu0 0.0
    %4728 = vmatpush1.xpose.msra.mxu0 0.0
    %4729 = vmatprep.subr.mxu0 0.0
    %4730 = vmatpush1.xpose.msra.mxu0 0.0
    %4731 = vmatprep.subr.mxu0 0.0
    %4732 = vmatpush1.xpose.msra.mxu0 0.0
    %4733 = vmatprep.subr.mxu0 0.0
    %4734 = vmatpush1.xpose.msra.mxu0 0.0
    %4735 = vmatprep.subr.mxu0 0.0
    %4736 = vmatpush1.xpose.msra.mxu0 0.0
    %4737 = vmatprep.subr.mxu0 0.0
    %4738 = vmatpush1.xpose.msra.mxu0 %v4705
    %4739 = vmatprep.subr.mxu0 0.0
    %4740 = vmatpush2.xpose.msra.mxu0 0.0
    %4741 = vmatprep.subr.mxu0 0.0
    %4742 = vmatpush2.xpose.msra.mxu0 0.0
    %4743 = vmatprep.subr.mxu0 0.0
    %4744 = vmatpush2.xpose.msra.mxu0 0.0
    %4745 = vmatprep.subr.mxu0 0.0
    %4746 = vmatpush2.xpose.msra.mxu0 0.0
    %4747 = vmatprep.subr.mxu0 0.0
    %4748 = vmatpush2.xpose.msra.mxu0 0.0
    %4749 = vmatprep.subr.mxu0 0.0
    %4750 = vmatpush2.xpose.msra.mxu0 0.0
    %4751 = vmatprep.subr.mxu0 0.0
    %4752 = vmatpush2.xpose.msra.mxu0 0.0
    %4753 = vmatprep.subr.mxu0 0.0
    %4754 = vmatpush2.xpose.msra.mxu0 0.0
    %4755 = vmatprep.subr.mxu0 0.0
    %4756 = vmatpush2.xpose.msra.mxu0 0.0
    %4757 = vmatprep.subr.mxu0 0.0
    %4758 = vmatpush2.xpose.msra.mxu0 0.0
    %4759 = vmatprep.subr.mxu0 0.0
    %4760 = vmatpush2.xpose.msra.mxu0 0.0
    %4761 = vmatprep.subr.mxu0 0.0
    %4762 = vmatpush2.xpose.msra.mxu0 0.0
    %4763 = vmatprep.subr.mxu0 0.0
    %4764 = vmatpush2.xpose.msra.mxu0 0.0
    %4765 = vmatprep.subr.mxu0 0.0
    %4766 = vmatpush2.xpose.msra.mxu0 0.0
    %4767 = vmatprep.subr.mxu0 0.0
    %4768 = vmatpush2.xpose.msra.mxu0 0.0
    %4769 = vmatprep.subr.mxu0 0.0
    %4770 = vmatpush2.xpose.msra.mxu0 0.0
    %4771 = vmatprep.mubr.f32.mxu0 0.0
    %4772 = vmatmul.mubr.f32.gmra.mxu0 %v4703
    %v4773 = vpop.f32.mrf.mxu0
    %v4774 = vadd.f32 0.0, %v4773
    %v4775 = vpop.f32.mrf.mxu0
    %4776 = vdwg.mxu0
    %4777 = vrot.lane.b32.xlu0 %v4367, 120
    %v4778 = vpop.permute.xlu0 %4777
    %4779 = vrot.lane.b32.xlu0 %v4367, 88
    %v4780 = vpop.permute.xlu0 %4779
    %v4781 = vsel %vm540, %v4778, 0
    %v4783 = vsel %vm540, %v4780, 0
    %4785 = vmatprep.subr.mxu0 0.0
    %4786 = vmatpush1.xpose.msra.mxu0 0.0
    %4787 = vmatprep.subr.mxu0 0.0
    %4788 = vmatpush1.xpose.msra.mxu0 0.0
    %4789 = vmatprep.subr.mxu0 0.0
    %4790 = vmatpush1.xpose.msra.mxu0 0.0
    %4791 = vmatprep.subr.mxu0 0.0
    %4792 = vmatpush1.xpose.msra.mxu0 0.0
    %4793 = vmatprep.subr.mxu0 0.0
    %4794 = vmatpush1.xpose.msra.mxu0 0.0
    %4795 = vmatprep.subr.mxu0 0.0
    %4796 = vmatpush1.xpose.msra.mxu0 0.0
    %4797 = vmatprep.subr.mxu0 0.0
    %4798 = vmatpush1.xpose.msra.mxu0 0.0
    %4799 = vmatprep.subr.mxu0 0.0
    %4800 = vmatpush1.xpose.msra.mxu0 0.0
    %4801 = vmatprep.subr.mxu0 0.0
    %4802 = vmatpush1.xpose.msra.mxu0 0.0
    %4803 = vmatprep.subr.mxu0 0.0
    %4804 = vmatpush1.xpose.msra.mxu0 0.0
    %4805 = vmatprep.subr.mxu0 0.0
    %4806 = vmatpush1.xpose.msra.mxu0 0.0
    %4807 = vmatprep.subr.mxu0 0.0
    %4808 = vmatpush1.xpose.msra.mxu0 0.0
    %4809 = vmatprep.subr.mxu0 0.0
    %4810 = vmatpush1.xpose.msra.mxu0 0.0
    %4811 = vmatprep.subr.mxu0 0.0
    %4812 = vmatpush1.xpose.msra.mxu0 0.0
    %4813 = vmatprep.subr.mxu0 0.0
    %4814 = vmatpush1.xpose.msra.mxu0 0.0
    %4815 = vmatprep.subr.mxu0 0.0
    %4816 = vmatpush1.xpose.msra.mxu0 %v4783
    %4817 = vmatprep.subr.mxu0 0.0
    %4818 = vmatpush2.xpose.msra.mxu0 0.0
    %4819 = vmatprep.subr.mxu0 0.0
    %4820 = vmatpush2.xpose.msra.mxu0 0.0
    %4821 = vmatprep.subr.mxu0 0.0
    %4822 = vmatpush2.xpose.msra.mxu0 0.0
    %4823 = vmatprep.subr.mxu0 0.0
    %4824 = vmatpush2.xpose.msra.mxu0 0.0
    %4825 = vmatprep.subr.mxu0 0.0
    %4826 = vmatpush2.xpose.msra.mxu0 0.0
    %4827 = vmatprep.subr.mxu0 0.0
    %4828 = vmatpush2.xpose.msra.mxu0 0.0
    %4829 = vmatprep.subr.mxu0 0.0
    %4830 = vmatpush2.xpose.msra.mxu0 0.0
    %4831 = vmatprep.subr.mxu0 0.0
    %4832 = vmatpush2.xpose.msra.mxu0 0.0
    %4833 = vmatprep.subr.mxu0 0.0
    %4834 = vmatpush2.xpose.msra.mxu0 0.0
    %4835 = vmatprep.subr.mxu0 0.0
    %4836 = vmatpush2.xpose.msra.mxu0 0.0
    %4837 = vmatprep.subr.mxu0 0.0
    %4838 = vmatpush2.xpose.msra.mxu0 0.0
    %4839 = vmatprep.subr.mxu0 0.0
    %4840 = vmatpush2.xpose.msra.mxu0 0.0
    %4841 = vmatprep.subr.mxu0 0.0
    %4842 = vmatpush2.xpose.msra.mxu0 0.0
    %4843 = vmatprep.subr.mxu0 0.0
    %4844 = vmatpush2.xpose.msra.mxu0 0.0
    %4845 = vmatprep.subr.mxu0 0.0
    %4846 = vmatpush2.xpose.msra.mxu0 0.0
    %4847 = vmatprep.subr.mxu0 0.0
    %4848 = vmatpush2.xpose.msra.mxu0 0.0
    %4849 = vmatprep.mubr.f32.mxu0 0.0
    %4850 = vmatmul.mubr.f32.gmra.mxu0 %v4781
    %v4851 = vpop.f32.mrf.mxu0
    %v4852 = vadd.f32 0.0, %v4851
    %v4853 = vpop.f32.mrf.mxu0
    %4854 = vdwg.mxu0
    %v4855 = vmul.f32 %v4774, 0.35355338
    %v4856 = vmul.f32 %v4852, 0.35355338
    %v4857 = vsel %vm4522, %v4855, -inf
    %4858 = vmax.xlane.f32.xlu0 %v4857
    %v4859 = vpop.xlane.xlu0 %4858
    %v4860 = vsel %vm4522, %v4856, -inf
    %4861 = vmax.xlane.f32.xlu0 %v4860
    %v4862 = vpop.xlane.xlu0 %4861
    %v4863 = vsub.f32 %v4855, %v4859
    %v4864 = vsub.f32 %v4856, %v4862
    %v4865 = vmul.f32 %v4863, 1.442695
    %v4866 = vpow.pop %v4865
    %v4867 = vmul.f32 %v4864, 1.442695
    %v4868 = vpow.pop %v4867
    %v4869 = vsel %vm4522, %v4866, 0.0
    %4870 = vadd.xlane.f32.xlu0 %v4869
    %v4871 = vpop.xlane.xlu0 %4870
    %v4872 = vsel %vm4522, %v4868, 0.0
    %4873 = vadd.xlane.f32.xlu0 %v4872
    %v4874 = vpop.xlane.xlu0 %4873
    %v4875 = vrcp.pop %v4871
    %v4876 = vrcp.pop %v4874
    %v4877 = vmul.f32 %v4866, %v4875
    %v4878 = vmul.f32 %v4868, %v4876
    %4879 = vrot.lane.b32.xlu0 %v4363, 56
    %v4880 = vpop.permute.xlu0 %4879
    %v4882 = vsel %vm445, %v4877, 0
    %v4884 = vsel %vm452, %v4880, 0
    %4886 = vmatprep.subr.mxu0 0.0
    %4887 = vmatpush1.msra.mxu0 0.0
    %4888 = vmatprep.subr.mxu0 0.0
    %4889 = vmatpush1.msra.mxu0 0.0
    %4890 = vmatprep.subr.mxu0 0.0
    %4891 = vmatpush1.msra.mxu0 0.0
    %4892 = vmatprep.subr.mxu0 0.0
    %4893 = vmatpush1.msra.mxu0 0.0
    %4894 = vmatprep.subr.mxu0 0.0
    %4895 = vmatpush1.msra.mxu0 0.0
    %4896 = vmatprep.subr.mxu0 0.0
    %4897 = vmatpush1.msra.mxu0 0.0
    %4898 = vmatprep.subr.mxu0 0.0
    %4899 = vmatpush1.msra.mxu0 0.0
    %4900 = vmatprep.subr.mxu0 0.0
    %4901 = vmatpush1.msra.mxu0 0.0
    %4902 = vmatprep.subr.mxu0 0.0
    %4903 = vmatpush1.msra.mxu0 0.0
    %4904 = vmatprep.subr.mxu0 0.0
    %4905 = vmatpush1.msra.mxu0 0.0
    %4906 = vmatprep.subr.mxu0 0.0
    %4907 = vmatpush1.msra.mxu0 0.0
    %4908 = vmatprep.subr.mxu0 0.0
    %4909 = vmatpush1.msra.mxu0 0.0
    %4910 = vmatprep.subr.mxu0 0.0
    %4911 = vmatpush1.msra.mxu0 0.0
    %4912 = vmatprep.subr.mxu0 0.0
    %4913 = vmatpush1.msra.mxu0 0.0
    %4914 = vmatprep.subr.mxu0 0.0
    %4915 = vmatpush1.msra.mxu0 0.0
    %4916 = vmatprep.subr.mxu0 0.0
    %4917 = vmatpush1.msra.mxu0 %v4884
    %4918 = vmatprep.subr.mxu0 0.0
    %4919 = vmatpush2.msra.mxu0 0.0
    %4920 = vmatprep.subr.mxu0 0.0
    %4921 = vmatpush2.msra.mxu0 0.0
    %4922 = vmatprep.subr.mxu0 0.0
    %4923 = vmatpush2.msra.mxu0 0.0
    %4924 = vmatprep.subr.mxu0 0.0
    %4925 = vmatpush2.msra.mxu0 0.0
    %4926 = vmatprep.subr.mxu0 0.0
    %4927 = vmatpush2.msra.mxu0 0.0
    %4928 = vmatprep.subr.mxu0 0.0
    %4929 = vmatpush2.msra.mxu0 0.0
    %4930 = vmatprep.subr.mxu0 0.0
    %4931 = vmatpush2.msra.mxu0 0.0
    %4932 = vmatprep.subr.mxu0 0.0
    %4933 = vmatpush2.msra.mxu0 0.0
    %4934 = vmatprep.subr.mxu0 0.0
    %4935 = vmatpush2.msra.mxu0 0.0
    %4936 = vmatprep.subr.mxu0 0.0
    %4937 = vmatpush2.msra.mxu0 0.0
    %4938 = vmatprep.subr.mxu0 0.0
    %4939 = vmatpush2.msra.mxu0 0.0
    %4940 = vmatprep.subr.mxu0 0.0
    %4941 = vmatpush2.msra.mxu0 0.0
    %4942 = vmatprep.subr.mxu0 0.0
    %4943 = vmatpush2.msra.mxu0 0.0
    %4944 = vmatprep.subr.mxu0 0.0
    %4945 = vmatpush2.msra.mxu0 0.0
    %4946 = vmatprep.subr.mxu0 0.0
    %4947 = vmatpush2.msra.mxu0 0.0
    %4948 = vmatprep.subr.mxu0 0.0
    %4949 = vmatpush2.msra.mxu0 0.0
    %4950 = vmatprep.mubr.f32.mxu0 0.0
    %4951 = vmatmul.mubr.f32.gmra.mxu0 %v4882
    %v4952 = vpop.f32.mrf.mxu0
    %v4953 = vadd.f32 0.0, %v4952
    %v4954 = vpop.f32.mrf.mxu0
    %4955 = vdwg.mxu0
    %4956 = vrot.lane.b32.xlu0 %v4367, 56
    %v4957 = vpop.permute.xlu0 %4956
    %v4959 = vsel %vm445, %v4878, 0
    %v4961 = vsel %vm452, %v4957, 0
    %4963 = vmatprep.subr.mxu0 0.0
    %4964 = vmatpush1.msra.mxu0 0.0
    %4965 = vmatprep.subr.mxu0 0.0
    %4966 = vmatpush1.msra.mxu0 0.0
    %4967 = vmatprep.subr.mxu0 0.0
    %4968 = vmatpush1.msra.mxu0 0.0
    %4969 = vmatprep.subr.mxu0 0.0
    %4970 = vmatpush1.msra.mxu0 0.0
    %4971 = vmatprep.subr.mxu0 0.0
    %4972 = vmatpush1.msra.mxu0 0.0
    %4973 = vmatprep.subr.mxu0 0.0
    %4974 = vmatpush1.msra.mxu0 0.0
    %4975 = vmatprep.subr.mxu0 0.0
    %4976 = vmatpush1.msra.mxu0 0.0
    %4977 = vmatprep.subr.mxu0 0.0
    %4978 = vmatpush1.msra.mxu0 0.0
    %4979 = vmatprep.subr.mxu0 0.0
    %4980 = vmatpush1.msra.mxu0 0.0
    %4981 = vmatprep.subr.mxu0 0.0
    %4982 = vmatpush1.msra.mxu0 0.0
    %4983 = vmatprep.subr.mxu0 0.0
    %4984 = vmatpush1.msra.mxu0 0.0
    %4985 = vmatprep.subr.mxu0 0.0
    %4986 = vmatpush1.msra.mxu0 0.0
    %4987 = vmatprep.subr.mxu0 0.0
    %4988 = vmatpush1.msra.mxu0 0.0
    %4989 = vmatprep.subr.mxu0 0.0
    %4990 = vmatpush1.msra.mxu0 0.0
    %4991 = vmatprep.subr.mxu0 0.0
    %4992 = vmatpush1.msra.mxu0 0.0
    %4993 = vmatprep.subr.mxu0 0.0
    %4994 = vmatpush1.msra.mxu0 %v4961
    %4995 = vmatprep.subr.mxu0 0.0
    %4996 = vmatpush2.msra.mxu0 0.0
    %4997 = vmatprep.subr.mxu0 0.0
    %4998 = vmatpush2.msra.mxu0 0.0
    %4999 = vmatprep.subr.mxu0 0.0
    %5000 = vmatpush2.msra.mxu0 0.0
    %5001 = vmatprep.subr.mxu0 0.0
    %5002 = vmatpush2.msra.mxu0 0.0
    %5003 = vmatprep.subr.mxu0 0.0
    %5004 = vmatpush2.msra.mxu0 0.0
    %5005 = vmatprep.subr.mxu0 0.0
    %5006 = vmatpush2.msra.mxu0 0.0
    %5007 = vmatprep.subr.mxu0 0.0
    %5008 = vmatpush2.msra.mxu0 0.0
    %5009 = vmatprep.subr.mxu0 0.0
    %5010 = vmatpush2.msra.mxu0 0.0
    %5011 = vmatprep.subr.mxu0 0.0
    %5012 = vmatpush2.msra.mxu0 0.0
    %5013 = vmatprep.subr.mxu0 0.0
    %5014 = vmatpush2.msra.mxu0 0.0
    %5015 = vmatprep.subr.mxu0 0.0
    %5016 = vmatpush2.msra.mxu0 0.0
    %5017 = vmatprep.subr.mxu0 0.0
    %5018 = vmatpush2.msra.mxu0 0.0
    %5019 = vmatprep.subr.mxu0 0.0
    %5020 = vmatpush2.msra.mxu0 0.0
    %5021 = vmatprep.subr.mxu0 0.0
    %5022 = vmatpush2.msra.mxu0 0.0
    %5023 = vmatprep.subr.mxu0 0.0
    %5024 = vmatpush2.msra.mxu0 0.0
    %5025 = vmatprep.subr.mxu0 0.0
    %5026 = vmatpush2.msra.mxu0 0.0
    %5027 = vmatprep.mubr.f32.mxu0 0.0
    %5028 = vmatmul.mubr.f32.gmra.mxu0 %v4959
    %v5029 = vpop.f32.mrf.mxu0
    %v5030 = vadd.f32 0.0, %v5029
    %v5031 = vpop.f32.mrf.mxu0
    %5032 = vdwg.mxu0
    %5033 = vrot.lane.b32.xlu0 %v4363, 112
    %v5034 = vpop.permute.xlu0 %5033
    %5035 = vrot.lane.b32.xlu0 %v4363, 80
    %v5036 = vpop.permute.xlu0 %5035
    %v5037 = vsel %vm540, %v5034, 0
    %v5039 = vsel %vm540, %v5036, 0
    %5041 = vmatprep.subr.mxu0 0.0
    %5042 = vmatpush1.xpose.msra.mxu0 0.0
    %5043 = vmatprep.subr.mxu0 0.0
    %5044 = vmatpush1.xpose.msra.mxu0 0.0
    %5045 = vmatprep.subr.mxu0 0.0
    %5046 = vmatpush1.xpose.msra.mxu0 0.0
    %5047 = vmatprep.subr.mxu0 0.0
    %5048 = vmatpush1.xpose.msra.mxu0 0.0
    %5049 = vmatprep.subr.mxu0 0.0
    %5050 = vmatpush1.xpose.msra.mxu0 0.0
    %5051 = vmatprep.subr.mxu0 0.0
    %5052 = vmatpush1.xpose.msra.mxu0 0.0
    %5053 = vmatprep.subr.mxu0 0.0
    %5054 = vmatpush1.xpose.msra.mxu0 0.0
    %5055 = vmatprep.subr.mxu0 0.0
    %5056 = vmatpush1.xpose.msra.mxu0 0.0
    %5057 = vmatprep.subr.mxu0 0.0
    %5058 = vmatpush1.xpose.msra.mxu0 0.0
    %5059 = vmatprep.subr.mxu0 0.0
    %5060 = vmatpush1.xpose.msra.mxu0 0.0
    %5061 = vmatprep.subr.mxu0 0.0
    %5062 = vmatpush1.xpose.msra.mxu0 0.0
    %5063 = vmatprep.subr.mxu0 0.0
    %5064 = vmatpush1.xpose.msra.mxu0 0.0
    %5065 = vmatprep.subr.mxu0 0.0
    %5066 = vmatpush1.xpose.msra.mxu0 0.0
    %5067 = vmatprep.subr.mxu0 0.0
    %5068 = vmatpush1.xpose.msra.mxu0 0.0
    %5069 = vmatprep.subr.mxu0 0.0
    %5070 = vmatpush1.xpose.msra.mxu0 0.0
    %5071 = vmatprep.subr.mxu0 0.0
    %5072 = vmatpush1.xpose.msra.mxu0 %v5039
    %5073 = vmatprep.subr.mxu0 0.0
    %5074 = vmatpush2.xpose.msra.mxu0 0.0
    %5075 = vmatprep.subr.mxu0 0.0
    %5076 = vmatpush2.xpose.msra.mxu0 0.0
    %5077 = vmatprep.subr.mxu0 0.0
    %5078 = vmatpush2.xpose.msra.mxu0 0.0
    %5079 = vmatprep.subr.mxu0 0.0
    %5080 = vmatpush2.xpose.msra.mxu0 0.0
    %5081 = vmatprep.subr.mxu0 0.0
    %5082 = vmatpush2.xpose.msra.mxu0 0.0
    %5083 = vmatprep.subr.mxu0 0.0
    %5084 = vmatpush2.xpose.msra.mxu0 0.0
    %5085 = vmatprep.subr.mxu0 0.0
    %5086 = vmatpush2.xpose.msra.mxu0 0.0
    %5087 = vmatprep.subr.mxu0 0.0
    %5088 = vmatpush2.xpose.msra.mxu0 0.0
    %5089 = vmatprep.subr.mxu0 0.0
    %5090 = vmatpush2.xpose.msra.mxu0 0.0
    %5091 = vmatprep.subr.mxu0 0.0
    %5092 = vmatpush2.xpose.msra.mxu0 0.0
    %5093 = vmatprep.subr.mxu0 0.0
    %5094 = vmatpush2.xpose.msra.mxu0 0.0
    %5095 = vmatprep.subr.mxu0 0.0
    %5096 = vmatpush2.xpose.msra.mxu0 0.0
    %5097 = vmatprep.subr.mxu0 0.0
    %5098 = vmatpush2.xpose.msra.mxu0 0.0
    %5099 = vmatprep.subr.mxu0 0.0
    %5100 = vmatpush2.xpose.msra.mxu0 0.0
    %5101 = vmatprep.subr.mxu0 0.0
    %5102 = vmatpush2.xpose.msra.mxu0 0.0
    %5103 = vmatprep.subr.mxu0 0.0
    %5104 = vmatpush2.xpose.msra.mxu0 0.0
    %5105 = vmatprep.mubr.f32.mxu0 0.0
    %5106 = vmatmul.mubr.f32.gmra.mxu0 %v5037
    %v5107 = vpop.f32.mrf.mxu0
    %v5108 = vadd.f32 0.0, %v5107
    %v5109 = vpop.f32.mrf.mxu0
    %5110 = vdwg.mxu0
    %5111 = vrot.lane.b32.xlu0 %v4367, 112
    %v5112 = vpop.permute.xlu0 %5111
    %5113 = vrot.lane.b32.xlu0 %v4367, 80
    %v5114 = vpop.permute.xlu0 %5113
    %v5115 = vsel %vm540, %v5112, 0
    %v5117 = vsel %vm540, %v5114, 0
    %5119 = vmatprep.subr.mxu0 0.0
    %5120 = vmatpush1.xpose.msra.mxu0 0.0
    %5121 = vmatprep.subr.mxu0 0.0
    %5122 = vmatpush1.xpose.msra.mxu0 0.0
    %5123 = vmatprep.subr.mxu0 0.0
    %5124 = vmatpush1.xpose.msra.mxu0 0.0
    %5125 = vmatprep.subr.mxu0 0.0
    %5126 = vmatpush1.xpose.msra.mxu0 0.0
    %5127 = vmatprep.subr.mxu0 0.0
    %5128 = vmatpush1.xpose.msra.mxu0 0.0
    %5129 = vmatprep.subr.mxu0 0.0
    %5130 = vmatpush1.xpose.msra.mxu0 0.0
    %5131 = vmatprep.subr.mxu0 0.0
    %5132 = vmatpush1.xpose.msra.mxu0 0.0
    %5133 = vmatprep.subr.mxu0 0.0
    %5134 = vmatpush1.xpose.msra.mxu0 0.0
    %5135 = vmatprep.subr.mxu0 0.0
    %5136 = vmatpush1.xpose.msra.mxu0 0.0
    %5137 = vmatprep.subr.mxu0 0.0
    %5138 = vmatpush1.xpose.msra.mxu0 0.0
    %5139 = vmatprep.subr.mxu0 0.0
    %5140 = vmatpush1.xpose.msra.mxu0 0.0
    %5141 = vmatprep.subr.mxu0 0.0
    %5142 = vmatpush1.xpose.msra.mxu0 0.0
    %5143 = vmatprep.subr.mxu0 0.0
    %5144 = vmatpush1.xpose.msra.mxu0 0.0
    %5145 = vmatprep.subr.mxu0 0.0
    %5146 = vmatpush1.xpose.msra.mxu0 0.0
    %5147 = vmatprep.subr.mxu0 0.0
    %5148 = vmatpush1.xpose.msra.mxu0 0.0
    %5149 = vmatprep.subr.mxu0 0.0
    %5150 = vmatpush1.xpose.msra.mxu0 %v5117
    %5151 = vmatprep.subr.mxu0 0.0
    %5152 = vmatpush2.xpose.msra.mxu0 0.0
    %5153 = vmatprep.subr.mxu0 0.0
    %5154 = vmatpush2.xpose.msra.mxu0 0.0
    %5155 = vmatprep.subr.mxu0 0.0
    %5156 = vmatpush2.xpose.msra.mxu0 0.0
    %5157 = vmatprep.subr.mxu0 0.0
    %5158 = vmatpush2.xpose.msra.mxu0 0.0
    %5159 = vmatprep.subr.mxu0 0.0
    %5160 = vmatpush2.xpose.msra.mxu0 0.0
    %5161 = vmatprep.subr.mxu0 0.0
    %5162 = vmatpush2.xpose.msra.mxu0 0.0
    %5163 = vmatprep.subr.mxu0 0.0
    %5164 = vmatpush2.xpose.msra.mxu0 0.0
    %5165 = vmatprep.subr.mxu0 0.0
    %5166 = vmatpush2.xpose.msra.mxu0 0.0
    %5167 = vmatprep.subr.mxu0 0.0
    %5168 = vmatpush2.xpose.msra.mxu0 0.0
    %5169 = vmatprep.subr.mxu0 0.0
    %5170 = vmatpush2.xpose.msra.mxu0 0.0
    %5171 = vmatprep.subr.mxu0 0.0
    %5172 = vmatpush2.xpose.msra.mxu0 0.0
    %5173 = vmatprep.subr.mxu0 0.0
    %5174 = vmatpush2.xpose.msra.mxu0 0.0
    %5175 = vmatprep.subr.mxu0 0.0
    %5176 = vmatpush2.xpose.msra.mxu0 0.0
    %5177 = vmatprep.subr.mxu0 0.0
    %5178 = vmatpush2.xpose.msra.mxu0 0.0
    %5179 = vmatprep.subr.mxu0 0.0
    %5180 = vmatpush2.xpose.msra.mxu0 0.0
    %5181 = vmatprep.subr.mxu0 0.0
    %5182 = vmatpush2.xpose.msra.mxu0 0.0
    %5183 = vmatprep.mubr.f32.mxu0 0.0
    %5184 = vmatmul.mubr.f32.gmra.mxu0 %v5115
    %v5185 = vpop.f32.mrf.mxu0
    %v5186 = vadd.f32 0.0, %v5185
    %v5187 = vpop.f32.mrf.mxu0
    %5188 = vdwg.mxu0
    %v5189 = vmul.f32 %v5108, 0.35355338
    %v5190 = vmul.f32 %v5186, 0.35355338
    %v5191 = vsel %vm4522, %v5189, -inf
    %5192 = vmax.xlane.f32.xlu0 %v5191
    %v5193 = vpop.xlane.xlu0 %5192
    %v5194 = vsel %vm4522, %v5190, -inf
    %5195 = vmax.xlane.f32.xlu0 %v5194
    %v5196 = vpop.xlane.xlu0 %5195
    %v5197 = vsub.f32 %v5189, %v5193
    %v5198 = vsub.f32 %v5190, %v5196
    %v5199 = vmul.f32 %v5197, 1.442695
    %v5200 = vpow.pop %v5199
    %v5201 = vmul.f32 %v5198, 1.442695
    %v5202 = vpow.pop %v5201
    %v5203 = vsel %vm4522, %v5200, 0.0
    %5204 = vadd.xlane.f32.xlu0 %v5203
    %v5205 = vpop.xlane.xlu0 %5204
    %v5206 = vsel %vm4522, %v5202, 0.0
    %5207 = vadd.xlane.f32.xlu0 %v5206
    %v5208 = vpop.xlane.xlu0 %5207
    %v5209 = vrcp.pop %v5205
    %v5210 = vrcp.pop %v5208
    %v5211 = vmul.f32 %v5200, %v5209
    %v5212 = vmul.f32 %v5202, %v5210
    %5213 = vrot.lane.b32.xlu0 %v4363, 48
    %v5214 = vpop.permute.xlu0 %5213
    %v5216 = vsel %vm445, %v5211, 0
    %v5218 = vsel %vm452, %v5214, 0
    %5220 = vmatprep.subr.mxu0 0.0
    %5221 = vmatpush1.msra.mxu0 0.0
    %5222 = vmatprep.subr.mxu0 0.0
    %5223 = vmatpush1.msra.mxu0 0.0
    %5224 = vmatprep.subr.mxu0 0.0
    %5225 = vmatpush1.msra.mxu0 0.0
    %5226 = vmatprep.subr.mxu0 0.0
    %5227 = vmatpush1.msra.mxu0 0.0
    %5228 = vmatprep.subr.mxu0 0.0
    %5229 = vmatpush1.msra.mxu0 0.0
    %5230 = vmatprep.subr.mxu0 0.0
    %5231 = vmatpush1.msra.mxu0 0.0
    %5232 = vmatprep.subr.mxu0 0.0
    %5233 = vmatpush1.msra.mxu0 0.0
    %5234 = vmatprep.subr.mxu0 0.0
    %5235 = vmatpush1.msra.mxu0 0.0
    %5236 = vmatprep.subr.mxu0 0.0
    %5237 = vmatpush1.msra.mxu0 0.0
    %5238 = vmatprep.subr.mxu0 0.0
    %5239 = vmatpush1.msra.mxu0 0.0
    %5240 = vmatprep.subr.mxu0 0.0
    %5241 = vmatpush1.msra.mxu0 0.0
    %5242 = vmatprep.subr.mxu0 0.0
    %5243 = vmatpush1.msra.mxu0 0.0
    %5244 = vmatprep.subr.mxu0 0.0
    %5245 = vmatpush1.msra.mxu0 0.0
    %5246 = vmatprep.subr.mxu0 0.0
    %5247 = vmatpush1.msra.mxu0 0.0
    %5248 = vmatprep.subr.mxu0 0.0
    %5249 = vmatpush1.msra.mxu0 0.0
    %5250 = vmatprep.subr.mxu0 0.0
    %5251 = vmatpush1.msra.mxu0 %v5218
    %5252 = vmatprep.subr.mxu0 0.0
    %5253 = vmatpush2.msra.mxu0 0.0
    %5254 = vmatprep.subr.mxu0 0.0
    %5255 = vmatpush2.msra.mxu0 0.0
    %5256 = vmatprep.subr.mxu0 0.0
    %5257 = vmatpush2.msra.mxu0 0.0
    %5258 = vmatprep.subr.mxu0 0.0
    %5259 = vmatpush2.msra.mxu0 0.0
    %5260 = vmatprep.subr.mxu0 0.0
    %5261 = vmatpush2.msra.mxu0 0.0
    %5262 = vmatprep.subr.mxu0 0.0
    %5263 = vmatpush2.msra.mxu0 0.0
    %5264 = vmatprep.subr.mxu0 0.0
    %5265 = vmatpush2.msra.mxu0 0.0
    %5266 = vmatprep.subr.mxu0 0.0
    %5267 = vmatpush2.msra.mxu0 0.0
    %5268 = vmatprep.subr.mxu0 0.0
    %5269 = vmatpush2.msra.mxu0 0.0
    %5270 = vmatprep.subr.mxu0 0.0
    %5271 = vmatpush2.msra.mxu0 0.0
    %5272 = vmatprep.subr.mxu0 0.0
    %5273 = vmatpush2.msra.mxu0 0.0
    %5274 = vmatprep.subr.mxu0 0.0
    %5275 = vmatpush2.msra.mxu0 0.0
    %5276 = vmatprep.subr.mxu0 0.0
    %5277 = vmatpush2.msra.mxu0 0.0
    %5278 = vmatprep.subr.mxu0 0.0
    %5279 = vmatpush2.msra.mxu0 0.0
    %5280 = vmatprep.subr.mxu0 0.0
    %5281 = vmatpush2.msra.mxu0 0.0
    %5282 = vmatprep.subr.mxu0 0.0
    %5283 = vmatpush2.msra.mxu0 0.0
    %5284 = vmatprep.mubr.f32.mxu0 0.0
    %5285 = vmatmul.mubr.f32.gmra.mxu0 %v5216
    %v5286 = vpop.f32.mrf.mxu0
    %v5287 = vadd.f32 0.0, %v5286
    %v5288 = vpop.f32.mrf.mxu0
    %5289 = vdwg.mxu0
    %5290 = vrot.lane.b32.xlu0 %v4367, 48
    %v5291 = vpop.permute.xlu0 %5290
    %v5293 = vsel %vm445, %v5212, 0
    %v5295 = vsel %vm452, %v5291, 0
    %5297 = vmatprep.subr.mxu0 0.0
    %5298 = vmatpush1.msra.mxu0 0.0
    %5299 = vmatprep.subr.mxu0 0.0
    %5300 = vmatpush1.msra.mxu0 0.0
    %5301 = vmatprep.subr.mxu0 0.0
    %5302 = vmatpush1.msra.mxu0 0.0
    %5303 = vmatprep.subr.mxu0 0.0
    %5304 = vmatpush1.msra.mxu0 0.0
    %5305 = vmatprep.subr.mxu0 0.0
    %5306 = vmatpush1.msra.mxu0 0.0
    %5307 = vmatprep.subr.mxu0 0.0
    %5308 = vmatpush1.msra.mxu0 0.0
    %5309 = vmatprep.subr.mxu0 0.0
    %5310 = vmatpush1.msra.mxu0 0.0
    %5311 = vmatprep.subr.mxu0 0.0
    %5312 = vmatpush1.msra.mxu0 0.0
    %5313 = vmatprep.subr.mxu0 0.0
    %5314 = vmatpush1.msra.mxu0 0.0
    %5315 = vmatprep.subr.mxu0 0.0
    %5316 = vmatpush1.msra.mxu0 0.0
    %5317 = vmatprep.subr.mxu0 0.0
    %5318 = vmatpush1.msra.mxu0 0.0
    %5319 = vmatprep.subr.mxu0 0.0
    %5320 = vmatpush1.msra.mxu0 0.0
    %5321 = vmatprep.subr.mxu0 0.0
    %5322 = vmatpush1.msra.mxu0 0.0
    %5323 = vmatprep.subr.mxu0 0.0
    %5324 = vmatpush1.msra.mxu0 0.0
    %5325 = vmatprep.subr.mxu0 0.0
    %5326 = vmatpush1.msra.mxu0 0.0
    %5327 = vmatprep.subr.mxu0 0.0
    %5328 = vmatpush1.msra.mxu0 %v5295
    %5329 = vmatprep.subr.mxu0 0.0
    %5330 = vmatpush2.msra.mxu0 0.0
    %5331 = vmatprep.subr.mxu0 0.0
    %5332 = vmatpush2.msra.mxu0 0.0
    %5333 = vmatprep.subr.mxu0 0.0
    %5334 = vmatpush2.msra.mxu0 0.0
    %5335 = vmatprep.subr.mxu0 0.0
    %5336 = vmatpush2.msra.mxu0 0.0
    %5337 = vmatprep.subr.mxu0 0.0
    %5338 = vmatpush2.msra.mxu0 0.0
    %5339 = vmatprep.subr.mxu0 0.0
    %5340 = vmatpush2.msra.mxu0 0.0
    %5341 = vmatprep.subr.mxu0 0.0
    %5342 = vmatpush2.msra.mxu0 0.0
    %5343 = vmatprep.subr.mxu0 0.0
    %5344 = vmatpush2.msra.mxu0 0.0
    %5345 = vmatprep.subr.mxu0 0.0
    %5346 = vmatpush2.msra.mxu0 0.0
    %5347 = vmatprep.subr.mxu0 0.0
    %5348 = vmatpush2.msra.mxu0 0.0
    %5349 = vmatprep.subr.mxu0 0.0
    %5350 = vmatpush2.msra.mxu0 0.0
    %5351 = vmatprep.subr.mxu0 0.0
    %5352 = vmatpush2.msra.mxu0 0.0
    %5353 = vmatprep.subr.mxu0 0.0
    %5354 = vmatpush2.msra.mxu0 0.0
    %5355 = vmatprep.subr.mxu0 0.0
    %5356 = vmatpush2.msra.mxu0 0.0
    %5357 = vmatprep.subr.mxu0 0.0
    %5358 = vmatpush2.msra.mxu0 0.0
    %5359 = vmatprep.subr.mxu0 0.0
    %5360 = vmatpush2.msra.mxu0 0.0
    %5361 = vmatprep.mubr.f32.mxu0 0.0
    %5362 = vmatmul.mubr.f32.gmra.mxu0 %v5293
    %v5363 = vpop.f32.mrf.mxu0
    %v5364 = vadd.f32 0.0, %v5363
    %v5365 = vpop.f32.mrf.mxu0
    %5366 = vdwg.mxu0
    %5367 = vrot.lane.b32.xlu0 %v4363, 104
    %v5368 = vpop.permute.xlu0 %5367
    %5369 = vrot.lane.b32.xlu0 %v4363, 72
    %v5370 = vpop.permute.xlu0 %5369
    %v5371 = vsel %vm540, %v5368, 0
    %v5373 = vsel %vm540, %v5370, 0
    %5375 = vmatprep.subr.mxu0 0.0
    %5376 = vmatpush1.xpose.msra.mxu0 0.0
    %5377 = vmatprep.subr.mxu0 0.0
    %5378 = vmatpush1.xpose.msra.mxu0 0.0
    %5379 = vmatprep.subr.mxu0 0.0
    %5380 = vmatpush1.xpose.msra.mxu0 0.0
    %5381 = vmatprep.subr.mxu0 0.0
    %5382 = vmatpush1.xpose.msra.mxu0 0.0
    %5383 = vmatprep.subr.mxu0 0.0
    %5384 = vmatpush1.xpose.msra.mxu0 0.0
    %5385 = vmatprep.subr.mxu0 0.0
    %5386 = vmatpush1.xpose.msra.mxu0 0.0
    %5387 = vmatprep.subr.mxu0 0.0
    %5388 = vmatpush1.xpose.msra.mxu0 0.0
    %5389 = vmatprep.subr.mxu0 0.0
    %5390 = vmatpush1.xpose.msra.mxu0 0.0
    %5391 = vmatprep.subr.mxu0 0.0
    %5392 = vmatpush1.xpose.msra.mxu0 0.0
    %5393 = vmatprep.subr.mxu0 0.0
    %5394 = vmatpush1.xpose.msra.mxu0 0.0
    %5395 = vmatprep.subr.mxu0 0.0
    %5396 = vmatpush1.xpose.msra.mxu0 0.0
    %5397 = vmatprep.subr.mxu0 0.0
    %5398 = vmatpush1.xpose.msra.mxu0 0.0
    %5399 = vmatprep.subr.mxu0 0.0
    %5400 = vmatpush1.xpose.msra.mxu0 0.0
    %5401 = vmatprep.subr.mxu0 0.0
    %5402 = vmatpush1.xpose.msra.mxu0 0.0
    %5403 = vmatprep.subr.mxu0 0.0
    %5404 = vmatpush1.xpose.msra.mxu0 0.0
    %5405 = vmatprep.subr.mxu0 0.0
    %5406 = vmatpush1.xpose.msra.mxu0 %v5373
    %5407 = vmatprep.subr.mxu0 0.0
    %5408 = vmatpush2.xpose.msra.mxu0 0.0
    %5409 = vmatprep.subr.mxu0 0.0
    %5410 = vmatpush2.xpose.msra.mxu0 0.0
    %5411 = vmatprep.subr.mxu0 0.0
    %5412 = vmatpush2.xpose.msra.mxu0 0.0
    %5413 = vmatprep.subr.mxu0 0.0
    %5414 = vmatpush2.xpose.msra.mxu0 0.0
    %5415 = vmatprep.subr.mxu0 0.0
    %5416 = vmatpush2.xpose.msra.mxu0 0.0
    %5417 = vmatprep.subr.mxu0 0.0
    %5418 = vmatpush2.xpose.msra.mxu0 0.0
    %5419 = vmatprep.subr.mxu0 0.0
    %5420 = vmatpush2.xpose.msra.mxu0 0.0
    %5421 = vmatprep.subr.mxu0 0.0
    %5422 = vmatpush2.xpose.msra.mxu0 0.0
    %5423 = vmatprep.subr.mxu0 0.0
    %5424 = vmatpush2.xpose.msra.mxu0 0.0
    %5425 = vmatprep.subr.mxu0 0.0
    %5426 = vmatpush2.xpose.msra.mxu0 0.0
    %5427 = vmatprep.subr.mxu0 0.0
    %5428 = vmatpush2.xpose.msra.mxu0 0.0
    %5429 = vmatprep.subr.mxu0 0.0
    %5430 = vmatpush2.xpose.msra.mxu0 0.0
    %5431 = vmatprep.subr.mxu0 0.0
    %5432 = vmatpush2.xpose.msra.mxu0 0.0
    %5433 = vmatprep.subr.mxu0 0.0
    %5434 = vmatpush2.xpose.msra.mxu0 0.0
    %5435 = vmatprep.subr.mxu0 0.0
    %5436 = vmatpush2.xpose.msra.mxu0 0.0
    %5437 = vmatprep.subr.mxu0 0.0
    %5438 = vmatpush2.xpose.msra.mxu0 0.0
    %5439 = vmatprep.mubr.f32.mxu0 0.0
    %5440 = vmatmul.mubr.f32.gmra.mxu0 %v5371
    %v5441 = vpop.f32.mrf.mxu0
    %v5442 = vadd.f32 0.0, %v5441
    %v5443 = vpop.f32.mrf.mxu0
    %5444 = vdwg.mxu0
    %5445 = vrot.lane.b32.xlu0 %v4367, 104
    %v5446 = vpop.permute.xlu0 %5445
    %5447 = vrot.lane.b32.xlu0 %v4367, 72
    %v5448 = vpop.permute.xlu0 %5447
    %v5449 = vsel %vm540, %v5446, 0
    %v5451 = vsel %vm540, %v5448, 0
    %5453 = vmatprep.subr.mxu0 0.0
    %5454 = vmatpush1.xpose.msra.mxu0 0.0
    %5455 = vmatprep.subr.mxu0 0.0
    %5456 = vmatpush1.xpose.msra.mxu0 0.0
    %5457 = vmatprep.subr.mxu0 0.0
    %5458 = vmatpush1.xpose.msra.mxu0 0.0
    %5459 = vmatprep.subr.mxu0 0.0
    %5460 = vmatpush1.xpose.msra.mxu0 0.0
    %5461 = vmatprep.subr.mxu0 0.0
    %5462 = vmatpush1.xpose.msra.mxu0 0.0
    %5463 = vmatprep.subr.mxu0 0.0
    %5464 = vmatpush1.xpose.msra.mxu0 0.0
    %5465 = vmatprep.subr.mxu0 0.0
    %5466 = vmatpush1.xpose.msra.mxu0 0.0
    %5467 = vmatprep.subr.mxu0 0.0
    %5468 = vmatpush1.xpose.msra.mxu0 0.0
    %5469 = vmatprep.subr.mxu0 0.0
    %5470 = vmatpush1.xpose.msra.mxu0 0.0
    %5471 = vmatprep.subr.mxu0 0.0
    %5472 = vmatpush1.xpose.msra.mxu0 0.0
    %5473 = vmatprep.subr.mxu0 0.0
    %5474 = vmatpush1.xpose.msra.mxu0 0.0
    %5475 = vmatprep.subr.mxu0 0.0
    %5476 = vmatpush1.xpose.msra.mxu0 0.0
    %5477 = vmatprep.subr.mxu0 0.0
    %5478 = vmatpush1.xpose.msra.mxu0 0.0
    %5479 = vmatprep.subr.mxu0 0.0
    %5480 = vmatpush1.xpose.msra.mxu0 0.0
    %5481 = vmatprep.subr.mxu0 0.0
    %5482 = vmatpush1.xpose.msra.mxu0 0.0
    %5483 = vmatprep.subr.mxu0 0.0
    %5484 = vmatpush1.xpose.msra.mxu0 %v5451
    %5485 = vmatprep.subr.mxu0 0.0
    %5486 = vmatpush2.xpose.msra.mxu0 0.0
    %5487 = vmatprep.subr.mxu0 0.0
    %5488 = vmatpush2.xpose.msra.mxu0 0.0
    %5489 = vmatprep.subr.mxu0 0.0
    %5490 = vmatpush2.xpose.msra.mxu0 0.0
    %5491 = vmatprep.subr.mxu0 0.0
    %5492 = vmatpush2.xpose.msra.mxu0 0.0
    %5493 = vmatprep.subr.mxu0 0.0
    %5494 = vmatpush2.xpose.msra.mxu0 0.0
    %5495 = vmatprep.subr.mxu0 0.0
    %5496 = vmatpush2.xpose.msra.mxu0 0.0
    %5497 = vmatprep.subr.mxu0 0.0
    %5498 = vmatpush2.xpose.msra.mxu0 0.0
    %5499 = vmatprep.subr.mxu0 0.0
    %5500 = vmatpush2.xpose.msra.mxu0 0.0
    %5501 = vmatprep.subr.mxu0 0.0
    %5502 = vmatpush2.xpose.msra.mxu0 0.0
    %5503 = vmatprep.subr.mxu0 0.0
    %5504 = vmatpush2.xpose.msra.mxu0 0.0
    %5505 = vmatprep.subr.mxu0 0.0
    %5506 = vmatpush2.xpose.msra.mxu0 0.0
    %5507 = vmatprep.subr.mxu0 0.0
    %5508 = vmatpush2.xpose.msra.mxu0 0.0
    %5509 = vmatprep.subr.mxu0 0.0
    %5510 = vmatpush2.xpose.msra.mxu0 0.0
    %5511 = vmatprep.subr.mxu0 0.0
    %5512 = vmatpush2.xpose.msra.mxu0 0.0
    %5513 = vmatprep.subr.mxu0 0.0
    %5514 = vmatpush2.xpose.msra.mxu0 0.0
    %5515 = vmatprep.subr.mxu0 0.0
    %5516 = vmatpush2.xpose.msra.mxu0 0.0
    %5517 = vmatprep.mubr.f32.mxu0 0.0
    %5518 = vmatmul.mubr.f32.gmra.mxu0 %v5449
    %v5519 = vpop.f32.mrf.mxu0
    %v5520 = vadd.f32 0.0, %v5519
    %v5521 = vpop.f32.mrf.mxu0
    %5522 = vdwg.mxu0
    %v5523 = vmul.f32 %v5442, 0.35355338
    %v5524 = vmul.f32 %v5520, 0.35355338
    %v5525 = vsel %vm4522, %v5523, -inf
    %5526 = vmax.xlane.f32.xlu0 %v5525
    %v5527 = vpop.xlane.xlu0 %5526
    %v5528 = vsel %vm4522, %v5524, -inf
    %5529 = vmax.xlane.f32.xlu0 %v5528
    %v5530 = vpop.xlane.xlu0 %5529
    %v5531 = vsub.f32 %v5523, %v5527
    %v5532 = vsub.f32 %v5524, %v5530
    %v5533 = vmul.f32 %v5531, 1.442695
    %v5534 = vpow.pop %v5533
    %v5535 = vmul.f32 %v5532, 1.442695
    %v5536 = vpow.pop %v5535
    %v5537 = vsel %vm4522, %v5534, 0.0
    %5538 = vadd.xlane.f32.xlu0 %v5537
    %v5539 = vpop.xlane.xlu0 %5538
    %v5540 = vsel %vm4522, %v5536, 0.0
    %5541 = vadd.xlane.f32.xlu0 %v5540
    %v5542 = vpop.xlane.xlu0 %5541
    %v5543 = vrcp.pop %v5539
    %v5544 = vrcp.pop %v5542
    %v5545 = vmul.f32 %v5534, %v5543
    %v5546 = vmul.f32 %v5536, %v5544
    %5547 = vrot.lane.b32.xlu0 %v4363, 40
    %v5548 = vpop.permute.xlu0 %5547
    %v5550 = vsel %vm445, %v5545, 0
    %v5552 = vsel %vm452, %v5548, 0
    %5554 = vmatprep.subr.mxu0 0.0
    %5555 = vmatpush1.msra.mxu0 0.0
    %5556 = vmatprep.subr.mxu0 0.0
    %5557 = vmatpush1.msra.mxu0 0.0
    %5558 = vmatprep.subr.mxu0 0.0
    %5559 = vmatpush1.msra.mxu0 0.0
    %5560 = vmatprep.subr.mxu0 0.0
    %5561 = vmatpush1.msra.mxu0 0.0
    %5562 = vmatprep.subr.mxu0 0.0
    %5563 = vmatpush1.msra.mxu0 0.0
    %5564 = vmatprep.subr.mxu0 0.0
    %5565 = vmatpush1.msra.mxu0 0.0
    %5566 = vmatprep.subr.mxu0 0.0
    %5567 = vmatpush1.msra.mxu0 0.0
    %5568 = vmatprep.subr.mxu0 0.0
    %5569 = vmatpush1.msra.mxu0 0.0
    %5570 = vmatprep.subr.mxu0 0.0
    %5571 = vmatpush1.msra.mxu0 0.0
    %5572 = vmatprep.subr.mxu0 0.0
    %5573 = vmatpush1.msra.mxu0 0.0
    %5574 = vmatprep.subr.mxu0 0.0
    %5575 = vmatpush1.msra.mxu0 0.0
    %5576 = vmatprep.subr.mxu0 0.0
    %5577 = vmatpush1.msra.mxu0 0.0
    %5578 = vmatprep.subr.mxu0 0.0
    %5579 = vmatpush1.msra.mxu0 0.0
    %5580 = vmatprep.subr.mxu0 0.0
    %5581 = vmatpush1.msra.mxu0 0.0
    %5582 = vmatprep.subr.mxu0 0.0
    %5583 = vmatpush1.msra.mxu0 0.0
    %5584 = vmatprep.subr.mxu0 0.0
    %5585 = vmatpush1.msra.mxu0 %v5552
    %5586 = vmatprep.subr.mxu0 0.0
    %5587 = vmatpush2.msra.mxu0 0.0
    %5588 = vmatprep.subr.mxu0 0.0
    %5589 = vmatpush2.msra.mxu0 0.0
    %5590 = vmatprep.subr.mxu0 0.0
    %5591 = vmatpush2.msra.mxu0 0.0
    %5592 = vmatprep.subr.mxu0 0.0
    %5593 = vmatpush2.msra.mxu0 0.0
    %5594 = vmatprep.subr.mxu0 0.0
    %5595 = vmatpush2.msra.mxu0 0.0
    %5596 = vmatprep.subr.mxu0 0.0
    %5597 = vmatpush2.msra.mxu0 0.0
    %5598 = vmatprep.subr.mxu0 0.0
    %5599 = vmatpush2.msra.mxu0 0.0
    %5600 = vmatprep.subr.mxu0 0.0
    %5601 = vmatpush2.msra.mxu0 0.0
    %5602 = vmatprep.subr.mxu0 0.0
    %5603 = vmatpush2.msra.mxu0 0.0
    %5604 = vmatprep.subr.mxu0 0.0
    %5605 = vmatpush2.msra.mxu0 0.0
    %5606 = vmatprep.subr.mxu0 0.0
    %5607 = vmatpush2.msra.mxu0 0.0
    %5608 = vmatprep.subr.mxu0 0.0
    %5609 = vmatpush2.msra.mxu0 0.0
    %5610 = vmatprep.subr.mxu0 0.0
    %5611 = vmatpush2.msra.mxu0 0.0
    %5612 = vmatprep.subr.mxu0 0.0
    %5613 = vmatpush2.msra.mxu0 0.0
    %5614 = vmatprep.subr.mxu0 0.0
    %5615 = vmatpush2.msra.mxu0 0.0
    %5616 = vmatprep.subr.mxu0 0.0
    %5617 = vmatpush2.msra.mxu0 0.0
    %5618 = vmatprep.mubr.f32.mxu0 0.0
    %5619 = vmatmul.mubr.f32.gmra.mxu0 %v5550
    %v5620 = vpop.f32.mrf.mxu0
    %v5621 = vadd.f32 0.0, %v5620
    %v5622 = vpop.f32.mrf.mxu0
    %5623 = vdwg.mxu0
    %5624 = vrot.lane.b32.xlu0 %v4367, 40
    %v5625 = vpop.permute.xlu0 %5624
    %v5627 = vsel %vm445, %v5546, 0
    %v5629 = vsel %vm452, %v5625, 0
    %5631 = vmatprep.subr.mxu0 0.0
    %5632 = vmatpush1.msra.mxu0 0.0
    %5633 = vmatprep.subr.mxu0 0.0
    %5634 = vmatpush1.msra.mxu0 0.0
    %5635 = vmatprep.subr.mxu0 0.0
    %5636 = vmatpush1.msra.mxu0 0.0
    %5637 = vmatprep.subr.mxu0 0.0
    %5638 = vmatpush1.msra.mxu0 0.0
    %5639 = vmatprep.subr.mxu0 0.0
    %5640 = vmatpush1.msra.mxu0 0.0
    %5641 = vmatprep.subr.mxu0 0.0
    %5642 = vmatpush1.msra.mxu0 0.0
    %5643 = vmatprep.subr.mxu0 0.0
    %5644 = vmatpush1.msra.mxu0 0.0
    %5645 = vmatprep.subr.mxu0 0.0
    %5646 = vmatpush1.msra.mxu0 0.0
    %5647 = vmatprep.subr.mxu0 0.0
    %5648 = vmatpush1.msra.mxu0 0.0
    %5649 = vmatprep.subr.mxu0 0.0
    %5650 = vmatpush1.msra.mxu0 0.0
    %5651 = vmatprep.subr.mxu0 0.0
    %5652 = vmatpush1.msra.mxu0 0.0
    %5653 = vmatprep.subr.mxu0 0.0
    %5654 = vmatpush1.msra.mxu0 0.0
    %5655 = vmatprep.subr.mxu0 0.0
    %5656 = vmatpush1.msra.mxu0 0.0
    %5657 = vmatprep.subr.mxu0 0.0
    %5658 = vmatpush1.msra.mxu0 0.0
    %5659 = vmatprep.subr.mxu0 0.0
    %5660 = vmatpush1.msra.mxu0 0.0
    %5661 = vmatprep.subr.mxu0 0.0
    %5662 = vmatpush1.msra.mxu0 %v5629
    %5663 = vmatprep.subr.mxu0 0.0
    %5664 = vmatpush2.msra.mxu0 0.0
    %5665 = vmatprep.subr.mxu0 0.0
    %5666 = vmatpush2.msra.mxu0 0.0
    %5667 = vmatprep.subr.mxu0 0.0
    %5668 = vmatpush2.msra.mxu0 0.0
    %5669 = vmatprep.subr.mxu0 0.0
    %5670 = vmatpush2.msra.mxu0 0.0
    %5671 = vmatprep.subr.mxu0 0.0
    %5672 = vmatpush2.msra.mxu0 0.0
    %5673 = vmatprep.subr.mxu0 0.0
    %5674 = vmatpush2.msra.mxu0 0.0
    %5675 = vmatprep.subr.mxu0 0.0
    %5676 = vmatpush2.msra.mxu0 0.0
    %5677 = vmatprep.subr.mxu0 0.0
    %5678 = vmatpush2.msra.mxu0 0.0
    %5679 = vmatprep.subr.mxu0 0.0
    %5680 = vmatpush2.msra.mxu0 0.0
    %5681 = vmatprep.subr.mxu0 0.0
    %5682 = vmatpush2.msra.mxu0 0.0
    %5683 = vmatprep.subr.mxu0 0.0
    %5684 = vmatpush2.msra.mxu0 0.0
    %5685 = vmatprep.subr.mxu0 0.0
    %5686 = vmatpush2.msra.mxu0 0.0
    %5687 = vmatprep.subr.mxu0 0.0
    %5688 = vmatpush2.msra.mxu0 0.0
    %5689 = vmatprep.subr.mxu0 0.0
    %5690 = vmatpush2.msra.mxu0 0.0
    %5691 = vmatprep.subr.mxu0 0.0
    %5692 = vmatpush2.msra.mxu0 0.0
    %5693 = vmatprep.subr.mxu0 0.0
    %5694 = vmatpush2.msra.mxu0 0.0
    %5695 = vmatprep.mubr.f32.mxu0 0.0
    %5696 = vmatmul.mubr.f32.gmra.mxu0 %v5627
    %v5697 = vpop.f32.mrf.mxu0
    %v5698 = vadd.f32 0.0, %v5697
    %v5699 = vpop.f32.mrf.mxu0
    %5700 = vdwg.mxu0
    %5703 = vrot.lane.b32.xlu0 %v4953, 8
    %v5704 = vpop.permute.xlu0 %5703
    %5705 = vrot.lane.b32.xlu0 %v5030, 8
    %v5706 = vpop.permute.xlu0 %5705
    %5711 = vrot.lane.b32.xlu0 %v5287, 16
    %v5712 = vpop.permute.xlu0 %5711
    %5713 = vrot.lane.b32.xlu0 %v5364, 16
    %v5714 = vpop.permute.xlu0 %5713
    %5719 = vrot.lane.b32.xlu0 %v5621, 24
    %v5720 = vpop.permute.xlu0 %5719
    %5721 = vrot.lane.b32.xlu0 %v5698, 24
    %v5722 = vpop.permute.xlu0 %5721
    %v5725 = vsel %vm540, %v4619, %v5704
    %v5726 = vsel %vm540, %v4696, %v5706
    %v5727 = vsel %vm2067, %v5725, %v5712
    %v5728 = vsel %vm2067, %v5726, %v5714
    %v5729 = vsel %vm2070, %v5727, %v5720
    %v5730 = vsel %vm2070, %v5728, %v5722
    %v5732 = vrot.slane %v5730, 4
    %v5734 = vsel %vm452, %v5729, %v5732
    %v5735 = vld [vmem:[%s41] sm:$0xff]
    %v5736 = vld [vmem:[%s41 + $0x8] sm:$0xff]
    %v5737 = vld [vmem:[%s41 + $0x10] sm:$0xff]
    %v5738 = vld [vmem:[%s41 + $0x18] sm:$0xff]
    %v5739 = vld [vmem:[#allocation23] sm:$0x1]
    %v5741 = vlaneseq
    %v5742 = vshrl.u32 %v5741, 7
    %v5743 = vsub.s32 0, %v5742
    %v5744 = vrot.slane %v5739, %v5743
    %v5747 = vsel %vm614, %v5734, 0
    %5749 = vmatprep.subr.mxu0 0.0
    %5750 = vmatpush1.msra.mxu0 0.0
    %5751 = vmatprep.subr.mxu0 0.0
    %5752 = vmatpush1.msra.mxu0 0.0
    %5753 = vmatprep.subr.mxu0 0.0
    %5754 = vmatpush1.msra.mxu0 0.0
    %5755 = vmatprep.subr.mxu0 0.0
    %5756 = vmatpush1.msra.mxu0 0.0
    %5757 = vmatprep.subr.mxu0 0.0
    %5758 = vmatpush1.msra.mxu0 0.0
    %5759 = vmatprep.subr.mxu0 0.0
    %5760 = vmatpush1.msra.mxu0 0.0
    %5761 = vmatprep.subr.mxu0 0.0
    %5762 = vmatpush1.msra.mxu0 0.0
    %5763 = vmatprep.subr.mxu0 0.0
    %5764 = vmatpush1.msra.mxu0 0.0
    %5765 = vmatprep.subr.mxu0 0.0
    %5766 = vmatpush1.msra.mxu0 0.0
    %5767 = vmatprep.subr.mxu0 0.0
    %5768 = vmatpush1.msra.mxu0 0.0
    %5769 = vmatprep.subr.mxu0 0.0
    %5770 = vmatpush1.msra.mxu0 0.0
    %5771 = vmatprep.subr.mxu0 0.0
    %5772 = vmatpush1.msra.mxu0 0.0
    %5773 = vmatprep.subr.mxu0 0.0
    %5774 = vmatpush1.msra.mxu0 %v5738
    %5775 = vmatprep.subr.mxu0 0.0
    %5776 = vmatpush1.msra.mxu0 %v5737
    %5777 = vmatprep.subr.mxu0 0.0
    %5778 = vmatpush1.msra.mxu0 %v5736
    %5779 = vmatprep.subr.mxu0 0.0
    %5780 = vmatpush1.msra.mxu0 %v5735
    %5781 = vmatprep.subr.mxu0 0.0
    %5782 = vmatpush2.msra.mxu0 0.0
    %5783 = vmatprep.subr.mxu0 0.0
    %5784 = vmatpush2.msra.mxu0 0.0
    %5785 = vmatprep.subr.mxu0 0.0
    %5786 = vmatpush2.msra.mxu0 0.0
    %5787 = vmatprep.subr.mxu0 0.0
    %5788 = vmatpush2.msra.mxu0 0.0
    %5789 = vmatprep.subr.mxu0 0.0
    %5790 = vmatpush2.msra.mxu0 0.0
    %5791 = vmatprep.subr.mxu0 0.0
    %5792 = vmatpush2.msra.mxu0 0.0
    %5793 = vmatprep.subr.mxu0 0.0
    %5794 = vmatpush2.msra.mxu0 0.0
    %5795 = vmatprep.subr.mxu0 0.0
    %5796 = vmatpush2.msra.mxu0 0.0
    %5797 = vmatprep.subr.mxu0 0.0
    %5798 = vmatpush2.msra.mxu0 0.0
    %5799 = vmatprep.subr.mxu0 0.0
    %5800 = vmatpush2.msra.mxu0 0.0
    %5801 = vmatprep.subr.mxu0 0.0
    %5802 = vmatpush2.msra.mxu0 0.0
    %5803 = vmatprep.subr.mxu0 0.0
    %5804 = vmatpush2.msra.mxu0 0.0
    %5805 = vmatprep.subr.mxu0 0.0
    %5806 = vmatpush2.msra.mxu0 0.0
    %5807 = vmatprep.subr.mxu0 0.0
    %5808 = vmatpush2.msra.mxu0 0.0
    %5809 = vmatprep.subr.mxu0 0.0
    %5810 = vmatpush2.msra.mxu0 0.0
    %5811 = vmatprep.subr.mxu0 0.0
    %5812 = vmatpush2.msra.mxu0 0.0
    %5813 = vmatprep.mubr.f32.mxu0 0.0
    %5814 = vmatmul.mubr.f32.gmra.mxu0 %v5747
    %v5815 = vpop.f32.mrf.mxu0
    %v5816 = vadd.f32 %v5744, %v5815
    %v5817 = vpop.f32.mrf.mxu0
    %5818 = vdwg.mxu0
    %v5819 = vadd.f32 %v611, %v5816
    %v5820 = vld [vmem:[#allocation25] sm:$0x1]
    %v5821 = vld [vmem:[#allocation26] sm:$0x1]
    %v5822 = vsel %vm614, %v5819, 0.0
    %5823 = vadd.xlane.f32.xlu0 %v5822
    %v5824 = vpop.xlane.xlu0 %5823
    %v5825 = vmul.f32 %v5824, %v2175
    %v5826 = vsub.f32 %v5819, %v5825
    %v5827 = vmul.f32 %v5826, %v5826
    %v5828 = vsel %vm614, %v5827, 0.0
    %5829 = vadd.xlane.f32.xlu0 %v5828
    %v5830 = vpop.xlane.xlu0 %5829
    %v5831 = vmul.f32 %v5830, %v2175
    %v5832 = vadd.f32 %v5831, 1e-05
    %v5833 = vrsqrt.pop %v5832
    %v5834 = vmul.f32 %v5826, %v5833
    %v5836 = vlaneseq
    %v5837 = vshrl.u32 %v5836, 7
    %v5838 = vsub.s32 0, %v5837
    %v5839 = vrot.slane %v5820, %v5838
    %v5841 = vmul.f32 %v5834, %v5839
    %v5843 = vlaneseq
    %v5844 = vshrl.u32 %v5843, 7
    %v5845 = vsub.s32 0, %v5844
    %v5846 = vrot.slane %v5821, %v5845
    %v5848 = vadd.f32 %v5841, %v5846
    %v5849 = vld [vmem:[%s49] sm:$0xff]
    %v5850 = vld [vmem:[%s49 + $0x8] sm:$0xff]
    %v5851 = vld [vmem:[%s49 + $0x10] sm:$0xff]
    %v5852 = vld [vmem:[%s49 + $0x18] sm:$0xff]
    %v5853 = vld [vmem:[#allocation28] sm:$0x1]
    %v5855 = vlaneseq
    %v5856 = vshrl.u32 %v5855, 7
    %v5857 = vsub.s32 0, %v5856
    %v5858 = vrot.slane %v5853, %v5857
    %v5861 = vsel %vm614, %v5848, 0
    %5863 = vmatprep.subr.mxu0 0.0
    %5864 = vmatpush1.msra.mxu0 0.0
    %5865 = vmatprep.subr.mxu0 0.0
    %5866 = vmatpush1.msra.mxu0 0.0
    %5867 = vmatprep.subr.mxu0 0.0
    %5868 = vmatpush1.msra.mxu0 0.0
    %5869 = vmatprep.subr.mxu0 0.0
    %5870 = vmatpush1.msra.mxu0 0.0
    %5871 = vmatprep.subr.mxu0 0.0
    %5872 = vmatpush1.msra.mxu0 0.0
    %5873 = vmatprep.subr.mxu0 0.0
    %5874 = vmatpush1.msra.mxu0 0.0
    %5875 = vmatprep.subr.mxu0 0.0
    %5876 = vmatpush1.msra.mxu0 0.0
    %5877 = vmatprep.subr.mxu0 0.0
    %5878 = vmatpush1.msra.mxu0 0.0
    %5879 = vmatprep.subr.mxu0 0.0
    %5880 = vmatpush1.msra.mxu0 0.0
    %5881 = vmatprep.subr.mxu0 0.0
    %5882 = vmatpush1.msra.mxu0 0.0
    %5883 = vmatprep.subr.mxu0 0.0
    %5884 = vmatpush1.msra.mxu0 0.0
    %5885 = vmatprep.subr.mxu0 0.0
    %5886 = vmatpush1.msra.mxu0 0.0
    %5887 = vmatprep.subr.mxu0 0.0
    %5888 = vmatpush1.msra.mxu0 %v5852
    %5889 = vmatprep.subr.mxu0 0.0
    %5890 = vmatpush1.msra.mxu0 %v5851
    %5891 = vmatprep.subr.mxu0 0.0
    %5892 = vmatpush1.msra.mxu0 %v5850
    %5893 = vmatprep.subr.mxu0 0.0
    %5894 = vmatpush1.msra.mxu0 %v5849
    %5895 = vmatprep.subr.mxu0 0.0
    %5896 = vmatpush2.msra.mxu0 0.0
    %5897 = vmatprep.subr.mxu0 0.0
    %5898 = vmatpush2.msra.mxu0 0.0
    %5899 = vmatprep.subr.mxu0 0.0
    %5900 = vmatpush2.msra.mxu0 0.0
    %5901 = vmatprep.subr.mxu0 0.0
    %5902 = vmatpush2.msra.mxu0 0.0
    %5903 = vmatprep.subr.mxu0 0.0
    %5904 = vmatpush2.msra.mxu0 0.0
    %5905 = vmatprep.subr.mxu0 0.0
    %5906 = vmatpush2.msra.mxu0 0.0
    %5907 = vmatprep.subr.mxu0 0.0
    %5908 = vmatpush2.msra.mxu0 0.0
    %5909 = vmatprep.subr.mxu0 0.0
    %5910 = vmatpush2.msra.mxu0 0.0
    %5911 = vmatprep.subr.mxu0 0.0
    %5912 = vmatpush2.msra.mxu0 0.0
    %5913 = vmatprep.subr.mxu0 0.0
    %5914 = vmatpush2.msra.mxu0 0.0
    %5915 = vmatprep.subr.mxu0 0.0
    %5916 = vmatpush2.msra.mxu0 0.0
    %5917 = vmatprep.subr.mxu0 0.0
    %5918 = vmatpush2.msra.mxu0 0.0
    %5919 = vmatprep.subr.mxu0 0.0
    %5920 = vmatpush2.msra.mxu0 0.0
    %5921 = vmatprep.subr.mxu0 0.0
    %5922 = vmatpush2.msra.mxu0 0.0
    %5923 = vmatprep.subr.mxu0 0.0
    %5924 = vmatpush2.msra.mxu0 0.0
    %5925 = vmatprep.subr.mxu0 0.0
    %5926 = vmatpush2.msra.mxu0 0.0
    %5927 = vmatprep.mubr.f32.mxu0 0.0
    %5928 = vmatmul.mubr.f32.gmra.mxu0 %v5861
    %v5929 = vpop.f32.mrf.mxu0
    %v5930 = vadd.f32 %v5858, %v5929
    %v5931 = vpop.f32.mrf.mxu0
    %5932 = vdwg.mxu0
    %v5933 = vmax.f32 %v5930, 0.0
    %v5934 = vld [vmem:[#allocation29] sm:$0xff]
    %v5935 = vld [vmem:[#allocation29 + $0x8] sm:$0xff]
    %v5936 = vld [vmem:[#allocation29 + $0x10] sm:$0xff]
    %v5937 = vld [vmem:[#allocation29 + $0x18] sm:$0xff]
    %v5938 = vld [vmem:[#allocation31] sm:$0x1]
    %v5940 = vlaneseq
    %v5941 = vshrl.u32 %v5940, 7
    %v5942 = vsub.s32 0, %v5941
    %v5943 = vrot.slane %v5938, %v5942
    %v5946 = vsel %vm614, %v5933, 0
    %5948 = vmatprep.subr.mxu0 0.0
    %5949 = vmatpush1.msra.mxu0 0.0
    %5950 = vmatprep.subr.mxu0 0.0
    %5951 = vmatpush1.msra.mxu0 0.0
    %5952 = vmatprep.subr.mxu0 0.0
    %5953 = vmatpush1.msra.mxu0 0.0
    %5954 = vmatprep.subr.mxu0 0.0
    %5955 = vmatpush1.msra.mxu0 0.0
    %5956 = vmatprep.subr.mxu0 0.0
    %5957 = vmatpush1.msra.mxu0 0.0
    %5958 = vmatprep.subr.mxu0 0.0
    %5959 = vmatpush1.msra.mxu0 0.0
    %5960 = vmatprep.subr.mxu0 0.0
    %5961 = vmatpush1.msra.mxu0 0.0
    %5962 = vmatprep.subr.mxu0 0.0
    %5963 = vmatpush1.msra.mxu0 0.0
    %5964 = vmatprep.subr.mxu0 0.0
    %5965 = vmatpush1.msra.mxu0 0.0
    %5966 = vmatprep.subr.mxu0 0.0
    %5967 = vmatpush1.msra.mxu0 0.0
    %5968 = vmatprep.subr.mxu0 0.0
    %5969 = vmatpush1.msra.mxu0 0.0
    %5970 = vmatprep.subr.mxu0 0.0
    %5971 = vmatpush1.msra.mxu0 0.0
    %5972 = vmatprep.subr.mxu0 0.0
    %5973 = vmatpush1.msra.mxu0 %v5937
    %5974 = vmatprep.subr.mxu0 0.0
    %5975 = vmatpush1.msra.mxu0 %v5936
    %5976 = vmatprep.subr.mxu0 0.0
    %5977 = vmatpush1.msra.mxu0 %v5935
    %5978 = vmatprep.subr.mxu0 0.0
    %5979 = vmatpush1.msra.mxu0 %v5934
    %5980 = vmatprep.subr.mxu0 0.0
    %5981 = vmatpush2.msra.mxu0 0.0
    %5982 = vmatprep.subr.mxu0 0.0
    %5983 = vmatpush2.msra.mxu0 0.0
    %5984 = vmatprep.subr.mxu0 0.0
    %5985 = vmatpush2.msra.mxu0 0.0
    %5986 = vmatprep.subr.mxu0 0.0
    %5987 = vmatpush2.msra.mxu0 0.0
    %5988 = vmatprep.subr.mxu0 0.0
    %5989 = vmatpush2.msra.mxu0 0.0
    %5990 = vmatprep.subr.mxu0 0.0
    %5991 = vmatpush2.msra.mxu0 0.0
    %5992 = vmatprep.subr.mxu0 0.0
    %5993 = vmatpush2.msra.mxu0 0.0
    %5994 = vmatprep.subr.mxu0 0.0
    %5995 = vmatpush2.msra.mxu0 0.0
    %5996 = vmatprep.subr.mxu0 0.0
    %5997 = vmatpush2.msra.mxu0 0.0
    %5998 = vmatprep.subr.mxu0 0.0
    %5999 = vmatpush2.msra.mxu0 0.0
    %6000 = vmatprep.subr.mxu0 0.0
    %6001 = vmatpush2.msra.mxu0 0.0
    %6002 = vmatprep.subr.mxu0 0.0
    %6003 = vmatpush2.msra.mxu0 0.0
    %6004 = vmatprep.subr.mxu0 0.0
    %6005 = vmatpush2.msra.mxu0 0.0
    %6006 = vmatprep.subr.mxu0 0.0
    %6007 = vmatpush2.msra.mxu0 0.0
    %6008 = vmatprep.subr.mxu0 0.0
    %6009 = vmatpush2.msra.mxu0 0.0
    %6010 = vmatprep.subr.mxu0 0.0
    %6011 = vmatpush2.msra.mxu0 0.0
    %6012 = vmatprep.mubr.f32.mxu0 0.0
    %6013 = vmatmul.mubr.f32.gmra.mxu0 %v5946
    %v6014 = vpop.f32.mrf.mxu0
    %v6015 = vadd.f32 %v5943, %v6014
    %v6016 = vpop.f32.mrf.mxu0
    %6017 = vdwg.mxu0
    %v6018 = vadd.f32 %v5848, %v6015
    %v6019 = vld [vmem:[#allocation32] sm:$0x1]
    %v6020 = vld [vmem:[#allocation34] sm:$0x1]
    %v6021 = vsel %vm614, %v6018, 0.0
    %6022 = vadd.xlane.f32.xlu0 %v6021
    %v6023 = vpop.xlane.xlu0 %6022
    %v6024 = vmul.f32 %v6023, %v2175
    %v6025 = vsub.f32 %v6018, %v6024
    %v6026 = vmul.f32 %v6025, %v6025
    %v6027 = vsel %vm614, %v6026, 0.0
    %6028 = vadd.xlane.f32.xlu0 %v6027
    %v6029 = vpop.xlane.xlu0 %6028
    %v6030 = vmul.f32 %v6029, %v2175
    %v6031 = vadd.f32 %v6030, 1e-05
    %v6032 = vrsqrt.pop %v6031
    %v6033 = vmul.f32 %v6025, %v6032
    %v6035 = vlaneseq
    %v6036 = vshrl.u32 %v6035, 7
    %v6037 = vsub.s32 0, %v6036
    %v6038 = vrot.slane %v6019, %v6037
    %v6040 = vmul.f32 %v6033, %v6038
    %v6042 = vlaneseq
    %v6043 = vshrl.u32 %v6042, 7
    %v6044 = vsub.s32 0, %v6043
    %v6045 = vrot.slane %v6020, %v6044
    %v6047 = vadd.f32 %v6040, %v6045
    %s6048 = scalar_lea.vmem %s37, 32
    %v6049 = vld [vmem:[%s6048] sm:$0xff]
    %v6050 = vld [vmem:[%s6048 + $0x8] sm:$0xff]
    %v6051 = vld [vmem:[%s6048 + $0x10] sm:$0xff]
    %v6052 = vld [vmem:[%s6048 + $0x18] sm:$0xff]
    %s6053 = scalar_lea.vmem [#allocation22], 1
    %v6054 = vld [vmem:[%s6053] sm:$0x1]
    %v6056 = vlaneseq
    %v6057 = vshrl.u32 %v6056, 7
    %v6058 = vsub.s32 0, %v6057
    %v6059 = vrot.slane %v6054, %v6058
    %v6062 = vsel %vm614, %v6047, 0
    %6064 = vmatprep.subr.mxu0 0.0
    %6065 = vmatpush1.msra.mxu0 0.0
    %6066 = vmatprep.subr.mxu0 0.0
    %6067 = vmatpush1.msra.mxu0 0.0
    %6068 = vmatprep.subr.mxu0 0.0
    %6069 = vmatpush1.msra.mxu0 0.0
    %6070 = vmatprep.subr.mxu0 0.0
    %6071 = vmatpush1.msra.mxu0 0.0
    %6072 = vmatprep.subr.mxu0 0.0
    %6073 = vmatpush1.msra.mxu0 0.0
    %6074 = vmatprep.subr.mxu0 0.0
    %6075 = vmatpush1.msra.mxu0 0.0
    %6076 = vmatprep.subr.mxu0 0.0
    %6077 = vmatpush1.msra.mxu0 0.0
    %6078 = vmatprep.subr.mxu0 0.0
    %6079 = vmatpush1.msra.mxu0 0.0
    %6080 = vmatprep.subr.mxu0 0.0
    %6081 = vmatpush1.msra.mxu0 0.0
    %6082 = vmatprep.subr.mxu0 0.0
    %6083 = vmatpush1.msra.mxu0 0.0
    %6084 = vmatprep.subr.mxu0 0.0
    %6085 = vmatpush1.msra.mxu0 0.0
    %6086 = vmatprep.subr.mxu0 0.0
    %6087 = vmatpush1.msra.mxu0 0.0
    %6088 = vmatprep.subr.mxu0 0.0
    %6089 = vmatpush1.msra.mxu0 %v6052
    %6090 = vmatprep.subr.mxu0 0.0
    %6091 = vmatpush1.msra.mxu0 %v6051
    %6092 = vmatprep.subr.mxu0 0.0
    %6093 = vmatpush1.msra.mxu0 %v6050
    %6094 = vmatprep.subr.mxu0 0.0
    %6095 = vmatpush1.msra.mxu0 %v6049
    %6096 = vmatprep.subr.mxu0 0.0
    %6097 = vmatpush2.msra.mxu0 0.0
    %6098 = vmatprep.subr.mxu0 0.0
    %6099 = vmatpush2.msra.mxu0 0.0
    %6100 = vmatprep.subr.mxu0 0.0
    %6101 = vmatpush2.msra.mxu0 0.0
    %6102 = vmatprep.subr.mxu0 0.0
    %6103 = vmatpush2.msra.mxu0 0.0
    %6104 = vmatprep.subr.mxu0 0.0
    %6105 = vmatpush2.msra.mxu0 0.0
    %6106 = vmatprep.subr.mxu0 0.0
    %6107 = vmatpush2.msra.mxu0 0.0
    %6108 = vmatprep.subr.mxu0 0.0
    %6109 = vmatpush2.msra.mxu0 0.0
    %6110 = vmatprep.subr.mxu0 0.0
    %6111 = vmatpush2.msra.mxu0 0.0
    %6112 = vmatprep.subr.mxu0 0.0
    %6113 = vmatpush2.msra.mxu0 0.0
    %6114 = vmatprep.subr.mxu0 0.0
    %6115 = vmatpush2.msra.mxu0 0.0
    %6116 = vmatprep.subr.mxu0 0.0
    %6117 = vmatpush2.msra.mxu0 0.0
    %6118 = vmatprep.subr.mxu0 0.0
    %6119 = vmatpush2.msra.mxu0 0.0
    %6120 = vmatprep.subr.mxu0 0.0
    %6121 = vmatpush2.msra.mxu0 0.0
    %6122 = vmatprep.subr.mxu0 0.0
    %6123 = vmatpush2.msra.mxu0 0.0
    %6124 = vmatprep.subr.mxu0 0.0
    %6125 = vmatpush2.msra.mxu0 0.0
    %6126 = vmatprep.subr.mxu0 0.0
    %6127 = vmatpush2.msra.mxu0 0.0
    %6128 = vmatprep.mubr.f32.mxu0 0.0
    %6129 = vmatmul.mubr.f32.gmra.mxu0 %v6062
    %v6130 = vpop.f32.mrf.mxu0
    %v6131 = vadd.f32 %v6059, %v6130
    %v6132 = vpop.f32.mrf.mxu0
    %6133 = vdwg.mxu0
    %v6135 = vrot.slane %v6131, 4
    %6136 = vrot.lane.b32.xlu0 %v6131, 96
    %v6137 = vpop.permute.xlu0 %6136
    %v6138 = vsel %vm540, %v6131, 0
    %v6140 = vsel %vm540, %v6137, 0
    %6142 = vmatprep.subr.mxu0 0.0
    %6143 = vmatpush1.xpose.msra.mxu0 0.0
    %6144 = vmatprep.subr.mxu0 0.0
    %6145 = vmatpush1.xpose.msra.mxu0 0.0
    %6146 = vmatprep.subr.mxu0 0.0
    %6147 = vmatpush1.xpose.msra.mxu0 0.0
    %6148 = vmatprep.subr.mxu0 0.0
    %6149 = vmatpush1.xpose.msra.mxu0 0.0
    %6150 = vmatprep.subr.mxu0 0.0
    %6151 = vmatpush1.xpose.msra.mxu0 0.0
    %6152 = vmatprep.subr.mxu0 0.0
    %6153 = vmatpush1.xpose.msra.mxu0 0.0
    %6154 = vmatprep.subr.mxu0 0.0
    %6155 = vmatpush1.xpose.msra.mxu0 0.0
    %6156 = vmatprep.subr.mxu0 0.0
    %6157 = vmatpush1.xpose.msra.mxu0 0.0
    %6158 = vmatprep.subr.mxu0 0.0
    %6159 = vmatpush1.xpose.msra.mxu0 0.0
    %6160 = vmatprep.subr.mxu0 0.0
    %6161 = vmatpush1.xpose.msra.mxu0 0.0
    %6162 = vmatprep.subr.mxu0 0.0
    %6163 = vmatpush1.xpose.msra.mxu0 0.0
    %6164 = vmatprep.subr.mxu0 0.0
    %6165 = vmatpush1.xpose.msra.mxu0 0.0
    %6166 = vmatprep.subr.mxu0 0.0
    %6167 = vmatpush1.xpose.msra.mxu0 0.0
    %6168 = vmatprep.subr.mxu0 0.0
    %6169 = vmatpush1.xpose.msra.mxu0 0.0
    %6170 = vmatprep.subr.mxu0 0.0
    %6171 = vmatpush1.xpose.msra.mxu0 0.0
    %6172 = vmatprep.subr.mxu0 0.0
    %6173 = vmatpush1.xpose.msra.mxu0 %v6140
    %6174 = vmatprep.subr.mxu0 0.0
    %6175 = vmatpush2.xpose.msra.mxu0 0.0
    %6176 = vmatprep.subr.mxu0 0.0
    %6177 = vmatpush2.xpose.msra.mxu0 0.0
    %6178 = vmatprep.subr.mxu0 0.0
    %6179 = vmatpush2.xpose.msra.mxu0 0.0
    %6180 = vmatprep.subr.mxu0 0.0
    %6181 = vmatpush2.xpose.msra.mxu0 0.0
    %6182 = vmatprep.subr.mxu0 0.0
    %6183 = vmatpush2.xpose.msra.mxu0 0.0
    %6184 = vmatprep.subr.mxu0 0.0
    %6185 = vmatpush2.xpose.msra.mxu0 0.0
    %6186 = vmatprep.subr.mxu0 0.0
    %6187 = vmatpush2.xpose.msra.mxu0 0.0
    %6188 = vmatprep.subr.mxu0 0.0
    %6189 = vmatpush2.xpose.msra.mxu0 0.0
    %6190 = vmatprep.subr.mxu0 0.0
    %6191 = vmatpush2.xpose.msra.mxu0 0.0
    %6192 = vmatprep.subr.mxu0 0.0
    %6193 = vmatpush2.xpose.msra.mxu0 0.0
    %6194 = vmatprep.subr.mxu0 0.0
    %6195 = vmatpush2.xpose.msra.mxu0 0.0
    %6196 = vmatprep.subr.mxu0 0.0
    %6197 = vmatpush2.xpose.msra.mxu0 0.0
    %6198 = vmatprep.subr.mxu0 0.0
    %6199 = vmatpush2.xpose.msra.mxu0 0.0
    %6200 = vmatprep.subr.mxu0 0.0
    %6201 = vmatpush2.xpose.msra.mxu0 0.0
    %6202 = vmatprep.subr.mxu0 0.0
    %6203 = vmatpush2.xpose.msra.mxu0 0.0
    %6204 = vmatprep.subr.mxu0 0.0
    %6205 = vmatpush2.xpose.msra.mxu0 0.0
    %6206 = vmatprep.mubr.f32.mxu0 0.0
    %6207 = vmatmul.mubr.f32.gmra.mxu0 %v6138
    %v6208 = vpop.f32.mrf.mxu0
    %v6209 = vadd.f32 0.0, %v6208
    %v6210 = vpop.f32.mrf.mxu0
    %6211 = vdwg.mxu0
    %6212 = vrot.lane.b32.xlu0 %v6135, 96
    %v6213 = vpop.permute.xlu0 %6212
    %v6214 = vsel %vm540, %v6135, 0
    %v6216 = vsel %vm540, %v6213, 0
    %6218 = vmatprep.subr.mxu0 0.0
    %6219 = vmatpush1.xpose.msra.mxu0 0.0
    %6220 = vmatprep.subr.mxu0 0.0
    %6221 = vmatpush1.xpose.msra.mxu0 0.0
    %6222 = vmatprep.subr.mxu0 0.0
    %6223 = vmatpush1.xpose.msra.mxu0 0.0
    %6224 = vmatprep.subr.mxu0 0.0
    %6225 = vmatpush1.xpose.msra.mxu0 0.0
    %6226 = vmatprep.subr.mxu0 0.0
    %6227 = vmatpush1.xpose.msra.mxu0 0.0
    %6228 = vmatprep.subr.mxu0 0.0
    %6229 = vmatpush1.xpose.msra.mxu0 0.0
    %6230 = vmatprep.subr.mxu0 0.0
    %6231 = vmatpush1.xpose.msra.mxu0 0.0
    %6232 = vmatprep.subr.mxu0 0.0
    %6233 = vmatpush1.xpose.msra.mxu0 0.0
    %6234 = vmatprep.subr.mxu0 0.0
    %6235 = vmatpush1.xpose.msra.mxu0 0.0
    %6236 = vmatprep.subr.mxu0 0.0
    %6237 = vmatpush1.xpose.msra.mxu0 0.0
    %6238 = vmatprep.subr.mxu0 0.0
    %6239 = vmatpush1.xpose.msra.mxu0 0.0
    %6240 = vmatprep.subr.mxu0 0.0
    %6241 = vmatpush1.xpose.msra.mxu0 0.0
    %6242 = vmatprep.subr.mxu0 0.0
    %6243 = vmatpush1.xpose.msra.mxu0 0.0
    %6244 = vmatprep.subr.mxu0 0.0
    %6245 = vmatpush1.xpose.msra.mxu0 0.0
    %6246 = vmatprep.subr.mxu0 0.0
    %6247 = vmatpush1.xpose.msra.mxu0 0.0
    %6248 = vmatprep.subr.mxu0 0.0
    %6249 = vmatpush1.xpose.msra.mxu0 %v6216
    %6250 = vmatprep.subr.mxu0 0.0
    %6251 = vmatpush2.xpose.msra.mxu0 0.0
    %6252 = vmatprep.subr.mxu0 0.0
    %6253 = vmatpush2.xpose.msra.mxu0 0.0
    %6254 = vmatprep.subr.mxu0 0.0
    %6255 = vmatpush2.xpose.msra.mxu0 0.0
    %6256 = vmatprep.subr.mxu0 0.0
    %6257 = vmatpush2.xpose.msra.mxu0 0.0
    %6258 = vmatprep.subr.mxu0 0.0
    %6259 = vmatpush2.xpose.msra.mxu0 0.0
    %6260 = vmatprep.subr.mxu0 0.0
    %6261 = vmatpush2.xpose.msra.mxu0 0.0
    %6262 = vmatprep.subr.mxu0 0.0
    %6263 = vmatpush2.xpose.msra.mxu0 0.0
    %6264 = vmatprep.subr.mxu0 0.0
    %6265 = vmatpush2.xpose.msra.mxu0 0.0
    %6266 = vmatprep.subr.mxu0 0.0
    %6267 = vmatpush2.xpose.msra.mxu0 0.0
    %6268 = vmatprep.subr.mxu0 0.0
    %6269 = vmatpush2.xpose.msra.mxu0 0.0
    %6270 = vmatprep.subr.mxu0 0.0
    %6271 = vmatpush2.xpose.msra.mxu0 0.0
    %6272 = vmatprep.subr.mxu0 0.0
    %6273 = vmatpush2.xpose.msra.mxu0 0.0
    %6274 = vmatprep.subr.mxu0 0.0
    %6275 = vmatpush2.xpose.msra.mxu0 0.0
    %6276 = vmatprep.subr.mxu0 0.0
    %6277 = vmatpush2.xpose.msra.mxu0 0.0
    %6278 = vmatprep.subr.mxu0 0.0
    %6279 = vmatpush2.xpose.msra.mxu0 0.0
    %6280 = vmatprep.subr.mxu0 0.0
    %6281 = vmatpush2.xpose.msra.mxu0 0.0
    %6282 = vmatprep.mubr.f32.mxu0 0.0
    %6283 = vmatmul.mubr.f32.gmra.mxu0 %v6214
    %v6284 = vpop.f32.mrf.mxu0
    %v6285 = vadd.f32 0.0, %v6284
    %v6286 = vpop.f32.mrf.mxu0
    %6287 = vdwg.mxu0
    %v6288 = vmul.f32 %v6209, 0.35355338
    %v6289 = vmul.f32 %v6285, 0.35355338
    %v6290 = vsel %vm4522, %v6288, -inf
    %6291 = vmax.xlane.f32.xlu0 %v6290
    %v6292 = vpop.xlane.xlu0 %6291
    %v6293 = vsel %vm4522, %v6289, -inf
    %6294 = vmax.xlane.f32.xlu0 %v6293
    %v6295 = vpop.xlane.xlu0 %6294
    %v6296 = vsub.f32 %v6288, %v6292
    %v6297 = vsub.f32 %v6289, %v6295
    %v6298 = vmul.f32 %v6296, 1.442695
    %v6299 = vpow.pop %v6298
    %v6300 = vmul.f32 %v6297, 1.442695
    %v6301 = vpow.pop %v6300
    %v6302 = vsel %vm4522, %v6299, 0.0
    %6303 = vadd.xlane.f32.xlu0 %v6302
    %v6304 = vpop.xlane.xlu0 %6303
    %v6305 = vsel %vm4522, %v6301, 0.0
    %6306 = vadd.xlane.f32.xlu0 %v6305
    %v6307 = vpop.xlane.xlu0 %6306
    %v6308 = vrcp.pop %v6304
    %v6309 = vrcp.pop %v6307
    %v6310 = vmul.f32 %v6299, %v6308
    %v6311 = vmul.f32 %v6301, %v6309
    %6312 = vrot.lane.b32.xlu0 %v6131, 64
    %v6313 = vpop.permute.xlu0 %6312
    %v6315 = vsel %vm445, %v6310, 0
    %v6317 = vsel %vm452, %v6313, 0
    %6319 = vmatprep.subr.mxu0 0.0
    %6320 = vmatpush1.msra.mxu0 0.0
    %6321 = vmatprep.subr.mxu0 0.0
    %6322 = vmatpush1.msra.mxu0 0.0
    %6323 = vmatprep.subr.mxu0 0.0
    %6324 = vmatpush1.msra.mxu0 0.0
    %6325 = vmatprep.subr.mxu0 0.0
    %6326 = vmatpush1.msra.mxu0 0.0
    %6327 = vmatprep.subr.mxu0 0.0
    %6328 = vmatpush1.msra.mxu0 0.0
    %6329 = vmatprep.subr.mxu0 0.0
    %6330 = vmatpush1.msra.mxu0 0.0
    %6331 = vmatprep.subr.mxu0 0.0
    %6332 = vmatpush1.msra.mxu0 0.0
    %6333 = vmatprep.subr.mxu0 0.0
    %6334 = vmatpush1.msra.mxu0 0.0
    %6335 = vmatprep.subr.mxu0 0.0
    %6336 = vmatpush1.msra.mxu0 0.0
    %6337 = vmatprep.subr.mxu0 0.0
    %6338 = vmatpush1.msra.mxu0 0.0
    %6339 = vmatprep.subr.mxu0 0.0
    %6340 = vmatpush1.msra.mxu0 0.0
    %6341 = vmatprep.subr.mxu0 0.0
    %6342 = vmatpush1.msra.mxu0 0.0
    %6343 = vmatprep.subr.mxu0 0.0
    %6344 = vmatpush1.msra.mxu0 0.0
    %6345 = vmatprep.subr.mxu0 0.0
    %6346 = vmatpush1.msra.mxu0 0.0
    %6347 = vmatprep.subr.mxu0 0.0
    %6348 = vmatpush1.msra.mxu0 0.0
    %6349 = vmatprep.subr.mxu0 0.0
    %6350 = vmatpush1.msra.mxu0 %v6317
    %6351 = vmatprep.subr.mxu0 0.0
    %6352 = vmatpush2.msra.mxu0 0.0
    %6353 = vmatprep.subr.mxu0 0.0
    %6354 = vmatpush2.msra.mxu0 0.0
    %6355 = vmatprep.subr.mxu0 0.0
    %6356 = vmatpush2.msra.mxu0 0.0
    %6357 = vmatprep.subr.mxu0 0.0
    %6358 = vmatpush2.msra.mxu0 0.0
    %6359 = vmatprep.subr.mxu0 0.0
    %6360 = vmatpush2.msra.mxu0 0.0
    %6361 = vmatprep.subr.mxu0 0.0
    %6362 = vmatpush2.msra.mxu0 0.0
    %6363 = vmatprep.subr.mxu0 0.0
    %6364 = vmatpush2.msra.mxu0 0.0
    %6365 = vmatprep.subr.mxu0 0.0
    %6366 = vmatpush2.msra.mxu0 0.0
    %6367 = vmatprep.subr.mxu0 0.0
    %6368 = vmatpush2.msra.mxu0 0.0
    %6369 = vmatprep.subr.mxu0 0.0
    %6370 = vmatpush2.msra.mxu0 0.0
    %6371 = vmatprep.subr.mxu0 0.0
    %6372 = vmatpush2.msra.mxu0 0.0
    %6373 = vmatprep.subr.mxu0 0.0
    %6374 = vmatpush2.msra.mxu0 0.0
    %6375 = vmatprep.subr.mxu0 0.0
    %6376 = vmatpush2.msra.mxu0 0.0
    %6377 = vmatprep.subr.mxu0 0.0
    %6378 = vmatpush2.msra.mxu0 0.0
    %6379 = vmatprep.subr.mxu0 0.0
    %6380 = vmatpush2.msra.mxu0 0.0
    %6381 = vmatprep.subr.mxu0 0.0
    %6382 = vmatpush2.msra.mxu0 0.0
    %6383 = vmatprep.mubr.f32.mxu0 0.0
    %6384 = vmatmul.mubr.f32.gmra.mxu0 %v6315
    %v6385 = vpop.f32.mrf.mxu0
    %v6386 = vadd.f32 0.0, %v6385
    %v6387 = vpop.f32.mrf.mxu0
    %6388 = vdwg.mxu0
    %6389 = vrot.lane.b32.xlu0 %v6135, 64
    %v6390 = vpop.permute.xlu0 %6389
    %v6392 = vsel %vm445, %v6311, 0
    %v6394 = vsel %vm452, %v6390, 0
    %6396 = vmatprep.subr.mxu0 0.0
    %6397 = vmatpush1.msra.mxu0 0.0
    %6398 = vmatprep.subr.mxu0 0.0
    %6399 = vmatpush1.msra.mxu0 0.0
    %6400 = vmatprep.subr.mxu0 0.0
    %6401 = vmatpush1.msra.mxu0 0.0
    %6402 = vmatprep.subr.mxu0 0.0
    %6403 = vmatpush1.msra.mxu0 0.0
    %6404 = vmatprep.subr.mxu0 0.0
    %6405 = vmatpush1.msra.mxu0 0.0
    %6406 = vmatprep.subr.mxu0 0.0
    %6407 = vmatpush1.msra.mxu0 0.0
    %6408 = vmatprep.subr.mxu0 0.0
    %6409 = vmatpush1.msra.mxu0 0.0
    %6410 = vmatprep.subr.mxu0 0.0
    %6411 = vmatpush1.msra.mxu0 0.0
    %6412 = vmatprep.subr.mxu0 0.0
    %6413 = vmatpush1.msra.mxu0 0.0
    %6414 = vmatprep.subr.mxu0 0.0
    %6415 = vmatpush1.msra.mxu0 0.0
    %6416 = vmatprep.subr.mxu0 0.0
    %6417 = vmatpush1.msra.mxu0 0.0
    %6418 = vmatprep.subr.mxu0 0.0
    %6419 = vmatpush1.msra.mxu0 0.0
    %6420 = vmatprep.subr.mxu0 0.0
    %6421 = vmatpush1.msra.mxu0 0.0
    %6422 = vmatprep.subr.mxu0 0.0
    %6423 = vmatpush1.msra.mxu0 0.0
    %6424 = vmatprep.subr.mxu0 0.0
    %6425 = vmatpush1.msra.mxu0 0.0
    %6426 = vmatprep.subr.mxu0 0.0
    %6427 = vmatpush1.msra.mxu0 %v6394
    %6428 = vmatprep.subr.mxu0 0.0
    %6429 = vmatpush2.msra.mxu0 0.0
    %6430 = vmatprep.subr.mxu0 0.0
    %6431 = vmatpush2.msra.mxu0 0.0
    %6432 = vmatprep.subr.mxu0 0.0
    %6433 = vmatpush2.msra.mxu0 0.0
    %6434 = vmatprep.subr.mxu0 0.0
    %6435 = vmatpush2.msra.mxu0 0.0
    %6436 = vmatprep.subr.mxu0 0.0
    %6437 = vmatpush2.msra.mxu0 0.0
    %6438 = vmatprep.subr.mxu0 0.0
    %6439 = vmatpush2.msra.mxu0 0.0
    %6440 = vmatprep.subr.mxu0 0.0
    %6441 = vmatpush2.msra.mxu0 0.0
    %6442 = vmatprep.subr.mxu0 0.0
    %6443 = vmatpush2.msra.mxu0 0.0
    %6444 = vmatprep.subr.mxu0 0.0
    %6445 = vmatpush2.msra.mxu0 0.0
    %6446 = vmatprep.subr.mxu0 0.0
    %6447 = vmatpush2.msra.mxu0 0.0
    %6448 = vmatprep.subr.mxu0 0.0
    %6449 = vmatpush2.msra.mxu0 0.0
    %6450 = vmatprep.subr.mxu0 0.0
    %6451 = vmatpush2.msra.mxu0 0.0
    %6452 = vmatprep.subr.mxu0 0.0
    %6453 = vmatpush2.msra.mxu0 0.0
    %6454 = vmatprep.subr.mxu0 0.0
    %6455 = vmatpush2.msra.mxu0 0.0
    %6456 = vmatprep.subr.mxu0 0.0
    %6457 = vmatpush2.msra.mxu0 0.0
    %6458 = vmatprep.subr.mxu0 0.0
    %6459 = vmatpush2.msra.mxu0 0.0
    %6460 = vmatprep.mubr.f32.mxu0 0.0
    %6461 = vmatmul.mubr.f32.gmra.mxu0 %v6392
    %v6462 = vpop.f32.mrf.mxu0
    %v6463 = vadd.f32 0.0, %v6462
    %v6464 = vpop.f32.mrf.mxu0
    %6465 = vdwg.mxu0
    %6466 = vrot.lane.b32.xlu0 %v6131, 120
    %v6467 = vpop.permute.xlu0 %6466
    %6468 = vrot.lane.b32.xlu0 %v6131, 88
    %v6469 = vpop.permute.xlu0 %6468
    %v6470 = vsel %vm540, %v6467, 0
    %v6472 = vsel %vm540, %v6469, 0
    %6474 = vmatprep.subr.mxu0 0.0
    %6475 = vmatpush1.xpose.msra.mxu0 0.0
    %6476 = vmatprep.subr.mxu0 0.0
    %6477 = vmatpush1.xpose.msra.mxu0 0.0
    %6478 = vmatprep.subr.mxu0 0.0
    %6479 = vmatpush1.xpose.msra.mxu0 0.0
    %6480 = vmatprep.subr.mxu0 0.0
    %6481 = vmatpush1.xpose.msra.mxu0 0.0
    %6482 = vmatprep.subr.mxu0 0.0
    %6483 = vmatpush1.xpose.msra.mxu0 0.0
    %6484 = vmatprep.subr.mxu0 0.0
    %6485 = vmatpush1.xpose.msra.mxu0 0.0
    %6486 = vmatprep.subr.mxu0 0.0
    %6487 = vmatpush1.xpose.msra.mxu0 0.0
    %6488 = vmatprep.subr.mxu0 0.0
    %6489 = vmatpush1.xpose.msra.mxu0 0.0
    %6490 = vmatprep.subr.mxu0 0.0
    %6491 = vmatpush1.xpose.msra.mxu0 0.0
    %6492 = vmatprep.subr.mxu0 0.0
    %6493 = vmatpush1.xpose.msra.mxu0 0.0
    %6494 = vmatprep.subr.mxu0 0.0
    %6495 = vmatpush1.xpose.msra.mxu0 0.0
    %6496 = vmatprep.subr.mxu0 0.0
    %6497 = vmatpush1.xpose.msra.mxu0 0.0
    %6498 = vmatprep.subr.mxu0 0.0
    %6499 = vmatpush1.xpose.msra.mxu0 0.0
    %6500 = vmatprep.subr.mxu0 0.0
    %6501 = vmatpush1.xpose.msra.mxu0 0.0
    %6502 = vmatprep.subr.mxu0 0.0
    %6503 = vmatpush1.xpose.msra.mxu0 0.0
    %6504 = vmatprep.subr.mxu0 0.0
    %6505 = vmatpush1.xpose.msra.mxu0 %v6472
    %6506 = vmatprep.subr.mxu0 0.0
    %6507 = vmatpush2.xpose.msra.mxu0 0.0
    %6508 = vmatprep.subr.mxu0 0.0
    %6509 = vmatpush2.xpose.msra.mxu0 0.0
    %6510 = vmatprep.subr.mxu0 0.0
    %6511 = vmatpush2.xpose.msra.mxu0 0.0
    %6512 = vmatprep.subr.mxu0 0.0
    %6513 = vmatpush2.xpose.msra.mxu0 0.0
    %6514 = vmatprep.subr.mxu0 0.0
    %6515 = vmatpush2.xpose.msra.mxu0 0.0
    %6516 = vmatprep.subr.mxu0 0.0
    %6517 = vmatpush2.xpose.msra.mxu0 0.0
    %6518 = vmatprep.subr.mxu0 0.0
    %6519 = vmatpush2.xpose.msra.mxu0 0.0
    %6520 = vmatprep.subr.mxu0 0.0
    %6521 = vmatpush2.xpose.msra.mxu0 0.0
    %6522 = vmatprep.subr.mxu0 0.0
    %6523 = vmatpush2.xpose.msra.mxu0 0.0
    %6524 = vmatprep.subr.mxu0 0.0
    %6525 = vmatpush2.xpose.msra.mxu0 0.0
    %6526 = vmatprep.subr.mxu0 0.0
    %6527 = vmatpush2.xpose.msra.mxu0 0.0
    %6528 = vmatprep.subr.mxu0 0.0
    %6529 = vmatpush2.xpose.msra.mxu0 0.0
    %6530 = vmatprep.subr.mxu0 0.0
    %6531 = vmatpush2.xpose.msra.mxu0 0.0
    %6532 = vmatprep.subr.mxu0 0.0
    %6533 = vmatpush2.xpose.msra.mxu0 0.0
    %6534 = vmatprep.subr.mxu0 0.0
    %6535 = vmatpush2.xpose.msra.mxu0 0.0
    %6536 = vmatprep.subr.mxu0 0.0
    %6537 = vmatpush2.xpose.msra.mxu0 0.0
    %6538 = vmatprep.mubr.f32.mxu0 0.0
    %6539 = vmatmul.mubr.f32.gmra.mxu0 %v6470
    %v6540 = vpop.f32.mrf.mxu0
    %v6541 = vadd.f32 0.0, %v6540
    %v6542 = vpop.f32.mrf.mxu0
    %6543 = vdwg.mxu0
    %6544 = vrot.lane.b32.xlu0 %v6135, 120
    %v6545 = vpop.permute.xlu0 %6544
    %6546 = vrot.lane.b32.xlu0 %v6135, 88
    %v6547 = vpop.permute.xlu0 %6546
    %v6548 = vsel %vm540, %v6545, 0
    %v6550 = vsel %vm540, %v6547, 0
    %6552 = vmatprep.subr.mxu0 0.0
    %6553 = vmatpush1.xpose.msra.mxu0 0.0
    %6554 = vmatprep.subr.mxu0 0.0
    %6555 = vmatpush1.xpose.msra.mxu0 0.0
    %6556 = vmatprep.subr.mxu0 0.0
    %6557 = vmatpush1.xpose.msra.mxu0 0.0
    %6558 = vmatprep.subr.mxu0 0.0
    %6559 = vmatpush1.xpose.msra.mxu0 0.0
    %6560 = vmatprep.subr.mxu0 0.0
    %6561 = vmatpush1.xpose.msra.mxu0 0.0
    %6562 = vmatprep.subr.mxu0 0.0
    %6563 = vmatpush1.xpose.msra.mxu0 0.0
    %6564 = vmatprep.subr.mxu0 0.0
    %6565 = vmatpush1.xpose.msra.mxu0 0.0
    %6566 = vmatprep.subr.mxu0 0.0
    %6567 = vmatpush1.xpose.msra.mxu0 0.0
    %6568 = vmatprep.subr.mxu0 0.0
    %6569 = vmatpush1.xpose.msra.mxu0 0.0
    %6570 = vmatprep.subr.mxu0 0.0
    %6571 = vmatpush1.xpose.msra.mxu0 0.0
    %6572 = vmatprep.subr.mxu0 0.0
    %6573 = vmatpush1.xpose.msra.mxu0 0.0
    %6574 = vmatprep.subr.mxu0 0.0
    %6575 = vmatpush1.xpose.msra.mxu0 0.0
    %6576 = vmatprep.subr.mxu0 0.0
    %6577 = vmatpush1.xpose.msra.mxu0 0.0
    %6578 = vmatprep.subr.mxu0 0.0
    %6579 = vmatpush1.xpose.msra.mxu0 0.0
    %6580 = vmatprep.subr.mxu0 0.0
    %6581 = vmatpush1.xpose.msra.mxu0 0.0
    %6582 = vmatprep.subr.mxu0 0.0
    %6583 = vmatpush1.xpose.msra.mxu0 %v6550
    %6584 = vmatprep.subr.mxu0 0.0
    %6585 = vmatpush2.xpose.msra.mxu0 0.0
    %6586 = vmatprep.subr.mxu0 0.0
    %6587 = vmatpush2.xpose.msra.mxu0 0.0
    %6588 = vmatprep.subr.mxu0 0.0
    %6589 = vmatpush2.xpose.msra.mxu0 0.0
    %6590 = vmatprep.subr.mxu0 0.0
    %6591 = vmatpush2.xpose.msra.mxu0 0.0
    %6592 = vmatprep.subr.mxu0 0.0
    %6593 = vmatpush2.xpose.msra.mxu0 0.0
    %6594 = vmatprep.subr.mxu0 0.0
    %6595 = vmatpush2.xpose.msra.mxu0 0.0
    %6596 = vmatprep.subr.mxu0 0.0
    %6597 = vmatpush2.xpose.msra.mxu0 0.0
    %6598 = vmatprep.subr.mxu0 0.0
    %6599 = vmatpush2.xpose.msra.mxu0 0.0
    %6600 = vmatprep.subr.mxu0 0.0
    %6601 = vmatpush2.xpose.msra.mxu0 0.0
    %6602 = vmatprep.subr.mxu0 0.0
    %6603 = vmatpush2.xpose.msra.mxu0 0.0
    %6604 = vmatprep.subr.mxu0 0.0
    %6605 = vmatpush2.xpose.msra.mxu0 0.0
    %6606 = vmatprep.subr.mxu0 0.0
    %6607 = vmatpush2.xpose.msra.mxu0 0.0
    %6608 = vmatprep.subr.mxu0 0.0
    %6609 = vmatpush2.xpose.msra.mxu0 0.0
    %6610 = vmatprep.subr.mxu0 0.0
    %6611 = vmatpush2.xpose.msra.mxu0 0.0
    %6612 = vmatprep.subr.mxu0 0.0
    %6613 = vmatpush2.xpose.msra.mxu0 0.0
    %6614 = vmatprep.subr.mxu0 0.0
    %6615 = vmatpush2.xpose.msra.mxu0 0.0
    %6616 = vmatprep.mubr.f32.mxu0 0.0
    %6617 = vmatmul.mubr.f32.gmra.mxu0 %v6548
    %v6618 = vpop.f32.mrf.mxu0
    %v6619 = vadd.f32 0.0, %v6618
    %v6620 = vpop.f32.mrf.mxu0
    %6621 = vdwg.mxu0
    %v6622 = vmul.f32 %v6541, 0.35355338
    %v6623 = vmul.f32 %v6619, 0.35355338
    %v6624 = vsel %vm4522, %v6622, -inf
    %6625 = vmax.xlane.f32.xlu0 %v6624
    %v6626 = vpop.xlane.xlu0 %6625
    %v6627 = vsel %vm4522, %v6623, -inf
    %6628 = vmax.xlane.f32.xlu0 %v6627
    %v6629 = vpop.xlane.xlu0 %6628
    %v6630 = vsub.f32 %v6622, %v6626
    %v6631 = vsub.f32 %v6623, %v6629
    %v6632 = vmul.f32 %v6630, 1.442695
    %v6633 = vpow.pop %v6632
    %v6634 = vmul.f32 %v6631, 1.442695
    %v6635 = vpow.pop %v6634
    %v6636 = vsel %vm4522, %v6633, 0.0
    %6637 = vadd.xlane.f32.xlu0 %v6636
    %v6638 = vpop.xlane.xlu0 %6637
    %v6639 = vsel %vm4522, %v6635, 0.0
    %6640 = vadd.xlane.f32.xlu0 %v6639
    %v6641 = vpop.xlane.xlu0 %6640
    %v6642 = vrcp.pop %v6638
    %v6643 = vrcp.pop %v6641
    %v6644 = vmul.f32 %v6633, %v6642
    %v6645 = vmul.f32 %v6635, %v6643
    %6646 = vrot.lane.b32.xlu0 %v6131, 56
    %v6647 = vpop.permute.xlu0 %6646
    %v6649 = vsel %vm445, %v6644, 0
    %v6651 = vsel %vm452, %v6647, 0
    %6653 = vmatprep.subr.mxu0 0.0
    %6654 = vmatpush1.msra.mxu0 0.0
    %6655 = vmatprep.subr.mxu0 0.0
    %6656 = vmatpush1.msra.mxu0 0.0
    %6657 = vmatprep.subr.mxu0 0.0
    %6658 = vmatpush1.msra.mxu0 0.0
    %6659 = vmatprep.subr.mxu0 0.0
    %6660 = vmatpush1.msra.mxu0 0.0
    %6661 = vmatprep.subr.mxu0 0.0
    %6662 = vmatpush1.msra.mxu0 0.0
    %6663 = vmatprep.subr.mxu0 0.0
    %6664 = vmatpush1.msra.mxu0 0.0
    %6665 = vmatprep.subr.mxu0 0.0
    %6666 = vmatpush1.msra.mxu0 0.0
    %6667 = vmatprep.subr.mxu0 0.0
    %6668 = vmatpush1.msra.mxu0 0.0
    %6669 = vmatprep.subr.mxu0 0.0
    %6670 = vmatpush1.msra.mxu0 0.0
    %6671 = vmatprep.subr.mxu0 0.0
    %6672 = vmatpush1.msra.mxu0 0.0
    %6673 = vmatprep.subr.mxu0 0.0
    %6674 = vmatpush1.msra.mxu0 0.0
    %6675 = vmatprep.subr.mxu0 0.0
    %6676 = vmatpush1.msra.mxu0 0.0
    %6677 = vmatprep.subr.mxu0 0.0
    %6678 = vmatpush1.msra.mxu0 0.0
    %6679 = vmatprep.subr.mxu0 0.0
    %6680 = vmatpush1.msra.mxu0 0.0
    %6681 = vmatprep.subr.mxu0 0.0
    %6682 = vmatpush1.msra.mxu0 0.0
    %6683 = vmatprep.subr.mxu0 0.0
    %6684 = vmatpush1.msra.mxu0 %v6651
    %6685 = vmatprep.subr.mxu0 0.0
    %6686 = vmatpush2.msra.mxu0 0.0
    %6687 = vmatprep.subr.mxu0 0.0
    %6688 = vmatpush2.msra.mxu0 0.0
    %6689 = vmatprep.subr.mxu0 0.0
    %6690 = vmatpush2.msra.mxu0 0.0
    %6691 = vmatprep.subr.mxu0 0.0
    %6692 = vmatpush2.msra.mxu0 0.0
    %6693 = vmatprep.subr.mxu0 0.0
    %6694 = vmatpush2.msra.mxu0 0.0
    %6695 = vmatprep.subr.mxu0 0.0
    %6696 = vmatpush2.msra.mxu0 0.0
    %6697 = vmatprep.subr.mxu0 0.0
    %6698 = vmatpush2.msra.mxu0 0.0
    %6699 = vmatprep.subr.mxu0 0.0
    %6700 = vmatpush2.msra.mxu0 0.0
    %6701 = vmatprep.subr.mxu0 0.0
    %6702 = vmatpush2.msra.mxu0 0.0
    %6703 = vmatprep.subr.mxu0 0.0
    %6704 = vmatpush2.msra.mxu0 0.0
    %6705 = vmatprep.subr.mxu0 0.0
    %6706 = vmatpush2.msra.mxu0 0.0
    %6707 = vmatprep.subr.mxu0 0.0
    %6708 = vmatpush2.msra.mxu0 0.0
    %6709 = vmatprep.subr.mxu0 0.0
    %6710 = vmatpush2.msra.mxu0 0.0
    %6711 = vmatprep.subr.mxu0 0.0
    %6712 = vmatpush2.msra.mxu0 0.0
    %6713 = vmatprep.subr.mxu0 0.0
    %6714 = vmatpush2.msra.mxu0 0.0
    %6715 = vmatprep.subr.mxu0 0.0
    %6716 = vmatpush2.msra.mxu0 0.0
    %6717 = vmatprep.mubr.f32.mxu0 0.0
    %6718 = vmatmul.mubr.f32.gmra.mxu0 %v6649
    %v6719 = vpop.f32.mrf.mxu0
    %v6720 = vadd.f32 0.0, %v6719
    %v6721 = vpop.f32.mrf.mxu0
    %6722 = vdwg.mxu0
    %6723 = vrot.lane.b32.xlu0 %v6135, 56
    %v6724 = vpop.permute.xlu0 %6723
    %v6726 = vsel %vm445, %v6645, 0
    %v6728 = vsel %vm452, %v6724, 0
    %6730 = vmatprep.subr.mxu0 0.0
    %6731 = vmatpush1.msra.mxu0 0.0
    %6732 = vmatprep.subr.mxu0 0.0
    %6733 = vmatpush1.msra.mxu0 0.0
    %6734 = vmatprep.subr.mxu0 0.0
    %6735 = vmatpush1.msra.mxu0 0.0
    %6736 = vmatprep.subr.mxu0 0.0
    %6737 = vmatpush1.msra.mxu0 0.0
    %6738 = vmatprep.subr.mxu0 0.0
    %6739 = vmatpush1.msra.mxu0 0.0
    %6740 = vmatprep.subr.mxu0 0.0
    %6741 = vmatpush1.msra.mxu0 0.0
    %6742 = vmatprep.subr.mxu0 0.0
    %6743 = vmatpush1.msra.mxu0 0.0
    %6744 = vmatprep.subr.mxu0 0.0
    %6745 = vmatpush1.msra.mxu0 0.0
    %6746 = vmatprep.subr.mxu0 0.0
    %6747 = vmatpush1.msra.mxu0 0.0
    %6748 = vmatprep.subr.mxu0 0.0
    %6749 = vmatpush1.msra.mxu0 0.0
    %6750 = vmatprep.subr.mxu0 0.0
    %6751 = vmatpush1.msra.mxu0 0.0
    %6752 = vmatprep.subr.mxu0 0.0
    %6753 = vmatpush1.msra.mxu0 0.0
    %6754 = vmatprep.subr.mxu0 0.0
    %6755 = vmatpush1.msra.mxu0 0.0
    %6756 = vmatprep.subr.mxu0 0.0
    %6757 = vmatpush1.msra.mxu0 0.0
    %6758 = vmatprep.subr.mxu0 0.0
    %6759 = vmatpush1.msra.mxu0 0.0
    %6760 = vmatprep.subr.mxu0 0.0
    %6761 = vmatpush1.msra.mxu0 %v6728
    %6762 = vmatprep.subr.mxu0 0.0
    %6763 = vmatpush2.msra.mxu0 0.0
    %6764 = vmatprep.subr.mxu0 0.0
    %6765 = vmatpush2.msra.mxu0 0.0
    %6766 = vmatprep.subr.mxu0 0.0
    %6767 = vmatpush2.msra.mxu0 0.0
    %6768 = vmatprep.subr.mxu0 0.0
    %6769 = vmatpush2.msra.mxu0 0.0
    %6770 = vmatprep.subr.mxu0 0.0
    %6771 = vmatpush2.msra.mxu0 0.0
    %6772 = vmatprep.subr.mxu0 0.0
    %6773 = vmatpush2.msra.mxu0 0.0
    %6774 = vmatprep.subr.mxu0 0.0
    %6775 = vmatpush2.msra.mxu0 0.0
    %6776 = vmatprep.subr.mxu0 0.0
    %6777 = vmatpush2.msra.mxu0 0.0
    %6778 = vmatprep.subr.mxu0 0.0
    %6779 = vmatpush2.msra.mxu0 0.0
    %6780 = vmatprep.subr.mxu0 0.0
    %6781 = vmatpush2.msra.mxu0 0.0
    %6782 = vmatprep.subr.mxu0 0.0
    %6783 = vmatpush2.msra.mxu0 0.0
    %6784 = vmatprep.subr.mxu0 0.0
    %6785 = vmatpush2.msra.mxu0 0.0
    %6786 = vmatprep.subr.mxu0 0.0
    %6787 = vmatpush2.msra.mxu0 0.0
    %6788 = vmatprep.subr.mxu0 0.0
    %6789 = vmatpush2.msra.mxu0 0.0
    %6790 = vmatprep.subr.mxu0 0.0
    %6791 = vmatpush2.msra.mxu0 0.0
    %6792 = vmatprep.subr.mxu0 0.0
    %6793 = vmatpush2.msra.mxu0 0.0
    %6794 = vmatprep.mubr.f32.mxu0 0.0
    %6795 = vmatmul.mubr.f32.gmra.mxu0 %v6726
    %v6796 = vpop.f32.mrf.mxu0
    %v6797 = vadd.f32 0.0, %v6796
    %v6798 = vpop.f32.mrf.mxu0
    %6799 = vdwg.mxu0
    %6800 = vrot.lane.b32.xlu0 %v6131, 112
    %v6801 = vpop.permute.xlu0 %6800
    %6802 = vrot.lane.b32.xlu0 %v6131, 80
    %v6803 = vpop.permute.xlu0 %6802
    %v6804 = vsel %vm540, %v6801, 0
    %v6806 = vsel %vm540, %v6803, 0
    %6808 = vmatprep.subr.mxu0 0.0
    %6809 = vmatpush1.xpose.msra.mxu0 0.0
    %6810 = vmatprep.subr.mxu0 0.0
    %6811 = vmatpush1.xpose.msra.mxu0 0.0
    %6812 = vmatprep.subr.mxu0 0.0
    %6813 = vmatpush1.xpose.msra.mxu0 0.0
    %6814 = vmatprep.subr.mxu0 0.0
    %6815 = vmatpush1.xpose.msra.mxu0 0.0
    %6816 = vmatprep.subr.mxu0 0.0
    %6817 = vmatpush1.xpose.msra.mxu0 0.0
    %6818 = vmatprep.subr.mxu0 0.0
    %6819 = vmatpush1.xpose.msra.mxu0 0.0
    %6820 = vmatprep.subr.mxu0 0.0
    %6821 = vmatpush1.xpose.msra.mxu0 0.0
    %6822 = vmatprep.subr.mxu0 0.0
    %6823 = vmatpush1.xpose.msra.mxu0 0.0
    %6824 = vmatprep.subr.mxu0 0.0
    %6825 = vmatpush1.xpose.msra.mxu0 0.0
    %6826 = vmatprep.subr.mxu0 0.0
    %6827 = vmatpush1.xpose.msra.mxu0 0.0
    %6828 = vmatprep.subr.mxu0 0.0
    %6829 = vmatpush1.xpose.msra.mxu0 0.0
    %6830 = vmatprep.subr.mxu0 0.0
    %6831 = vmatpush1.xpose.msra.mxu0 0.0
    %6832 = vmatprep.subr.mxu0 0.0
    %6833 = vmatpush1.xpose.msra.mxu0 0.0
    %6834 = vmatprep.subr.mxu0 0.0
    %6835 = vmatpush1.xpose.msra.mxu0 0.0
    %6836 = vmatprep.subr.mxu0 0.0
    %6837 = vmatpush1.xpose.msra.mxu0 0.0
    %6838 = vmatprep.subr.mxu0 0.0
    %6839 = vmatpush1.xpose.msra.mxu0 %v6806
    %6840 = vmatprep.subr.mxu0 0.0
    %6841 = vmatpush2.xpose.msra.mxu0 0.0
    %6842 = vmatprep.subr.mxu0 0.0
    %6843 = vmatpush2.xpose.msra.mxu0 0.0
    %6844 = vmatprep.subr.mxu0 0.0
    %6845 = vmatpush2.xpose.msra.mxu0 0.0
    %6846 = vmatprep.subr.mxu0 0.0
    %6847 = vmatpush2.xpose.msra.mxu0 0.0
    %6848 = vmatprep.subr.mxu0 0.0
    %6849 = vmatpush2.xpose.msra.mxu0 0.0
    %6850 = vmatprep.subr.mxu0 0.0
    %6851 = vmatpush2.xpose.msra.mxu0 0.0
    %6852 = vmatprep.subr.mxu0 0.0
    %6853 = vmatpush2.xpose.msra.mxu0 0.0
    %6854 = vmatprep.subr.mxu0 0.0
    %6855 = vmatpush2.xpose.msra.mxu0 0.0
    %6856 = vmatprep.subr.mxu0 0.0
    %6857 = vmatpush2.xpose.msra.mxu0 0.0
    %6858 = vmatprep.subr.mxu0 0.0
    %6859 = vmatpush2.xpose.msra.mxu0 0.0
    %6860 = vmatprep.subr.mxu0 0.0
    %6861 = vmatpush2.xpose.msra.mxu0 0.0
    %6862 = vmatprep.subr.mxu0 0.0
    %6863 = vmatpush2.xpose.msra.mxu0 0.0
    %6864 = vmatprep.subr.mxu0 0.0
    %6865 = vmatpush2.xpose.msra.mxu0 0.0
    %6866 = vmatprep.subr.mxu0 0.0
    %6867 = vmatpush2.xpose.msra.mxu0 0.0
    %6868 = vmatprep.subr.mxu0 0.0
    %6869 = vmatpush2.xpose.msra.mxu0 0.0
    %6870 = vmatprep.subr.mxu0 0.0
    %6871 = vmatpush2.xpose.msra.mxu0 0.0
    %6872 = vmatprep.mubr.f32.mxu0 0.0
    %6873 = vmatmul.mubr.f32.gmra.mxu0 %v6804
    %v6874 = vpop.f32.mrf.mxu0
    %v6875 = vadd.f32 0.0, %v6874
    %v6876 = vpop.f32.mrf.mxu0
    %6877 = vdwg.mxu0
    %6878 = vrot.lane.b32.xlu0 %v6135, 112
    %v6879 = vpop.permute.xlu0 %6878
    %6880 = vrot.lane.b32.xlu0 %v6135, 80
    %v6881 = vpop.permute.xlu0 %6880
    %v6882 = vsel %vm540, %v6879, 0
    %v6884 = vsel %vm540, %v6881, 0
    %6886 = vmatprep.subr.mxu0 0.0
    %6887 = vmatpush1.xpose.msra.mxu0 0.0
    %6888 = vmatprep.subr.mxu0 0.0
    %6889 = vmatpush1.xpose.msra.mxu0 0.0
    %6890 = vmatprep.subr.mxu0 0.0
    %6891 = vmatpush1.xpose.msra.mxu0 0.0
    %6892 = vmatprep.subr.mxu0 0.0
    %6893 = vmatpush1.xpose.msra.mxu0 0.0
    %6894 = vmatprep.subr.mxu0 0.0
    %6895 = vmatpush1.xpose.msra.mxu0 0.0
    %6896 = vmatprep.subr.mxu0 0.0
    %6897 = vmatpush1.xpose.msra.mxu0 0.0
    %6898 = vmatprep.subr.mxu0 0.0
    %6899 = vmatpush1.xpose.msra.mxu0 0.0
    %6900 = vmatprep.subr.mxu0 0.0
    %6901 = vmatpush1.xpose.msra.mxu0 0.0
    %6902 = vmatprep.subr.mxu0 0.0
    %6903 = vmatpush1.xpose.msra.mxu0 0.0
    %6904 = vmatprep.subr.mxu0 0.0
    %6905 = vmatpush1.xpose.msra.mxu0 0.0
    %6906 = vmatprep.subr.mxu0 0.0
    %6907 = vmatpush1.xpose.msra.mxu0 0.0
    %6908 = vmatprep.subr.mxu0 0.0
    %6909 = vmatpush1.xpose.msra.mxu0 0.0
    %6910 = vmatprep.subr.mxu0 0.0
    %6911 = vmatpush1.xpose.msra.mxu0 0.0
    %6912 = vmatprep.subr.mxu0 0.0
    %6913 = vmatpush1.xpose.msra.mxu0 0.0
    %6914 = vmatprep.subr.mxu0 0.0
    %6915 = vmatpush1.xpose.msra.mxu0 0.0
    %6916 = vmatprep.subr.mxu0 0.0
    %6917 = vmatpush1.xpose.msra.mxu0 %v6884
    %6918 = vmatprep.subr.mxu0 0.0
    %6919 = vmatpush2.xpose.msra.mxu0 0.0
    %6920 = vmatprep.subr.mxu0 0.0
    %6921 = vmatpush2.xpose.msra.mxu0 0.0
    %6922 = vmatprep.subr.mxu0 0.0
    %6923 = vmatpush2.xpose.msra.mxu0 0.0
    %6924 = vmatprep.subr.mxu0 0.0
    %6925 = vmatpush2.xpose.msra.mxu0 0.0
    %6926 = vmatprep.subr.mxu0 0.0
    %6927 = vmatpush2.xpose.msra.mxu0 0.0
    %6928 = vmatprep.subr.mxu0 0.0
    %6929 = vmatpush2.xpose.msra.mxu0 0.0
    %6930 = vmatprep.subr.mxu0 0.0
    %6931 = vmatpush2.xpose.msra.mxu0 0.0
    %6932 = vmatprep.subr.mxu0 0.0
    %6933 = vmatpush2.xpose.msra.mxu0 0.0
    %6934 = vmatprep.subr.mxu0 0.0
    %6935 = vmatpush2.xpose.msra.mxu0 0.0
    %6936 = vmatprep.subr.mxu0 0.0
    %6937 = vmatpush2.xpose.msra.mxu0 0.0
    %6938 = vmatprep.subr.mxu0 0.0
    %6939 = vmatpush2.xpose.msra.mxu0 0.0
    %6940 = vmatprep.subr.mxu0 0.0
    %6941 = vmatpush2.xpose.msra.mxu0 0.0
    %6942 = vmatprep.subr.mxu0 0.0
    %6943 = vmatpush2.xpose.msra.mxu0 0.0
    %6944 = vmatprep.subr.mxu0 0.0
    %6945 = vmatpush2.xpose.msra.mxu0 0.0
    %6946 = vmatprep.subr.mxu0 0.0
    %6947 = vmatpush2.xpose.msra.mxu0 0.0
    %6948 = vmatprep.subr.mxu0 0.0
    %6949 = vmatpush2.xpose.msra.mxu0 0.0
    %6950 = vmatprep.mubr.f32.mxu0 0.0
    %6951 = vmatmul.mubr.f32.gmra.mxu0 %v6882
    %v6952 = vpop.f32.mrf.mxu0
    %v6953 = vadd.f32 0.0, %v6952
    %v6954 = vpop.f32.mrf.mxu0
    %6955 = vdwg.mxu0
    %v6956 = vmul.f32 %v6875, 0.35355338
    %v6957 = vmul.f32 %v6953, 0.35355338
    %v6958 = vsel %vm4522, %v6956, -inf
    %6959 = vmax.xlane.f32.xlu0 %v6958
    %v6960 = vpop.xlane.xlu0 %6959
    %v6961 = vsel %vm4522, %v6957, -inf
    %6962 = vmax.xlane.f32.xlu0 %v6961
    %v6963 = vpop.xlane.xlu0 %6962
    %v6964 = vsub.f32 %v6956, %v6960
    %v6965 = vsub.f32 %v6957, %v6963
    %v6966 = vmul.f32 %v6964, 1.442695
    %v6967 = vpow.pop %v6966
    %v6968 = vmul.f32 %v6965, 1.442695
    %v6969 = vpow.pop %v6968
    %v6970 = vsel %vm4522, %v6967, 0.0
    %6971 = vadd.xlane.f32.xlu0 %v6970
    %v6972 = vpop.xlane.xlu0 %6971
    %v6973 = vsel %vm4522, %v6969, 0.0
    %6974 = vadd.xlane.f32.xlu0 %v6973
    %v6975 = vpop.xlane.xlu0 %6974
    %v6976 = vrcp.pop %v6972
    %v6977 = vrcp.pop %v6975
    %v6978 = vmul.f32 %v6967, %v6976
    %v6979 = vmul.f32 %v6969, %v6977
    %6980 = vrot.lane.b32.xlu0 %v6131, 48
    %v6981 = vpop.permute.xlu0 %6980
    %v6983 = vsel %vm445, %v6978, 0
    %v6985 = vsel %vm452, %v6981, 0
    %6987 = vmatprep.subr.mxu0 0.0
    %6988 = vmatpush1.msra.mxu0 0.0
    %6989 = vmatprep.subr.mxu0 0.0
    %6990 = vmatpush1.msra.mxu0 0.0
    %6991 = vmatprep.subr.mxu0 0.0
    %6992 = vmatpush1.msra.mxu0 0.0
    %6993 = vmatprep.subr.mxu0 0.0
    %6994 = vmatpush1.msra.mxu0 0.0
    %6995 = vmatprep.subr.mxu0 0.0
    %6996 = vmatpush1.msra.mxu0 0.0
    %6997 = vmatprep.subr.mxu0 0.0
    %6998 = vmatpush1.msra.mxu0 0.0
    %6999 = vmatprep.subr.mxu0 0.0
    %7000 = vmatpush1.msra.mxu0 0.0
    %7001 = vmatprep.subr.mxu0 0.0
    %7002 = vmatpush1.msra.mxu0 0.0
    %7003 = vmatprep.subr.mxu0 0.0
    %7004 = vmatpush1.msra.mxu0 0.0
    %7005 = vmatprep.subr.mxu0 0.0
    %7006 = vmatpush1.msra.mxu0 0.0
    %7007 = vmatprep.subr.mxu0 0.0
    %7008 = vmatpush1.msra.mxu0 0.0
    %7009 = vmatprep.subr.mxu0 0.0
    %7010 = vmatpush1.msra.mxu0 0.0
    %7011 = vmatprep.subr.mxu0 0.0
    %7012 = vmatpush1.msra.mxu0 0.0
    %7013 = vmatprep.subr.mxu0 0.0
    %7014 = vmatpush1.msra.mxu0 0.0
    %7015 = vmatprep.subr.mxu0 0.0
    %7016 = vmatpush1.msra.mxu0 0.0
    %7017 = vmatprep.subr.mxu0 0.0
    %7018 = vmatpush1.msra.mxu0 %v6985
    %7019 = vmatprep.subr.mxu0 0.0
    %7020 = vmatpush2.msra.mxu0 0.0
    %7021 = vmatprep.subr.mxu0 0.0
    %7022 = vmatpush2.msra.mxu0 0.0
    %7023 = vmatprep.subr.mxu0 0.0
    %7024 = vmatpush2.msra.mxu0 0.0
    %7025 = vmatprep.subr.mxu0 0.0
    %7026 = vmatpush2.msra.mxu0 0.0
    %7027 = vmatprep.subr.mxu0 0.0
    %7028 = vmatpush2.msra.mxu0 0.0
    %7029 = vmatprep.subr.mxu0 0.0
    %7030 = vmatpush2.msra.mxu0 0.0
    %7031 = vmatprep.subr.mxu0 0.0
    %7032 = vmatpush2.msra.mxu0 0.0
    %7033 = vmatprep.subr.mxu0 0.0
    %7034 = vmatpush2.msra.mxu0 0.0
    %7035 = vmatprep.subr.mxu0 0.0
    %7036 = vmatpush2.msra.mxu0 0.0
    %7037 = vmatprep.subr.mxu0 0.0
    %7038 = vmatpush2.msra.mxu0 0.0
    %7039 = vmatprep.subr.mxu0 0.0
    %7040 = vmatpush2.msra.mxu0 0.0
    %7041 = vmatprep.subr.mxu0 0.0
    %7042 = vmatpush2.msra.mxu0 0.0
    %7043 = vmatprep.subr.mxu0 0.0
    %7044 = vmatpush2.msra.mxu0 0.0
    %7045 = vmatprep.subr.mxu0 0.0
    %7046 = vmatpush2.msra.mxu0 0.0
    %7047 = vmatprep.subr.mxu0 0.0
    %7048 = vmatpush2.msra.mxu0 0.0
    %7049 = vmatprep.subr.mxu0 0.0
    %7050 = vmatpush2.msra.mxu0 0.0
    %7051 = vmatprep.mubr.f32.mxu0 0.0
    %7052 = vmatmul.mubr.f32.gmra.mxu0 %v6983
    %v7053 = vpop.f32.mrf.mxu0
    %v7054 = vadd.f32 0.0, %v7053
    %v7055 = vpop.f32.mrf.mxu0
    %7056 = vdwg.mxu0
    %7057 = vrot.lane.b32.xlu0 %v6135, 48
    %v7058 = vpop.permute.xlu0 %7057
    %v7060 = vsel %vm445, %v6979, 0
    %v7062 = vsel %vm452, %v7058, 0
    %7064 = vmatprep.subr.mxu0 0.0
    %7065 = vmatpush1.msra.mxu0 0.0
    %7066 = vmatprep.subr.mxu0 0.0
    %7067 = vmatpush1.msra.mxu0 0.0
    %7068 = vmatprep.subr.mxu0 0.0
    %7069 = vmatpush1.msra.mxu0 0.0
    %7070 = vmatprep.subr.mxu0 0.0
    %7071 = vmatpush1.msra.mxu0 0.0
    %7072 = vmatprep.subr.mxu0 0.0
    %7073 = vmatpush1.msra.mxu0 0.0
    %7074 = vmatprep.subr.mxu0 0.0
    %7075 = vmatpush1.msra.mxu0 0.0
    %7076 = vmatprep.subr.mxu0 0.0
    %7077 = vmatpush1.msra.mxu0 0.0
    %7078 = vmatprep.subr.mxu0 0.0
    %7079 = vmatpush1.msra.mxu0 0.0
    %7080 = vmatprep.subr.mxu0 0.0
    %7081 = vmatpush1.msra.mxu0 0.0
    %7082 = vmatprep.subr.mxu0 0.0
    %7083 = vmatpush1.msra.mxu0 0.0
    %7084 = vmatprep.subr.mxu0 0.0
    %7085 = vmatpush1.msra.mxu0 0.0
    %7086 = vmatprep.subr.mxu0 0.0
    %7087 = vmatpush1.msra.mxu0 0.0
    %7088 = vmatprep.subr.mxu0 0.0
    %7089 = vmatpush1.msra.mxu0 0.0
    %7090 = vmatprep.subr.mxu0 0.0
    %7091 = vmatpush1.msra.mxu0 0.0
    %7092 = vmatprep.subr.mxu0 0.0
    %7093 = vmatpush1.msra.mxu0 0.0
    %7094 = vmatprep.subr.mxu0 0.0
    %7095 = vmatpush1.msra.mxu0 %v7062
    %7096 = vmatprep.subr.mxu0 0.0
    %7097 = vmatpush2.msra.mxu0 0.0
    %7098 = vmatprep.subr.mxu0 0.0
    %7099 = vmatpush2.msra.mxu0 0.0
    %7100 = vmatprep.subr.mxu0 0.0
    %7101 = vmatpush2.msra.mxu0 0.0
    %7102 = vmatprep.subr.mxu0 0.0
    %7103 = vmatpush2.msra.mxu0 0.0
    %7104 = vmatprep.subr.mxu0 0.0
    %7105 = vmatpush2.msra.mxu0 0.0
    %7106 = vmatprep.subr.mxu0 0.0
    %7107 = vmatpush2.msra.mxu0 0.0
    %7108 = vmatprep.subr.mxu0 0.0
    %7109 = vmatpush2.msra.mxu0 0.0
    %7110 = vmatprep.subr.mxu0 0.0
    %7111 = vmatpush2.msra.mxu0 0.0
    %7112 = vmatprep.subr.mxu0 0.0
    %7113 = vmatpush2.msra.mxu0 0.0
    %7114 = vmatprep.subr.mxu0 0.0
    %7115 = vmatpush2.msra.mxu0 0.0
    %7116 = vmatprep.subr.mxu0 0.0
    %7117 = vmatpush2.msra.mxu0 0.0
    %7118 = vmatprep.subr.mxu0 0.0
    %7119 = vmatpush2.msra.mxu0 0.0
    %7120 = vmatprep.subr.mxu0 0.0
    %7121 = vmatpush2.msra.mxu0 0.0
    %7122 = vmatprep.subr.mxu0 0.0
    %7123 = vmatpush2.msra.mxu0 0.0
    %7124 = vmatprep.subr.mxu0 0.0
    %7125 = vmatpush2.msra.mxu0 0.0
    %7126 = vmatprep.subr.mxu0 0.0
    %7127 = vmatpush2.msra.mxu0 0.0
    %7128 = vmatprep.mubr.f32.mxu0 0.0
    %7129 = vmatmul.mubr.f32.gmra.mxu0 %v7060
    %v7130 = vpop.f32.mrf.mxu0
    %v7131 = vadd.f32 0.0, %v7130
    %v7132 = vpop.f32.mrf.mxu0
    %7133 = vdwg.mxu0
    %7134 = vrot.lane.b32.xlu0 %v6131, 104
    %v7135 = vpop.permute.xlu0 %7134
    %7136 = vrot.lane.b32.xlu0 %v6131, 72
    %v7137 = vpop.permute.xlu0 %7136
    %v7138 = vsel %vm540, %v7135, 0
    %v7140 = vsel %vm540, %v7137, 0
    %7142 = vmatprep.subr.mxu0 0.0
    %7143 = vmatpush1.xpose.msra.mxu0 0.0
    %7144 = vmatprep.subr.mxu0 0.0
    %7145 = vmatpush1.xpose.msra.mxu0 0.0
    %7146 = vmatprep.subr.mxu0 0.0
    %7147 = vmatpush1.xpose.msra.mxu0 0.0
    %7148 = vmatprep.subr.mxu0 0.0
    %7149 = vmatpush1.xpose.msra.mxu0 0.0
    %7150 = vmatprep.subr.mxu0 0.0
    %7151 = vmatpush1.xpose.msra.mxu0 0.0
    %7152 = vmatprep.subr.mxu0 0.0
    %7153 = vmatpush1.xpose.msra.mxu0 0.0
    %7154 = vmatprep.subr.mxu0 0.0
    %7155 = vmatpush1.xpose.msra.mxu0 0.0
    %7156 = vmatprep.subr.mxu0 0.0
    %7157 = vmatpush1.xpose.msra.mxu0 0.0
    %7158 = vmatprep.subr.mxu0 0.0
    %7159 = vmatpush1.xpose.msra.mxu0 0.0
    %7160 = vmatprep.subr.mxu0 0.0
    %7161 = vmatpush1.xpose.msra.mxu0 0.0
    %7162 = vmatprep.subr.mxu0 0.0
    %7163 = vmatpush1.xpose.msra.mxu0 0.0
    %7164 = vmatprep.subr.mxu0 0.0
    %7165 = vmatpush1.xpose.msra.mxu0 0.0
    %7166 = vmatprep.subr.mxu0 0.0
    %7167 = vmatpush1.xpose.msra.mxu0 0.0
    %7168 = vmatprep.subr.mxu0 0.0
    %7169 = vmatpush1.xpose.msra.mxu0 0.0
    %7170 = vmatprep.subr.mxu0 0.0
    %7171 = vmatpush1.xpose.msra.mxu0 0.0
    %7172 = vmatprep.subr.mxu0 0.0
    %7173 = vmatpush1.xpose.msra.mxu0 %v7140
    %7174 = vmatprep.subr.mxu0 0.0
    %7175 = vmatpush2.xpose.msra.mxu0 0.0
    %7176 = vmatprep.subr.mxu0 0.0
    %7177 = vmatpush2.xpose.msra.mxu0 0.0
    %7178 = vmatprep.subr.mxu0 0.0
    %7179 = vmatpush2.xpose.msra.mxu0 0.0
    %7180 = vmatprep.subr.mxu0 0.0
    %7181 = vmatpush2.xpose.msra.mxu0 0.0
    %7182 = vmatprep.subr.mxu0 0.0
    %7183 = vmatpush2.xpose.msra.mxu0 0.0
    %7184 = vmatprep.subr.mxu0 0.0
    %7185 = vmatpush2.xpose.msra.mxu0 0.0
    %7186 = vmatprep.subr.mxu0 0.0
    %7187 = vmatpush2.xpose.msra.mxu0 0.0
    %7188 = vmatprep.subr.mxu0 0.0
    %7189 = vmatpush2.xpose.msra.mxu0 0.0
    %7190 = vmatprep.subr.mxu0 0.0
    %7191 = vmatpush2.xpose.msra.mxu0 0.0
    %7192 = vmatprep.subr.mxu0 0.0
    %7193 = vmatpush2.xpose.msra.mxu0 0.0
    %7194 = vmatprep.subr.mxu0 0.0
    %7195 = vmatpush2.xpose.msra.mxu0 0.0
    %7196 = vmatprep.subr.mxu0 0.0
    %7197 = vmatpush2.xpose.msra.mxu0 0.0
    %7198 = vmatprep.subr.mxu0 0.0
    %7199 = vmatpush2.xpose.msra.mxu0 0.0
    %7200 = vmatprep.subr.mxu0 0.0
    %7201 = vmatpush2.xpose.msra.mxu0 0.0
    %7202 = vmatprep.subr.mxu0 0.0
    %7203 = vmatpush2.xpose.msra.mxu0 0.0
    %7204 = vmatprep.subr.mxu0 0.0
    %7205 = vmatpush2.xpose.msra.mxu0 0.0
    %7206 = vmatprep.mubr.f32.mxu0 0.0
    %7207 = vmatmul.mubr.f32.gmra.mxu0 %v7138
    %v7208 = vpop.f32.mrf.mxu0
    %v7209 = vadd.f32 0.0, %v7208
    %v7210 = vpop.f32.mrf.mxu0
    %7211 = vdwg.mxu0
    %7212 = vrot.lane.b32.xlu0 %v6135, 104
    %v7213 = vpop.permute.xlu0 %7212
    %7214 = vrot.lane.b32.xlu0 %v6135, 72
    %v7215 = vpop.permute.xlu0 %7214
    %v7216 = vsel %vm540, %v7213, 0
    %v7218 = vsel %vm540, %v7215, 0
    %7220 = vmatprep.subr.mxu0 0.0
    %7221 = vmatpush1.xpose.msra.mxu0 0.0
    %7222 = vmatprep.subr.mxu0 0.0
    %7223 = vmatpush1.xpose.msra.mxu0 0.0
    %7224 = vmatprep.subr.mxu0 0.0
    %7225 = vmatpush1.xpose.msra.mxu0 0.0
    %7226 = vmatprep.subr.mxu0 0.0
    %7227 = vmatpush1.xpose.msra.mxu0 0.0
    %7228 = vmatprep.subr.mxu0 0.0
    %7229 = vmatpush1.xpose.msra.mxu0 0.0
    %7230 = vmatprep.subr.mxu0 0.0
    %7231 = vmatpush1.xpose.msra.mxu0 0.0
    %7232 = vmatprep.subr.mxu0 0.0
    %7233 = vmatpush1.xpose.msra.mxu0 0.0
    %7234 = vmatprep.subr.mxu0 0.0
    %7235 = vmatpush1.xpose.msra.mxu0 0.0
    %7236 = vmatprep.subr.mxu0 0.0
    %7237 = vmatpush1.xpose.msra.mxu0 0.0
    %7238 = vmatprep.subr.mxu0 0.0
    %7239 = vmatpush1.xpose.msra.mxu0 0.0
    %7240 = vmatprep.subr.mxu0 0.0
    %7241 = vmatpush1.xpose.msra.mxu0 0.0
    %7242 = vmatprep.subr.mxu0 0.0
    %7243 = vmatpush1.xpose.msra.mxu0 0.0
    %7244 = vmatprep.subr.mxu0 0.0
    %7245 = vmatpush1.xpose.msra.mxu0 0.0
    %7246 = vmatprep.subr.mxu0 0.0
    %7247 = vmatpush1.xpose.msra.mxu0 0.0
    %7248 = vmatprep.subr.mxu0 0.0
    %7249 = vmatpush1.xpose.msra.mxu0 0.0
    %7250 = vmatprep.subr.mxu0 0.0
    %7251 = vmatpush1.xpose.msra.mxu0 %v7218
    %7252 = vmatprep.subr.mxu0 0.0
    %7253 = vmatpush2.xpose.msra.mxu0 0.0
    %7254 = vmatprep.subr.mxu0 0.0
    %7255 = vmatpush2.xpose.msra.mxu0 0.0
    %7256 = vmatprep.subr.mxu0 0.0
    %7257 = vmatpush2.xpose.msra.mxu0 0.0
    %7258 = vmatprep.subr.mxu0 0.0
    %7259 = vmatpush2.xpose.msra.mxu0 0.0
    %7260 = vmatprep.subr.mxu0 0.0
    %7261 = vmatpush2.xpose.msra.mxu0 0.0
    %7262 = vmatprep.subr.mxu0 0.0
    %7263 = vmatpush2.xpose.msra.mxu0 0.0
    %7264 = vmatprep.subr.mxu0 0.0
    %7265 = vmatpush2.xpose.msra.mxu0 0.0
    %7266 = vmatprep.subr.mxu0 0.0
    %7267 = vmatpush2.xpose.msra.mxu0 0.0
    %7268 = vmatprep.subr.mxu0 0.0
    %7269 = vmatpush2.xpose.msra.mxu0 0.0
    %7270 = vmatprep.subr.mxu0 0.0
    %7271 = vmatpush2.xpose.msra.mxu0 0.0
    %7272 = vmatprep.subr.mxu0 0.0
    %7273 = vmatpush2.xpose.msra.mxu0 0.0
    %7274 = vmatprep.subr.mxu0 0.0
    %7275 = vmatpush2.xpose.msra.mxu0 0.0
    %7276 = vmatprep.subr.mxu0 0.0
    %7277 = vmatpush2.xpose.msra.mxu0 0.0
    %7278 = vmatprep.subr.mxu0 0.0
    %7279 = vmatpush2.xpose.msra.mxu0 0.0
    %7280 = vmatprep.subr.mxu0 0.0
    %7281 = vmatpush2.xpose.msra.mxu0 0.0
    %7282 = vmatprep.subr.mxu0 0.0
    %7283 = vmatpush2.xpose.msra.mxu0 0.0
    %7284 = vmatprep.mubr.f32.mxu0 0.0
    %7285 = vmatmul.mubr.f32.gmra.mxu0 %v7216
    %v7286 = vpop.f32.mrf.mxu0
    %v7287 = vadd.f32 0.0, %v7286
    %v7288 = vpop.f32.mrf.mxu0
    %7289 = vdwg.mxu0
    %v7290 = vmul.f32 %v7209, 0.35355338
    %v7291 = vmul.f32 %v7287, 0.35355338
    %v7292 = vsel %vm4522, %v7290, -inf
    %7293 = vmax.xlane.f32.xlu0 %v7292
    %v7294 = vpop.xlane.xlu0 %7293
    %v7295 = vsel %vm4522, %v7291, -inf
    %7296 = vmax.xlane.f32.xlu0 %v7295
    %v7297 = vpop.xlane.xlu0 %7296
    %v7298 = vsub.f32 %v7290, %v7294
    %v7299 = vsub.f32 %v7291, %v7297
    %v7300 = vmul.f32 %v7298, 1.442695
    %v7301 = vpow.pop %v7300
    %v7302 = vmul.f32 %v7299, 1.442695
    %v7303 = vpow.pop %v7302
    %v7304 = vsel %vm4522, %v7301, 0.0
    %7305 = vadd.xlane.f32.xlu0 %v7304
    %v7306 = vpop.xlane.xlu0 %7305
    %v7307 = vsel %vm4522, %v7303, 0.0
    %7308 = vadd.xlane.f32.xlu0 %v7307
    %v7309 = vpop.xlane.xlu0 %7308
    %v7310 = vrcp.pop %v7306
    %v7311 = vrcp.pop %v7309
    %v7312 = vmul.f32 %v7301, %v7310
    %v7313 = vmul.f32 %v7303, %v7311
    %7314 = vrot.lane.b32.xlu0 %v6131, 40
    %v7315 = vpop.permute.xlu0 %7314
    %v7317 = vsel %vm445, %v7312, 0
    %v7319 = vsel %vm452, %v7315, 0
    %7321 = vmatprep.subr.mxu0 0.0
    %7322 = vmatpush1.msra.mxu0 0.0
    %7323 = vmatprep.subr.mxu0 0.0
    %7324 = vmatpush1.msra.mxu0 0.0
    %7325 = vmatprep.subr.mxu0 0.0
    %7326 = vmatpush1.msra.mxu0 0.0
    %7327 = vmatprep.subr.mxu0 0.0
    %7328 = vmatpush1.msra.mxu0 0.0
    %7329 = vmatprep.subr.mxu0 0.0
    %7330 = vmatpush1.msra.mxu0 0.0
    %7331 = vmatprep.subr.mxu0 0.0
    %7332 = vmatpush1.msra.mxu0 0.0
    %7333 = vmatprep.subr.mxu0 0.0
    %7334 = vmatpush1.msra.mxu0 0.0
    %7335 = vmatprep.subr.mxu0 0.0
    %7336 = vmatpush1.msra.mxu0 0.0
    %7337 = vmatprep.subr.mxu0 0.0
    %7338 = vmatpush1.msra.mxu0 0.0
    %7339 = vmatprep.subr.mxu0 0.0
    %7340 = vmatpush1.msra.mxu0 0.0
    %7341 = vmatprep.subr.mxu0 0.0
    %7342 = vmatpush1.msra.mxu0 0.0
    %7343 = vmatprep.subr.mxu0 0.0
    %7344 = vmatpush1.msra.mxu0 0.0
    %7345 = vmatprep.subr.mxu0 0.0
    %7346 = vmatpush1.msra.mxu0 0.0
    %7347 = vmatprep.subr.mxu0 0.0
    %7348 = vmatpush1.msra.mxu0 0.0
    %7349 = vmatprep.subr.mxu0 0.0
    %7350 = vmatpush1.msra.mxu0 0.0
    %7351 = vmatprep.subr.mxu0 0.0
    %7352 = vmatpush1.msra.mxu0 %v7319
    %7353 = vmatprep.subr.mxu0 0.0
    %7354 = vmatpush2.msra.mxu0 0.0
    %7355 = vmatprep.subr.mxu0 0.0
    %7356 = vmatpush2.msra.mxu0 0.0
    %7357 = vmatprep.subr.mxu0 0.0
    %7358 = vmatpush2.msra.mxu0 0.0
    %7359 = vmatprep.subr.mxu0 0.0
    %7360 = vmatpush2.msra.mxu0 0.0
    %7361 = vmatprep.subr.mxu0 0.0
    %7362 = vmatpush2.msra.mxu0 0.0
    %7363 = vmatprep.subr.mxu0 0.0
    %7364 = vmatpush2.msra.mxu0 0.0
    %7365 = vmatprep.subr.mxu0 0.0
    %7366 = vmatpush2.msra.mxu0 0.0
    %7367 = vmatprep.subr.mxu0 0.0
    %7368 = vmatpush2.msra.mxu0 0.0
    %7369 = vmatprep.subr.mxu0 0.0
    %7370 = vmatpush2.msra.mxu0 0.0
    %7371 = vmatprep.subr.mxu0 0.0
    %7372 = vmatpush2.msra.mxu0 0.0
    %7373 = vmatprep.subr.mxu0 0.0
    %7374 = vmatpush2.msra.mxu0 0.0
    %7375 = vmatprep.subr.mxu0 0.0
    %7376 = vmatpush2.msra.mxu0 0.0
    %7377 = vmatprep.subr.mxu0 0.0
    %7378 = vmatpush2.msra.mxu0 0.0
    %7379 = vmatprep.subr.mxu0 0.0
    %7380 = vmatpush2.msra.mxu0 0.0
    %7381 = vmatprep.subr.mxu0 0.0
    %7382 = vmatpush2.msra.mxu0 0.0
    %7383 = vmatprep.subr.mxu0 0.0
    %7384 = vmatpush2.msra.mxu0 0.0
    %7385 = vmatprep.mubr.f32.mxu0 0.0
    %7386 = vmatmul.mubr.f32.gmra.mxu0 %v7317
    %v7387 = vpop.f32.mrf.mxu0
    %v7388 = vadd.f32 0.0, %v7387
    %v7389 = vpop.f32.mrf.mxu0
    %7390 = vdwg.mxu0
    %7391 = vrot.lane.b32.xlu0 %v6135, 40
    %v7392 = vpop.permute.xlu0 %7391
    %v7394 = vsel %vm445, %v7313, 0
    %v7396 = vsel %vm452, %v7392, 0
    %7398 = vmatprep.subr.mxu0 0.0
    %7399 = vmatpush1.msra.mxu0 0.0
    %7400 = vmatprep.subr.mxu0 0.0
    %7401 = vmatpush1.msra.mxu0 0.0
    %7402 = vmatprep.subr.mxu0 0.0
    %7403 = vmatpush1.msra.mxu0 0.0
    %7404 = vmatprep.subr.mxu0 0.0
    %7405 = vmatpush1.msra.mxu0 0.0
    %7406 = vmatprep.subr.mxu0 0.0
    %7407 = vmatpush1.msra.mxu0 0.0
    %7408 = vmatprep.subr.mxu0 0.0
    %7409 = vmatpush1.msra.mxu0 0.0
    %7410 = vmatprep.subr.mxu0 0.0
    %7411 = vmatpush1.msra.mxu0 0.0
    %7412 = vmatprep.subr.mxu0 0.0
    %7413 = vmatpush1.msra.mxu0 0.0
    %7414 = vmatprep.subr.mxu0 0.0
    %7415 = vmatpush1.msra.mxu0 0.0
    %7416 = vmatprep.subr.mxu0 0.0
    %7417 = vmatpush1.msra.mxu0 0.0
    %7418 = vmatprep.subr.mxu0 0.0
    %7419 = vmatpush1.msra.mxu0 0.0
    %7420 = vmatprep.subr.mxu0 0.0
    %7421 = vmatpush1.msra.mxu0 0.0
    %7422 = vmatprep.subr.mxu0 0.0
    %7423 = vmatpush1.msra.mxu0 0.0
    %7424 = vmatprep.subr.mxu0 0.0
    %7425 = vmatpush1.msra.mxu0 0.0
    %7426 = vmatprep.subr.mxu0 0.0
    %7427 = vmatpush1.msra.mxu0 0.0
    %7428 = vmatprep.subr.mxu0 0.0
    %7429 = vmatpush1.msra.mxu0 %v7396
    %7430 = vmatprep.subr.mxu0 0.0
    %7431 = vmatpush2.msra.mxu0 0.0
    %7432 = vmatprep.subr.mxu0 0.0
    %7433 = vmatpush2.msra.mxu0 0.0
    %7434 = vmatprep.subr.mxu0 0.0
    %7435 = vmatpush2.msra.mxu0 0.0
    %7436 = vmatprep.subr.mxu0 0.0
    %7437 = vmatpush2.msra.mxu0 0.0
    %7438 = vmatprep.subr.mxu0 0.0
    %7439 = vmatpush2.msra.mxu0 0.0
    %7440 = vmatprep.subr.mxu0 0.0
    %7441 = vmatpush2.msra.mxu0 0.0
    %7442 = vmatprep.subr.mxu0 0.0
    %7443 = vmatpush2.msra.mxu0 0.0
    %7444 = vmatprep.subr.mxu0 0.0
    %7445 = vmatpush2.msra.mxu0 0.0
    %7446 = vmatprep.subr.mxu0 0.0
    %7447 = vmatpush2.msra.mxu0 0.0
    %7448 = vmatprep.subr.mxu0 0.0
    %7449 = vmatpush2.msra.mxu0 0.0
    %7450 = vmatprep.subr.mxu0 0.0
    %7451 = vmatpush2.msra.mxu0 0.0
    %7452 = vmatprep.subr.mxu0 0.0
    %7453 = vmatpush2.msra.mxu0 0.0
    %7454 = vmatprep.subr.mxu0 0.0
    %7455 = vmatpush2.msra.mxu0 0.0
    %7456 = vmatprep.subr.mxu0 0.0
    %7457 = vmatpush2.msra.mxu0 0.0
    %7458 = vmatprep.subr.mxu0 0.0
    %7459 = vmatpush2.msra.mxu0 0.0
    %7460 = vmatprep.subr.mxu0 0.0
    %7461 = vmatpush2.msra.mxu0 0.0
    %7462 = vmatprep.mubr.f32.mxu0 0.0
    %7463 = vmatmul.mubr.f32.gmra.mxu0 %v7394
    %v7464 = vpop.f32.mrf.mxu0
    %v7465 = vadd.f32 0.0, %v7464
    %v7466 = vpop.f32.mrf.mxu0
    %7467 = vdwg.mxu0
    %7468 = vst.msk [vmem:[%s75] sm:$0xf] %vm4522, %v6310
    %7469 = vst.msk [vmem:[%s75 + $0x4] sm:$0xf] %vm4522, %v6311
    %7470 = vst.msk [vmem:[%s75 + $0x8] sm:$0xf] %vm4522, %v6644
    %7471 = vst.msk [vmem:[%s75 + $0xc] sm:$0xf] %vm4522, %v6645
    %7472 = vst.msk [vmem:[%s75 + $0x10] sm:$0xf] %vm4522, %v6978
    %7473 = vst.msk [vmem:[%s75 + $0x14] sm:$0xf] %vm4522, %v6979
    %7474 = vst.msk [vmem:[%s75 + $0x18] sm:$0xf] %vm4522, %v7312
    %7475 = vst.msk [vmem:[%s75 + $0x1c] sm:$0xf] %vm4522, %v7313
    %7478 = vrot.lane.b32.xlu0 %v6720, 8
    %v7479 = vpop.permute.xlu0 %7478
    %7480 = vrot.lane.b32.xlu0 %v6797, 8
    %v7481 = vpop.permute.xlu0 %7480
    %7486 = vrot.lane.b32.xlu0 %v7054, 16
    %v7487 = vpop.permute.xlu0 %7486
    %7488 = vrot.lane.b32.xlu0 %v7131, 16
    %v7489 = vpop.permute.xlu0 %7488
    %7494 = vrot.lane.b32.xlu0 %v7388, 24
    %v7495 = vpop.permute.xlu0 %7494
    %7496 = vrot.lane.b32.xlu0 %v7465, 24
    %v7497 = vpop.permute.xlu0 %7496
    %v7500 = vsel %vm540, %v6386, %v7479
    %v7501 = vsel %vm540, %v6463, %v7481
    %v7502 = vsel %vm2067, %v7500, %v7487
    %v7503 = vsel %vm2067, %v7501, %v7489
    %v7504 = vsel %vm2070, %v7502, %v7495
    %v7505 = vsel %vm2070, %v7503, %v7497
    %v7507 = vrot.slane %v7505, 4
    %v7509 = vsel %vm452, %v7504, %v7507
    %s7510 = scalar_lea.vmem %s41, 32
    %v7511 = vld [vmem:[%s7510] sm:$0xff]
    %v7512 = vld [vmem:[%s7510 + $0x8] sm:$0xff]
    %v7513 = vld [vmem:[%s7510 + $0x10] sm:$0xff]
    %v7514 = vld [vmem:[%s7510 + $0x18] sm:$0xff]
    %s7515 = scalar_lea.vmem [#allocation23], 1
    %v7516 = vld [vmem:[%s7515] sm:$0x1]
    %v7518 = vlaneseq
    %v7519 = vshrl.u32 %v7518, 7
    %v7520 = vsub.s32 0, %v7519
    %v7521 = vrot.slane %v7516, %v7520
    %v7524 = vsel %vm614, %v7509, 0
    %7526 = vmatprep.subr.mxu0 0.0
    %7527 = vmatpush1.msra.mxu0 0.0
    %7528 = vmatprep.subr.mxu0 0.0
    %7529 = vmatpush1.msra.mxu0 0.0
    %7530 = vmatprep.subr.mxu0 0.0
    %7531 = vmatpush1.msra.mxu0 0.0
    %7532 = vmatprep.subr.mxu0 0.0
    %7533 = vmatpush1.msra.mxu0 0.0
    %7534 = vmatprep.subr.mxu0 0.0
    %7535 = vmatpush1.msra.mxu0 0.0
    %7536 = vmatprep.subr.mxu0 0.0
    %7537 = vmatpush1.msra.mxu0 0.0
    %7538 = vmatprep.subr.mxu0 0.0
    %7539 = vmatpush1.msra.mxu0 0.0
    %7540 = vmatprep.subr.mxu0 0.0
    %7541 = vmatpush1.msra.mxu0 0.0
    %7542 = vmatprep.subr.mxu0 0.0
    %7543 = vmatpush1.msra.mxu0 0.0
    %7544 = vmatprep.subr.mxu0 0.0
    %7545 = vmatpush1.msra.mxu0 0.0
    %7546 = vmatprep.subr.mxu0 0.0
    %7547 = vmatpush1.msra.mxu0 0.0
    %7548 = vmatprep.subr.mxu0 0.0
    %7549 = vmatpush1.msra.mxu0 0.0
    %7550 = vmatprep.subr.mxu0 0.0
    %7551 = vmatpush1.msra.mxu0 %v7514
    %7552 = vmatprep.subr.mxu0 0.0
    %7553 = vmatpush1.msra.mxu0 %v7513
    %7554 = vmatprep.subr.mxu0 0.0
    %7555 = vmatpush1.msra.mxu0 %v7512
    %7556 = vmatprep.subr.mxu0 0.0
    %7557 = vmatpush1.msra.mxu0 %v7511
    %7558 = vmatprep.subr.mxu0 0.0
    %7559 = vmatpush2.msra.mxu0 0.0
    %7560 = vmatprep.subr.mxu0 0.0
    %7561 = vmatpush2.msra.mxu0 0.0
    %7562 = vmatprep.subr.mxu0 0.0
    %7563 = vmatpush2.msra.mxu0 0.0
    %7564 = vmatprep.subr.mxu0 0.0
    %7565 = vmatpush2.msra.mxu0 0.0
    %7566 = vmatprep.subr.mxu0 0.0
    %7567 = vmatpush2.msra.mxu0 0.0
    %7568 = vmatprep.subr.mxu0 0.0
    %7569 = vmatpush2.msra.mxu0 0.0
    %7570 = vmatprep.subr.mxu0 0.0
    %7571 = vmatpush2.msra.mxu0 0.0
    %7572 = vmatprep.subr.mxu0 0.0
    %7573 = vmatpush2.msra.mxu0 0.0
    %7574 = vmatprep.subr.mxu0 0.0
    %7575 = vmatpush2.msra.mxu0 0.0
    %7576 = vmatprep.subr.mxu0 0.0
    %7577 = vmatpush2.msra.mxu0 0.0
    %7578 = vmatprep.subr.mxu0 0.0
    %7579 = vmatpush2.msra.mxu0 0.0
    %7580 = vmatprep.subr.mxu0 0.0
    %7581 = vmatpush2.msra.mxu0 0.0
    %7582 = vmatprep.subr.mxu0 0.0
    %7583 = vmatpush2.msra.mxu0 0.0
    %7584 = vmatprep.subr.mxu0 0.0
    %7585 = vmatpush2.msra.mxu0 0.0
    %7586 = vmatprep.subr.mxu0 0.0
    %7587 = vmatpush2.msra.mxu0 0.0
    %7588 = vmatprep.subr.mxu0 0.0
    %7589 = vmatpush2.msra.mxu0 0.0
    %7590 = vmatprep.mubr.f32.mxu0 0.0
    %7591 = vmatmul.mubr.f32.gmra.mxu0 %v7524
    %v7592 = vpop.f32.mrf.mxu0
    %v7593 = vadd.f32 %v7521, %v7592
    %v7594 = vpop.f32.mrf.mxu0
    %7595 = vdwg.mxu0
    %v7596 = vadd.f32 %v6047, %v7593
    %s7597 = scalar_lea.vmem [#allocation25], 1
    %v7598 = vld [vmem:[%s7597] sm:$0x1]
    %s7599 = scalar_lea.vmem [#allocation26], 1
    %v7600 = vld [vmem:[%s7599] sm:$0x1]
    %v7601 = vsel %vm614, %v7596, 0.0
    %7602 = vadd.xlane.f32.xlu0 %v7601
    %v7603 = vpop.xlane.xlu0 %7602
    %v7604 = vmul.f32 %v7603, %v2175
    %v7605 = vsub.f32 %v7596, %v7604
    %v7606 = vmul.f32 %v7605, %v7605
    %v7607 = vsel %vm614, %v7606, 0.0
    %7608 = vadd.xlane.f32.xlu0 %v7607
    %v7609 = vpop.xlane.xlu0 %7608
    %v7610 = vmul.f32 %v7609, %v2175
    %v7611 = vadd.f32 %v7610, 1e-05
    %v7612 = vrsqrt.pop %v7611
    %v7613 = vmul.f32 %v7605, %v7612
    %v7615 = vlaneseq
    %v7616 = vshrl.u32 %v7615, 7
    %v7617 = vsub.s32 0, %v7616
    %v7618 = vrot.slane %v7598, %v7617
    %v7620 = vmul.f32 %v7613, %v7618
    %v7622 = vlaneseq
    %v7623 = vshrl.u32 %v7622, 7
    %v7624 = vsub.s32 0, %v7623
    %v7625 = vrot.slane %v7600, %v7624
    %v7627 = vadd.f32 %v7620, %v7625
    %s7628 = scalar_lea.vmem %s49, 32
    %v7629 = vld [vmem:[%s7628] sm:$0xff]
    %v7630 = vld [vmem:[%s7628 + $0x8] sm:$0xff]
    %v7631 = vld [vmem:[%s7628 + $0x10] sm:$0xff]
    %v7632 = vld [vmem:[%s7628 + $0x18] sm:$0xff]
    %s7633 = scalar_lea.vmem [#allocation28], 1
    %v7634 = vld [vmem:[%s7633] sm:$0x1]
    %v7636 = vlaneseq
    %v7637 = vshrl.u32 %v7636, 7
    %v7638 = vsub.s32 0, %v7637
    %v7639 = vrot.slane %v7634, %v7638
    %v7642 = vsel %vm614, %v7627, 0
    %7644 = vmatprep.subr.mxu0 0.0
    %7645 = vmatpush1.msra.mxu0 0.0
    %7646 = vmatprep.subr.mxu0 0.0
    %7647 = vmatpush1.msra.mxu0 0.0
    %7648 = vmatprep.subr.mxu0 0.0
    %7649 = vmatpush1.msra.mxu0 0.0
    %7650 = vmatprep.subr.mxu0 0.0
    %7651 = vmatpush1.msra.mxu0 0.0
    %7652 = vmatprep.subr.mxu0 0.0
    %7653 = vmatpush1.msra.mxu0 0.0
    %7654 = vmatprep.subr.mxu0 0.0
    %7655 = vmatpush1.msra.mxu0 0.0
    %7656 = vmatprep.subr.mxu0 0.0
    %7657 = vmatpush1.msra.mxu0 0.0
    %7658 = vmatprep.subr.mxu0 0.0
    %7659 = vmatpush1.msra.mxu0 0.0
    %7660 = vmatprep.subr.mxu0 0.0
    %7661 = vmatpush1.msra.mxu0 0.0
    %7662 = vmatprep.subr.mxu0 0.0
    %7663 = vmatpush1.msra.mxu0 0.0
    %7664 = vmatprep.subr.mxu0 0.0
    %7665 = vmatpush1.msra.mxu0 0.0
    %7666 = vmatprep.subr.mxu0 0.0
    %7667 = vmatpush1.msra.mxu0 0.0
    %7668 = vmatprep.subr.mxu0 0.0
    %7669 = vmatpush1.msra.mxu0 %v7632
    %7670 = vmatprep.subr.mxu0 0.0
    %7671 = vmatpush1.msra.mxu0 %v7631
    %7672 = vmatprep.subr.mxu0 0.0
    %7673 = vmatpush1.msra.mxu0 %v7630
    %7674 = vmatprep.subr.mxu0 0.0
    %7675 = vmatpush1.msra.mxu0 %v7629
    %7676 = vmatprep.subr.mxu0 0.0
    %7677 = vmatpush2.msra.mxu0 0.0
    %7678 = vmatprep.subr.mxu0 0.0
    %7679 = vmatpush2.msra.mxu0 0.0
    %7680 = vmatprep.subr.mxu0 0.0
    %7681 = vmatpush2.msra.mxu0 0.0
    %7682 = vmatprep.subr.mxu0 0.0
    %7683 = vmatpush2.msra.mxu0 0.0
    %7684 = vmatprep.subr.mxu0 0.0
    %7685 = vmatpush2.msra.mxu0 0.0
    %7686 = vmatprep.subr.mxu0 0.0
    %7687 = vmatpush2.msra.mxu0 0.0
    %7688 = vmatprep.subr.mxu0 0.0
    %7689 = vmatpush2.msra.mxu0 0.0
    %7690 = vmatprep.subr.mxu0 0.0
    %7691 = vmatpush2.msra.mxu0 0.0
    %7692 = vmatprep.subr.mxu0 0.0
    %7693 = vmatpush2.msra.mxu0 0.0
    %7694 = vmatprep.subr.mxu0 0.0
    %7695 = vmatpush2.msra.mxu0 0.0
    %7696 = vmatprep.subr.mxu0 0.0
    %7697 = vmatpush2.msra.mxu0 0.0
    %7698 = vmatprep.subr.mxu0 0.0
    %7699 = vmatpush2.msra.mxu0 0.0
    %7700 = vmatprep.subr.mxu0 0.0
    %7701 = vmatpush2.msra.mxu0 0.0
    %7702 = vmatprep.subr.mxu0 0.0
    %7703 = vmatpush2.msra.mxu0 0.0
    %7704 = vmatprep.subr.mxu0 0.0
    %7705 = vmatpush2.msra.mxu0 0.0
    %7706 = vmatprep.subr.mxu0 0.0
    %7707 = vmatpush2.msra.mxu0 0.0
    %7708 = vmatprep.mubr.f32.mxu0 0.0
    %7709 = vmatmul.mubr.f32.gmra.mxu0 %v7642
    %v7710 = vpop.f32.mrf.mxu0
    %v7711 = vadd.f32 %v7639, %v7710
    %v7712 = vpop.f32.mrf.mxu0
    %7713 = vdwg.mxu0
    %v7714 = vmax.f32 %v7711, 0.0
    %s7715 = scalar_lea.vmem [#allocation29], 32
    %v7716 = vld [vmem:[%s7715] sm:$0xff]
    %v7717 = vld [vmem:[%s7715 + $0x8] sm:$0xff]
    %v7718 = vld [vmem:[%s7715 + $0x10] sm:$0xff]
    %v7719 = vld [vmem:[%s7715 + $0x18] sm:$0xff]
    %s7720 = scalar_lea.vmem [#allocation31], 1
    %v7721 = vld [vmem:[%s7720] sm:$0x1]
    %v7723 = vlaneseq
    %v7724 = vshrl.u32 %v7723, 7
    %v7725 = vsub.s32 0, %v7724
    %v7726 = vrot.slane %v7721, %v7725
    %v7729 = vsel %vm614, %v7714, 0
    %7731 = vmatprep.subr.mxu0 0.0
    %7732 = vmatpush1.msra.mxu0 0.0
    %7733 = vmatprep.subr.mxu0 0.0
    %7734 = vmatpush1.msra.mxu0 0.0
    %7735 = vmatprep.subr.mxu0 0.0
    %7736 = vmatpush1.msra.mxu0 0.0
    %7737 = vmatprep.subr.mxu0 0.0
    %7738 = vmatpush1.msra.mxu0 0.0
    %7739 = vmatprep.subr.mxu0 0.0
    %7740 = vmatpush1.msra.mxu0 0.0
    %7741 = vmatprep.subr.mxu0 0.0
    %7742 = vmatpush1.msra.mxu0 0.0
    %7743 = vmatprep.subr.mxu0 0.0
    %7744 = vmatpush1.msra.mxu0 0.0
    %7745 = vmatprep.subr.mxu0 0.0
    %7746 = vmatpush1.msra.mxu0 0.0
    %7747 = vmatprep.subr.mxu0 0.0
    %7748 = vmatpush1.msra.mxu0 0.0
    %7749 = vmatprep.subr.mxu0 0.0
    %7750 = vmatpush1.msra.mxu0 0.0
    %7751 = vmatprep.subr.mxu0 0.0
    %7752 = vmatpush1.msra.mxu0 0.0
    %7753 = vmatprep.subr.mxu0 0.0
    %7754 = vmatpush1.msra.mxu0 0.0
    %7755 = vmatprep.subr.mxu0 0.0
    %7756 = vmatpush1.msra.mxu0 %v7719
    %7757 = vmatprep.subr.mxu0 0.0
    %7758 = vmatpush1.msra.mxu0 %v7718
    %7759 = vmatprep.subr.mxu0 0.0
    %7760 = vmatpush1.msra.mxu0 %v7717
    %7761 = vmatprep.subr.mxu0 0.0
    %7762 = vmatpush1.msra.mxu0 %v7716
    %7763 = vmatprep.subr.mxu0 0.0
    %7764 = vmatpush2.msra.mxu0 0.0
    %7765 = vmatprep.subr.mxu0 0.0
    %7766 = vmatpush2.msra.mxu0 0.0
    %7767 = vmatprep.subr.mxu0 0.0
    %7768 = vmatpush2.msra.mxu0 0.0
    %7769 = vmatprep.subr.mxu0 0.0
    %7770 = vmatpush2.msra.mxu0 0.0
    %7771 = vmatprep.subr.mxu0 0.0
    %7772 = vmatpush2.msra.mxu0 0.0
    %7773 = vmatprep.subr.mxu0 0.0
    %7774 = vmatpush2.msra.mxu0 0.0
    %7775 = vmatprep.subr.mxu0 0.0
    %7776 = vmatpush2.msra.mxu0 0.0
    %7777 = vmatprep.subr.mxu0 0.0
    %7778 = vmatpush2.msra.mxu0 0.0
    %7779 = vmatprep.subr.mxu0 0.0
    %7780 = vmatpush2.msra.mxu0 0.0
    %7781 = vmatprep.subr.mxu0 0.0
    %7782 = vmatpush2.msra.mxu0 0.0
    %7783 = vmatprep.subr.mxu0 0.0
    %7784 = vmatpush2.msra.mxu0 0.0
    %7785 = vmatprep.subr.mxu0 0.0
    %7786 = vmatpush2.msra.mxu0 0.0
    %7787 = vmatprep.subr.mxu0 0.0
    %7788 = vmatpush2.msra.mxu0 0.0
    %7789 = vmatprep.subr.mxu0 0.0
    %7790 = vmatpush2.msra.mxu0 0.0
    %7791 = vmatprep.subr.mxu0 0.0
    %7792 = vmatpush2.msra.mxu0 0.0
    %7793 = vmatprep.subr.mxu0 0.0
    %7794 = vmatpush2.msra.mxu0 0.0
    %7795 = vmatprep.mubr.f32.mxu0 0.0
    %7796 = vmatmul.mubr.f32.gmra.mxu0 %v7729
    %v7797 = vpop.f32.mrf.mxu0
    %v7798 = vadd.f32 %v7726, %v7797
    %v7799 = vpop.f32.mrf.mxu0
    %7800 = vdwg.mxu0
    %v7801 = vadd.f32 %v7627, %v7798
    %s7802 = scalar_lea.vmem [#allocation32], 1
    %v7803 = vld [vmem:[%s7802] sm:$0x1]
    %s7804 = scalar_lea.vmem [#allocation34], 1
    %v7805 = vld [vmem:[%s7804] sm:$0x1]
    %v7806 = vsel %vm614, %v7801, 0.0
    %7807 = vadd.xlane.f32.xlu0 %v7806
    %v7808 = vpop.xlane.xlu0 %7807
    %v7809 = vmul.f32 %v7808, %v2175
    %v7810 = vsub.f32 %v7801, %v7809
    %v7811 = vmul.f32 %v7810, %v7810
    %v7812 = vsel %vm614, %v7811, 0.0
    %7813 = vadd.xlane.f32.xlu0 %v7812
    %v7814 = vpop.xlane.xlu0 %7813
    %v7815 = vmul.f32 %v7814, %v2175
    %v7816 = vadd.f32 %v7815, 1e-05
    %v7817 = vrsqrt.pop %v7816
    %v7818 = vmul.f32 %v7810, %v7817
    %v7820 = vlaneseq
    %v7821 = vshrl.u32 %v7820, 7
    %v7822 = vsub.s32 0, %v7821
    %v7823 = vrot.slane %v7803, %v7822
    %v7825 = vmul.f32 %v7818, %v7823
    %v7827 = vlaneseq
    %v7828 = vshrl.u32 %v7827, 7
    %v7829 = vsub.s32 0, %v7828
    %v7830 = vrot.slane %v7805, %v7829
    %v7832 = vadd.f32 %v7825, %v7830
    %v7834 = vrot.slane %v4280, 1
    %7835 = vrot.lane.b32.xlu0 %v7834, 32
    %v7836 = vpop.permute.xlu0 %7835
    %v7838 = vrot.slane %v4280, 2
    %7839 = vrot.lane.b32.xlu0 %v7838, 64
    %v7840 = vpop.permute.xlu0 %7839
    %v7842 = vrot.slane %v4280, 3
    %7843 = vrot.lane.b32.xlu0 %v7842, 96
    %v7844 = vpop.permute.xlu0 %7843
    %v7846 = vrot.slane %v4280, 4
    %v7848 = vrot.slane %v4280, 5
    %7849 = vrot.lane.b32.xlu0 %v7848, 32
    %v7850 = vpop.permute.xlu0 %7849
    %v7852 = vrot.slane %v4280, 6
    %7853 = vrot.lane.b32.xlu0 %v7852, 64
    %v7854 = vpop.permute.xlu0 %7853
    %v7856 = vrot.slane %v4280, 7
    %7857 = vrot.lane.b32.xlu0 %v7856, 96
    %v7858 = vpop.permute.xlu0 %7857
    %v7860 = vsel %vm614, %v4280, %v7836
    %vm7861 = vcmask 523264
    %v7862 = vsel %vm7861, %v7860, %v7840
    %vm7863 = vcmask 785408
    %v7864 = vsel %vm7863, %v7862, %v7844
    %v7865 = vsel %vm614, %v7846, %v7850
    %v7866 = vsel %vm7861, %v7865, %v7854
    %v7867 = vsel %vm7863, %v7866, %v7858
    %v7869 = vrot.slane %v4281, 1
    %7870 = vrot.lane.b32.xlu0 %v7869, 32
    %v7871 = vpop.permute.xlu0 %7870
    %v7873 = vrot.slane %v4281, 2
    %7874 = vrot.lane.b32.xlu0 %v7873, 64
    %v7875 = vpop.permute.xlu0 %7874
    %v7877 = vrot.slane %v4281, 3
    %7878 = vrot.lane.b32.xlu0 %v7877, 96
    %v7879 = vpop.permute.xlu0 %7878
    %v7881 = vrot.slane %v4281, 4
    %v7883 = vrot.slane %v4281, 5
    %7884 = vrot.lane.b32.xlu0 %v7883, 32
    %v7885 = vpop.permute.xlu0 %7884
    %v7887 = vrot.slane %v4281, 6
    %7888 = vrot.lane.b32.xlu0 %v7887, 64
    %v7889 = vpop.permute.xlu0 %7888
    %v7891 = vrot.slane %v4281, 7
    %7892 = vrot.lane.b32.xlu0 %v7891, 96
    %v7893 = vpop.permute.xlu0 %7892
    %v7895 = vsel %vm614, %v4281, %v7871
    %v7896 = vsel %vm7861, %v7895, %v7875
    %v7897 = vsel %vm7863, %v7896, %v7879
    %v7898 = vsel %vm614, %v7881, %v7885
    %v7899 = vsel %vm7861, %v7898, %v7889
    %v7900 = vsel %vm7863, %v7899, %v7893
    %v7903 = vrot.slane %v7897, 7
    %v7904 = vrot.slane %v7900, 7
    %vm7907 = vcmask 1040384
    %v7908 = vsel %vm7907, %v7864, %v7903
    %v7909 = vsel %vm7907, %v7867, %v7904
    %v7911 = vrot.slane %v7832, 1
    %7912 = vrot.lane.b32.xlu0 %v7911, 32
    %v7913 = vpop.permute.xlu0 %7912
    %v7915 = vrot.slane %v7832, 2
    %7916 = vrot.lane.b32.xlu0 %v7915, 64
    %v7917 = vpop.permute.xlu0 %7916
    %v7919 = vrot.slane %v7832, 3
    %7920 = vrot.lane.b32.xlu0 %v7919, 96
    %v7921 = vpop.permute.xlu0 %7920
    %v7923 = vsel %vm614, %v7832, %v7913
    %v7924 = vsel %vm7861, %v7923, %v7917
    %v7925 = vsel %vm7863, %v7924, %v7921
    %v7927 = vrot.slane %v7925, 3
    %v7929 = vsel %vm7907, %v7925, %v7927
    %v7930 = vld [vmem:[%s61] sm:$0x3f]
    %v7931 = vld [vmem:[%s63] sm:$0x1]
    %v7933 = vlaneseq
    %v7934 = vshrl.u32 %v7933, 7
    %v7935 = vsub.s32 0, %v7934
    %v7936 = vrot.slane %v7930, %v7935
    %v7937 = vlaneseq
    %v7938 = vshrl.u32 %v7937, 7
    %v7939 = vsub.s32 2, %v7938
    %v7940 = vrot.slane %v7930, %v7939
    %v7941 = vlaneseq
    %v7942 = vshrl.u32 %v7941, 7
    %v7943 = vsub.s32 4, %v7942
    %v7944 = vrot.slane %v7930, %v7943
    %v7948 = vlaneseq
    %v7949 = vshrl.u32 %v7948, 7
    %v7950 = vsub.s32 0, %v7949
    %v7951 = vrot.slane %v7936, %v7950
    %v7952 = vlaneseq
    %v7953 = vshrl.u32 %v7952, 7
    %v7954 = vsub.s32 0, %v7953
    %v7955 = vrot.slane %v7940, %v7954
    %v7956 = vlaneseq
    %v7957 = vshrl.u32 %v7956, 7
    %v7958 = vsub.s32 0, %v7957
    %v7959 = vrot.slane %v7944, %v7958
    %v7960 = vmul.f32 %v7908, %v7951
    %v7961 = vmul.f32 %v7909, %v7955
    %v7962 = vmul.f32 %v7929, %v7959
    %vm7963 = vcmask 1041408
    %v7964 = vsel %vm7963, %v7960, 0.0
    %v7965 = vsel %vm7963, %v7961, 0.0
    %v7966 = vadd.f32 %v7964, %v7965
    %v7967 = vsel %vm7963, %v7962, 0.0
    %v7968 = vadd.f32 %v7966, %v7967
    %7969 = vadd.xlane.f32.xlu0 %v7968
    %v7970 = vpop.xlane.xlu0 %7969
    %v7972 = vlaneseq
    %v7973 = vshrl.u32 %v7972, 7
    %v7974 = vsub.s32 0, %v7973
    %v7975 = vrot.slane %v7931, %v7974
    %v7977 = vadd.f32 %v7970, %v7975
    %v7978 = vlaneseq
    %v7979 = vshrl.u32 %v7978, 7
    %v7980 = vsub.s32 1, %v7979
    %v7981 = vrot.slane %v7930, %v7980
    %v7982 = vlaneseq
    %v7983 = vshrl.u32 %v7982, 7
    %v7984 = vsub.s32 3, %v7983
    %v7985 = vrot.slane %v7930, %v7984
    %v7986 = vlaneseq
    %v7987 = vshrl.u32 %v7986, 7
    %v7988 = vsub.s32 5, %v7987
    %v7989 = vrot.slane %v7930, %v7988
    %v7993 = vlaneseq
    %v7994 = vshrl.u32 %v7993, 7
    %v7995 = vsub.s32 1, %v7994
    %v7996 = vrot.slane %v7981, %v7995
    %v7997 = vlaneseq
    %v7998 = vshrl.u32 %v7997, 7
    %v7999 = vsub.s32 1, %v7998
    %v8000 = vrot.slane %v7985, %v7999
    %v8001 = vlaneseq
    %v8002 = vshrl.u32 %v8001, 7
    %v8003 = vsub.s32 1, %v8002
    %v8004 = vrot.slane %v7989, %v8003
    %v8005 = vmul.f32 %v7908, %v7996
    %v8006 = vmul.f32 %v7909, %v8000
    %v8007 = vmul.f32 %v7929, %v8004
    %v8008 = vsel %vm7963, %v8005, 0.0
    %v8009 = vsel %vm7963, %v8006, 0.0
    %v8010 = vadd.f32 %v8008, %v8009
    %v8011 = vsel %vm7963, %v8007, 0.0
    %v8012 = vadd.f32 %v8010, %v8011
    %8013 = vadd.xlane.f32.xlu0 %v8012
    %v8014 = vpop.xlane.xlu0 %8013
    %v8015 = vadd.f32 %v8014, %v7975
    %8017 = vrot.lane.b32.xlu0 %v8015, 127
    %v8018 = vpop.permute.xlu0 %8017
    %v8020 = vmax.f32 %v7977, %v8018
    %v8021 = vsub.f32 %v7977, %v8020
    %v8022 = vmul.f32 %v8021, 1.442695
    %v8023 = vpow.pop %v8022
    %8025 = vrot.lane.b32.xlu0 %v8020, 1
    %v8026 = vpop.permute.xlu0 %8025
    %v8028 = vsub.f32 %v8015, %v8026
    %v8029 = vmul.f32 %v8028, 1.442695
    %v8030 = vpow.pop %v8029
    %8032 = vrot.lane.b32.xlu0 %v8030, 127
    %v8033 = vpop.permute.xlu0 %8032
    %v8035 = vadd.f32 %v8023, %v8033
    %v8036 = vrcp.pop %v8035
    %v8037 = vmul.f32 %v8023, %v8036
    %8039 = vrot.lane.b32.xlu0 %v8036, 1
    %v8040 = vpop.permute.xlu0 %8039
    %v8042 = vmul.f32 %v8030, %v8040
    %vm8043 = vcmask 7168
    %v8044 = vsel %vm8043, %v8037, %v8042
    %vm8045 = vcmask 9216
    %8046 = vst.msk [vmem:[#allocation42] sm:$0x3] %vm8045, %v8044
    %8048 = vset.pattern.permute.xlu0 0
    %8049 = vperm.xlu0 %8048, %v8037
    %v8050 = vpop.permute.xlu0 %8049
    %v8052 = vmul.f32 %v7908, %v8050
    %v8053 = vmul.f32 %v7909, %v8050
    %8055 = vset.pattern.permute.xlu0 1
    %8056 = vperm.xlu0 %8055, %v8042
    %v8057 = vpop.permute.xlu0 %8056
    %v8059 = vmul.f32 %v7929, %v8057
    %v8063 = vcombine.low %v8052, %v8053
    %v8065 = vunpack.c.l.s4 1983009808
    %v8066 = vunpack.c.0.s8 %v8065
    %v8067 = vlaneseq
    %v8068 = vshrl.u32 %v8067, 7
    %v8069 = vsub.s32 %v8066, %v8068
    %v8070 = vrot.slane %v8063, %v8069
    %v8072 = vunpack.c.l.s4 1983009808
    %v8073 = vunpack.c.0.s8 %v8072
    %v8074 = vlaneseq
    %v8075 = vshrl.u32 %v8074, 7
    %v8076 = vsub.s32 %v8073, %v8075
    %v8077 = vrot.slane %v8059, %v8076
    %v8078 = vcombine.low %v8070, %v8077
    %8080 = vst [vmem:[#allocation36] sm:$0x3f] %v8078
    %v8081 = vld [vmem:[%s65] sm:$0xff]
    %v8082 = vld [vmem:[%s65 + $0x8] sm:$0xff]
    %v8083 = vld [vmem:[%s65 + $0x10] sm:$0xff]
    %v8084 = vld [vmem:[%s65 + $0x18] sm:$0xff]
    %v8085 = vld [vmem:[%s65 + $0x20] sm:$0xff]
    %v8086 = vld [vmem:[%s65 + $0x28] sm:$0xff]
    %v8087 = vld [vmem:[%s65 + $0x30] sm:$0xff]
    %v8088 = vld [vmem:[%s65 + $0x38] sm:$0xff]
    %v8089 = vld [vmem:[%s65 + $0x40] sm:$0xff]
    %v8090 = vld [vmem:[%s65 + $0x48] sm:$0xff]
    %v8091 = vld [vmem:[%s65 + $0x50] sm:$0xff]
    %v8092 = vld [vmem:[%s65 + $0x58] sm:$0xff]
    %v8093 = vld [vmem:[%s65 + $0x60] sm:$0xff]
    %v8094 = vld [vmem:[%s65 + $0x68] sm:$0xff]
    %v8095 = vld [vmem:[%s65 + $0x70] sm:$0xff]
    %v8096 = vld [vmem:[%s65 + $0x78] sm:$0xff]
    %v8097 = vld [vmem:[%s65 + $0x80] sm:$0xff]
    %v8098 = vld [vmem:[%s65 + $0x88] sm:$0xff]
    %v8099 = vld [vmem:[%s65 + $0x90] sm:$0xff]
    %v8100 = vld [vmem:[%s65 + $0x98] sm:$0xff]
    %v8101 = vld [vmem:[%s65 + $0xa0] sm:$0xff]
    %v8102 = vld [vmem:[%s65 + $0xa8] sm:$0xff]
    %v8103 = vld [vmem:[%s65 + $0xb0] sm:$0xff]
    %v8104 = vld [vmem:[%s65 + $0xb8] sm:$0xff]
    %v8105 = vld [vmem:[%s65 + $0xc0] sm:$0xff]
    %v8106 = vld [vmem:[%s65 + $0xc8] sm:$0xff]
    %v8107 = vld [vmem:[%s65 + $0xd0] sm:$0xff]
    %v8108 = vld [vmem:[%s65 + $0xd8] sm:$0xff]
    %v8109 = vld [vmem:[%s65 + $0xe0] sm:$0xff]
    %v8110 = vld [vmem:[%s65 + $0xe8] sm:$0xff]
    %v8111 = vld [vmem:[%s65 + $0xf0] sm:$0xff]
    %v8112 = vld [vmem:[%s65 + $0xf8] sm:$0xff]
    %v8113 = vld [vmem:[%s65 + $0x100] sm:$0xff]
    %v8114 = vld [vmem:[%s65 + $0x108] sm:$0xff]
    %v8115 = vld [vmem:[%s65 + $0x110] sm:$0xff]
    %v8116 = vld [vmem:[%s65 + $0x118] sm:$0xff]
    %v8117 = vld [vmem:[%s65 + $0x120] sm:$0xff]
    %v8118 = vld [vmem:[%s65 + $0x128] sm:$0xff]
    %v8119 = vld [vmem:[%s65 + $0x130] sm:$0xff]
    %v8120 = vld [vmem:[%s65 + $0x138] sm:$0xff]
    %v8121 = vld [vmem:[%s65 + $0x140] sm:$0xff]
    %v8122 = vld [vmem:[%s65 + $0x148] sm:$0xff]
    %v8123 = vld [vmem:[%s65 + $0x150] sm:$0xff]
    %v8124 = vld [vmem:[%s65 + $0x158] sm:$0xff]
    %v8125 = vld [vmem:[%s65 + $0x160] sm:$0xff]
    %v8126 = vld [vmem:[%s65 + $0x168] sm:$0xff]
    %v8127 = vld [vmem:[%s65 + $0x170] sm:$0xff]
    %v8128 = vld [vmem:[%s65 + $0x178] sm:$0xff]
    %v8129 = vld [vmem:[%s67] sm:$0x1]
    %v8131 = vlaneseq
    %v8132 = vshrl.u32 %v8131, 7
    %v8133 = vsub.s32 0, %v8132
    %v8134 = vrot.slane %v8129, %v8133
    %8136 = vmatprep.subr.mxu0 0.0
    %8137 = vmatpush1.msra.mxu0 %v8096
    %8138 = vmatprep.subr.mxu0 0.0
    %8139 = vmatpush1.msra.mxu0 %v8095
    %8140 = vmatprep.subr.mxu0 0.0
    %8141 = vmatpush1.msra.mxu0 %v8094
    %8142 = vmatprep.subr.mxu0 0.0
    %8143 = vmatpush1.msra.mxu0 %v8093
    %8144 = vmatprep.subr.mxu0 0.0
    %8145 = vmatpush1.msra.mxu0 %v8092
    %8146 = vmatprep.subr.mxu0 0.0
    %8147 = vmatpush1.msra.mxu0 %v8091
    %8148 = vmatprep.subr.mxu0 0.0
    %8149 = vmatpush1.msra.mxu0 %v8090
    %8150 = vmatprep.subr.mxu0 0.0
    %8151 = vmatpush1.msra.mxu0 %v8089
    %8152 = vmatprep.subr.mxu0 0.0
    %8153 = vmatpush1.msra.mxu0 %v8088
    %8154 = vmatprep.subr.mxu0 0.0
    %8155 = vmatpush1.msra.mxu0 %v8087
    %8156 = vmatprep.subr.mxu0 0.0
    %8157 = vmatpush1.msra.mxu0 %v8086
    %8158 = vmatprep.subr.mxu0 0.0
    %8159 = vmatpush1.msra.mxu0 %v8085
    %8160 = vmatprep.subr.mxu0 0.0
    %8161 = vmatpush1.msra.mxu0 %v8084
    %8162 = vmatprep.subr.mxu0 0.0
    %8163 = vmatpush1.msra.mxu0 %v8083
    %8164 = vmatprep.subr.mxu0 0.0
    %8165 = vmatpush1.msra.mxu0 %v8082
    %8166 = vmatprep.subr.mxu0 0.0
    %8167 = vmatpush1.msra.mxu0 %v8081
    %8168 = vmatprep.subr.mxu0 0.0
    %8169 = vmatpush2.msra.mxu0 %v8112
    %8170 = vmatprep.subr.mxu0 0.0
    %8171 = vmatpush2.msra.mxu0 %v8111
    %8172 = vmatprep.subr.mxu0 0.0
    %8173 = vmatpush2.msra.mxu0 %v8110
    %8174 = vmatprep.subr.mxu0 0.0
    %8175 = vmatpush2.msra.mxu0 %v8109
    %8176 = vmatprep.subr.mxu0 0.0
    %8177 = vmatpush2.msra.mxu0 %v8108
    %8178 = vmatprep.subr.mxu0 0.0
    %8179 = vmatpush2.msra.mxu0 %v8107
    %8180 = vmatprep.subr.mxu0 0.0
    %8181 = vmatpush2.msra.mxu0 %v8106
    %8182 = vmatprep.subr.mxu0 0.0
    %8183 = vmatpush2.msra.mxu0 %v8105
    %8184 = vmatprep.subr.mxu0 0.0
    %8185 = vmatpush2.msra.mxu0 %v8104
    %8186 = vmatprep.subr.mxu0 0.0
    %8187 = vmatpush2.msra.mxu0 %v8103
    %8188 = vmatprep.subr.mxu0 0.0
    %8189 = vmatpush2.msra.mxu0 %v8102
    %8190 = vmatprep.subr.mxu0 0.0
    %8191 = vmatpush2.msra.mxu0 %v8101
    %8192 = vmatprep.subr.mxu0 0.0
    %8193 = vmatpush2.msra.mxu0 %v8100
    %8194 = vmatprep.subr.mxu0 0.0
    %8195 = vmatpush2.msra.mxu0 %v8099
    %8196 = vmatprep.subr.mxu0 0.0
    %8197 = vmatpush2.msra.mxu0 %v8098
    %8198 = vmatprep.subr.mxu0 0.0
    %8199 = vmatpush2.msra.mxu0 %v8097
    %8200 = vmatprep.mubr.f32.mxu0 %v8053
    %8201 = vmatmul.mubr.f32.gmra.mxu0 %v8052
    %v8202 = vpop.f32.mrf.mxu0
    %v8203 = vadd.f32 %v8134, %v8202
    %v8204 = vpop.f32.mrf.mxu0
    %8205 = vdwg.mxu0
    %8206 = vmatprep.subr.mxu0 0.0
    %8207 = vmatpush1.msra.mxu0 %v8128
    %8208 = vmatprep.subr.mxu0 0.0
    %8209 = vmatpush1.msra.mxu0 %v8127
    %8210 = vmatprep.subr.mxu0 0.0
    %8211 = vmatpush1.msra.mxu0 %v8126
    %8212 = vmatprep.subr.mxu0 0.0
    %8213 = vmatpush1.msra.mxu0 %v8125
    %8214 = vmatprep.subr.mxu0 0.0
    %8215 = vmatpush1.msra.mxu0 %v8124
    %8216 = vmatprep.subr.mxu0 0.0
    %8217 = vmatpush1.msra.mxu0 %v8123
    %8218 = vmatprep.subr.mxu0 0.0
    %8219 = vmatpush1.msra.mxu0 %v8122
    %8220 = vmatprep.subr.mxu0 0.0
    %8221 = vmatpush1.msra.mxu0 %v8121
    %8222 = vmatprep.subr.mxu0 0.0
    %8223 = vmatpush1.msra.mxu0 %v8120
    %8224 = vmatprep.subr.mxu0 0.0
    %8225 = vmatpush1.msra.mxu0 %v8119
    %8226 = vmatprep.subr.mxu0 0.0
    %8227 = vmatpush1.msra.mxu0 %v8118
    %8228 = vmatprep.subr.mxu0 0.0
    %8229 = vmatpush1.msra.mxu0 %v8117
    %8230 = vmatprep.subr.mxu0 0.0
    %8231 = vmatpush1.msra.mxu0 %v8116
    %8232 = vmatprep.subr.mxu0 0.0
    %8233 = vmatpush1.msra.mxu0 %v8115
    %8234 = vmatprep.subr.mxu0 0.0
    %8235 = vmatpush1.msra.mxu0 %v8114
    %8236 = vmatprep.subr.mxu0 0.0
    %8237 = vmatpush1.msra.mxu0 %v8113
    %8238 = vmatprep.subr.mxu0 0.0
    %8239 = vmatpush2.msra.mxu0 0.0
    %8240 = vmatprep.subr.mxu0 0.0
    %8241 = vmatpush2.msra.mxu0 0.0
    %8242 = vmatprep.subr.mxu0 0.0
    %8243 = vmatpush2.msra.mxu0 0.0
    %8244 = vmatprep.subr.mxu0 0.0
    %8245 = vmatpush2.msra.mxu0 0.0
    %8246 = vmatprep.subr.mxu0 0.0
    %8247 = vmatpush2.msra.mxu0 0.0
    %8248 = vmatprep.subr.mxu0 0.0
    %8249 = vmatpush2.msra.mxu0 0.0
    %8250 = vmatprep.subr.mxu0 0.0
    %8251 = vmatpush2.msra.mxu0 0.0
    %8252 = vmatprep.subr.mxu0 0.0
    %8253 = vmatpush2.msra.mxu0 0.0
    %8254 = vmatprep.subr.mxu0 0.0
    %8255 = vmatpush2.msra.mxu0 0.0
    %8256 = vmatprep.subr.mxu0 0.0
    %8257 = vmatpush2.msra.mxu0 0.0
    %8258 = vmatprep.subr.mxu0 0.0
    %8259 = vmatpush2.msra.mxu0 0.0
    %8260 = vmatprep.subr.mxu0 0.0
    %8261 = vmatpush2.msra.mxu0 0.0
    %8262 = vmatprep.subr.mxu0 0.0
    %8263 = vmatpush2.msra.mxu0 0.0
    %8264 = vmatprep.subr.mxu0 0.0
    %8265 = vmatpush2.msra.mxu0 0.0
    %8266 = vmatprep.subr.mxu0 0.0
    %8267 = vmatpush2.msra.mxu0 0.0
    %8268 = vmatprep.subr.mxu0 0.0
    %8269 = vmatpush2.msra.mxu0 0.0
    %8270 = vmatprep.mubr.f32.mxu0 0.0
    %8271 = vmatmul.mubr.f32.gmra.mxu0 %v8059
    %v8272 = vpop.f32.mrf.mxu0
    %v8273 = vadd.f32 %v8203, %v8272
    %v8274 = vpop.f32.mrf.mxu0
    %8275 = vdwg.mxu0
    %vm8276 = vcmask 25600
    %8277 = vst.msk [vmem:[#allocation35] sm:$0x3] %vm8276, %v8273
    // Predicated region
    $region222: #{transformer_forward.1} parent=1 // pred_check
      _
    $region223: #{transformer_forward.1} parent=1 // pred_check_branch
      %8279 = sbr.rel (0) target = $region225
    $region224: #{transformer_forward.1} parent=1 // pred_region
      %s8281 = ssub.s32 32, 32
      %8282 = vsyncadd [#allocation4], %s8281
      %s8284 = sshll.u32 [#allocation35], 4
      %s8285 = int_to_ptr.vmem [resolvable:$true] %s8284
      %8287 = dma.vmem_to_hbm [thread:$0]  %s8285, 32, %s69, [#allocation4]
    $region225: #{transformer_forward.1} parent=1 // pred_fallthru
      _
    // Predicated region
    $region226: #{transformer_forward.1} parent=1 // pred_check
      _
    $region227: #{transformer_forward.1} parent=1 // pred_check_branch
      %8289 = sbr.rel (0) target = $region229
    $region228: #{transformer_forward.1} parent=1 // pred_region
      %s8291 = ssub.s32 96, 96
      %8292 = vsyncadd [#allocation37], %s8291
      %s8294 = sshll.u32 [#allocation36], 4
      %s8295 = int_to_ptr.vmem [resolvable:$true] %s8294
      %8297 = dma.vmem_to_hbm [thread:$0]  %s8295, 96, %s71, [#allocation37]
    $region229: #{transformer_forward.1} parent=1 // pred_fallthru
      _
    // Predicated region
    $region230: #{transformer_forward.1} parent=1 // pred_check
      _
    $region231: #{transformer_forward.1} parent=1 // pred_check_branch
      %8299 = sbr.rel (0) target = $region233
    $region232: #{transformer_forward.1} parent=1 // pred_region
      %s8301 = ssub.s32 1024, 1024
      %8302 = vsyncadd [#allocation37], %s8301
      %s8303 = sshll.u32 [#allocation38], 4
      %s8304 = int_to_ptr.vmem [resolvable:$true] %s8303
      %8309 = dma.vmem_to_hbm [thread:$0]  %s8304, 1024, %s73, [#allocation37], 128, 128, 8
    $region233: #{transformer_forward.1} parent=1 // pred_fallthru
      _
    // Predicated region
    $region234: #{transformer_forward.1} parent=1 // pred_check
      _
    $region235: #{transformer_forward.1} parent=1 // pred_check_branch
      %8311 = sbr.rel (0) target = $region237
    $region236: #{transformer_forward.1} parent=1 // pred_region
      _
    $region237: #{transformer_forward.1} parent=1 // pred_fallthru
      _
    // Predicated region
    $region238: #{transformer_forward.1} parent=1 // pred_check
      _
    $region239: #{transformer_forward.1} parent=1 // pred_check_branch
      %8313 = sbr.rel (0) target = $region241
    $region240: #{transformer_forward.1} parent=1 // pred_region
      %s8315 = ssub.s32 256, 256
      %8316 = vsyncadd [#allocation40], %s8315
      %s8317 = sshll.u32 [#allocation39], 4
      %s8318 = int_to_ptr.vmem [resolvable:$true] %s8317
      %8323 = dma.vmem_to_hbm [thread:$0]  %s8318, 256, %s77, [#allocation40], 128, 128, 8
    $region241: #{transformer_forward.1} parent=1 // pred_fallthru
      _
    // Predicated region
    $region242: #{transformer_forward.1} parent=1 // pred_check
      _
    $region243: #{transformer_forward.1} parent=1 // pred_check_branch
      %8325 = sbr.rel (0) target = $region245
    $region244: #{transformer_forward.1} parent=1 // pred_region
      %s8327 = ssub.s32 128, 128
      %8328 = vsyncadd [#allocation40], %s8327
      %s8329 = sshll.u32 [#allocation41], 4
      %s8330 = int_to_ptr.vmem [resolvable:$true] %s8329
      %8335 = dma.vmem_to_hbm [thread:$0]  %s8330, 128, %s79, [#allocation40], 64, 64, 4
    $region245: #{transformer_forward.1} parent=1 // pred_fallthru
      _
    // Predicated region
    $region246: #{transformer_forward.1} parent=1 // pred_check
      _
    $region247: #{transformer_forward.1} parent=1 // pred_check_branch
      %8337 = sbr.rel (0) target = $region249
    $region248: #{transformer_forward.1} parent=1 // pred_region
      %s8339 = ssub.s32 32, 32
      %8340 = vsyncadd [#allocation43], %s8339
      %s8342 = sshll.u32 [#allocation42], 4
      %s8343 = int_to_ptr.vmem [resolvable:$true] %s8342
      %8345 = dma.vmem_to_hbm [thread:$0]  %s8343, 32, %s81, [#allocation43]
    $region249: #{transformer_forward.1} parent=1 // pred_fallthru
      _
    // Predicated region
    $region250: #{transformer_forward.1} parent=1 // pred_check
      _
    $region251: #{transformer_forward.1} parent=1 // pred_check_branch
      %8347 = sbr.rel (0) target = $region253
    $region252: #{transformer_forward.1} parent=1 // pred_region
      %8348 = dma.done [#allocation4], 32
    $region253: #{transformer_forward.1} parent=1 // pred_fallthru
      _
    // Predicated region
    $region254: #{transformer_forward.1} parent=1 // pred_check
      _
    $region255: #{transformer_forward.1} parent=1 // pred_check_branch
      %8350 = sbr.rel (0) target = $region257
    $region256: #{transformer_forward.1} parent=1 // pred_region
      %8351 = dma.done [#allocation37], 96
    $region257: #{transformer_forward.1} parent=1 // pred_fallthru
      _
    // Predicated region
    $region258: #{transformer_forward.1} parent=1 // pred_check
      _
    $region259: #{transformer_forward.1} parent=1 // pred_check_branch
      %8353 = sbr.rel (0) target = $region261
    $region260: #{transformer_forward.1} parent=1 // pred_region
      %8354 = dma.done [#allocation37], 1024
    $region261: #{transformer_forward.1} parent=1 // pred_fallthru
      _
    // Predicated region
    $region262: #{transformer_forward.1} parent=1 // pred_check
      _
    $region263: #{transformer_forward.1} parent=1 // pred_check_branch
      %8356 = sbr.rel (0) target = $region265
    $region264: #{transformer_forward.1} parent=1 // pred_region
      _
    $region265: #{transformer_forward.1} parent=1 // pred_fallthru
      _
    // Predicated region
    $region266: #{transformer_forward.1} parent=1 // pred_check
      _
    $region267: #{transformer_forward.1} parent=1 // pred_check_branch
      %8358 = sbr.rel (0) target = $region269
    $region268: #{transformer_forward.1} parent=1 // pred_region
      %8359 = dma.done [#allocation40], 256
    $region269: #{transformer_forward.1} parent=1 // pred_fallthru
      _
    // Predicated region
    $region270: #{transformer_forward.1} parent=1 // pred_check
      _
    $region271: #{transformer_forward.1} parent=1 // pred_check_branch
      %8361 = sbr.rel (0) target = $region273
    $region272: #{transformer_forward.1} parent=1 // pred_region
      %8362 = dma.done [#allocation40], 128
    $region273: #{transformer_forward.1} parent=1 // pred_fallthru
      _
    // Predicated region
    $region274: #{transformer_forward.1} parent=1 // pred_check
      _
    $region275: #{transformer_forward.1} parent=1 // pred_check_branch
      %8364 = sbr.rel (0) target = $region277
    $region276: #{transformer_forward.1} parent=1 // pred_region
      %8365 = dma.done [#allocation43], 32
    $region277: #{transformer_forward.1} parent=1 // pred_fallthru
      _
    %8366 = vsyncpa [#allocation3], 1
    %8367 = vsyncpa [#allocation6], 1
    %8368 = vsyncpa [#allocation9], 1
    %8369 = vsyncpa [#allocation12], 1
    %8370 = vsyncpa [#allocation15], 1
    %8371 = vsyncpa [#allocation18], 1
    %8372 = vsyncpa [#allocation21], 1
    %8373 = vsyncpa [#allocation24], 1
    %8374 = vsyncpa [#allocation27], 1
    %8375 = vsyncpa [#allocation30], 1
    %8376 = vsyncpa [#allocation33], 1
    %8377 = vsyncpa [#allocation4], 1
    %8378 = vsyncpa [#allocation37], 1
    %8379 = vsyncpa [#allocation40], 1
    %8380 = vsyncpa [#allocation43], 1

</llo_original>
